<compile_context>
chip_gen: v7x
topology: tpu7x:2x2x1
jax: 0.10.0
libtpu: 0.0.40
codegen_flags: <defaults>
</compile_context>

<pallas_src>
import functools

import numpy as np
import jax
import jax.numpy as jnp
from jax.experimental import pallas as pl
from jax.experimental.pallas import tpu as pltpu


def _round_up(x, m):
    return ((x + m - 1) // m) * m


def _cdiv(a, b):
    return -(-a // b)


# ----------------------------------------------------------------------------
# fused kernel: masks -> resize -> messages -> link propagation -> GRU -> readout
# one grid step = one block of `Bb` graphs
# ----------------------------------------------------------------------------
def gpnn_kernel(valid_ref,                               # (Bp,) int32 in SMEM (prefetch)
                edge_ref, node_ref,                      # (Bb,N,N,Ee), (Bb,N,En) bf16
                w_er_ref, b_er_ref, w_nr_ref, b_nr_ref,  # feature resize Linears
                w_l1_ref, b_l1_ref, w_l2_ref, b_l2_ref,  # link GraphConv (1x1 convs)
                w_mn_ref, w_me_ref, b_m_ref,             # message fn (linear_concat_relu)
                w_gi_ref, w_gh_ref, b_gi_ref, b_gh_ref,  # GRU (gates fused along lanes)
                w_ro_ref, b_ro_ref,                      # readout fc (C padded to 128)
                adj_ref, lbl_ref,                        # outputs (Bb,N,A2), (Bb,N,Cp)
                *, num_rounds):
    Bb, N, _, Ee = edge_ref.shape
    En = node_ref.shape[2]
    M = w_er_ref.shape[1]
    L = w_l1_ref.shape[1]
    Cp = w_ro_ref.shape[1]
    A2 = adj_ref.shape[2]
    f32 = jnp.float32
    bf16 = jnp.bfloat16

    def mm(a, b):
        return jnp.dot(a, b, preferred_element_type=f32)

    # ---- validity masks rebuilt in-kernel from SMEM-prefetched node counts ----
    g = pl.program_id(0)
    iota_n = jax.lax.broadcasted_iota(jnp.int32, (1, N), 1)
    rows = [(iota_n < valid_ref[g * Bb + j]).astype(f32) for j in range(Bb)]
    nvm = rows[0] if Bb == 1 else jnp.concatenate(rows, axis=0)       # (Bb, N)
    pair_mask = nvm[:, :, None] * nvm[:, None, :]                     # (Bb, N, N)
    node_mask = nvm[:, :, None]                                       # (Bb, N, 1)

    # ---- feature resize (bf16 storage, f32 accumulation) ----
    e_res = (mm(edge_ref[...].reshape(Bb * N * N, Ee), w_er_ref[...])
             + b_er_ref[...])                                          # (BNN, M) f32
    n_res = (mm(node_ref[...].reshape(Bb * N, En), w_nr_ref[...])
             + b_nr_ref[...])                                          # (BN, M) f32
    e_res_b = e_res.astype(bf16)
    n_res_b = n_res.astype(bf16)

    # ---- raw (pre-gating) messages: raw[g,i,w,:] = relu(W_n h_w + W_e e_iw + b) ----
    node_proj = mm(n_res_b, w_mn_ref[...]).reshape(Bb, N, M)
    edge_proj = mm(e_res_b, w_me_ref[...]).reshape(Bb, N, N, M)
    raw_b = jnp.maximum(edge_proj + node_proj[:, None, :, :]
                        + b_m_ref[...][None, None, :, :], 0.0).astype(bf16)

    b_l1 = b_l1_ref[...]                                               # (1, L) f32
    w_l2 = w_l2_ref[...]                                               # (1, L) f32
    b_l2 = b_l2_ref[...]                                               # (1, 1) f32

    # First 1x1 link conv of the gated state is round-invariant because the gate is
    # a per-(i,w) scalar: dot(sig*raw, W1) == sig * dot(raw, W1).  Hoist it.
    p3_b = mm(raw_b.reshape(Bb * N * N, M), w_l1_ref[...]) \
        .reshape(Bb, N, N, L).astype(bf16)

    # ---- round 0: link fn applied to the (resized) edge features ----
    # The tiny L->1 conv stays in f32 on the VPU/XLU (multiply + lane reduce):
    # keeps adjacency sign stable and leaves MXU push slots to the big matmuls.
    h0 = jnp.maximum(mm(e_res_b, w_l1_ref[...]) + b_l1, 0.0).reshape(Bb, N, N, L)
    adj = jnp.sum(h0 * w_l2[None, None, :, :], axis=-1) + b_l2         # unmasked
    sig = jax.nn.sigmoid(adj) * pair_mask

    # ---- propagation rounds 1..num_rounds-1 (only edge states evolve) ----
    def round_body(_, carry):
        _adj, sig_c = carry
        h = jnp.maximum(sig_c[:, :, :, None] * p3_b + b_l1[None, None, :, :], 0.0)
        conv = jnp.sum(h * w_l2[None, None, :, :], axis=-1) + b_l2
        # PyTorch stores the gated message at state[:, w, i]; the link conv of that
        # state is the transpose of `conv` (computed in [i, w] order).
        adj_new = jnp.swapaxes(conv, 1, 2)                   # mask applied after loop
        sig_new = jax.nn.sigmoid(adj_new) * pair_mask
        return adj_new, sig_new

    if num_rounds > 1:
        adj, sig = jax.lax.fori_loop(1, num_rounds, round_body, (adj, sig),
                                     unroll=(num_rounds - 1) <= 4)

    # ---- final gated messages + GRU node update + readout ----
    msum = jnp.sum(sig[:, :, :, None] * raw_b, axis=2)                 # (Bb, N, M) f32
    x = msum.reshape(Bb * N, M).astype(bf16)
    h_node = n_res                                                     # never updated
    xi = mm(x, w_gi_ref[...]) + b_gi_ref[...]                          # (BN, 3M) r|z|n
    hh = mm(n_res_b, w_gh_ref[...]) + b_gh_ref[...]
    r = jax.nn.sigmoid(xi[:, 0:M] + hh[:, 0:M])
    z = jax.nn.sigmoid(xi[:, M:2 * M] + hh[:, M:2 * M])
    n = jnp.tanh(xi[:, 2 * M:3 * M] + r * hh[:, 2 * M:3 * M])
    h_new = (1.0 - z) * n + z * h_node

    logits = mm(h_new.astype(bf16), w_ro_ref[...]) + b_ro_ref[...]     # (BN, Cp)
    lbl_ref[...] = logits.reshape(Bb, N, Cp) * node_mask

    adj_out = adj * pair_mask
    if A2 > N:                                                         # lane-dense store
        adj_out = jnp.concatenate(
            [adj_out, jnp.zeros((Bb, N, A2 - N), f32)], axis=-1)
    adj_ref[...] = adj_out


# ----------------------------------------------------------------------------
# VMEM / cost bookkeeping
# ----------------------------------------------------------------------------
def _vmem_block_bytes(Bb, Np, Ee, En, M, L, Cp, A2):
    """Rough per-grid-step VMEM residency (bytes) used to size the batch block."""
    f32, bf16 = 4, 2
    npn = Bb * Np * Np
    stream_in = 2 * (npn * Ee + Bb * Np * En) * bf16           # double-buffered inputs
    stream_out = 2 * Bb * Np * (A2 + Cp) * f32                 # double-buffered outputs
    weights = ((Ee + En + L + 2 * M + 6 * M + Cp) * M) * bf16 \
        + (2 * M + 2 * L + 1 + 6 * M + Cp + M) * f32           # (single-buffered) consts
    inter = npn * ((2 * M + L) * bf16 + (M + L + 4) * f32)     # e_res/raw/p3 + transients
    inter += Bb * Np * (10 * M + Cp) * f32                     # GRU / readout temporaries
    return stream_in + stream_out + weights + inter


def _cost_estimate(Bp, Np, Ee, En, M, L, Cp, A2, rounds):
    mxu = 2 * Bp * Np * (Np * Ee * M + En * M + Np * M * M + M * M
                         + 2 * Np * M * L + 6 * M * M + M * Cp)
    vpu = Bp * Np * Np * (rounds * (4 * L + 6) + 4 * M)
    trans = Bp * (rounds * Np * Np + 3 * Np * M)
    bytes_accessed = (Bp * Np * (Np * Ee + En) * 2
                      + ((Ee + En + L + 8 * M + Cp) * M) * 2
                      + Bp * Np * (A2 + Cp) * 4)
    return pl.CostEstimate(flops=int(mxu + vpu), transcendentals=int(trans),
                           bytes_accessed=int(bytes_accessed))


# ----------------------------------------------------------------------------
# wrapper: padding, batch blocking, GRU gate fusion, lane padding, VMEM budget
# ----------------------------------------------------------------------------
def gpnn_forward(edge_features, node_features, human_nums, obj_nums, params,
                 propagate_layers, *, batch_block=8,
                 vmem_budget_bytes=44 * (1 << 20)):
    edge_f = jnp.asarray(edge_features)
    node_f = jnp.asarray(node_features)
    B, N, _, Ee = edge_f.shape
    En = node_f.shape[-1]
    M = params["W_er"].shape[1]
    L = params["w_l1"].shape[1]
    C = params["w_ro"].shape[1]

    Np = _round_up(max(N, 8), 8)            # sublane-aligned node axis
    Cp = _round_up(C, 128)                  # lane-dense label stores
    A2 = _round_up(Np, 128)                 # lane-dense adjacency stores

    # >=2 grid steps so the "parallel" batch axis can use v7x's 2nd TensorCore;
    # then shrink the block until the per-step VMEM estimate fits a v7x-safe budget.
    Bb = max(1, min(batch_block, _cdiv(B, 2)))
    while Bb > 1 and _vmem_block_bytes(Bb, Np, Ee, En, M, L, Cp, A2) > vmem_budget_bytes:
        Bb -= 1
    Bp = _round_up(B, Bb)

    # streamed inputs: bf16 (halves HBM traffic + VMEM), zero-pad batch / node axes
    edge_b = jnp.pad(edge_f.astype(jnp.bfloat16),
                     ((0, Bp - B), (0, Np - N), (0, Np - N), (0, 0)))
    node_b = jnp.pad(node_f.astype(jnp.bfloat16),
                     ((0, Bp - B), (0, Np - N), (0, 0)))

    # valid-node counts (SMEM scalar prefetch); padded graphs get 0 -> fully masked
    valid = (jnp.asarray(human_nums, jnp.int32).reshape(-1)
             + jnp.asarray(obj_nums, jnp.int32).reshape(-1))
    valid = jnp.pad(valid, (0, Bp - B))

    bf = lambda a: jnp.asarray(a, jnp.bfloat16)
    fp = lambda a: jnp.asarray(a, jnp.float32)
    # fuse the three GRU gate matmuls per input into one (M, 3M) matmul
    w_gi = bf(jnp.concatenate([params["w_gi"][k] for k in range(3)], axis=1))
    w_gh = bf(jnp.concatenate([params["w_gh"][k] for k in range(3)], axis=1))
    b_gi = fp(jnp.concatenate([params["b_gi"][k] for k in range(3)], axis=1))
    b_gh = fp(jnp.concatenate([params["b_gh"][k] for k in range(3)], axis=1))
    # zero-pad readout channels to a multiple of 128 (unmasked stores)
    w_ro = bf(jnp.pad(params["w_ro"], ((0, 0), (0, Cp - C))))
    b_ro = fp(jnp.pad(params["b_ro"], ((0, 0), (0, Cp - C))))
    weight_args = (
        bf(params["W_er"]), fp(params["b_er"]),
        bf(params["W_nr"]), fp(params["b_nr"]),
        bf(params["w_l1"]), fp(params["b_l1"]),
        fp(params["w_l2"]).reshape(1, L), fp(params["b_l2"]),
        bf(params["w_mn"]), bf(params["w_me"]), fp(params["b_m"]),
        w_gi, w_gh, b_gi, b_gh, w_ro, b_ro)

    kernel = functools.partial(gpnn_kernel, num_rounds=int(propagate_layers))
    est = _vmem_block_bytes(Bb, Np, Ee, En, M, L, Cp, A2)
    vmem_limit = int(min(60 * (1 << 20), max(32 * (1 << 20), 2 * est)))
    cost = _cost_estimate(Bp, Np, Ee, En, M, L, Cp, A2, int(propagate_layers))

    def _call(single_buffer_weights):
        if single_buffer_weights:
            def const_spec(*block):
                # Constant index_map -> one buffer suffices; halves weight VMEM (v7x).
                return pl.BlockSpec(block, lambda *_: (0,) * len(block),
                                    pipeline_mode=pl.Buffered(buffer_count=1))
        else:
            def const_spec(*block):
                return pl.BlockSpec(block, lambda *_: (0,) * len(block))

        in_specs = [
            pl.BlockSpec((Bb, Np, Np, Ee), lambda g, v: (g, 0, 0, 0)),  # edge features
            pl.BlockSpec((Bb, Np, En), lambda g, v: (g, 0, 0)),         # node features
            const_spec(Ee, M), const_spec(1, M),                        # edge resize
            const_spec(En, M), const_spec(1, M),                        # node resize
            const_spec(M, L), const_spec(1, L),                         # link conv 1
            const_spec(1, L), const_spec(1, 1),                         # link conv 2
            const_spec(M, M), const_spec(M, M), const_spec(1, M),       # message fn
            const_spec(M, 3 * M), const_spec(M, 3 * M),                 # GRU weights
            const_spec(1, 3 * M), const_spec(1, 3 * M),                 # GRU biases
            const_spec(M, Cp), const_spec(1, Cp),                       # readout
        ]
        out_specs = (
            pl.BlockSpec((Bb, Np, A2), lambda g, v: (g, 0, 0)),
            pl.BlockSpec((Bb, Np, Cp), lambda g, v: (g, 0, 0)),
        )
        grid_spec = pltpu.PrefetchScalarGridSpec(
            num_scalar_prefetch=1, grid=(Bp // Bb,),
            in_specs=in_specs, out_specs=out_specs)
        return pl.pallas_call(
            kernel, grid_spec=grid_spec,
            out_shape=(jax.ShapeDtypeStruct((Bp, Np, A2), jnp.float32),
                       jax.ShapeDtypeStruct((Bp, Np, Cp), jnp.float32)),
            compiler_params=pltpu.CompilerParams(
                dimension_semantics=("parallel",),
                vmem_limit_bytes=vmem_limit),
            cost_estimate=cost,
        )(valid, edge_b, node_b, *weight_args)

    try:
        out_adj, out_lbl = _call(True)
    except Exception:
        # pl.Buffered(1) pipeline_mode unsupported on this JAX build -> default
        # double-buffered weights (identical numerics, slightly more VMEM).
        out_adj, out_lbl = _call(False)

    return out_adj[:B, :N, :N], out_lbl[:B, :N, :C]


# ----------------------------------------------------------------------------
# deterministic parameter init (weights stored (in, out); y = x @ W + b)
# ----------------------------------------------------------------------------
def init_params(key, Ee, En, M, L, C):
    ks = jax.random.split(key, 16)

    def w(k, fi, fo):
        return (jax.random.normal(k, (fi, fo), jnp.float32)
                * jnp.sqrt(2.0 / (fi + fo)))

    def bias(k, shape):
        return 0.05 * jax.random.normal(k, shape, jnp.float32)

    p = {}
    p["W_er"] = w(ks[0], Ee, M); p["b_er"] = bias(ks[1], (1, M))
    p["W_nr"] = w(ks[2], En, M); p["b_nr"] = bias(ks[3], (1, M))
    p["w_l1"] = w(ks[4], M, L);  p["b_l1"] = bias(ks[5], (1, L))
    p["w_l2"] = w(ks[6], L, 1)
    p["b_l2"] = bias(ks[7], (1, 1))
    p["w_mn"] = w(ks[8], M, M)
    p["w_me"] = w(ks[9], M, M)
    p["b_m"] = bias(ks[10], (1, M))
    p["w_gi"] = jnp.stack([w(k, M, M) for k in jax.random.split(ks[11], 3)])
    p["w_gh"] = jnp.stack([w(k, M, M) for k in jax.random.split(ks[12], 3)])
    p["b_gi"] = bias(ks[13], (3, 1, M))
    p["b_gh"] = bias(ks[14], (3, 1, M))
    kro1, kro2 = jax.random.split(ks[15])
    p["w_ro"] = w(kro1, M, C); p["b_ro"] = bias(kro2, (1, C))
    return p


# ----------------------------------------------------------------------------
# pure numpy reference mirroring the PyTorch forward loop (f32 ground truth)
# ----------------------------------------------------------------------------
def reference_forward(edge_raw, node_raw, human_nums, obj_nums, p, P):
    edge_raw = np.asarray(edge_raw, np.float32)
    node_raw = np.asarray(node_raw, np.float32)
    g = {k: np.asarray(v, np.float32) for k, v in p.items()}

    ef = edge_raw @ g["W_er"] + g["b_er"][0]            # (B,N,N,M)
    nf = node_raw @ g["W_nr"] + g["b_nr"][0]            # (B,N,M)
    ef_p = np.transpose(ef, (0, 3, 1, 2))               # (B,M,N,N)
    nf_p = np.transpose(nf, (0, 2, 1))                  # (B,M,N)
    B, M, N, _ = ef_p.shape
    C = g["w_ro"].shape[1]

    w_l1, b_l1 = g["w_l1"], g["b_l1"][0]
    w_l2, b_l2 = g["w_l2"][:, 0], float(g["b_l2"][0, 0])
    w_mn, w_me, b_m = g["w_mn"], g["w_me"], g["b_m"][0]
    w_gi, w_gh = g["w_gi"], g["w_gh"]
    b_gi, b_gh = g["b_gi"][:, 0, :], g["b_gh"][:, 0, :]
    w_ro, b_ro = g["w_ro"], g["b_ro"][0]

    def sigmoid(x):
        return 1.0 / (1.0 + np.exp(-x))

    def link(x):                                        # x: (M, v, v)
        h = np.einsum("cab,cl->lab", x, w_l1) + b_l1[:, None, None]
        h = np.maximum(h, 0.0)
        return np.einsum("lab,l->ab", h, w_l2) + b_l2

    pred_adj = np.zeros((B, N, N), np.float32)
    pred_lbl = np.zeros((B, N, C), np.float32)
    for b in range(B):
        v = int(human_nums[b] + obj_nums[b])
        edge_states = [ef_p[b].copy() for _ in range(P + 1)]
        for r in range(P):
            pred_adj[b, :v, :v] = link(edge_states[r][:, :v, :v])
            sig = sigmoid(pred_adj[b, :v, :v])
            for i in range(v):
                h_v = nf_p[b, :, i]
                h_w = nf_p[b, :, :v]
                e_vw = ef_p[b, :, i, :v]
                raw = np.maximum(h_w.T @ w_mn + e_vw.T @ w_me + b_m, 0.0)   # (v, M)
                m_v = sig[i, :v][:, None] * raw
                edge_states[r + 1][:, :v, i] = m_v.T
                m_sum = m_v.sum(axis=0)
                ir = m_sum @ w_gi[0] + b_gi[0]
                iz = m_sum @ w_gi[1] + b_gi[1]
                inn = m_sum @ w_gi[2] + b_gi[2]
                hr = h_v @ w_gh[0] + b_gh[0]
                hz = h_v @ w_gh[1] + b_gh[1]
                hn = h_v @ w_gh[2] + b_gh[2]
                rg = sigmoid(ir + hr)
                zg = sigmoid(iz + hz)
                ng = np.tanh(inn + rg * hn)
                h_new = (1.0 - zg) * ng + zg * h_v
                if r == P - 1:
                    pred_lbl[b, i, :] = h_new @ w_ro + b_ro
    return pred_adj, pred_lbl


def _close(a, b, tol):
    a = np.asarray(a, np.float64)
    b = np.asarray(b, np.float64)
    denom = max(float(np.max(np.abs(b))), 1.0)
    return float(np.max(np.abs(a - b))) / denom < tol


if __name__ == "__main__":
    B, N = 4, 8
    Ee, En, M, L, C, P = 16, 16, 32, 32, 10, 2

    key = jax.random.PRNGKey(0)
    k_param, k_edge, k_node = jax.random.split(key, 3)
    params = init_params(k_param, Ee, En, M, L, C)

    edge_features = jax.random.normal(k_edge, (B, N, N, Ee), jnp.float32)
    node_features = jax.random.normal(k_node, (B, N, En), jnp.float32)
    human_nums = jnp.array([5, 3, 6, 2], jnp.int32)
    obj_nums = jnp.array([3, 3, 2, 4], jnp.int32)

    pred_adj, pred_labels = gpnn_forward(edge_features, node_features,
                                         human_nums, obj_nums, params, P)
    jax.block_until_ready((pred_adj, pred_labels))

    ref_adj, ref_lbl = reference_forward(edge_features, node_features,
                                         np.asarray(human_nums),
                                         np.asarray(obj_nums), params, P)
    # Tolerance accounts for bf16 input/weight/intermediate storage and
    # single-pass bf16 MXU matmuls (accumulation stays in f32).
    assert _close(pred_adj, ref_adj, 6e-2), "pred_adj_mat mismatch"
    assert _close(pred_labels, ref_lbl, 6e-2), "pred_node_labels mismatch"

    print("KERNEL_OK")
</pallas_src>

<mosaic_0001>
module attributes {stable_mosaic.version = 11 : i64} {
  func.func @gpnn_kernel(%arg0: i32, %arg1: memref<4xi32, #tpu.memory_space<smem>>, %arg2: memref<2x8x8x16xbf16, #tpu.memory_space<vmem>>, %arg3: memref<2x8x16xbf16, #tpu.memory_space<vmem>>, %arg4: memref<16x32xbf16, #tpu.memory_space<vmem>>, %arg5: memref<1x32xf32, #tpu.memory_space<vmem>>, %arg6: memref<16x32xbf16, #tpu.memory_space<vmem>>, %arg7: memref<1x32xf32, #tpu.memory_space<vmem>>, %arg8: memref<32x32xbf16, #tpu.memory_space<vmem>>, %arg9: memref<1x32xf32, #tpu.memory_space<vmem>>, %arg10: memref<1x32xf32, #tpu.memory_space<vmem>>, %arg11: memref<1x1xf32, #tpu.memory_space<vmem>>, %arg12: memref<32x32xbf16, #tpu.memory_space<vmem>>, %arg13: memref<32x32xbf16, #tpu.memory_space<vmem>>, %arg14: memref<1x32xf32, #tpu.memory_space<vmem>>, %arg15: memref<32x96xbf16, #tpu.memory_space<vmem>>, %arg16: memref<32x96xbf16, #tpu.memory_space<vmem>>, %arg17: memref<1x96xf32, #tpu.memory_space<vmem>>, %arg18: memref<1x96xf32, #tpu.memory_space<vmem>>, %arg19: memref<32x128xbf16, #tpu.memory_space<vmem>>, %arg20: memref<1x128xf32, #tpu.memory_space<vmem>>, %arg21: memref<2x8x128xf32, #tpu.memory_space<vmem>>, %arg22: memref<2x8x128xf32, #tpu.memory_space<vmem>>) attributes {dimension_semantics = [#tpu.dimension_semantics<parallel>], iteration_bounds = array<i64: 2>, scalar_prefetch = 1 : i64, scratch_operands = 0 : i64, tpu.core_type = #tpu.core_type<tc>, window_params = [{transform_indices = @transform_0, window_bounds = array<i64: 2, 8, 8, 16>}, {transform_indices = @transform_1, window_bounds = array<i64: 2, 8, 16>}, {pipeline_mode = #tpu.pipeline_mode<synchronous>, transform_indices = @transform_2, window_bounds = array<i64: 16, 32>}, {pipeline_mode = #tpu.pipeline_mode<synchronous>, transform_indices = @transform_3, window_bounds = array<i64: 1, 32>}, {pipeline_mode = #tpu.pipeline_mode<synchronous>, transform_indices = @transform_4, window_bounds = array<i64: 16, 32>}, {pipeline_mode = #tpu.pipeline_mode<synchronous>, transform_indices = @transform_5, window_bounds = array<i64: 1, 32>}, {pipeline_mode = #tpu.pipeline_mode<synchronous>, transform_indices = @transform_6, window_bounds = array<i64: 32, 32>}, {pipeline_mode = #tpu.pipeline_mode<synchronous>, transform_indices = @transform_7, window_bounds = array<i64: 1, 32>}, {pipeline_mode = #tpu.pipeline_mode<synchronous>, transform_indices = @transform_8, window_bounds = array<i64: 1, 32>}, {pipeline_mode = #tpu.pipeline_mode<synchronous>, transform_indices = @transform_9, window_bounds = array<i64: 1, 1>}, {pipeline_mode = #tpu.pipeline_mode<synchronous>, transform_indices = @transform_10, window_bounds = array<i64: 32, 32>}, {pipeline_mode = #tpu.pipeline_mode<synchronous>, transform_indices = @transform_11, window_bounds = array<i64: 32, 32>}, {pipeline_mode = #tpu.pipeline_mode<synchronous>, transform_indices = @transform_12, window_bounds = array<i64: 1, 32>}, {pipeline_mode = #tpu.pipeline_mode<synchronous>, transform_indices = @transform_13, window_bounds = array<i64: 32, 96>}, {pipeline_mode = #tpu.pipeline_mode<synchronous>, transform_indices = @transform_14, window_bounds = array<i64: 32, 96>}, {pipeline_mode = #tpu.pipeline_mode<synchronous>, transform_indices = @transform_15, window_bounds = array<i64: 1, 96>}, {pipeline_mode = #tpu.pipeline_mode<synchronous>, transform_indices = @transform_16, window_bounds = array<i64: 1, 96>}, {pipeline_mode = #tpu.pipeline_mode<synchronous>, transform_indices = @transform_17, window_bounds = array<i64: 32, 128>}, {pipeline_mode = #tpu.pipeline_mode<synchronous>, transform_indices = @transform_18, window_bounds = array<i64: 1, 128>}, {transform_indices = @transform_19, window_bounds = array<i64: 2, 8, 128>}, {transform_indices = @transform_20, window_bounds = array<i64: 2, 8, 128>}]} {
    %0 = tpu.iota {dimensions = array<i32: 1>} : vector<1x8xi32>
    %c2_i32 = arith.constant 2 : i32
    %1 = arith.muli %arg0, %c2_i32 : i32
    %c0_i32 = arith.constant 0 : i32
    %2 = arith.addi %1, %c0_i32 : i32
    %3 = arith.index_cast %2 : i32 to index
    %4 = memref.load %arg1[%3] : memref<4xi32, #tpu.memory_space<smem>>
    %5 = vector.broadcast %4 : i32 to vector<1x8xi32>
    %6 = arith.cmpi slt, %0, %5 : vector<1x8xi32>
    %7 = arith.extui %6 : vector<1x8xi1> to vector<1x8xi32>
    %8 = arith.sitofp %7 : vector<1x8xi32> to vector<1x8xf32>
    %c2_i32_0 = arith.constant 2 : i32
    %9 = arith.muli %arg0, %c2_i32_0 : i32
    %c1_i32 = arith.constant 1 : i32
    %10 = arith.addi %9, %c1_i32 : i32
    %11 = arith.index_cast %10 : i32 to index
    %12 = memref.load %arg1[%11] : memref<4xi32, #tpu.memory_space<smem>>
    %13 = vector.broadcast %12 : i32 to vector<1x8xi32>
    %14 = arith.cmpi slt, %0, %13 : vector<1x8xi32>
    %15 = arith.extui %14 : vector<1x8xi1> to vector<1x8xi32>
    %16 = arith.sitofp %15 : vector<1x8xi32> to vector<1x8xf32>
    %17 = tpu.concatenate %8, %16 in 0 : vector<1x8xf32>, vector<1x8xf32> -> vector<2x8xf32>
    %18 = vector.shape_cast %17 : vector<2x8xf32> to vector<2x8x1xf32>
    %19 = vector.shape_cast %17 : vector<2x8xf32> to vector<2x1x8xf32>
    %20 = vector.broadcast %18 : vector<2x8x1xf32> to vector<2x8x8xf32>
    %21 = vector.broadcast %19 : vector<2x1x8xf32> to vector<2x8x8xf32>
    %22 = arith.mulf %20, %21 : vector<2x8x8xf32>
    %23 = vector.shape_cast %17 : vector<2x8xf32> to vector<2x8x1xf32>
    %c0 = arith.constant 0 : index
    %c0_1 = arith.constant 0 : index
    %c0_2 = arith.constant 0 : index
    %c0_3 = arith.constant 0 : index
    %24 = vector.load %arg2[%c0, %c0_1, %c0_2, %c0_3] : memref<2x8x8x16xbf16, #tpu.memory_space<vmem>>, vector<2x8x8x16xbf16>
    %25 = vector.shape_cast %24 : vector<2x8x8x16xbf16> to vector<128x16xbf16>
    %c0_4 = arith.constant 0 : index
    %c0_5 = arith.constant 0 : index
    %26 = vector.load %arg4[%c0_4, %c0_5] : memref<16x32xbf16, #tpu.memory_space<vmem>>, vector<16x32xbf16>
    %cst = arith.constant dense<0.000000e+00> : vector<128x32xf32>
    %27 = tpu.matmul %25, %26, %cst {dimension_numbers = #tpu.dot_dimension_numbers<[1], [0], [0], [1], [0, 0, 1, 1], [], []>} : vector<128x16xbf16>, vector<16x32xbf16>, vector<128x32xf32> -> vector<128x32xf32>
    %c0_6 = arith.constant 0 : index
    %c0_7 = arith.constant 0 : index
    %28 = vector.load %arg5[%c0_6, %c0_7] : memref<1x32xf32, #tpu.memory_space<vmem>>, vector<1x32xf32>
    %29 = vector.broadcast %28 : vector<1x32xf32> to vector<128x32xf32>
    %30 = arith.addf %27, %29 : vector<128x32xf32>
    %c0_8 = arith.constant 0 : index
    %c0_9 = arith.constant 0 : index
    %c0_10 = arith.constant 0 : index
    %31 = vector.load %arg3[%c0_8, %c0_9, %c0_10] : memref<2x8x16xbf16, #tpu.memory_space<vmem>>, vector<2x8x16xbf16>
    %32 = vector.shape_cast %31 : vector<2x8x16xbf16> to vector<16x16xbf16>
    %c0_11 = arith.constant 0 : index
    %c0_12 = arith.constant 0 : index
    %33 = vector.load %arg6[%c0_11, %c0_12] : memref<16x32xbf16, #tpu.memory_space<vmem>>, vector<16x32xbf16>
    %cst_13 = arith.constant dense<0.000000e+00> : vector<16x32xf32>
    %34 = tpu.matmul %32, %33, %cst_13 {dimension_numbers = #tpu.dot_dimension_numbers<[1], [0], [0], [1], [0, 0, 1, 1], [], []>} : vector<16x16xbf16>, vector<16x32xbf16>, vector<16x32xf32> -> vector<16x32xf32>
    %c0_14 = arith.constant 0 : index
    %c0_15 = arith.constant 0 : index
    %35 = vector.load %arg7[%c0_14, %c0_15] : memref<1x32xf32, #tpu.memory_space<vmem>>, vector<1x32xf32>
    %36 = vector.broadcast %35 : vector<1x32xf32> to vector<16x32xf32>
    %37 = arith.addf %34, %36 : vector<16x32xf32>
    %38 = arith.truncf %30 : vector<128x32xf32> to vector<128x32xbf16>
    %39 = arith.truncf %37 : vector<16x32xf32> to vector<16x32xbf16>
    %c0_16 = arith.constant 0 : index
    %c0_17 = arith.constant 0 : index
    %40 = vector.load %arg12[%c0_16, %c0_17] : memref<32x32xbf16, #tpu.memory_space<vmem>>, vector<32x32xbf16>
    %cst_18 = arith.constant dense<0.000000e+00> : vector<16x32xf32>
    %41 = tpu.matmul %39, %40, %cst_18 {dimension_numbers = #tpu.dot_dimension_numbers<[1], [0], [0], [1], [0, 0, 1, 1], [], []>} : vector<16x32xbf16>, vector<32x32xbf16>, vector<16x32xf32> -> vector<16x32xf32>
    %42 = vector.shape_cast %41 : vector<16x32xf32> to vector<2x8x32xf32>
    %c0_19 = arith.constant 0 : index
    %c0_20 = arith.constant 0 : index
    %43 = vector.load %arg13[%c0_19, %c0_20] : memref<32x32xbf16, #tpu.memory_space<vmem>>, vector<32x32xbf16>
    %cst_21 = arith.constant dense<0.000000e+00> : vector<128x32xf32>
    %44 = tpu.matmul %38, %43, %cst_21 {dimension_numbers = #tpu.dot_dimension_numbers<[1], [0], [0], [1], [0, 0, 1, 1], [], []>} : vector<128x32xbf16>, vector<32x32xbf16>, vector<128x32xf32> -> vector<128x32xf32>
    %45 = vector.shape_cast %44 : vector<128x32xf32> to vector<2x8x8x32xf32>
    %46 = vector.shape_cast %42 : vector<2x8x32xf32> to vector<2x1x8x32xf32>
    %47 = vector.broadcast %46 : vector<2x1x8x32xf32> to vector<2x8x8x32xf32>
    %48 = arith.addf %45, %47 : vector<2x8x8x32xf32>
    %c0_22 = arith.constant 0 : index
    %c0_23 = arith.constant 0 : index
    %49 = vector.load %arg14[%c0_22, %c0_23] : memref<1x32xf32, #tpu.memory_space<vmem>>, vector<1x32xf32>
    %50 = vector.shape_cast %49 : vector<1x32xf32> to vector<1x1x1x32xf32>
    %51 = vector.broadcast %50 : vector<1x1x1x32xf32> to vector<2x8x8x32xf32>
    %52 = arith.addf %48, %51 : vector<2x8x8x32xf32>
    %cst_24 = arith.constant 0.000000e+00 : f32
    %53 = vector.broadcast %cst_24 : f32 to vector<2x8x8x32xf32>
    %54 = arith.maximumf %52, %53 : vector<2x8x8x32xf32>
    %55 = arith.truncf %54 : vector<2x8x8x32xf32> to vector<2x8x8x32xbf16>
    %c0_25 = arith.constant 0 : index
    %c0_26 = arith.constant 0 : index
    %56 = vector.load %arg9[%c0_25, %c0_26] : memref<1x32xf32, #tpu.memory_space<vmem>>, vector<1x32xf32>
    %c0_27 = arith.constant 0 : index
    %c0_28 = arith.constant 0 : index
    %57 = vector.load %arg10[%c0_27, %c0_28] : memref<1x32xf32, #tpu.memory_space<vmem>>, vector<1x32xf32>
    %c0_29 = arith.constant 0 : index
    %c0_30 = arith.constant 0 : index
    %58 = vector.load %arg11[%c0_29, %c0_30] : memref<1x1xf32, #tpu.memory_space<vmem>>, vector<1x1xf32>
    %59 = vector.shape_cast %55 : vector<2x8x8x32xbf16> to vector<128x32xbf16>
    %c0_31 = arith.constant 0 : index
    %c0_32 = arith.constant 0 : index
    %60 = vector.load %arg8[%c0_31, %c0_32] : memref<32x32xbf16, #tpu.memory_space<vmem>>, vector<32x32xbf16>
    %cst_33 = arith.constant dense<0.000000e+00> : vector<128x32xf32>
    %61 = tpu.matmul %59, %60, %cst_33 {dimension_numbers = #tpu.dot_dimension_numbers<[1], [0], [0], [1], [0, 0, 1, 1], [], []>} : vector<128x32xbf16>, vector<32x32xbf16>, vector<128x32xf32> -> vector<128x32xf32>
    %62 = vector.shape_cast %61 : vector<128x32xf32> to vector<2x8x8x32xf32>
    %63 = arith.truncf %62 : vector<2x8x8x32xf32> to vector<2x8x8x32xbf16>
    %c0_34 = arith.constant 0 : index
    %c0_35 = arith.constant 0 : index
    %64 = vector.load %arg8[%c0_34, %c0_35] : memref<32x32xbf16, #tpu.memory_space<vmem>>, vector<32x32xbf16>
    %cst_36 = arith.constant dense<0.000000e+00> : vector<128x32xf32>
    %65 = tpu.matmul %38, %64, %cst_36 {dimension_numbers = #tpu.dot_dimension_numbers<[1], [0], [0], [1], [0, 0, 1, 1], [], []>} : vector<128x32xbf16>, vector<32x32xbf16>, vector<128x32xf32> -> vector<128x32xf32>
    %66 = vector.broadcast %56 : vector<1x32xf32> to vector<128x32xf32>
    %67 = arith.addf %65, %66 : vector<128x32xf32>
    %cst_37 = arith.constant 0.000000e+00 : f32
    %68 = vector.broadcast %cst_37 : f32 to vector<128x32xf32>
    %69 = arith.maximumf %67, %68 : vector<128x32xf32>
    %70 = vector.shape_cast %69 : vector<128x32xf32> to vector<2x8x8x32xf32>
    %71 = vector.shape_cast %57 : vector<1x32xf32> to vector<1x1x1x32xf32>
    %72 = vector.broadcast %71 : vector<1x1x1x32xf32> to vector<2x8x8x32xf32>
    %73 = arith.mulf %70, %72 : vector<2x8x8x32xf32>
    %cst_38 = arith.constant dense<0.000000e+00> : vector<2x8x8xf32>
    %74 = vector.multi_reduction <add>, %73, %cst_38 [3] : vector<2x8x8x32xf32> to vector<2x8x8xf32>
    %75 = vector.shape_cast %58 : vector<1x1xf32> to vector<1x1x1xf32>
    %76 = vector.broadcast %75 : vector<1x1x1xf32> to vector<2x8x8xf32>
    %77 = arith.addf %74, %76 : vector<2x8x8xf32>
    %78 = arith.negf %77 : vector<2x8x8xf32>
    %79 = math.exp %78 : vector<2x8x8xf32>
    %cst_39 = arith.constant 1.000000e+00 : f32
    %80 = vector.broadcast %cst_39 : f32 to vector<2x8x8xf32>
    %81 = arith.addf %80, %79 : vector<2x8x8xf32>
    %82 = arith.divf %80, %81 : vector<2x8x8xf32>
    %83 = arith.mulf %82, %22 : vector<2x8x8xf32>
    %c0_i32_40 = arith.constant 0 : i32
    %84 = vector.shape_cast %83 : vector<2x8x8xf32> to vector<2x8x8x1xf32>
    %85 = arith.extf %63 : vector<2x8x8x32xbf16> to vector<2x8x8x32xf32>
    %86 = vector.broadcast %84 : vector<2x8x8x1xf32> to vector<2x8x8x32xf32>
    %87 = arith.mulf %86, %85 : vector<2x8x8x32xf32>
    %88 = vector.shape_cast %56 : vector<1x32xf32> to vector<1x1x1x32xf32>
    %89 = vector.broadcast %88 : vector<1x1x1x32xf32> to vector<2x8x8x32xf32>
    %90 = arith.addf %87, %89 : vector<2x8x8x32xf32>
    %cst_41 = arith.constant 0.000000e+00 : f32
    %91 = vector.broadcast %cst_41 : f32 to vector<2x8x8x32xf32>
    %92 = arith.maximumf %90, %91 : vector<2x8x8x32xf32>
    %93 = vector.shape_cast %57 : vector<1x32xf32> to vector<1x1x1x32xf32>
    %94 = vector.broadcast %93 : vector<1x1x1x32xf32> to vector<2x8x8x32xf32>
    %95 = arith.mulf %92, %94 : vector<2x8x8x32xf32>
    %cst_42 = arith.constant dense<0.000000e+00> : vector<2x8x8xf32>
    %96 = vector.multi_reduction <add>, %95, %cst_42 [3] : vector<2x8x8x32xf32> to vector<2x8x8xf32>
    %97 = vector.shape_cast %58 : vector<1x1xf32> to vector<1x1x1xf32>
    %98 = vector.broadcast %97 : vector<1x1x1xf32> to vector<2x8x8xf32>
    %99 = arith.addf %96, %98 : vector<2x8x8xf32>
    %100 = tpu.transpose %99, [0, 2, 1] : vector<2x8x8xf32> -> vector<2x8x8xf32>
    %101 = arith.negf %100 : vector<2x8x8xf32>
    %102 = math.exp %101 : vector<2x8x8xf32>
    %cst_43 = arith.constant 1.000000e+00 : f32
    %103 = vector.broadcast %cst_43 : f32 to vector<2x8x8xf32>
    %104 = arith.addf %103, %102 : vector<2x8x8xf32>
    %105 = arith.divf %103, %104 : vector<2x8x8xf32>
    %106 = arith.mulf %105, %22 : vector<2x8x8xf32>
    %107 = vector.shape_cast %106 : vector<2x8x8xf32> to vector<2x8x8x1xf32>
    %108 = arith.extf %55 : vector<2x8x8x32xbf16> to vector<2x8x8x32xf32>
    %109 = vector.broadcast %107 : vector<2x8x8x1xf32> to vector<2x8x8x32xf32>
    %110 = arith.mulf %109, %108 : vector<2x8x8x32xf32>
    %cst_44 = arith.constant dense<0.000000e+00> : vector<2x8x32xf32>
    %111 = vector.multi_reduction <add>, %110, %cst_44 [2] : vector<2x8x8x32xf32> to vector<2x8x32xf32>
    %112 = vector.shape_cast %111 : vector<2x8x32xf32> to vector<16x32xf32>
    %113 = arith.truncf %112 : vector<16x32xf32> to vector<16x32xbf16>
    %c0_45 = arith.constant 0 : index
    %c0_46 = arith.constant 0 : index
    %114 = vector.load %arg15[%c0_45, %c0_46] : memref<32x96xbf16, #tpu.memory_space<vmem>>, vector<32x96xbf16>
    %cst_47 = arith.constant dense<0.000000e+00> : vector<16x96xf32>
    %115 = tpu.matmul %113, %114, %cst_47 {dimension_numbers = #tpu.dot_dimension_numbers<[1], [0], [0], [1], [0, 0, 1, 1], [], []>} : vector<16x32xbf16>, vector<32x96xbf16>, vector<16x96xf32> -> vector<16x96xf32>
    %c0_48 = arith.constant 0 : index
    %c0_49 = arith.constant 0 : index
    %116 = vector.load %arg17[%c0_48, %c0_49] : memref<1x96xf32, #tpu.memory_space<vmem>>, vector<1x96xf32>
    %117 = vector.broadcast %116 : vector<1x96xf32> to vector<16x96xf32>
    %118 = arith.addf %115, %117 : vector<16x96xf32>
    %c0_50 = arith.constant 0 : index
    %c0_51 = arith.constant 0 : index
    %119 = vector.load %arg16[%c0_50, %c0_51] : memref<32x96xbf16, #tpu.memory_space<vmem>>, vector<32x96xbf16>
    %cst_52 = arith.constant dense<0.000000e+00> : vector<16x96xf32>
    %120 = tpu.matmul %39, %119, %cst_52 {dimension_numbers = #tpu.dot_dimension_numbers<[1], [0], [0], [1], [0, 0, 1, 1], [], []>} : vector<16x32xbf16>, vector<32x96xbf16>, vector<16x96xf32> -> vector<16x96xf32>
    %c0_53 = arith.constant 0 : index
    %c0_54 = arith.constant 0 : index
    %121 = vector.load %arg18[%c0_53, %c0_54] : memref<1x96xf32, #tpu.memory_space<vmem>>, vector<1x96xf32>
    %122 = vector.broadcast %121 : vector<1x96xf32> to vector<16x96xf32>
    %123 = arith.addf %120, %122 : vector<16x96xf32>
    %124 = vector.extract_strided_slice %118 {offsets = [0, 0], sizes = [16, 32], strides = [1, 1]} : vector<16x96xf32> to vector<16x32xf32>
    %125 = vector.extract_strided_slice %123 {offsets = [0, 0], sizes = [16, 32], strides = [1, 1]} : vector<16x96xf32> to vector<16x32xf32>
    %126 = arith.addf %124, %125 : vector<16x32xf32>
    %127 = arith.negf %126 : vector<16x32xf32>
    %128 = math.exp %127 : vector<16x32xf32>
    %cst_55 = arith.constant 1.000000e+00 : f32
    %129 = vector.broadcast %cst_55 : f32 to vector<16x32xf32>
    %130 = arith.addf %129, %128 : vector<16x32xf32>
    %131 = arith.divf %129, %130 : vector<16x32xf32>
    %132 = vector.extract_strided_slice %118 {offsets = [0, 32], sizes = [16, 32], strides = [1, 1]} : vector<16x96xf32> to vector<16x32xf32>
    %133 = vector.extract_strided_slice %123 {offsets = [0, 32], sizes = [16, 32], strides = [1, 1]} : vector<16x96xf32> to vector<16x32xf32>
    %134 = arith.addf %132, %133 : vector<16x32xf32>
    %135 = arith.negf %134 : vector<16x32xf32>
    %136 = math.exp %135 : vector<16x32xf32>
    %cst_56 = arith.constant 1.000000e+00 : f32
    %137 = vector.broadcast %cst_56 : f32 to vector<16x32xf32>
    %138 = arith.addf %137, %136 : vector<16x32xf32>
    %139 = arith.divf %137, %138 : vector<16x32xf32>
    %140 = vector.extract_strided_slice %118 {offsets = [0, 64], sizes = [16, 32], strides = [1, 1]} : vector<16x96xf32> to vector<16x32xf32>
    %141 = vector.extract_strided_slice %123 {offsets = [0, 64], sizes = [16, 32], strides = [1, 1]} : vector<16x96xf32> to vector<16x32xf32>
    %142 = arith.mulf %131, %141 : vector<16x32xf32>
    %143 = arith.addf %140, %142 : vector<16x32xf32>
    %144 = math.tanh %143 : vector<16x32xf32>
    %cst_57 = arith.constant 1.000000e+00 : f32
    %145 = vector.broadcast %cst_57 : f32 to vector<16x32xf32>
    %146 = arith.subf %145, %139 : vector<16x32xf32>
    %147 = arith.mulf %146, %144 : vector<16x32xf32>
    %148 = arith.mulf %139, %37 : vector<16x32xf32>
    %149 = arith.addf %147, %148 : vector<16x32xf32>
    %150 = arith.truncf %149 : vector<16x32xf32> to vector<16x32xbf16>
    %c0_58 = arith.constant 0 : index
    %c0_59 = arith.constant 0 : index
    %151 = vector.load %arg19[%c0_58, %c0_59] : memref<32x128xbf16, #tpu.memory_space<vmem>>, vector<32x128xbf16>
    %cst_60 = arith.constant dense<0.000000e+00> : vector<16x128xf32>
    %152 = tpu.matmul %150, %151, %cst_60 {dimension_numbers = #tpu.dot_dimension_numbers<[1], [0], [0], [1], [0, 0, 1, 1], [], []>} : vector<16x32xbf16>, vector<32x128xbf16>, vector<16x128xf32> -> vector<16x128xf32>
    %c0_61 = arith.constant 0 : index
    %c0_62 = arith.constant 0 : index
    %153 = vector.load %arg20[%c0_61, %c0_62] : memref<1x128xf32, #tpu.memory_space<vmem>>, vector<1x128xf32>
    %154 = vector.broadcast %153 : vector<1x128xf32> to vector<16x128xf32>
    %155 = arith.addf %152, %154 : vector<16x128xf32>
    %156 = vector.shape_cast %155 : vector<16x128xf32> to vector<2x8x128xf32>
    %157 = vector.broadcast %23 : vector<2x8x1xf32> to vector<2x8x128xf32>
    %158 = arith.mulf %156, %157 : vector<2x8x128xf32>
    %c0_63 = arith.constant 0 : index
    %c0_64 = arith.constant 0 : index
    %c0_65 = arith.constant 0 : index
    %159 = vector.load %arg22[%c0_63, %c0_64, %c0_65] : memref<2x8x128xf32, #tpu.memory_space<vmem>>, vector<2x8x128xf32>
    tpu.vector_store %arg22[%c0_63, %c0_64, %c0_65], %158 {strides = array<i32>} : memref<2x8x128xf32, #tpu.memory_space<vmem>>, vector<2x8x128xf32>,
    %160 = arith.mulf %100, %22 : vector<2x8x8xf32>
    %cst_66 = arith.constant 0.000000e+00 : f32
    %161 = vector.broadcast %cst_66 : f32 to vector<2x8x120xf32>
    %162 = tpu.concatenate %160, %161 in 2 : vector<2x8x8xf32>, vector<2x8x120xf32> -> vector<2x8x128xf32>
    %c0_67 = arith.constant 0 : index
    %c0_68 = arith.constant 0 : index
    %c0_69 = arith.constant 0 : index
    %163 = vector.load %arg21[%c0_67, %c0_68, %c0_69] : memref<2x8x128xf32, #tpu.memory_space<vmem>>, vector<2x8x128xf32>
    tpu.vector_store %arg21[%c0_67, %c0_68, %c0_69], %162 {strides = array<i32>} : memref<2x8x128xf32, #tpu.memory_space<vmem>>, vector<2x8x128xf32>,
    return
  }
  func.func @transform_0(%arg0: i32, %arg1: memref<4xi32, #tpu.memory_space<smem>>) -> (i32, i32, i32, i32) {
    %c0_i32 = arith.constant 0 : i32
    %c0_i32_0 = arith.constant 0 : i32
    %c0_i32_1 = arith.constant 0 : i32
    %c0_i32_2 = arith.constant 0 : i32
    return %arg0, %c0_i32, %c0_i32_0, %c0_i32_1 : i32, i32, i32, i32
  }
  func.func @transform_1(%arg0: i32, %arg1: memref<4xi32, #tpu.memory_space<smem>>) -> (i32, i32, i32) {
    %c0_i32 = arith.constant 0 : i32
    %c0_i32_0 = arith.constant 0 : i32
    %c0_i32_1 = arith.constant 0 : i32
    return %arg0, %c0_i32, %c0_i32_0 : i32, i32, i32
  }
  func.func @transform_2(%arg0: i32, %arg1: memref<4xi32, #tpu.memory_space<smem>>) -> (i32, i32) {
    %c0_i32 = arith.constant 0 : i32
    %c0_i32_0 = arith.constant 0 : i32
    %c0_i32_1 = arith.constant 0 : i32
    return %c0_i32, %c0_i32_0 : i32, i32
  }
  func.func @transform_3(%arg0: i32, %arg1: memref<4xi32, #tpu.memory_space<smem>>) -> (i32, i32) {
    %c0_i32 = arith.constant 0 : i32
    %c0_i32_0 = arith.constant 0 : i32
    %c0_i32_1 = arith.constant 0 : i32
    return %c0_i32, %c0_i32_0 : i32, i32
  }
  func.func @transform_4(%arg0: i32, %arg1: memref<4xi32, #tpu.memory_space<smem>>) -> (i32, i32) {
    %c0_i32 = arith.constant 0 : i32
    %c0_i32_0 = arith.constant 0 : i32
    %c0_i32_1 = arith.constant 0 : i32
    return %c0_i32, %c0_i32_0 : i32, i32
  }
  func.func @transform_5(%arg0: i32, %arg1: memref<4xi32, #tpu.memory_space<smem>>) -> (i32, i32) {
    %c0_i32 = arith.constant 0 : i32
    %c0_i32_0 = arith.constant 0 : i32
    %c0_i32_1 = arith.constant 0 : i32
    return %c0_i32, %c0_i32_0 : i32, i32
  }
  func.func @transform_6(%arg0: i32, %arg1: memref<4xi32, #tpu.memory_space<smem>>) -> (i32, i32) {
    %c0_i32 = arith.constant 0 : i32
    %c0_i32_0 = arith.constant 0 : i32
    %c0_i32_1 = arith.constant 0 : i32
    return %c0_i32, %c0_i32_0 : i32, i32
  }
  func.func @transform_7(%arg0: i32, %arg1: memref<4xi32, #tpu.memory_space<smem>>) -> (i32, i32) {
    %c0_i32 = arith.constant 0 : i32
    %c0_i32_0 = arith.constant 0 : i32
    %c0_i32_1 = arith.constant 0 : i32
    return %c0_i32, %c0_i32_0 : i32, i32
  }
  func.func @transform_8(%arg0: i32, %arg1: memref<4xi32, #tpu.memory_space<smem>>) -> (i32, i32) {
    %c0_i32 = arith.constant 0 : i32
    %c0_i32_0 = arith.constant 0 : i32
    %c0_i32_1 = arith.constant 0 : i32
    return %c0_i32, %c0_i32_0 : i32, i32
  }
  func.func @transform_9(%arg0: i32, %arg1: memref<4xi32, #tpu.memory_space<smem>>) -> (i32, i32) {
    %c0_i32 = arith.constant 0 : i32
    %c0_i32_0 = arith.constant 0 : i32
    %c0_i32_1 = arith.constant 0 : i32
    return %c0_i32, %c0_i32_0 : i32, i32
  }
  func.func @transform_10(%arg0: i32, %arg1: memref<4xi32, #tpu.memory_space<smem>>) -> (i32, i32) {
    %c0_i32 = arith.constant 0 : i32
    %c0_i32_0 = arith.constant 0 : i32
    %c0_i32_1 = arith.constant 0 : i32
    return %c0_i32, %c0_i32_0 : i32, i32
  }
  func.func @transform_11(%arg0: i32, %arg1: memref<4xi32, #tpu.memory_space<smem>>) -> (i32, i32) {
    %c0_i32 = arith.constant 0 : i32
    %c0_i32_0 = arith.constant 0 : i32
    %c0_i32_1 = arith.constant 0 : i32
    return %c0_i32, %c0_i32_0 : i32, i32
  }
  func.func @transform_12(%arg0: i32, %arg1: memref<4xi32, #tpu.memory_space<smem>>) -> (i32, i32) {
    %c0_i32 = arith.constant 0 : i32
    %c0_i32_0 = arith.constant 0 : i32
    %c0_i32_1 = arith.constant 0 : i32
    return %c0_i32, %c0_i32_0 : i32, i32
  }
  func.func @transform_13(%arg0: i32, %arg1: memref<4xi32, #tpu.memory_space<smem>>) -> (i32, i32) {
    %c0_i32 = arith.constant 0 : i32
    %c0_i32_0 = arith.constant 0 : i32
    %c0_i32_1 = arith.constant 0 : i32
    return %c0_i32, %c0_i32_0 : i32, i32
  }
  func.func @transform_14(%arg0: i32, %arg1: memref<4xi32, #tpu.memory_space<smem>>) -> (i32, i32) {
    %c0_i32 = arith.constant 0 : i32
    %c0_i32_0 = arith.constant 0 : i32
    %c0_i32_1 = arith.constant 0 : i32
    return %c0_i32, %c0_i32_0 : i32, i32
  }
  func.func @transform_15(%arg0: i32, %arg1: memref<4xi32, #tpu.memory_space<smem>>) -> (i32, i32) {
    %c0_i32 = arith.constant 0 : i32
    %c0_i32_0 = arith.constant 0 : i32
    %c0_i32_1 = arith.constant 0 : i32
    return %c0_i32, %c0_i32_0 : i32, i32
  }
  func.func @transform_16(%arg0: i32, %arg1: memref<4xi32, #tpu.memory_space<smem>>) -> (i32, i32) {
    %c0_i32 = arith.constant 0 : i32
    %c0_i32_0 = arith.constant 0 : i32
    %c0_i32_1 = arith.constant 0 : i32
    return %c0_i32, %c0_i32_0 : i32, i32
  }
  func.func @transform_17(%arg0: i32, %arg1: memref<4xi32, #tpu.memory_space<smem>>) -> (i32, i32) {
    %c0_i32 = arith.constant 0 : i32
    %c0_i32_0 = arith.constant 0 : i32
    %c0_i32_1 = arith.constant 0 : i32
    return %c0_i32, %c0_i32_0 : i32, i32
  }
  func.func @transform_18(%arg0: i32, %arg1: memref<4xi32, #tpu.memory_space<smem>>) -> (i32, i32) {
    %c0_i32 = arith.constant 0 : i32
    %c0_i32_0 = arith.constant 0 : i32
    %c0_i32_1 = arith.constant 0 : i32
    return %c0_i32, %c0_i32_0 : i32, i32
  }
  func.func @transform_19(%arg0: i32, %arg1: memref<4xi32, #tpu.memory_space<smem>>) -> (i32, i32, i32) {
    %c0_i32 = arith.constant 0 : i32
    %c0_i32_0 = arith.constant 0 : i32
    %c0_i32_1 = arith.constant 0 : i32
    return %arg0, %c0_i32, %c0_i32_0 : i32, i32, i32
  }
  func.func @transform_20(%arg0: i32, %arg1: memref<4xi32, #tpu.memory_space<smem>>) -> (i32, i32, i32) {
    %c0_i32 = arith.constant 0 : i32
    %c0_i32_0 = arith.constant 0 : i32
    %c0_i32_1 = arith.constant 0 : i32
    return %arg0, %c0_i32, %c0_i32_0 : i32, i32, i32
  }
}

module attributes {stable_mosaic.version = 11 : i64} {
  func.func @gpnn_kernel(%arg0: i32, %arg1: memref<4xi32, #tpu.memory_space<smem>>, %arg2: memref<2x8x8x16xbf16, #tpu.memory_space<vmem>>, %arg3: memref<2x8x16xbf16, #tpu.memory_space<vmem>>, %arg4: memref<16x32xbf16, #tpu.memory_space<vmem>>, %arg5: memref<1x32xf32, #tpu.memory_space<vmem>>, %arg6: memref<16x32xbf16, #tpu.memory_space<vmem>>, %arg7: memref<1x32xf32, #tpu.memory_space<vmem>>, %arg8: memref<32x32xbf16, #tpu.memory_space<vmem>>, %arg9: memref<1x32xf32, #tpu.memory_space<vmem>>, %arg10: memref<1x32xf32, #tpu.memory_space<vmem>>, %arg11: memref<1x1xf32, #tpu.memory_space<vmem>>, %arg12: memref<32x32xbf16, #tpu.memory_space<vmem>>, %arg13: memref<32x32xbf16, #tpu.memory_space<vmem>>, %arg14: memref<1x32xf32, #tpu.memory_space<vmem>>, %arg15: memref<32x96xbf16, #tpu.memory_space<vmem>>, %arg16: memref<32x96xbf16, #tpu.memory_space<vmem>>, %arg17: memref<1x96xf32, #tpu.memory_space<vmem>>, %arg18: memref<1x96xf32, #tpu.memory_space<vmem>>, %arg19: memref<32x128xbf16, #tpu.memory_space<vmem>>, %arg20: memref<1x128xf32, #tpu.memory_space<vmem>>, %arg21: memref<2x8x128xf32, #tpu.memory_space<vmem>>, %arg22: memref<2x8x128xf32, #tpu.memory_space<vmem>>) attributes {dimension_semantics = [#tpu.dimension_semantics<parallel>], iteration_bounds = array<i64: 2>, scalar_prefetch = 1 : i64, scratch_operands = 0 : i64, tpu.core_type = #tpu.core_type<tc>, window_params = [{transform_indices = @transform_0, window_bounds = array<i64: 2, 8, 8, 16>}, {transform_indices = @transform_1, window_bounds = array<i64: 2, 8, 16>}, {pipeline_mode = #tpu.pipeline_mode<synchronous>, transform_indices = @transform_2, window_bounds = array<i64: 16, 32>}, {pipeline_mode = #tpu.pipeline_mode<synchronous>, transform_indices = @transform_3, window_bounds = array<i64: 1, 32>}, {pipeline_mode = #tpu.pipeline_mode<synchronous>, transform_indices = @transform_4, window_bounds = array<i64: 16, 32>}, {pipeline_mode = #tpu.pipeline_mode<synchronous>, transform_indices = @transform_5, window_bounds = array<i64: 1, 32>}, {pipeline_mode = #tpu.pipeline_mode<synchronous>, transform_indices = @transform_6, window_bounds = array<i64: 32, 32>}, {pipeline_mode = #tpu.pipeline_mode<synchronous>, transform_indices = @transform_7, window_bounds = array<i64: 1, 32>}, {pipeline_mode = #tpu.pipeline_mode<synchronous>, transform_indices = @transform_8, window_bounds = array<i64: 1, 32>}, {pipeline_mode = #tpu.pipeline_mode<synchronous>, transform_indices = @transform_9, window_bounds = array<i64: 1, 1>}, {pipeline_mode = #tpu.pipeline_mode<synchronous>, transform_indices = @transform_10, window_bounds = array<i64: 32, 32>}, {pipeline_mode = #tpu.pipeline_mode<synchronous>, transform_indices = @transform_11, window_bounds = array<i64: 32, 32>}, {pipeline_mode = #tpu.pipeline_mode<synchronous>, transform_indices = @transform_12, window_bounds = array<i64: 1, 32>}, {pipeline_mode = #tpu.pipeline_mode<synchronous>, transform_indices = @transform_13, window_bounds = array<i64: 32, 96>}, {pipeline_mode = #tpu.pipeline_mode<synchronous>, transform_indices = @transform_14, window_bounds = array<i64: 32, 96>}, {pipeline_mode = #tpu.pipeline_mode<synchronous>, transform_indices = @transform_15, window_bounds = array<i64: 1, 96>}, {pipeline_mode = #tpu.pipeline_mode<synchronous>, transform_indices = @transform_16, window_bounds = array<i64: 1, 96>}, {pipeline_mode = #tpu.pipeline_mode<synchronous>, transform_indices = @transform_17, window_bounds = array<i64: 32, 128>}, {pipeline_mode = #tpu.pipeline_mode<synchronous>, transform_indices = @transform_18, window_bounds = array<i64: 1, 128>}, {transform_indices = @transform_19, window_bounds = array<i64: 2, 8, 128>}, {transform_indices = @transform_20, window_bounds = array<i64: 2, 8, 128>}]} {
    %0 = tpu.iota {dimensions = array<i32: 1>} : vector<1x8xi32>
    %c2_i32 = arith.constant 2 : i32
    %1 = arith.muli %arg0, %c2_i32 : i32
    %c0_i32 = arith.constant 0 : i32
    %2 = arith.addi %1, %c0_i32 : i32
    %3 = arith.index_cast %2 : i32 to index
    %4 = memref.load %arg1[%3] : memref<4xi32, #tpu.memory_space<smem>>
    %5 = vector.broadcast %4 : i32 to vector<1x8xi32>
    %6 = arith.cmpi slt, %0, %5 : vector<1x8xi32>
    %7 = arith.extui %6 : vector<1x8xi1> to vector<1x8xi32>
    %8 = arith.sitofp %7 : vector<1x8xi32> to vector<1x8xf32>
    %c2_i32_0 = arith.constant 2 : i32
    %9 = arith.muli %arg0, %c2_i32_0 : i32
    %c1_i32 = arith.constant 1 : i32
    %10 = arith.addi %9, %c1_i32 : i32
    %11 = arith.index_cast %10 : i32 to index
    %12 = memref.load %arg1[%11] : memref<4xi32, #tpu.memory_space<smem>>
    %13 = vector.broadcast %12 : i32 to vector<1x8xi32>
    %14 = arith.cmpi slt, %0, %13 : vector<1x8xi32>
    %15 = arith.extui %14 : vector<1x8xi1> to vector<1x8xi32>
    %16 = arith.sitofp %15 : vector<1x8xi32> to vector<1x8xf32>
    %17 = tpu.concatenate %8, %16 in 0 : vector<1x8xf32>, vector<1x8xf32> -> vector<2x8xf32>
    %18 = vector.shape_cast %17 : vector<2x8xf32> to vector<2x8x1xf32>
    %19 = vector.shape_cast %17 : vector<2x8xf32> to vector<2x1x8xf32>
    %20 = vector.broadcast %18 : vector<2x8x1xf32> to vector<2x8x8xf32>
    %21 = vector.broadcast %19 : vector<2x1x8xf32> to vector<2x8x8xf32>
    %22 = arith.mulf %20, %21 : vector<2x8x8xf32>
    %23 = vector.shape_cast %17 : vector<2x8xf32> to vector<2x8x1xf32>
    %c0 = arith.constant 0 : index
    %c0_1 = arith.constant 0 : index
    %c0_2 = arith.constant 0 : index
    %c0_3 = arith.constant 0 : index
    %24 = vector.load %arg2[%c0, %c0_1, %c0_2, %c0_3] : memref<2x8x8x16xbf16, #tpu.memory_space<vmem>>, vector<2x8x8x16xbf16>
    %25 = vector.shape_cast %24 : vector<2x8x8x16xbf16> to vector<128x16xbf16>
    %c0_4 = arith.constant 0 : index
    %c0_5 = arith.constant 0 : index
    %26 = vector.load %arg4[%c0_4, %c0_5] : memref<16x32xbf16, #tpu.memory_space<vmem>>, vector<16x32xbf16>
    %cst = arith.constant dense<0.000000e+00> : vector<128x32xf32>
    %27 = tpu.matmul %25, %26, %cst {dimension_numbers = #tpu.dot_dimension_numbers<[1], [0], [0], [1], [0, 0, 1, 1], [], []>} : vector<128x16xbf16>, vector<16x32xbf16>, vector<128x32xf32> -> vector<128x32xf32>
    %c0_6 = arith.constant 0 : index
    %c0_7 = arith.constant 0 : index
    %28 = vector.load %arg5[%c0_6, %c0_7] : memref<1x32xf32, #tpu.memory_space<vmem>>, vector<1x32xf32>
    %29 = vector.broadcast %28 : vector<1x32xf32> to vector<128x32xf32>
    %30 = arith.addf %27, %29 : vector<128x32xf32>
    %c0_8 = arith.constant 0 : index
    %c0_9 = arith.constant 0 : index
    %c0_10 = arith.constant 0 : index
    %31 = vector.load %arg3[%c0_8, %c0_9, %c0_10] : memref<2x8x16xbf16, #tpu.memory_space<vmem>>, vector<2x8x16xbf16>
    %32 = vector.shape_cast %31 : vector<2x8x16xbf16> to vector<16x16xbf16>
    %c0_11 = arith.constant 0 : index
    %c0_12 = arith.constant 0 : index
    %33 = vector.load %arg6[%c0_11, %c0_12] : memref<16x32xbf16, #tpu.memory_space<vmem>>, vector<16x32xbf16>
    %cst_13 = arith.constant dense<0.000000e+00> : vector<16x32xf32>
    %34 = tpu.matmul %32, %33, %cst_13 {dimension_numbers = #tpu.dot_dimension_numbers<[1], [0], [0], [1], [0, 0, 1, 1], [], []>} : vector<16x16xbf16>, vector<16x32xbf16>, vector<16x32xf32> -> vector<16x32xf32>
    %c0_14 = arith.constant 0 : index
    %c0_15 = arith.constant 0 : index
    %35 = vector.load %arg7[%c0_14, %c0_15] : memref<1x32xf32, #tpu.memory_space<vmem>>, vector<1x32xf32>
    %36 = vector.broadcast %35 : vector<1x32xf32> to vector<16x32xf32>
    %37 = arith.addf %34, %36 : vector<16x32xf32>
    %38 = arith.truncf %30 : vector<128x32xf32> to vector<128x32xbf16>
    %39 = arith.truncf %37 : vector<16x32xf32> to vector<16x32xbf16>
    %c0_16 = arith.constant 0 : index
    %c0_17 = arith.constant 0 : index
    %40 = vector.load %arg12[%c0_16, %c0_17] : memref<32x32xbf16, #tpu.memory_space<vmem>>, vector<32x32xbf16>
    %cst_18 = arith.constant dense<0.000000e+00> : vector<16x32xf32>
    %41 = tpu.matmul %39, %40, %cst_18 {dimension_numbers = #tpu.dot_dimension_numbers<[1], [0], [0], [1], [0, 0, 1, 1], [], []>} : vector<16x32xbf16>, vector<32x32xbf16>, vector<16x32xf32> -> vector<16x32xf32>
    %42 = vector.shape_cast %41 : vector<16x32xf32> to vector<2x8x32xf32>
    %c0_19 = arith.constant 0 : index
    %c0_20 = arith.constant 0 : index
    %43 = vector.load %arg13[%c0_19, %c0_20] : memref<32x32xbf16, #tpu.memory_space<vmem>>, vector<32x32xbf16>
    %cst_21 = arith.constant dense<0.000000e+00> : vector<128x32xf32>
    %44 = tpu.matmul %38, %43, %cst_21 {dimension_numbers = #tpu.dot_dimension_numbers<[1], [0], [0], [1], [0, 0, 1, 1], [], []>} : vector<128x32xbf16>, vector<32x32xbf16>, vector<128x32xf32> -> vector<128x32xf32>
    %45 = vector.shape_cast %44 : vector<128x32xf32> to vector<2x8x8x32xf32>
    %46 = vector.shape_cast %42 : vector<2x8x32xf32> to vector<2x1x8x32xf32>
    %47 = vector.broadcast %46 : vector<2x1x8x32xf32> to vector<2x8x8x32xf32>
    %48 = arith.addf %45, %47 : vector<2x8x8x32xf32>
    %c0_22 = arith.constant 0 : index
    %c0_23 = arith.constant 0 : index
    %49 = vector.load %arg14[%c0_22, %c0_23] : memref<1x32xf32, #tpu.memory_space<vmem>>, vector<1x32xf32>
    %50 = vector.shape_cast %49 : vector<1x32xf32> to vector<1x1x1x32xf32>
    %51 = vector.broadcast %50 : vector<1x1x1x32xf32> to vector<2x8x8x32xf32>
    %52 = arith.addf %48, %51 : vector<2x8x8x32xf32>
    %cst_24 = arith.constant 0.000000e+00 : f32
    %53 = vector.broadcast %cst_24 : f32 to vector<2x8x8x32xf32>
    %54 = arith.maximumf %52, %53 : vector<2x8x8x32xf32>
    %55 = arith.truncf %54 : vector<2x8x8x32xf32> to vector<2x8x8x32xbf16>
    %c0_25 = arith.constant 0 : index
    %c0_26 = arith.constant 0 : index
    %56 = vector.load %arg9[%c0_25, %c0_26] : memref<1x32xf32, #tpu.memory_space<vmem>>, vector<1x32xf32>
    %c0_27 = arith.constant 0 : index
    %c0_28 = arith.constant 0 : index
    %57 = vector.load %arg10[%c0_27, %c0_28] : memref<1x32xf32, #tpu.memory_space<vmem>>, vector<1x32xf32>
    %c0_29 = arith.constant 0 : index
    %c0_30 = arith.constant 0 : index
    %58 = vector.load %arg11[%c0_29, %c0_30] : memref<1x1xf32, #tpu.memory_space<vmem>>, vector<1x1xf32>
    %59 = vector.shape_cast %55 : vector<2x8x8x32xbf16> to vector<128x32xbf16>
    %c0_31 = arith.constant 0 : index
    %c0_32 = arith.constant 0 : index
    %60 = vector.load %arg8[%c0_31, %c0_32] : memref<32x32xbf16, #tpu.memory_space<vmem>>, vector<32x32xbf16>
    %cst_33 = arith.constant dense<0.000000e+00> : vector<128x32xf32>
    %61 = tpu.matmul %59, %60, %cst_33 {dimension_numbers = #tpu.dot_dimension_numbers<[1], [0], [0], [1], [0, 0, 1, 1], [], []>} : vector<128x32xbf16>, vector<32x32xbf16>, vector<128x32xf32> -> vector<128x32xf32>
    %62 = vector.shape_cast %61 : vector<128x32xf32> to vector<2x8x8x32xf32>
    %63 = arith.truncf %62 : vector<2x8x8x32xf32> to vector<2x8x8x32xbf16>
    %c0_34 = arith.constant 0 : index
    %c0_35 = arith.constant 0 : index
    %64 = vector.load %arg8[%c0_34, %c0_35] : memref<32x32xbf16, #tpu.memory_space<vmem>>, vector<32x32xbf16>
    %cst_36 = arith.constant dense<0.000000e+00> : vector<128x32xf32>
    %65 = tpu.matmul %38, %64, %cst_36 {dimension_numbers = #tpu.dot_dimension_numbers<[1], [0], [0], [1], [0, 0, 1, 1], [], []>} : vector<128x32xbf16>, vector<32x32xbf16>, vector<128x32xf32> -> vector<128x32xf32>
    %66 = vector.broadcast %56 : vector<1x32xf32> to vector<128x32xf32>
    %67 = arith.addf %65, %66 : vector<128x32xf32>
    %cst_37 = arith.constant 0.000000e+00 : f32
    %68 = vector.broadcast %cst_37 : f32 to vector<128x32xf32>
    %69 = arith.maximumf %67, %68 : vector<128x32xf32>
    %70 = vector.shape_cast %69 : vector<128x32xf32> to vector<2x8x8x32xf32>
    %71 = vector.shape_cast %57 : vector<1x32xf32> to vector<1x1x1x32xf32>
    %72 = vector.broadcast %71 : vector<1x1x1x32xf32> to vector<2x8x8x32xf32>
    %73 = arith.mulf %70, %72 : vector<2x8x8x32xf32>
    %cst_38 = arith.constant dense<0.000000e+00> : vector<2x8x8xf32>
    %74 = vector.multi_reduction <add>, %73, %cst_38 [3] : vector<2x8x8x32xf32> to vector<2x8x8xf32>
    %75 = vector.shape_cast %58 : vector<1x1xf32> to vector<1x1x1xf32>
    %76 = vector.broadcast %75 : vector<1x1x1xf32> to vector<2x8x8xf32>
    %77 = arith.addf %74, %76 : vector<2x8x8xf32>
    %78 = arith.negf %77 : vector<2x8x8xf32>
    %79 = math.exp %78 : vector<2x8x8xf32>
    %cst_39 = arith.constant 1.000000e+00 : f32
    %80 = vector.broadcast %cst_39 : f32 to vector<2x8x8xf32>
    %81 = arith.addf %80, %79 : vector<2x8x8xf32>
    %82 = arith.divf %80, %81 : vector<2x8x8xf32>
    %83 = arith.mulf %82, %22 : vector<2x8x8xf32>
    %c0_i32_40 = arith.constant 0 : i32
    %84 = vector.shape_cast %83 : vector<2x8x8xf32> to vector<2x8x8x1xf32>
    %85 = arith.extf %63 : vector<2x8x8x32xbf16> to vector<2x8x8x32xf32>
    %86 = vector.broadcast %84 : vector<2x8x8x1xf32> to vector<2x8x8x32xf32>
    %87 = arith.mulf %86, %85 : vector<2x8x8x32xf32>
    %88 = vector.shape_cast %56 : vector<1x32xf32> to vector<1x1x1x32xf32>
    %89 = vector.broadcast %88 : vector<1x1x1x32xf32> to vector<2x8x8x32xf32>
    %90 = arith.addf %87, %89 : vector<2x8x8x32xf32>
    %cst_41 = arith.constant 0.000000e+00 : f32
    %91 = vector.broadcast %cst_41 : f32 to vector<2x8x8x32xf32>
    %92 = arith.maximumf %90, %91 : vector<2x8x8x32xf32>
    %93 = vector.shape_cast %57 : vector<1x32xf32> to vector<1x1x1x32xf32>
    %94 = vector.broadcast %93 : vector<1x1x1x32xf32> to vector<2x8x8x32xf32>
    %95 = arith.mulf %92, %94 : vector<2x8x8x32xf32>
    %cst_42 = arith.constant dense<0.000000e+00> : vector<2x8x8xf32>
    %96 = vector.multi_reduction <add>, %95, %cst_42 [3] : vector<2x8x8x32xf32> to vector<2x8x8xf32>
    %97 = vector.shape_cast %58 : vector<1x1xf32> to vector<1x1x1xf32>
    %98 = vector.broadcast %97 : vector<1x1x1xf32> to vector<2x8x8xf32>
    %99 = arith.addf %96, %98 : vector<2x8x8xf32>
    %100 = tpu.transpose %99, [0, 2, 1] : vector<2x8x8xf32> -> vector<2x8x8xf32>
    %101 = arith.negf %100 : vector<2x8x8xf32>
    %102 = math.exp %101 : vector<2x8x8xf32>
    %cst_43 = arith.constant 1.000000e+00 : f32
    %103 = vector.broadcast %cst_43 : f32 to vector<2x8x8xf32>
    %104 = arith.addf %103, %102 : vector<2x8x8xf32>
    %105 = arith.divf %103, %104 : vector<2x8x8xf32>
    %106 = arith.mulf %105, %22 : vector<2x8x8xf32>
    %107 = vector.shape_cast %106 : vector<2x8x8xf32> to vector<2x8x8x1xf32>
    %108 = arith.extf %55 : vector<2x8x8x32xbf16> to vector<2x8x8x32xf32>
    %109 = vector.broadcast %107 : vector<2x8x8x1xf32> to vector<2x8x8x32xf32>
    %110 = arith.mulf %109, %108 : vector<2x8x8x32xf32>
    %cst_44 = arith.constant dense<0.000000e+00> : vector<2x8x32xf32>
    %111 = vector.multi_reduction <add>, %110, %cst_44 [2] : vector<2x8x8x32xf32> to vector<2x8x32xf32>
    %112 = vector.shape_cast %111 : vector<2x8x32xf32> to vector<16x32xf32>
    %113 = arith.truncf %112 : vector<16x32xf32> to vector<16x32xbf16>
    %c0_45 = arith.constant 0 : index
    %c0_46 = arith.constant 0 : index
    %114 = vector.load %arg15[%c0_45, %c0_46] : memref<32x96xbf16, #tpu.memory_space<vmem>>, vector<32x96xbf16>
    %cst_47 = arith.constant dense<0.000000e+00> : vector<16x96xf32>
    %115 = tpu.matmul %113, %114, %cst_47 {dimension_numbers = #tpu.dot_dimension_numbers<[1], [0], [0], [1], [0, 0, 1, 1], [], []>} : vector<16x32xbf16>, vector<32x96xbf16>, vector<16x96xf32> -> vector<16x96xf32>
    %c0_48 = arith.constant 0 : index
    %c0_49 = arith.constant 0 : index
    %116 = vector.load %arg17[%c0_48, %c0_49] : memref<1x96xf32, #tpu.memory_space<vmem>>, vector<1x96xf32>
    %117 = vector.broadcast %116 : vector<1x96xf32> to vector<16x96xf32>
    %118 = arith.addf %115, %117 : vector<16x96xf32>
    %c0_50 = arith.constant 0 : index
    %c0_51 = arith.constant 0 : index
    %119 = vector.load %arg16[%c0_50, %c0_51] : memref<32x96xbf16, #tpu.memory_space<vmem>>, vector<32x96xbf16>
    %cst_52 = arith.constant dense<0.000000e+00> : vector<16x96xf32>
    %120 = tpu.matmul %39, %119, %cst_52 {dimension_numbers = #tpu.dot_dimension_numbers<[1], [0], [0], [1], [0, 0, 1, 1], [], []>} : vector<16x32xbf16>, vector<32x96xbf16>, vector<16x96xf32> -> vector<16x96xf32>
    %c0_53 = arith.constant 0 : index
    %c0_54 = arith.constant 0 : index
    %121 = vector.load %arg18[%c0_53, %c0_54] : memref<1x96xf32, #tpu.memory_space<vmem>>, vector<1x96xf32>
    %122 = vector.broadcast %121 : vector<1x96xf32> to vector<16x96xf32>
    %123 = arith.addf %120, %122 : vector<16x96xf32>
    %124 = vector.extract_strided_slice %118 {offsets = [0, 0], sizes = [16, 32], strides = [1, 1]} : vector<16x96xf32> to vector<16x32xf32>
    %125 = vector.extract_strided_slice %123 {offsets = [0, 0], sizes = [16, 32], strides = [1, 1]} : vector<16x96xf32> to vector<16x32xf32>
    %126 = arith.addf %124, %125 : vector<16x32xf32>
    %127 = arith.negf %126 : vector<16x32xf32>
    %128 = math.exp %127 : vector<16x32xf32>
    %cst_55 = arith.constant 1.000000e+00 : f32
    %129 = vector.broadcast %cst_55 : f32 to vector<16x32xf32>
    %130 = arith.addf %129, %128 : vector<16x32xf32>
    %131 = arith.divf %129, %130 : vector<16x32xf32>
    %132 = vector.extract_strided_slice %118 {offsets = [0, 32], sizes = [16, 32], strides = [1, 1]} : vector<16x96xf32> to vector<16x32xf32>
    %133 = vector.extract_strided_slice %123 {offsets = [0, 32], sizes = [16, 32], strides = [1, 1]} : vector<16x96xf32> to vector<16x32xf32>
    %134 = arith.addf %132, %133 : vector<16x32xf32>
    %135 = arith.negf %134 : vector<16x32xf32>
    %136 = math.exp %135 : vector<16x32xf32>
    %cst_56 = arith.constant 1.000000e+00 : f32
    %137 = vector.broadcast %cst_56 : f32 to vector<16x32xf32>
    %138 = arith.addf %137, %136 : vector<16x32xf32>
    %139 = arith.divf %137, %138 : vector<16x32xf32>
    %140 = vector.extract_strided_slice %118 {offsets = [0, 64], sizes = [16, 32], strides = [1, 1]} : vector<16x96xf32> to vector<16x32xf32>
    %141 = vector.extract_strided_slice %123 {offsets = [0, 64], sizes = [16, 32], strides = [1, 1]} : vector<16x96xf32> to vector<16x32xf32>
    %142 = arith.mulf %131, %141 : vector<16x32xf32>
    %143 = arith.addf %140, %142 : vector<16x32xf32>
    %144 = math.tanh %143 : vector<16x32xf32>
    %cst_57 = arith.constant 1.000000e+00 : f32
    %145 = vector.broadcast %cst_57 : f32 to vector<16x32xf32>
    %146 = arith.subf %145, %139 : vector<16x32xf32>
    %147 = arith.mulf %146, %144 : vector<16x32xf32>
    %148 = arith.mulf %139, %37 : vector<16x32xf32>
    %149 = arith.addf %147, %148 : vector<16x32xf32>
    %150 = arith.truncf %149 : vector<16x32xf32> to vector<16x32xbf16>
    %c0_58 = arith.constant 0 : index
    %c0_59 = arith.constant 0 : index
    %151 = vector.load %arg19[%c0_58, %c0_59] : memref<32x128xbf16, #tpu.memory_space<vmem>>, vector<32x128xbf16>
    %cst_60 = arith.constant dense<0.000000e+00> : vector<16x128xf32>
    %152 = tpu.matmul %150, %151, %cst_60 {dimension_numbers = #tpu.dot_dimension_numbers<[1], [0], [0], [1], [0, 0, 1, 1], [], []>} : vector<16x32xbf16>, vector<32x128xbf16>, vector<16x128xf32> -> vector<16x128xf32>
    %c0_61 = arith.constant 0 : index
    %c0_62 = arith.constant 0 : index
    %153 = vector.load %arg20[%c0_61, %c0_62] : memref<1x128xf32, #tpu.memory_space<vmem>>, vector<1x128xf32>
    %154 = vector.broadcast %153 : vector<1x128xf32> to vector<16x128xf32>
    %155 = arith.addf %152, %154 : vector<16x128xf32>
    %156 = vector.shape_cast %155 : vector<16x128xf32> to vector<2x8x128xf32>
    %157 = vector.broadcast %23 : vector<2x8x1xf32> to vector<2x8x128xf32>
    %158 = arith.mulf %156, %157 : vector<2x8x128xf32>
    %c0_63 = arith.constant 0 : index
    %c0_64 = arith.constant 0 : index
    %c0_65 = arith.constant 0 : index
    %159 = vector.load %arg22[%c0_63, %c0_64, %c0_65] : memref<2x8x128xf32, #tpu.memory_space<vmem>>, vector<2x8x128xf32>
    tpu.vector_store %arg22[%c0_63, %c0_64, %c0_65], %158 {strides = array<i32>} : memref<2x8x128xf32, #tpu.memory_space<vmem>>, vector<2x8x128xf32>,
    %160 = arith.mulf %100, %22 : vector<2x8x8xf32>
    %cst_66 = arith.constant 0.000000e+00 : f32
    %161 = vector.broadcast %cst_66 : f32 to vector<2x8x120xf32>
    %162 = tpu.concatenate %160, %161 in 2 : vector<2x8x8xf32>, vector<2x8x120xf32> -> vector<2x8x128xf32>
    %c0_67 = arith.constant 0 : index
    %c0_68 = arith.constant 0 : index
    %c0_69 = arith.constant 0 : index
    %163 = vector.load %arg21[%c0_67, %c0_68, %c0_69] : memref<2x8x128xf32, #tpu.memory_space<vmem>>, vector<2x8x128xf32>
    tpu.vector_store %arg21[%c0_67, %c0_68, %c0_69], %162 {strides = array<i32>} : memref<2x8x128xf32, #tpu.memory_space<vmem>>, vector<2x8x128xf32>,
    return
  }
  func.func @transform_0(%arg0: i32, %arg1: memref<4xi32, #tpu.memory_space<smem>>) -> (i32, i32, i32, i32) {
    %c0_i32 = arith.constant 0 : i32
    %c0_i32_0 = arith.constant 0 : i32
    %c0_i32_1 = arith.constant 0 : i32
    %c0_i32_2 = arith.constant 0 : i32
    return %arg0, %c0_i32, %c0_i32_0, %c0_i32_1 : i32, i32, i32, i32
  }
  func.func @transform_1(%arg0: i32, %arg1: memref<4xi32, #tpu.memory_space<smem>>) -> (i32, i32, i32) {
    %c0_i32 = arith.constant 0 : i32
    %c0_i32_0 = arith.constant 0 : i32
    %c0_i32_1 = arith.constant 0 : i32
    return %arg0, %c0_i32, %c0_i32_0 : i32, i32, i32
  }
  func.func @transform_2(%arg0: i32, %arg1: memref<4xi32, #tpu.memory_space<smem>>) -> (i32, i32) {
    %c0_i32 = arith.constant 0 : i32
    %c0_i32_0 = arith.constant 0 : i32
    %c0_i32_1 = arith.constant 0 : i32
    return %c0_i32, %c0_i32_0 : i32, i32
  }
  func.func @transform_3(%arg0: i32, %arg1: memref<4xi32, #tpu.memory_space<smem>>) -> (i32, i32) {
    %c0_i32 = arith.constant 0 : i32
    %c0_i32_0 = arith.constant 0 : i32
    %c0_i32_1 = arith.constant 0 : i32
    return %c0_i32, %c0_i32_0 : i32, i32
  }
  func.func @transform_4(%arg0: i32, %arg1: memref<4xi32, #tpu.memory_space<smem>>) -> (i32, i32) {
    %c0_i32 = arith.constant 0 : i32
    %c0_i32_0 = arith.constant 0 : i32
    %c0_i32_1 = arith.constant 0 : i32
    return %c0_i32, %c0_i32_0 : i32, i32
  }
  func.func @transform_5(%arg0: i32, %arg1: memref<4xi32, #tpu.memory_space<smem>>) -> (i32, i32) {
    %c0_i32 = arith.constant 0 : i32
    %c0_i32_0 = arith.constant 0 : i32
    %c0_i32_1 = arith.constant 0 : i32
    return %c0_i32, %c0_i32_0 : i32, i32
  }
  func.func @transform_6(%arg0: i32, %arg1: memref<4xi32, #tpu.memory_space<smem>>) -> (i32, i32) {
    %c0_i32 = arith.constant 0 : i32
    %c0_i32_0 = arith.constant 0 : i32
    %c0_i32_1 = arith.constant 0 : i32
    return %c0_i32, %c0_i32_0 : i32, i32
  }
  func.func @transform_7(%arg0: i32, %arg1: memref<4xi32, #tpu.memory_space<smem>>) -> (i32, i32) {
    %c0_i32 = arith.constant 0 : i32
    %c0_i32_0 = arith.constant 0 : i32
    %c0_i32_1 = arith.constant 0 : i32
    return %c0_i32, %c0_i32_0 : i32, i32
  }
  func.func @transform_8(%arg0: i32, %arg1: memref<4xi32, #tpu.memory_space<smem>>) -> (i32, i32) {
    %c0_i32 = arith.constant 0 : i32
    %c0_i32_0 = arith.constant 0 : i32
    %c0_i32_1 = arith.constant 0 : i32
    return %c0_i32, %c0_i32_0 : i32, i32
  }
  func.func @transform_9(%arg0: i32, %arg1: memref<4xi32, #tpu.memory_space<smem>>) -> (i32, i32) {
    %c0_i32 = arith.constant 0 : i32
    %c0_i32_0 = arith.constant 0 : i32
    %c0_i32_1 = arith.constant 0 : i32
    return %c0_i32, %c0_i32_0 : i32, i32
  }
  func.func @transform_10(%arg0: i32, %arg1: memref<4xi32, #tpu.memory_space<smem>>) -> (i32, i32) {
    %c0_i32 = arith.constant 0 : i32
    %c0_i32_0 = arith.constant 0 : i32
    %c0_i32_1 = arith.constant 0 : i32
    return %c0_i32, %c0_i32_0 : i32, i32
  }
  func.func @transform_11(%arg0: i32, %arg1: memref<4xi32, #tpu.memory_space<smem>>) -> (i32, i32) {
    %c0_i32 = arith.constant 0 : i32
    %c0_i32_0 = arith.constant 0 : i32
    %c0_i32_1 = arith.constant 0 : i32
    return %c0_i32, %c0_i32_0 : i32, i32
  }
  func.func @transform_12(%arg0: i32, %arg1: memref<4xi32, #tpu.memory_space<smem>>) -> (i32, i32) {
    %c0_i32 = arith.constant 0 : i32
    %c0_i32_0 = arith.constant 0 : i32
    %c0_i32_1 = arith.constant 0 : i32
    return %c0_i32, %c0_i32_0 : i32, i32
  }
  func.func @transform_13(%arg0: i32, %arg1: memref<4xi32, #tpu.memory_space<smem>>) -> (i32, i32) {
    %c0_i32 = arith.constant 0 : i32
    %c0_i32_0 = arith.constant 0 : i32
    %c0_i32_1 = arith.constant 0 : i32
    return %c0_i32, %c0_i32_0 : i32, i32
  }
  func.func @transform_14(%arg0: i32, %arg1: memref<4xi32, #tpu.memory_space<smem>>) -> (i32, i32) {
    %c0_i32 = arith.constant 0 : i32
    %c0_i32_0 = arith.constant 0 : i32
    %c0_i32_1 = arith.constant 0 : i32
    return %c0_i32, %c0_i32_0 : i32, i32
  }
  func.func @transform_15(%arg0: i32, %arg1: memref<4xi32, #tpu.memory_space<smem>>) -> (i32, i32) {
    %c0_i32 = arith.constant 0 : i32
    %c0_i32_0 = arith.constant 0 : i32
    %c0_i32_1 = arith.constant 0 : i32
    return %c0_i32, %c0_i32_0 : i32, i32
  }
  func.func @transform_16(%arg0: i32, %arg1: memref<4xi32, #tpu.memory_space<smem>>) -> (i32, i32) {
    %c0_i32 = arith.constant 0 : i32
    %c0_i32_0 = arith.constant 0 : i32
    %c0_i32_1 = arith.constant 0 : i32
    return %c0_i32, %c0_i32_0 : i32, i32
  }
  func.func @transform_17(%arg0: i32, %arg1: memref<4xi32, #tpu.memory_space<smem>>) -> (i32, i32) {
    %c0_i32 = arith.constant 0 : i32
    %c0_i32_0 = arith.constant 0 : i32
    %c0_i32_1 = arith.constant 0 : i32
    return %c0_i32, %c0_i32_0 : i32, i32
  }
  func.func @transform_18(%arg0: i32, %arg1: memref<4xi32, #tpu.memory_space<smem>>) -> (i32, i32) {
    %c0_i32 = arith.constant 0 : i32
    %c0_i32_0 = arith.constant 0 : i32
    %c0_i32_1 = arith.constant 0 : i32
    return %c0_i32, %c0_i32_0 : i32, i32
  }
  func.func @transform_19(%arg0: i32, %arg1: memref<4xi32, #tpu.memory_space<smem>>) -> (i32, i32, i32) {
    %c0_i32 = arith.constant 0 : i32
    %c0_i32_0 = arith.constant 0 : i32
    %c0_i32_1 = arith.constant 0 : i32
    return %arg0, %c0_i32, %c0_i32_0 : i32, i32, i32
  }
  func.func @transform_20(%arg0: i32, %arg1: memref<4xi32, #tpu.memory_space<smem>>) -> (i32, i32, i32) {
    %c0_i32 = arith.constant 0 : i32
    %c0_i32_0 = arith.constant 0 : i32
    %c0_i32_1 = arith.constant 0 : i32
    return %arg0, %c0_i32, %c0_i32_0 : i32, i32, i32
  }
}

</mosaic_0001>

<llo_original>
// kernel: tpu_custom_call.1
$region0: #{tpu_custom_call.1}
  #allocation0 [shape = 'u32[]', space=smem, size = 0x4, offset = 0x4, fixed_abs, tag = 'smem constant byte address 0x4 - core index']
  #allocation1 [shape = 'u32[144,128]{1,0:T(1,128)}', space=vmem, size = 0x12000, scoped, tag = 'internal scratch']
  #allocation2 [shape = 's32[1]{0}', space=sflag, size = 0x4, scoped, tag = 'scoped memory for tpu_custom_call.1']
  #allocation3 [shape = 'u8[512]{0}', space=smem, size = 0x200, scoped, tag = 'prefetched SMEM operand 0']
  #allocation4 [shape = 'f32[1,1]{1,0:T(1,128)S(1)}', space=vmem, size = 0x200, scoped, tag = 'scoped memory for tpu_custom_call.1']
  %s0 = inlined_call_operand.hbm [shape: s32[4], index: 0, kind: input, shape index: {}]
  %s1 = inlined_call_operand.hbm [shape: bf16[4,8,8,16], index: 1, kind: input, shape index: {}]
  %s2 = inlined_call_operand.hbm [shape: bf16[4,8,16], index: 2, kind: input, shape index: {}]
  %s3 = inlined_call_operand.hbm [shape: bf16[16,32], index: 3, kind: input, shape index: {}]
  %s4 = inlined_call_operand.hbm [shape: f32[1,32], index: 4, kind: input, shape index: {}]
  %s5 = inlined_call_operand.hbm [shape: bf16[16,32], index: 5, kind: input, shape index: {}]
  %s6 = inlined_call_operand.hbm [shape: f32[1,32], index: 6, kind: input, shape index: {}]
  %s7 = inlined_call_operand.vmem [shape: bf16[32,32], index: 7, kind: input, shape index: {}]
  %s8 = inlined_call_operand.hbm [shape: f32[1,32], index: 8, kind: input, shape index: {}]
  %s9 = inlined_call_operand.hbm [shape: f32[1,32], index: 9, kind: input, shape index: {}]
  %s10 = inlined_call_operand.<no memory space> [shape: f32[1,1], index: 10, kind: input, shape index: {}]
  %s11 = inlined_call_operand.vmem [shape: bf16[32,32], index: 11, kind: input, shape index: {}]
  %s12 = inlined_call_operand.hbm [shape: bf16[32,32], index: 12, kind: input, shape index: {}]
  %s13 = inlined_call_operand.hbm [shape: f32[1,32], index: 13, kind: input, shape index: {}]
  %s14 = inlined_call_operand.vmem [shape: bf16[32,96], index: 14, kind: input, shape index: {}]
  %s15 = inlined_call_operand.hbm [shape: bf16[32,96], index: 15, kind: input, shape index: {}]
  %s16 = inlined_call_operand.hbm [shape: f32[1,96], index: 16, kind: input, shape index: {}]
  %s17 = inlined_call_operand.hbm [shape: f32[1,96], index: 17, kind: input, shape index: {}]
  %s18 = inlined_call_operand.vmem [shape: bf16[32,128], index: 18, kind: input, shape index: {}]
  %s19 = inlined_call_operand.vmem [shape: f32[1,128], index: 19, kind: input, shape index: {}]
  %s20 = inlined_call_operand.hbm [shape: f32[4,8,128], index: 20, kind: output, shape index: {0}]
  %s21 = inlined_call_operand.hbm [shape: f32[4,8,128], index: 21, kind: output, shape index: {1}]
  %22 = xla_tuple %s20, %s21
  %s23 = sld [smem:[#allocation0]]
  $region169: #{tpu_custom_call.1} parent=0
    _
  %s25 = ssub.s32 1, %s23
  %s26 = scalar_select 0, %s25, %s23
  %28 = dma.hbm_to_smem %s0, 16, [#allocation3], [#allocation2]
  %v29 = vstv %s10
  %30 = vst [vmem:[#allocation4] sm:$0x1] %v29
  %31 = dma.done [#allocation2], 16
  %32 = sfence
  $region1: #{tpu_custom_call.1} parent=0
    #allocation5 [shape = 'u8[65536]{0}', space=vmem, size = 0x10000, scoped, tag = 'input window, operand 1']
    #allocation6 [shape = 's32[2]{0}', space=sflag, size = 0x8, scoped, tag = 'scoped memory for tpu_custom_call.1']
    #allocation7 [shape = 's32[2]{0}', space=sflag, size = 0x8, scoped, tag = 'scoped memory for tpu_custom_call.1']
    #allocation8 [shape = 'u8[8192]{0}', space=vmem, size = 0x2000, scoped, tag = 'input window, operand 2']
    #allocation9 [shape = 's32[2]{0}', space=sflag, size = 0x8, scoped, tag = 'scoped memory for tpu_custom_call.1']
    #allocation10 [shape = 'u8[4096]{0}', space=vmem, size = 0x1000, scoped, tag = 'input window, operand 3, single buffered']
    #allocation11 [shape = 'u8[512]{0}', space=vmem, size = 0x400, scoped, tag = 'input window, operand 4, single buffered']
    #allocation12 [shape = 's32[1]{0}', space=sflag, size = 0x4, scoped, tag = 'scoped memory for tpu_custom_call.1']
    #allocation13 [shape = 'u8[4096]{0}', space=vmem, size = 0x1000, scoped, tag = 'input window, operand 5, single buffered']
    #allocation14 [shape = 'u8[512]{0}', space=vmem, size = 0x400, scoped, tag = 'input window, operand 6, single buffered']
    #allocation15 [shape = 's32[1]{0}', space=sflag, size = 0x4, scoped, tag = 'scoped memory for tpu_custom_call.1']
    #allocation16 [shape = 'u8[512]{0}', space=vmem, size = 0x400, scoped, tag = 'input window, operand 8, single buffered']
    #allocation17 [shape = 'u8[512]{0}', space=vmem, size = 0x400, scoped, tag = 'input window, operand 9, single buffered']
    #allocation18 [shape = 's32[1]{0}', space=sflag, size = 0x4, scoped, tag = 'scoped memory for tpu_custom_call.1']
    #allocation19 [shape = 'u8[8192]{0}', space=vmem, size = 0x2000, scoped, tag = 'input window, operand 12, single buffered']
    #allocation20 [shape = 'u8[512]{0}', space=vmem, size = 0x400, scoped, tag = 'input window, operand 13, single buffered']
    #allocation21 [shape = 's32[1]{0}', space=sflag, size = 0x4, scoped, tag = 'scoped memory for tpu_custom_call.1']
    #allocation22 [shape = 'u8[8192]{0}', space=vmem, size = 0x2000, scoped, tag = 'input window, operand 15, single buffered']
    #allocation23 [shape = 'u8[512]{0}', space=vmem, size = 0x400, scoped, tag = 'input window, operand 16, single buffered']
    #allocation24 [shape = 's32[1]{0}', space=sflag, size = 0x4, scoped, tag = 'scoped memory for tpu_custom_call.1']
    #allocation25 [shape = 'u8[512]{0}', space=vmem, size = 0x400, scoped, tag = 'input window, operand 17, single buffered']
    #allocation26 [shape = 'u8[16384]{0}', space=vmem, size = 0x4000, scoped, tag = 'output window, operand 0']
    #allocation27 [shape = 'u8[16384]{0}', space=vmem, size = 0x4000, scoped, tag = 'output window, operand 1']
    #allocation28 [shape = 's32[2]{0}', space=sflag, size = 0x8, scoped, tag = 'scoped memory for tpu_custom_call.1']
    %33 = vsyncpa [#allocation6], 0
    %s34 = scalar_lea.sflag [#allocation6], 1
    %35 = vsyncpa %s34, 0
    %36 = vsyncpa [#allocation9], 0
    %s37 = scalar_lea.sflag [#allocation9], 1
    %38 = vsyncpa %s37, 0
    %39 = vsyncpa [#allocation12], 0
    %40 = vsyncpa [#allocation15], 0
    %41 = vsyncpa [#allocation18], 0
    %42 = vsyncpa [#allocation21], 0
    %43 = vsyncpa [#allocation24], 0
    %44 = vsyncpa [#allocation7], 0
    %s45 = scalar_lea.sflag [#allocation7], 1
    %46 = vsyncpa %s45, 0
    %47 = vsyncpa [#allocation28], 0
    %s48 = scalar_lea.sflag [#allocation28], 1
    %49 = vsyncpa %s48, 0
    loop: start=0, step=1, limit=4
    $region2: #{tpu_custom_call.1} parent=1 // loop_pre_header
      _
    $region3: #{tpu_custom_call.1} parent=1 // loop_header
      %s51 = sphi 0, %s55
      %p52 = scmp.ge.s32.totalorder %s51, 4
      %s61 = sphi 0, %s63
      %s64 = sphi 0, %s61
      %s65 = sphi 0, %s64
      %s81 = sphi 0, %s65
      %s87 = sphi 0, %s89
      %s90 = sphi 0, %s87
      %s91 = sphi 0, %s90
      %s107 = sphi 0, %s91
      %s111 = sphi 0, %s111
      %s113 = sphi 0, %s111
      %s114 = sphi 0, %s113
      %s128 = sphi 0, %s114
      %s132 = sphi 0, %s132
      %s134 = sphi 0, %s132
      %s135 = sphi 0, %s134
      %s149 = sphi 0, %s135
      %s153 = sphi 0, %s153
      %s155 = sphi 0, %s153
      %s156 = sphi 0, %s155
      %s170 = sphi 0, %s156
      %s174 = sphi 0, %s174
      %s176 = sphi 0, %s174
      %s177 = sphi 0, %s176
      %s191 = sphi 0, %s177
      %s195 = sphi 0, %s195
      %s197 = sphi 0, %s195
      %s198 = sphi 0, %s197
      %s212 = sphi 0, %s198
      %s216 = sphi 0, %s216
      %s218 = sphi 0, %s216
      %s219 = sphi 0, %s218
      %s233 = sphi 0, %s219
      %s237 = sphi 0, %s237
      %s239 = sphi 0, %s237
      %s240 = sphi 0, %s239
      %s254 = sphi 0, %s240
      %s258 = sphi 0, %s258
      %s260 = sphi 0, %s258
      %s261 = sphi 0, %s260
      %s275 = sphi 0, %s261
      %s279 = sphi 0, %s279
      %s281 = sphi 0, %s279
      %s282 = sphi 0, %s281
      %s296 = sphi 0, %s282
      %s300 = sphi 0, %s300
      %s302 = sphi 0, %s300
      %s303 = sphi 0, %s302
      %s317 = sphi 0, %s303
      %s321 = sphi 0, %s321
      %s323 = sphi 0, %s321
      %s324 = sphi 0, %s323
      %s338 = sphi 0, %s324
      %s342 = sphi 0, %s342
      %s344 = sphi 0, %s342
      %s345 = sphi 0, %s344
      %s359 = sphi 0, %s345
      %s363 = sphi 0, %s363
      %s365 = sphi 0, %s363
      %s366 = sphi 0, %s365
      %s380 = sphi 0, %s366
      %s384 = sphi 0, %s384
      %s386 = sphi 0, %s384
      %s387 = sphi 0, %s386
      %s401 = sphi 0, %s387
      %s405 = sphi 0, %s405
      %s407 = sphi 0, %s405
      %s408 = sphi 0, %s407
      %s422 = sphi 0, %s408
      %s426 = sphi 0, %s426
      %s428 = sphi 0, %s426
      %s429 = sphi 0, %s428
      %s443 = sphi 0, %s429
      %s447 = sphi 0, %s447
      %s449 = sphi 0, %s447
      %s450 = sphi 0, %s449
      %s464 = sphi 0, %s450
      %s470 = sphi 0, %s472
      %s473 = sphi 0, %s470
      %s474 = sphi 0, %s473
      %s490 = sphi 0, %s474
      %s496 = sphi 0, %s498
      %s499 = sphi 0, %s496
      %s500 = sphi 0, %s499
      %s516 = sphi 0, %s500
    $region4: #{tpu_custom_call.1} parent=1 // loop_header_branch
      %54 = sbr.rel (%p52) target = $region8
    $region5: #{tpu_custom_call.1} parent=1 // loop_body
      %s56 = ssub.s32 %s51, 1
      %s57 = ssub.s32 %s51, 2
      %s58 = sadd.s32 %s51, 1
      %s59 = ssub.s32 %s51, %s58
      %p60 = scmp.eq.s32.totalorder %s59, 0
      %s62 = sadd.s32 %s61, 1
      %s63 = scalar_select %p60, %s61, %s62
      %p66 = pneg %p60
      %p67 = scmp.eq.s32.totalorder %s51, 1
      %p68 = por %p66, %p67
      %p69 = scmp.ne.s32.totalorder %s61, %s64
      %p70 = scmp.eq.s32.totalorder %s51, 0
      %p71 = por %p69, %p70
      %p72 = scmp.ne.s32.totalorder %s61, %s64
      %p73 = scmp.eq.s32.totalorder %s56, 1
      %p74 = por %p72, %p73
      %p75 = scmp.ne.s32.totalorder %s64, %s65
      %p76 = scmp.eq.s32.totalorder %s56, 0
      %p77 = por %p75, %p76
      %p78 = scmp.ne.s32.totalorder %s64, %s65
      %p79 = scmp.eq.s32.totalorder %s57, 1
      %p80 = por %p78, %p79
      %p82 = scmp.ne.s32.totalorder %s65, %s81
      %p83 = scmp.eq.s32.totalorder %s57, 0
      %p84 = por %p82, %p83
      %s85 = ssub.s32 %s51, %s58
      %p86 = scmp.eq.s32.totalorder %s85, 0
      %s88 = sadd.s32 %s87, 1
      %s89 = scalar_select %p86, %s87, %s88
      %p92 = pneg %p86
      %p93 = scmp.eq.s32.totalorder %s51, 1
      %p94 = por %p92, %p93
      %p95 = scmp.ne.s32.totalorder %s87, %s90
      %p96 = scmp.eq.s32.totalorder %s51, 0
      %p97 = por %p95, %p96
      %p98 = scmp.ne.s32.totalorder %s87, %s90
      %p99 = scmp.eq.s32.totalorder %s56, 1
      %p100 = por %p98, %p99
      %p101 = scmp.ne.s32.totalorder %s90, %s91
      %p102 = scmp.eq.s32.totalorder %s56, 0
      %p103 = por %p101, %p102
      %p104 = scmp.ne.s32.totalorder %s90, %s91
      %p105 = scmp.eq.s32.totalorder %s57, 1
      %p106 = por %p104, %p105
      %p108 = scmp.ne.s32.totalorder %s91, %s107
      %p109 = scmp.eq.s32.totalorder %s57, 0
      %p110 = por %p108, %p109
      %s112 = sadd.s32 %s111, 1
      %p115 = scmp.eq.s32.totalorder %s51, 1
      %p116 = scmp.ne.s32.totalorder %s111, %s113
      %p117 = scmp.eq.s32.totalorder %s51, 0
      %p118 = por %p116, %p117
      %p119 = scmp.ne.s32.totalorder %s111, %s113
      %p120 = scmp.eq.s32.totalorder %s56, 1
      %p121 = por %p119, %p120
      %p122 = scmp.ne.s32.totalorder %s113, %s114
      %p123 = scmp.eq.s32.totalorder %s56, 0
      %p124 = por %p122, %p123
      %p125 = scmp.ne.s32.totalorder %s113, %s114
      %p126 = scmp.eq.s32.totalorder %s57, 1
      %p127 = por %p125, %p126
      %p129 = scmp.ne.s32.totalorder %s114, %s128
      %p130 = scmp.eq.s32.totalorder %s57, 0
      %p131 = por %p129, %p130
      %s133 = sadd.s32 %s132, 1
      %p136 = scmp.eq.s32.totalorder %s51, 1
      %p137 = scmp.ne.s32.totalorder %s132, %s134
      %p138 = scmp.eq.s32.totalorder %s51, 0
      %p139 = por %p137, %p138
      %p140 = scmp.ne.s32.totalorder %s132, %s134
      %p141 = scmp.eq.s32.totalorder %s56, 1
      %p142 = por %p140, %p141
      %p143 = scmp.ne.s32.totalorder %s134, %s135
      %p144 = scmp.eq.s32.totalorder %s56, 0
      %p145 = por %p143, %p144
      %p146 = scmp.ne.s32.totalorder %s134, %s135
      %p147 = scmp.eq.s32.totalorder %s57, 1
      %p148 = por %p146, %p147
      %p150 = scmp.ne.s32.totalorder %s135, %s149
      %p151 = scmp.eq.s32.totalorder %s57, 0
      %p152 = por %p150, %p151
      %s154 = sadd.s32 %s153, 1
      %p157 = scmp.eq.s32.totalorder %s51, 1
      %p158 = scmp.ne.s32.totalorder %s153, %s155
      %p159 = scmp.eq.s32.totalorder %s51, 0
      %p160 = por %p158, %p159
      %p161 = scmp.ne.s32.totalorder %s153, %s155
      %p162 = scmp.eq.s32.totalorder %s56, 1
      %p163 = por %p161, %p162
      %p164 = scmp.ne.s32.totalorder %s155, %s156
      %p165 = scmp.eq.s32.totalorder %s56, 0
      %p166 = por %p164, %p165
      %p167 = scmp.ne.s32.totalorder %s155, %s156
      %p168 = scmp.eq.s32.totalorder %s57, 1
      %p169 = por %p167, %p168
      %p171 = scmp.ne.s32.totalorder %s156, %s170
      %p172 = scmp.eq.s32.totalorder %s57, 0
      %p173 = por %p171, %p172
      %s175 = sadd.s32 %s174, 1
      %p178 = scmp.eq.s32.totalorder %s51, 1
      %p179 = scmp.ne.s32.totalorder %s174, %s176
      %p180 = scmp.eq.s32.totalorder %s51, 0
      %p181 = por %p179, %p180
      %p182 = scmp.ne.s32.totalorder %s174, %s176
      %p183 = scmp.eq.s32.totalorder %s56, 1
      %p184 = por %p182, %p183
      %p185 = scmp.ne.s32.totalorder %s176, %s177
      %p186 = scmp.eq.s32.totalorder %s56, 0
      %p187 = por %p185, %p186
      %p188 = scmp.ne.s32.totalorder %s176, %s177
      %p189 = scmp.eq.s32.totalorder %s57, 1
      %p190 = por %p188, %p189
      %p192 = scmp.ne.s32.totalorder %s177, %s191
      %p193 = scmp.eq.s32.totalorder %s57, 0
      %p194 = por %p192, %p193
      %s196 = sadd.s32 %s195, 1
      %p199 = scmp.eq.s32.totalorder %s51, 1
      %p200 = scmp.ne.s32.totalorder %s195, %s197
      %p201 = scmp.eq.s32.totalorder %s51, 0
      %p202 = por %p200, %p201
      %p203 = scmp.ne.s32.totalorder %s195, %s197
      %p204 = scmp.eq.s32.totalorder %s56, 1
      %p205 = por %p203, %p204
      %p206 = scmp.ne.s32.totalorder %s197, %s198
      %p207 = scmp.eq.s32.totalorder %s56, 0
      %p208 = por %p206, %p207
      %p209 = scmp.ne.s32.totalorder %s197, %s198
      %p210 = scmp.eq.s32.totalorder %s57, 1
      %p211 = por %p209, %p210
      %p213 = scmp.ne.s32.totalorder %s198, %s212
      %p214 = scmp.eq.s32.totalorder %s57, 0
      %p215 = por %p213, %p214
      %s217 = sadd.s32 %s216, 1
      %p220 = scmp.eq.s32.totalorder %s51, 1
      %p221 = scmp.ne.s32.totalorder %s216, %s218
      %p222 = scmp.eq.s32.totalorder %s51, 0
      %p223 = por %p221, %p222
      %p224 = scmp.ne.s32.totalorder %s216, %s218
      %p225 = scmp.eq.s32.totalorder %s56, 1
      %p226 = por %p224, %p225
      %p227 = scmp.ne.s32.totalorder %s218, %s219
      %p228 = scmp.eq.s32.totalorder %s56, 0
      %p229 = por %p227, %p228
      %p230 = scmp.ne.s32.totalorder %s218, %s219
      %p231 = scmp.eq.s32.totalorder %s57, 1
      %p232 = por %p230, %p231
      %p234 = scmp.ne.s32.totalorder %s219, %s233
      %p235 = scmp.eq.s32.totalorder %s57, 0
      %p236 = por %p234, %p235
      %s238 = sadd.s32 %s237, 1
      %p241 = scmp.eq.s32.totalorder %s51, 1
      %p242 = scmp.ne.s32.totalorder %s237, %s239
      %p243 = scmp.eq.s32.totalorder %s51, 0
      %p244 = por %p242, %p243
      %p245 = scmp.ne.s32.totalorder %s237, %s239
      %p246 = scmp.eq.s32.totalorder %s56, 1
      %p247 = por %p245, %p246
      %p248 = scmp.ne.s32.totalorder %s239, %s240
      %p249 = scmp.eq.s32.totalorder %s56, 0
      %p250 = por %p248, %p249
      %p251 = scmp.ne.s32.totalorder %s239, %s240
      %p252 = scmp.eq.s32.totalorder %s57, 1
      %p253 = por %p251, %p252
      %p255 = scmp.ne.s32.totalorder %s240, %s254
      %p256 = scmp.eq.s32.totalorder %s57, 0
      %p257 = por %p255, %p256
      %s259 = sadd.s32 %s258, 1
      %p262 = scmp.eq.s32.totalorder %s51, 1
      %p263 = scmp.ne.s32.totalorder %s258, %s260
      %p264 = scmp.eq.s32.totalorder %s51, 0
      %p265 = por %p263, %p264
      %p266 = scmp.ne.s32.totalorder %s258, %s260
      %p267 = scmp.eq.s32.totalorder %s56, 1
      %p268 = por %p266, %p267
      %p269 = scmp.ne.s32.totalorder %s260, %s261
      %p270 = scmp.eq.s32.totalorder %s56, 0
      %p271 = por %p269, %p270
      %p272 = scmp.ne.s32.totalorder %s260, %s261
      %p273 = scmp.eq.s32.totalorder %s57, 1
      %p274 = por %p272, %p273
      %p276 = scmp.ne.s32.totalorder %s261, %s275
      %p277 = scmp.eq.s32.totalorder %s57, 0
      %p278 = por %p276, %p277
      %s280 = sadd.s32 %s279, 1
      %p283 = scmp.eq.s32.totalorder %s51, 1
      %p284 = scmp.ne.s32.totalorder %s279, %s281
      %p285 = scmp.eq.s32.totalorder %s51, 0
      %p286 = por %p284, %p285
      %p287 = scmp.ne.s32.totalorder %s279, %s281
      %p288 = scmp.eq.s32.totalorder %s56, 1
      %p289 = por %p287, %p288
      %p290 = scmp.ne.s32.totalorder %s281, %s282
      %p291 = scmp.eq.s32.totalorder %s56, 0
      %p292 = por %p290, %p291
      %p293 = scmp.ne.s32.totalorder %s281, %s282
      %p294 = scmp.eq.s32.totalorder %s57, 1
      %p295 = por %p293, %p294
      %p297 = scmp.ne.s32.totalorder %s282, %s296
      %p298 = scmp.eq.s32.totalorder %s57, 0
      %p299 = por %p297, %p298
      %s301 = sadd.s32 %s300, 1
      %p304 = scmp.eq.s32.totalorder %s51, 1
      %p305 = scmp.ne.s32.totalorder %s300, %s302
      %p306 = scmp.eq.s32.totalorder %s51, 0
      %p307 = por %p305, %p306
      %p308 = scmp.ne.s32.totalorder %s300, %s302
      %p309 = scmp.eq.s32.totalorder %s56, 1
      %p310 = por %p308, %p309
      %p311 = scmp.ne.s32.totalorder %s302, %s303
      %p312 = scmp.eq.s32.totalorder %s56, 0
      %p313 = por %p311, %p312
      %p314 = scmp.ne.s32.totalorder %s302, %s303
      %p315 = scmp.eq.s32.totalorder %s57, 1
      %p316 = por %p314, %p315
      %p318 = scmp.ne.s32.totalorder %s303, %s317
      %p319 = scmp.eq.s32.totalorder %s57, 0
      %p320 = por %p318, %p319
      %s322 = sadd.s32 %s321, 1
      %p325 = scmp.eq.s32.totalorder %s51, 1
      %p326 = scmp.ne.s32.totalorder %s321, %s323
      %p327 = scmp.eq.s32.totalorder %s51, 0
      %p328 = por %p326, %p327
      %p329 = scmp.ne.s32.totalorder %s321, %s323
      %p330 = scmp.eq.s32.totalorder %s56, 1
      %p331 = por %p329, %p330
      %p332 = scmp.ne.s32.totalorder %s323, %s324
      %p333 = scmp.eq.s32.totalorder %s56, 0
      %p334 = por %p332, %p333
      %p335 = scmp.ne.s32.totalorder %s323, %s324
      %p336 = scmp.eq.s32.totalorder %s57, 1
      %p337 = por %p335, %p336
      %p339 = scmp.ne.s32.totalorder %s324, %s338
      %p340 = scmp.eq.s32.totalorder %s57, 0
      %p341 = por %p339, %p340
      %s343 = sadd.s32 %s342, 1
      %p346 = scmp.eq.s32.totalorder %s51, 1
      %p347 = scmp.ne.s32.totalorder %s342, %s344
      %p348 = scmp.eq.s32.totalorder %s51, 0
      %p349 = por %p347, %p348
      %p350 = scmp.ne.s32.totalorder %s342, %s344
      %p351 = scmp.eq.s32.totalorder %s56, 1
      %p352 = por %p350, %p351
      %p353 = scmp.ne.s32.totalorder %s344, %s345
      %p354 = scmp.eq.s32.totalorder %s56, 0
      %p355 = por %p353, %p354
      %p356 = scmp.ne.s32.totalorder %s344, %s345
      %p357 = scmp.eq.s32.totalorder %s57, 1
      %p358 = por %p356, %p357
      %p360 = scmp.ne.s32.totalorder %s345, %s359
      %p361 = scmp.eq.s32.totalorder %s57, 0
      %p362 = por %p360, %p361
      %s364 = sadd.s32 %s363, 1
      %p367 = scmp.eq.s32.totalorder %s51, 1
      %p368 = scmp.ne.s32.totalorder %s363, %s365
      %p369 = scmp.eq.s32.totalorder %s51, 0
      %p370 = por %p368, %p369
      %p371 = scmp.ne.s32.totalorder %s363, %s365
      %p372 = scmp.eq.s32.totalorder %s56, 1
      %p373 = por %p371, %p372
      %p374 = scmp.ne.s32.totalorder %s365, %s366
      %p375 = scmp.eq.s32.totalorder %s56, 0
      %p376 = por %p374, %p375
      %p377 = scmp.ne.s32.totalorder %s365, %s366
      %p378 = scmp.eq.s32.totalorder %s57, 1
      %p379 = por %p377, %p378
      %p381 = scmp.ne.s32.totalorder %s366, %s380
      %p382 = scmp.eq.s32.totalorder %s57, 0
      %p383 = por %p381, %p382
      %s385 = sadd.s32 %s384, 1
      %p388 = scmp.eq.s32.totalorder %s51, 1
      %p389 = scmp.ne.s32.totalorder %s384, %s386
      %p390 = scmp.eq.s32.totalorder %s51, 0
      %p391 = por %p389, %p390
      %p392 = scmp.ne.s32.totalorder %s384, %s386
      %p393 = scmp.eq.s32.totalorder %s56, 1
      %p394 = por %p392, %p393
      %p395 = scmp.ne.s32.totalorder %s386, %s387
      %p396 = scmp.eq.s32.totalorder %s56, 0
      %p397 = por %p395, %p396
      %p398 = scmp.ne.s32.totalorder %s386, %s387
      %p399 = scmp.eq.s32.totalorder %s57, 1
      %p400 = por %p398, %p399
      %p402 = scmp.ne.s32.totalorder %s387, %s401
      %p403 = scmp.eq.s32.totalorder %s57, 0
      %p404 = por %p402, %p403
      %s406 = sadd.s32 %s405, 1
      %p409 = scmp.eq.s32.totalorder %s51, 1
      %p410 = scmp.ne.s32.totalorder %s405, %s407
      %p411 = scmp.eq.s32.totalorder %s51, 0
      %p412 = por %p410, %p411
      %p413 = scmp.ne.s32.totalorder %s405, %s407
      %p414 = scmp.eq.s32.totalorder %s56, 1
      %p415 = por %p413, %p414
      %p416 = scmp.ne.s32.totalorder %s407, %s408
      %p417 = scmp.eq.s32.totalorder %s56, 0
      %p418 = por %p416, %p417
      %p419 = scmp.ne.s32.totalorder %s407, %s408
      %p420 = scmp.eq.s32.totalorder %s57, 1
      %p421 = por %p419, %p420
      %p423 = scmp.ne.s32.totalorder %s408, %s422
      %p424 = scmp.eq.s32.totalorder %s57, 0
      %p425 = por %p423, %p424
      %s427 = sadd.s32 %s426, 1
      %p430 = scmp.eq.s32.totalorder %s51, 1
      %p431 = scmp.ne.s32.totalorder %s426, %s428
      %p432 = scmp.eq.s32.totalorder %s51, 0
      %p433 = por %p431, %p432
      %p434 = scmp.ne.s32.totalorder %s426, %s428
      %p435 = scmp.eq.s32.totalorder %s56, 1
      %p436 = por %p434, %p435
      %p437 = scmp.ne.s32.totalorder %s428, %s429
      %p438 = scmp.eq.s32.totalorder %s56, 0
      %p439 = por %p437, %p438
      %p440 = scmp.ne.s32.totalorder %s428, %s429
      %p441 = scmp.eq.s32.totalorder %s57, 1
      %p442 = por %p440, %p441
      %p444 = scmp.ne.s32.totalorder %s429, %s443
      %p445 = scmp.eq.s32.totalorder %s57, 0
      %p446 = por %p444, %p445
      %s448 = sadd.s32 %s447, 1
      %p451 = scmp.eq.s32.totalorder %s51, 1
      %p452 = scmp.ne.s32.totalorder %s447, %s449
      %p453 = scmp.eq.s32.totalorder %s51, 0
      %p454 = por %p452, %p453
      %p455 = scmp.ne.s32.totalorder %s447, %s449
      %p456 = scmp.eq.s32.totalorder %s56, 1
      %p457 = por %p455, %p456
      %p458 = scmp.ne.s32.totalorder %s449, %s450
      %p459 = scmp.eq.s32.totalorder %s56, 0
      %p460 = por %p458, %p459
      %p461 = scmp.ne.s32.totalorder %s449, %s450
      %p462 = scmp.eq.s32.totalorder %s57, 1
      %p463 = por %p461, %p462
      %p465 = scmp.ne.s32.totalorder %s450, %s464
      %p466 = scmp.eq.s32.totalorder %s57, 0
      %p467 = por %p465, %p466
      %s468 = ssub.s32 %s51, %s58
      %p469 = scmp.eq.s32.totalorder %s468, 0
      %s471 = sadd.s32 %s470, 1
      %s472 = scalar_select %p469, %s470, %s471
      %p475 = pneg %p469
      %p476 = scmp.eq.s32.totalorder %s51, 1
      %p477 = por %p475, %p476
      %p478 = scmp.ne.s32.totalorder %s470, %s473
      %p479 = scmp.eq.s32.totalorder %s51, 0
      %p480 = por %p478, %p479
      %p481 = scmp.ne.s32.totalorder %s470, %s473
      %p482 = scmp.eq.s32.totalorder %s56, 1
      %p483 = por %p481, %p482
      %p484 = scmp.ne.s32.totalorder %s473, %s474
      %p485 = scmp.eq.s32.totalorder %s56, 0
      %p486 = por %p484, %p485
      %p487 = scmp.ne.s32.totalorder %s473, %s474
      %p488 = scmp.eq.s32.totalorder %s57, 1
      %p489 = por %p487, %p488
      %p491 = scmp.ne.s32.totalorder %s474, %s490
      %p492 = scmp.eq.s32.totalorder %s57, 0
      %p493 = por %p491, %p492
      %s494 = ssub.s32 %s51, %s58
      %p495 = scmp.eq.s32.totalorder %s494, 0
      %s497 = sadd.s32 %s496, 1
      %s498 = scalar_select %p495, %s496, %s497
      %p501 = pneg %p495
      %p502 = scmp.eq.s32.totalorder %s51, 1
      %p503 = por %p501, %p502
      %p504 = scmp.ne.s32.totalorder %s496, %s499
      %p505 = scmp.eq.s32.totalorder %s51, 0
      %p506 = por %p504, %p505
      %p507 = scmp.ne.s32.totalorder %s496, %s499
      %p508 = scmp.eq.s32.totalorder %s56, 1
      %p509 = por %p507, %p508
      %p510 = scmp.ne.s32.totalorder %s499, %s500
      %p511 = scmp.eq.s32.totalorder %s56, 0
      %p512 = por %p510, %p511
      %p513 = scmp.ne.s32.totalorder %s499, %s500
      %p514 = scmp.eq.s32.totalorder %s57, 1
      %p515 = por %p513, %p514
      %p517 = scmp.ne.s32.totalorder %s500, %s516
      %p518 = scmp.eq.s32.totalorder %s57, 0
      %p519 = por %p517, %p518
      %p520 = scmp.le.s32.totalorder 1, %s51
      %p521 = scmp.lt.s32.totalorder %s51, 3
      %p522 = pnand %p520, %p521
      %p523 = pneg %p522
      // Predicated region
      $region9: #{tpu_custom_call.1} parent=5 // pred_check
        _
      $region10: #{tpu_custom_call.1} parent=5 // pred_check_branch
        %525 = sbr.rel (%p522) target = $region12
      $region11: #{tpu_custom_call.1} parent=5 // pred_region
        %s526 = ssub.s32 %s51, 1
        // Predicated region
        $region13: #{tpu_custom_call.1} parent=11 // pred_check
          %p527 = pneg %p124
        $region14: #{tpu_custom_call.1} parent=11 // pred_check_branch
          %529 = sbr.rel (%p527) target = $region16
        $region15: #{tpu_custom_call.1} parent=11 // pred_region
          %s531 = ssub.s32 128, 128
          %532 = vsyncadd [#allocation9], %s531
          %s533 = sshll.u32 [#allocation10], 4
          %s534 = int_to_ptr.vmem [resolvable:$true] %s533
          %539 = dma.hbm_to_vmem [thread:$0]  %s3, 128, %s534, [#allocation9], 64, 64, 4
        $region16: #{tpu_custom_call.1} parent=11 // pred_fallthru
          _
        // Predicated region
        $region17: #{tpu_custom_call.1} parent=11 // pred_check
          %p540 = pneg %p145
        $region18: #{tpu_custom_call.1} parent=11 // pred_check_branch
          %542 = sbr.rel (%p540) target = $region20
        $region19: #{tpu_custom_call.1} parent=11 // pred_region
          %s544 = ssub.s32 16, 16
          %545 = vsyncadd [#allocation12], %s544
          %s547 = sshll.u32 [#allocation11], 4
          %s548 = int_to_ptr.vmem [resolvable:$true] %s547
          %550 = dma.hbm_to_vmem [thread:$0]  %s4, 16, %s548, [#allocation12]
        $region20: #{tpu_custom_call.1} parent=11 // pred_fallthru
          _
        // Predicated region
        $region21: #{tpu_custom_call.1} parent=11 // pred_check
          %p551 = pneg %p166
        $region22: #{tpu_custom_call.1} parent=11 // pred_check_branch
          %553 = sbr.rel (%p551) target = $region24
        $region23: #{tpu_custom_call.1} parent=11 // pred_region
          %s555 = ssub.s32 128, 128
          %556 = vsyncadd [#allocation12], %s555
          %s557 = sshll.u32 [#allocation13], 4
          %s558 = int_to_ptr.vmem [resolvable:$true] %s557
          %563 = dma.hbm_to_vmem [thread:$0]  %s5, 128, %s558, [#allocation12], 64, 64, 4
        $region24: #{tpu_custom_call.1} parent=11 // pred_fallthru
          _
        // Predicated region
        $region25: #{tpu_custom_call.1} parent=11 // pred_check
          %p564 = pneg %p187
        $region26: #{tpu_custom_call.1} parent=11 // pred_check_branch
          %566 = sbr.rel (%p564) target = $region28
        $region27: #{tpu_custom_call.1} parent=11 // pred_region
          %s568 = ssub.s32 16, 16
          %569 = vsyncadd [#allocation15], %s568
          %s571 = sshll.u32 [#allocation14], 4
          %s572 = int_to_ptr.vmem [resolvable:$true] %s571
          %574 = dma.hbm_to_vmem [thread:$0]  %s6, 16, %s572, [#allocation15]
        $region28: #{tpu_custom_call.1} parent=11 // pred_fallthru
          _
        // Predicated region
        $region29: #{tpu_custom_call.1} parent=11 // pred_check
          %p575 = pneg %p208
        $region30: #{tpu_custom_call.1} parent=11 // pred_check_branch
          %577 = sbr.rel (%p575) target = $region32
        $region31: #{tpu_custom_call.1} parent=11 // pred_region
          _
        $region32: #{tpu_custom_call.1} parent=11 // pred_fallthru
          _
        // Predicated region
        $region33: #{tpu_custom_call.1} parent=11 // pred_check
          %p578 = pneg %p229
        $region34: #{tpu_custom_call.1} parent=11 // pred_check_branch
          %580 = sbr.rel (%p578) target = $region36
        $region35: #{tpu_custom_call.1} parent=11 // pred_region
          %s582 = ssub.s32 16, 16
          %583 = vsyncadd [#allocation15], %s582
          %s585 = sshll.u32 [#allocation16], 4
          %s586 = int_to_ptr.vmem [resolvable:$true] %s585
          %588 = dma.hbm_to_vmem [thread:$0]  %s8, 16, %s586, [#allocation15]
        $region36: #{tpu_custom_call.1} parent=11 // pred_fallthru
          _
        // Predicated region
        $region37: #{tpu_custom_call.1} parent=11 // pred_check
          %p589 = pneg %p250
        $region38: #{tpu_custom_call.1} parent=11 // pred_check_branch
          %591 = sbr.rel (%p589) target = $region40
        $region39: #{tpu_custom_call.1} parent=11 // pred_region
          %s593 = ssub.s32 16, 16
          %594 = vsyncadd [#allocation18], %s593
          %s596 = sshll.u32 [#allocation17], 4
          %s597 = int_to_ptr.vmem [resolvable:$true] %s596
          %599 = dma.hbm_to_vmem [thread:$0]  %s9, 16, %s597, [#allocation18]
        $region40: #{tpu_custom_call.1} parent=11 // pred_fallthru
          _
        // Predicated region
        $region41: #{tpu_custom_call.1} parent=11 // pred_check
          %p600 = pneg %p271
        $region42: #{tpu_custom_call.1} parent=11 // pred_check_branch
          %602 = sbr.rel (%p600) target = $region44
        $region43: #{tpu_custom_call.1} parent=11 // pred_region
          _
        $region44: #{tpu_custom_call.1} parent=11 // pred_fallthru
          _
        // Predicated region
        $region45: #{tpu_custom_call.1} parent=11 // pred_check
          %p603 = pneg %p292
        $region46: #{tpu_custom_call.1} parent=11 // pred_check_branch
          %605 = sbr.rel (%p603) target = $region48
        $region47: #{tpu_custom_call.1} parent=11 // pred_region
          _
        $region48: #{tpu_custom_call.1} parent=11 // pred_fallthru
          _
        // Predicated region
        $region49: #{tpu_custom_call.1} parent=11 // pred_check
          %p606 = pneg %p313
        $region50: #{tpu_custom_call.1} parent=11 // pred_check_branch
          %608 = sbr.rel (%p606) target = $region52
        $region51: #{tpu_custom_call.1} parent=11 // pred_region
          %s610 = ssub.s32 256, 256
          %611 = vsyncadd [#allocation18], %s610
          %s612 = sshll.u32 [#allocation19], 4
          %s613 = int_to_ptr.vmem [resolvable:$true] %s612
          %618 = dma.hbm_to_vmem [thread:$0]  %s12, 256, %s613, [#allocation18], 64, 64, 4
        $region52: #{tpu_custom_call.1} parent=11 // pred_fallthru
          _
        // Predicated region
        $region53: #{tpu_custom_call.1} parent=11 // pred_check
          %p619 = pneg %p334
        $region54: #{tpu_custom_call.1} parent=11 // pred_check_branch
          %621 = sbr.rel (%p619) target = $region56
        $region55: #{tpu_custom_call.1} parent=11 // pred_region
          %s623 = ssub.s32 16, 16
          %624 = vsyncadd [#allocation21], %s623
          %s626 = sshll.u32 [#allocation20], 4
          %s627 = int_to_ptr.vmem [resolvable:$true] %s626
          %629 = dma.hbm_to_vmem [thread:$0]  %s13, 16, %s627, [#allocation21]
        $region56: #{tpu_custom_call.1} parent=11 // pred_fallthru
          _
        // Predicated region
        $region57: #{tpu_custom_call.1} parent=11 // pred_check
          %p630 = pneg %p355
        $region58: #{tpu_custom_call.1} parent=11 // pred_check_branch
          %632 = sbr.rel (%p630) target = $region60
        $region59: #{tpu_custom_call.1} parent=11 // pred_region
          _
        $region60: #{tpu_custom_call.1} parent=11 // pred_fallthru
          _
        // Predicated region
        $region61: #{tpu_custom_call.1} parent=11 // pred_check
          %p633 = pneg %p376
        $region62: #{tpu_custom_call.1} parent=11 // pred_check_branch
          %635 = sbr.rel (%p633) target = $region64
        $region63: #{tpu_custom_call.1} parent=11 // pred_region
          %s637 = ssub.s32 256, 256
          %638 = vsyncadd [#allocation21], %s637
          %s639 = sshll.u32 [#allocation22], 4
          %s640 = int_to_ptr.vmem [resolvable:$true] %s639
          %645 = dma.hbm_to_vmem [thread:$0]  %s15, 256, %s640, [#allocation21], 64, 64, 4
        $region64: #{tpu_custom_call.1} parent=11 // pred_fallthru
          _
        // Predicated region
        $region65: #{tpu_custom_call.1} parent=11 // pred_check
          %p646 = pneg %p397
        $region66: #{tpu_custom_call.1} parent=11 // pred_check_branch
          %648 = sbr.rel (%p646) target = $region68
        $region67: #{tpu_custom_call.1} parent=11 // pred_region
          %s650 = ssub.s32 16, 16
          %651 = vsyncadd [#allocation24], %s650
          %s653 = sshll.u32 [#allocation23], 4
          %s654 = int_to_ptr.vmem [resolvable:$true] %s653
          %656 = dma.hbm_to_vmem [thread:$0]  %s16, 16, %s654, [#allocation24]
        $region68: #{tpu_custom_call.1} parent=11 // pred_fallthru
          _
        // Predicated region
        $region69: #{tpu_custom_call.1} parent=11 // pred_check
          %p657 = pneg %p418
        $region70: #{tpu_custom_call.1} parent=11 // pred_check_branch
          %659 = sbr.rel (%p657) target = $region72
        $region71: #{tpu_custom_call.1} parent=11 // pred_region
          %s661 = ssub.s32 16, 16
          %662 = vsyncadd [#allocation24], %s661
          %s664 = sshll.u32 [#allocation25], 4
          %s665 = int_to_ptr.vmem [resolvable:$true] %s664
          %667 = dma.hbm_to_vmem [thread:$0]  %s17, 16, %s665, [#allocation24]
        $region72: #{tpu_custom_call.1} parent=11 // pred_fallthru
          _
        // Predicated region
        $region73: #{tpu_custom_call.1} parent=11 // pred_check
          %p668 = pneg %p439
        $region74: #{tpu_custom_call.1} parent=11 // pred_check_branch
          %670 = sbr.rel (%p668) target = $region76
        $region75: #{tpu_custom_call.1} parent=11 // pred_region
          _
        $region76: #{tpu_custom_call.1} parent=11 // pred_fallthru
          _
        // Predicated region
        $region77: #{tpu_custom_call.1} parent=11 // pred_check
          %p671 = pneg %p460
        $region78: #{tpu_custom_call.1} parent=11 // pred_check_branch
          %673 = sbr.rel (%p671) target = $region80
        $region79: #{tpu_custom_call.1} parent=11 // pred_region
          _
        $region80: #{tpu_custom_call.1} parent=11 // pred_fallthru
          _
      $region12: #{tpu_custom_call.1} parent=5 // pred_fallthru
        _
      %p674 = scmp.lt.s32.totalorder %s51, 2
      // Predicated region
      $region81: #{tpu_custom_call.1} parent=5 // pred_check
        %p675 = pneg %p674
      $region82: #{tpu_custom_call.1} parent=5 // pred_check_branch
        %677 = sbr.rel (%p675) target = $region84
      $region83: #{tpu_custom_call.1} parent=5 // pred_region
        // Predicated region
        $region85: #{tpu_custom_call.1} parent=83 // pred_check
          %p678 = pneg %p71
        $region86: #{tpu_custom_call.1} parent=83 // pred_check_branch
          %680 = sbr.rel (%p678) target = $region88
        $region87: #{tpu_custom_call.1} parent=83 // pred_region
          %s681 = sand.u32 %s61, 1
          %s682 = scalar_lea.sflag [#allocation6], %s681
          %s683 = sand.u32 %s61, 1
          %s684 = smul.addr %s683, 64
          %s685 = scalar_lea.vmem [#allocation5], %s684
          %s686 = smul.u32 2, %s51
          %s688 = ssub.s32 1024, 1024
          %689 = vsyncadd %s682, %s688
          %s690 = smul.addr %s686, 8
          %s691 = smul.addr %s690, 64
          %s692 = scalar_lea.hbm %s1, %s691
          %s693 = sshll.u32 %s685, 4
          %s694 = int_to_ptr.vmem [resolvable:$true] %s693
          %699 = dma.hbm_to_vmem [thread:$0]  %s692, 1024, %s694, %s682, 64, 64, 4
        $region88: #{tpu_custom_call.1} parent=83 // pred_fallthru
          _
        // Predicated region
        $region89: #{tpu_custom_call.1} parent=83 // pred_check
          %p700 = pneg %p97
        $region90: #{tpu_custom_call.1} parent=83 // pred_check_branch
          %702 = sbr.rel (%p700) target = $region92
        $region91: #{tpu_custom_call.1} parent=83 // pred_region
          %s703 = sand.u32 %s51, 1
          %s704 = scalar_lea.sflag [#allocation9], %s703
          %s705 = sand.u32 %s87, 1
          %s706 = smul.addr %s705, 8
          %s707 = scalar_lea.vmem [#allocation8], %s706
          %s708 = smul.u32 2, %s51
          %s710 = ssub.s32 128, 128
          %711 = vsyncadd %s704, %s710
          %s712 = smul.addr %s708, 64
          %s713 = scalar_lea.hbm %s2, %s712
          %s714 = sshll.u32 %s707, 4
          %s715 = int_to_ptr.vmem [resolvable:$true] %s714
          %720 = dma.hbm_to_vmem [thread:$0]  %s713, 128, %s715, %s704, 64, 64, 4
        $region92: #{tpu_custom_call.1} parent=83 // pred_fallthru
          _
      $region84: #{tpu_custom_call.1} parent=5 // pred_fallthru
        _
      %p721 = scmp.le.s32.totalorder 1, %s51
      %p722 = scmp.lt.s32.totalorder %s51, 3
      %p723 = pnand %p721, %p722
      %p724 = pneg %p723
      // Predicated region
      $region93: #{tpu_custom_call.1} parent=5 // pred_check
        _
      $region94: #{tpu_custom_call.1} parent=5 // pred_check_branch
        %726 = sbr.rel (%p723) target = $region96
      $region95: #{tpu_custom_call.1} parent=5 // pred_region
        %s727 = ssub.s32 %s51, 1
        %s728 = sand.u32 %s64, 1
        %s729 = scalar_lea.sflag [#allocation6], %s728
        %s730 = sand.u32 %s64, 1
        %s731 = smul.addr %s730, 64
        %s732 = scalar_lea.vmem [#allocation5], %s731
        // Predicated region
        $region97: #{tpu_custom_call.1} parent=95 // pred_check
          %p733 = pneg %p77
        $region98: #{tpu_custom_call.1} parent=95 // pred_check_branch
          %735 = sbr.rel (%p733) target = $region100
        $region99: #{tpu_custom_call.1} parent=95 // pred_region
          %736 = dma.done %s729, 1024
        $region100: #{tpu_custom_call.1} parent=95 // pred_fallthru
          _
        %s737 = sand.u32 %s56, 1
        %s738 = scalar_lea.sflag [#allocation9], %s737
        %s739 = sand.u32 %s90, 1
        %s740 = smul.addr %s739, 8
        %s741 = scalar_lea.vmem [#allocation8], %s740
        // Predicated region
        $region101: #{tpu_custom_call.1} parent=95 // pred_check
          %p742 = pneg %p103
        $region102: #{tpu_custom_call.1} parent=95 // pred_check_branch
          %744 = sbr.rel (%p742) target = $region104
        $region103: #{tpu_custom_call.1} parent=95 // pred_region
          %745 = dma.done %s738, 128
        $region104: #{tpu_custom_call.1} parent=95 // pred_fallthru
          _
        // Predicated region
        $region105: #{tpu_custom_call.1} parent=95 // pred_check
          %p746 = pneg %p124
        $region106: #{tpu_custom_call.1} parent=95 // pred_check_branch
          %748 = sbr.rel (%p746) target = $region108
        $region107: #{tpu_custom_call.1} parent=95 // pred_region
          %749 = dma.done [#allocation9], 128
        $region108: #{tpu_custom_call.1} parent=95 // pred_fallthru
          _
        // Predicated region
        $region109: #{tpu_custom_call.1} parent=95 // pred_check
          %p750 = pneg %p145
        $region110: #{tpu_custom_call.1} parent=95 // pred_check_branch
          %752 = sbr.rel (%p750) target = $region112
        $region111: #{tpu_custom_call.1} parent=95 // pred_region
          %753 = dma.done [#allocation12], 16
        $region112: #{tpu_custom_call.1} parent=95 // pred_fallthru
          _
        // Predicated region
        $region113: #{tpu_custom_call.1} parent=95 // pred_check
          %p754 = pneg %p166
        $region114: #{tpu_custom_call.1} parent=95 // pred_check_branch
          %756 = sbr.rel (%p754) target = $region116
        $region115: #{tpu_custom_call.1} parent=95 // pred_region
          %757 = dma.done [#allocation12], 128
        $region116: #{tpu_custom_call.1} parent=95 // pred_fallthru
          _
        // Predicated region
        $region117: #{tpu_custom_call.1} parent=95 // pred_check
          %p758 = pneg %p187
        $region118: #{tpu_custom_call.1} parent=95 // pred_check_branch
          %760 = sbr.rel (%p758) target = $region120
        $region119: #{tpu_custom_call.1} parent=95 // pred_region
          %761 = dma.done [#allocation15], 16
        $region120: #{tpu_custom_call.1} parent=95 // pred_fallthru
          _
        // Predicated region
        $region121: #{tpu_custom_call.1} parent=95 // pred_check
          %p762 = pneg %p229
        $region122: #{tpu_custom_call.1} parent=95 // pred_check_branch
          %764 = sbr.rel (%p762) target = $region124
        $region123: #{tpu_custom_call.1} parent=95 // pred_region
          %765 = dma.done [#allocation15], 16
        $region124: #{tpu_custom_call.1} parent=95 // pred_fallthru
          _
        // Predicated region
        $region125: #{tpu_custom_call.1} parent=95 // pred_check
          %p766 = pneg %p250
        $region126: #{tpu_custom_call.1} parent=95 // pred_check_branch
          %768 = sbr.rel (%p766) target = $region128
        $region127: #{tpu_custom_call.1} parent=95 // pred_region
          %769 = dma.done [#allocation18], 16
        $region128: #{tpu_custom_call.1} parent=95 // pred_fallthru
          _
        // Predicated region
        $region129: #{tpu_custom_call.1} parent=95 // pred_check
          %p770 = pneg %p313
        $region130: #{tpu_custom_call.1} parent=95 // pred_check_branch
          %772 = sbr.rel (%p770) target = $region132
        $region131: #{tpu_custom_call.1} parent=95 // pred_region
          %773 = dma.done [#allocation18], 256
        $region132: #{tpu_custom_call.1} parent=95 // pred_fallthru
          _
        // Predicated region
        $region133: #{tpu_custom_call.1} parent=95 // pred_check
          %p774 = pneg %p334
        $region134: #{tpu_custom_call.1} parent=95 // pred_check_branch
          %776 = sbr.rel (%p774) target = $region136
        $region135: #{tpu_custom_call.1} parent=95 // pred_region
          %777 = dma.done [#allocation21], 16
        $region136: #{tpu_custom_call.1} parent=95 // pred_fallthru
          _
        // Predicated region
        $region137: #{tpu_custom_call.1} parent=95 // pred_check
          %p778 = pneg %p376
        $region138: #{tpu_custom_call.1} parent=95 // pred_check_branch
          %780 = sbr.rel (%p778) target = $region140
        $region139: #{tpu_custom_call.1} parent=95 // pred_region
          %781 = dma.done [#allocation21], 256
        $region140: #{tpu_custom_call.1} parent=95 // pred_fallthru
          _
        // Predicated region
        $region141: #{tpu_custom_call.1} parent=95 // pred_check
          %p782 = pneg %p397
        $region142: #{tpu_custom_call.1} parent=95 // pred_check_branch
          %784 = sbr.rel (%p782) target = $region144
        $region143: #{tpu_custom_call.1} parent=95 // pred_region
          %785 = dma.done [#allocation24], 16
        $region144: #{tpu_custom_call.1} parent=95 // pred_fallthru
          _
        // Predicated region
        $region145: #{tpu_custom_call.1} parent=95 // pred_check
          %p786 = pneg %p418
        $region146: #{tpu_custom_call.1} parent=95 // pred_check_branch
          %788 = sbr.rel (%p786) target = $region148
        $region147: #{tpu_custom_call.1} parent=95 // pred_region
          %789 = dma.done [#allocation24], 16
        $region148: #{tpu_custom_call.1} parent=95 // pred_fallthru
          _
        %s790 = sand.u32 %s64, 1
        %s791 = scalar_lea.sflag [#allocation6], %s790
        %s792 = sand.u32 %s64, 1
        %s793 = smul.addr %s792, 64
        %s794 = scalar_lea.vmem [#allocation5], %s793
        %p795 = pneg %p77
        %p796 = pneg %p74
        %s797 = sand.u32 %s56, 1
        %s798 = scalar_lea.sflag [#allocation9], %s797
        %s799 = sand.u32 %s90, 1
        %s800 = smul.addr %s799, 8
        %s801 = scalar_lea.vmem [#allocation8], %s800
        %p802 = pneg %p103
        %p803 = pneg %p100
        %p804 = pneg %p124
        %p805 = pneg %p121
        %p806 = pneg %p145
        %p807 = pneg %p142
        %p808 = pneg %p166
        %p809 = pneg %p163
        %p810 = pneg %p187
        %p811 = pneg %p184
        %p812 = pneg %p208
        %p813 = pneg %p205
        %p814 = pneg %p229
        %p815 = pneg %p226
        %p816 = pneg %p250
        %p817 = pneg %p247
        %p818 = pneg %p271
        %p819 = pneg %p268
        %p820 = pneg %p292
        %p821 = pneg %p289
        %p822 = pneg %p313
        %p823 = pneg %p310
        %p824 = pneg %p334
        %p825 = pneg %p331
        %p826 = pneg %p355
        %p827 = pneg %p352
        %p828 = pneg %p376
        %p829 = pneg %p373
        %p830 = pneg %p397
        %p831 = pneg %p394
        %p832 = pneg %p418
        %p833 = pneg %p415
        %p834 = pneg %p439
        %p835 = pneg %p436
        %p836 = pneg %p460
        %p837 = pneg %p457
        %p838 = pneg %p486
        %p839 = pneg %p483
        %s840 = sand.u32 %s473, 1
        %s841 = scalar_lea.sflag [#allocation7], %s840
        %s842 = sand.u32 %s473, 1
        %s843 = smul.addr %s842, 16
        %s844 = scalar_lea.vmem [#allocation26], %s843
        %p845 = pneg %p512
        %p846 = pneg %p509
        %s847 = sand.u32 %s499, 1
        %s848 = scalar_lea.sflag [#allocation28], %s847
        %s849 = sand.u32 %s499, 1
        %s850 = smul.addr %s849, 16
        %s851 = scalar_lea.vmem [#allocation27], %s850
        %s852 = smul.u32 2, %s56
        %s853 = smul.u32 2, %s56
        %s854 = smul.u32 2, %s56
        %s855 = smul.u32 2, %s56
        %v857 = vlaneseq
        %v858 = vand.u32 %v857, 127
        %s859 = smul.u32 %s56, 2
        %s860 = sld [smem:[#allocation3 + %s859]]
        %v861 = vstv %s860
        %vm862 = vcmp.lt.s32.totalorder %v858, %v861
        %v863 = vsel %vm862, 1, 0
        %v864 = vcvt.s32.f32 %v863
        %s865 = sadd.s32 %s859, 1
        %s866 = sld [smem:[#allocation3 + %s865]]
        %v867 = vstv %s866
        %vm868 = vcmp.lt.s32.totalorder %v858, %v867
        %v869 = vsel %vm868, 1, 0
        %v870 = vcvt.s32.f32 %v869
        %vm871 = vcmask 1040384
        %v872 = vsel %vm871, %v864, %v870
        %v873 = vlaneseq
        %v874 = vshrl.u32 %v873, 7
        %v875 = vsub.s32 0, %v874
        %v876 = vrot.slane %v872, %v875
        %878 = vbcast.lane.b32.xlu0 %v876, 256
        %v879 = vpop.permute.xlu0 %878
        %v880 = vlaneseq
        %v881 = vshrl.u32 %v880, 7
        %v882 = vsub.s32 1, %v881
        %v883 = vrot.slane %v872, %v882
        %885 = vbcast.lane.b32.xlu0 %v883, 256
        %v886 = vpop.permute.xlu0 %885
        %v889 = vunpack.c.l.s4 1966171168
        %v890 = vunpack.c.0.s8 %v889
        %v891 = vlaneseq
        %v892 = vshrl.u32 %v891, 7
        %v893 = vsub.s32 %v890, %v892
        %v894 = vrot.slane %v872, %v893
        %v895 = vcombine.high %v894, %v894
        %v897 = vunpack.c.l.s4 1966171168
        %v898 = vunpack.c.0.s8 %v897
        %v899 = vlaneseq
        %v900 = vshrl.u32 %v899, 7
        %v901 = vsub.s32 %v898, %v900
        %v902 = vrot.slane %v894, %v901
        %v904 = vunpack.c.l.s4 1966171168
        %v905 = vunpack.c.0.s8 %v904
        %v906 = vlaneseq
        %v907 = vshrl.u32 %v906, 7
        %v908 = vsub.s32 %v905, %v907
        %v909 = vrot.slane %v895, %v908
        %v910 = vlaneseq
        %v911 = vshrl.u32 %v910, 7
        %v912 = vsub.s32 0, %v911
        %v913 = vrot.slane %v902, %v912
        %v914 = vlaneseq
        %v915 = vshrl.u32 %v914, 7
        %v916 = vsub.s32 0, %v915
        %v917 = vrot.slane %v909, %v916
        %v920 = vmul.f32 %v879, %v913
        %v921 = vmul.f32 %v886, %v917
        %v922 = vld [vmem:[%s732] sm:$0xf]
        %v923 = vld [vmem:[%s732 + $0x4] sm:$0xf]
        %v924 = vld [vmem:[%s732 + $0x8] sm:$0xf]
        %v925 = vld [vmem:[%s732 + $0xc] sm:$0xf]
        %v926 = vld [vmem:[%s732 + $0x10] sm:$0xf]
        %v927 = vld [vmem:[%s732 + $0x14] sm:$0xf]
        %v928 = vld [vmem:[%s732 + $0x18] sm:$0xf]
        %v929 = vld [vmem:[%s732 + $0x1c] sm:$0xf]
        %v930 = vld [vmem:[%s732 + $0x20] sm:$0xf]
        %v931 = vld [vmem:[%s732 + $0x24] sm:$0xf]
        %v932 = vld [vmem:[%s732 + $0x28] sm:$0xf]
        %v933 = vld [vmem:[%s732 + $0x2c] sm:$0xf]
        %v934 = vld [vmem:[%s732 + $0x30] sm:$0xf]
        %v935 = vld [vmem:[%s732 + $0x34] sm:$0xf]
        %v936 = vld [vmem:[%s732 + $0x38] sm:$0xf]
        %v937 = vld [vmem:[%s732 + $0x3c] sm:$0xf]
        %v938 = vld [vmem:[#allocation10] sm:$0xf]
        %v939 = vld [vmem:[#allocation10 + $0x4] sm:$0xf]
        %v940 = vld [vmem:[#allocation11] sm:$0x1]
        %v942 = vlaneseq
        %v943 = vshrl.u32 %v942, 7
        %v944 = vsub.s32 0, %v943
        %v945 = vrot.slane %v940, %v944
        %v963 = vunpack.c.l.b16 %v922
        %v964 = vunpack.c.l.b16 %v923
        %v965 = vunpack.c.l.b16 %v924
        %v966 = vunpack.c.l.b16 %v925
        %v967 = vunpack.c.l.b16 %v926
        %v968 = vunpack.c.l.b16 %v927
        %v969 = vunpack.c.l.b16 %v928
        %v970 = vunpack.c.l.b16 %v929
        %v971 = vunpack.c.l.b16 %v930
        %v972 = vunpack.c.l.b16 %v931
        %v973 = vunpack.c.l.b16 %v932
        %v974 = vunpack.c.l.b16 %v933
        %v975 = vunpack.c.l.b16 %v934
        %v976 = vunpack.c.l.b16 %v935
        %v977 = vunpack.c.l.b16 %v936
        %v978 = vunpack.c.l.b16 %v937
        %v979 = vpack.c.b16 %v964, %v963
        %v980 = vpack.c.b16 %v966, %v965
        %v981 = vpack.c.b16 %v968, %v967
        %v982 = vpack.c.b16 %v970, %v969
        %v983 = vpack.c.b16 %v972, %v971
        %v984 = vpack.c.b16 %v974, %v973
        %v985 = vpack.c.b16 %v976, %v975
        %v986 = vpack.c.b16 %v978, %v977
        %v989 = vunpack.c.l.b16 %v938
        %v990 = vunpack.c.l.b16 %v939
        %v991 = vpack.c.b16 %v990, %v989
        %vm993 = vcmask 130048
        %v995 = vsel %vm993, %v979, 0
        %v998 = vsel %vm993, %v980, 0
        %v1001 = vsel %vm993, %v981, 0
        %v1004 = vsel %vm993, %v982, 0
        %v1007 = vsel %vm993, %v983, 0
        %v1010 = vsel %vm993, %v984, 0
        %v1013 = vsel %vm993, %v985, 0
        %v1016 = vsel %vm993, %v986, 0
        %1018 = vmatprep.subr.bf16.mxu0 0
        %1019 = vmatpush1.bf16.msra.mxu0 %v991
        %1020 = vmatprep.subr.bf16.mxu0 0
        %1021 = vmatpush1.bf16.msra.mxu0 0
        %1022 = vmatprep.subr.bf16.mxu0 0
        %1023 = vmatpush1.bf16.msra.mxu0 0
        %1024 = vmatprep.subr.bf16.mxu0 0
        %1025 = vmatpush1.bf16.msra.mxu0 0
        %1026 = vmatprep.subr.bf16.mxu0 0
        %1027 = vmatpush1.bf16.msra.mxu0 0
        %1028 = vmatprep.subr.bf16.mxu0 0
        %1029 = vmatpush1.bf16.msra.mxu0 0
        %1030 = vmatprep.subr.bf16.mxu0 0
        %1031 = vmatpush1.bf16.msra.mxu0 0
        %1032 = vmatprep.subr.bf16.mxu0 0
        %1033 = vmatpush1.bf16.msra.mxu0 0
        %1034 = vmatprep.subr.bf16.mxu0 0
        %1035 = vmatpush1.bf16.msra.mxu0 0
        %1036 = vmatprep.subr.bf16.mxu0 0
        %1037 = vmatpush1.bf16.msra.mxu0 0
        %1038 = vmatprep.subr.bf16.mxu0 0
        %1039 = vmatpush1.bf16.msra.mxu0 0
        %1040 = vmatprep.subr.bf16.mxu0 0
        %1041 = vmatpush1.bf16.msra.mxu0 0
        %1042 = vmatprep.subr.bf16.mxu0 0
        %1043 = vmatpush1.bf16.msra.mxu0 0
        %1044 = vmatprep.subr.bf16.mxu0 0
        %1045 = vmatpush1.bf16.msra.mxu0 0
        %1046 = vmatprep.subr.bf16.mxu0 0
        %1047 = vmatpush1.bf16.msra.mxu0 0
        %1048 = vmatprep.subr.bf16.mxu0 0
        %1049 = vmatpush1.bf16.msra.mxu0 0
        %1050 = vmatprep.mubr.bf16.mxu0 0
        %1051 = vmatmul.mubr.bf16.gmra.mrb[0].mxu0 %v995
        %v1052 = vpop.f32.mrb[0].mxu0
        %v1053 = vadd.f32 %v945, %v1052
        %v1054 = vpop.f32.mrb[0].mxu0
        %v1055 = vpop.f32.mrb[0].mxu0
        %v1056 = vadd.f32 %v945, %v1055
        %v1057 = vpop.f32.mrb[0].mxu0
        %1058 = vmatprep.mubr.bf16.mxu0 0
        %1059 = vmatmul.mubr.bf16.gmra.mrb[0].mxu0 %v998
        %v1060 = vpop.f32.mrb[0].mxu0
        %v1061 = vadd.f32 %v945, %v1060
        %v1062 = vpop.f32.mrb[0].mxu0
        %v1063 = vpop.f32.mrb[0].mxu0
        %v1064 = vadd.f32 %v945, %v1063
        %v1065 = vpop.f32.mrb[0].mxu0
        %1066 = vmatprep.mubr.bf16.mxu0 0
        %1067 = vmatmul.mubr.bf16.gmra.mrb[0].mxu0 %v1001
        %v1068 = vpop.f32.mrb[0].mxu0
        %v1069 = vadd.f32 %v945, %v1068
        %v1070 = vpop.f32.mrb[0].mxu0
        %v1071 = vpop.f32.mrb[0].mxu0
        %v1072 = vadd.f32 %v945, %v1071
        %v1073 = vpop.f32.mrb[0].mxu0
        %1074 = vmatprep.mubr.bf16.mxu0 0
        %1075 = vmatmul.mubr.bf16.gmra.mrb[0].mxu0 %v1004
        %v1076 = vpop.f32.mrb[0].mxu0
        %v1077 = vadd.f32 %v945, %v1076
        %v1078 = vpop.f32.mrb[0].mxu0
        %v1079 = vpop.f32.mrb[0].mxu0
        %v1080 = vadd.f32 %v945, %v1079
        %v1081 = vpop.f32.mrb[0].mxu0
        %1082 = vmatprep.mubr.bf16.mxu0 0
        %1083 = vmatmul.mubr.bf16.gmra.mrb[0].mxu0 %v1007
        %v1084 = vpop.f32.mrb[0].mxu0
        %v1085 = vadd.f32 %v945, %v1084
        %v1086 = vpop.f32.mrb[0].mxu0
        %v1087 = vpop.f32.mrb[0].mxu0
        %v1088 = vadd.f32 %v945, %v1087
        %v1089 = vpop.f32.mrb[0].mxu0
        %1090 = vmatprep.mubr.bf16.mxu0 0
        %1091 = vmatmul.mubr.bf16.gmra.mrb[0].mxu0 %v1010
        %v1092 = vpop.f32.mrb[0].mxu0
        %v1093 = vadd.f32 %v945, %v1092
        %v1094 = vpop.f32.mrb[0].mxu0
        %v1095 = vpop.f32.mrb[0].mxu0
        %v1096 = vadd.f32 %v945, %v1095
        %v1097 = vpop.f32.mrb[0].mxu0
        %1098 = vmatprep.mubr.bf16.mxu0 0
        %1099 = vmatmul.mubr.bf16.gmra.mrb[0].mxu0 %v1013
        %v1100 = vpop.f32.mrb[0].mxu0
        %v1101 = vadd.f32 %v945, %v1100
        %v1102 = vpop.f32.mrb[0].mxu0
        %v1103 = vpop.f32.mrb[0].mxu0
        %v1104 = vadd.f32 %v945, %v1103
        %v1105 = vpop.f32.mrb[0].mxu0
        %1106 = vmatprep.mubr.bf16.mxu0 0
        %1107 = vmatmul.mubr.bf16.gmra.mrb[0].mxu0 %v1016
        %v1108 = vpop.f32.mrb[0].mxu0
        %v1109 = vadd.f32 %v945, %v1108
        %v1110 = vpop.f32.mrb[0].mxu0
        %v1111 = vpop.f32.mrb[0].mxu0
        %v1112 = vadd.f32 %v945, %v1111
        %v1113 = vpop.f32.mrb[0].mxu0
        %1114 = vdwg.mxu0
        %v1115 = vld [vmem:[%s741] sm:$0xf]
        %v1116 = vld [vmem:[%s741 + $0x4] sm:$0xf]
        %v1117 = vld [vmem:[#allocation13] sm:$0xf]
        %v1118 = vld [vmem:[#allocation13 + $0x4] sm:$0xf]
        %v1119 = vld [vmem:[#allocation14] sm:$0x1]
        %v1121 = vlaneseq
        %v1122 = vshrl.u32 %v1121, 7
        %v1123 = vsub.s32 0, %v1122
        %v1124 = vrot.slane %v1119, %v1123
        %v1128 = vunpack.c.l.b16 %v1115
        %v1129 = vunpack.c.l.b16 %v1116
        %v1130 = vpack.c.b16 %v1129, %v1128
        %v1133 = vunpack.c.l.b16 %v1117
        %v1134 = vunpack.c.l.b16 %v1118
        %v1135 = vpack.c.b16 %v1134, %v1133
        %v1138 = vsel %vm993, %v1130, 0
        %1140 = vmatprep.subr.bf16.mxu0 0
        %1141 = vmatpush1.bf16.msra.mxu0 %v1135
        %1142 = vmatprep.subr.bf16.mxu0 0
        %1143 = vmatpush1.bf16.msra.mxu0 0
        %1144 = vmatprep.subr.bf16.mxu0 0
        %1145 = vmatpush1.bf16.msra.mxu0 0
        %1146 = vmatprep.subr.bf16.mxu0 0
        %1147 = vmatpush1.bf16.msra.mxu0 0
        %1148 = vmatprep.subr.bf16.mxu0 0
        %1149 = vmatpush1.bf16.msra.mxu0 0
        %1150 = vmatprep.subr.bf16.mxu0 0
        %1151 = vmatpush1.bf16.msra.mxu0 0
        %1152 = vmatprep.subr.bf16.mxu0 0
        %1153 = vmatpush1.bf16.msra.mxu0 0
        %1154 = vmatprep.subr.bf16.mxu0 0
        %1155 = vmatpush1.bf16.msra.mxu0 0
        %1156 = vmatprep.subr.bf16.mxu0 0
        %1157 = vmatpush1.bf16.msra.mxu0 0
        %1158 = vmatprep.subr.bf16.mxu0 0
        %1159 = vmatpush1.bf16.msra.mxu0 0
        %1160 = vmatprep.subr.bf16.mxu0 0
        %1161 = vmatpush1.bf16.msra.mxu0 0
        %1162 = vmatprep.subr.bf16.mxu0 0
        %1163 = vmatpush1.bf16.msra.mxu0 0
        %1164 = vmatprep.subr.bf16.mxu0 0
        %1165 = vmatpush1.bf16.msra.mxu0 0
        %1166 = vmatprep.subr.bf16.mxu0 0
        %1167 = vmatpush1.bf16.msra.mxu0 0
        %1168 = vmatprep.subr.bf16.mxu0 0
        %1169 = vmatpush1.bf16.msra.mxu0 0
        %1170 = vmatprep.subr.bf16.mxu0 0
        %1171 = vmatpush1.bf16.msra.mxu0 0
        %1172 = vmatprep.mubr.bf16.mxu0 0
        %1173 = vmatmul.mubr.bf16.gmra.mrb[0].mxu0 %v1138
        %v1174 = vpop.f32.mrb[0].mxu0
        %v1175 = vadd.f32 %v1124, %v1174
        %v1176 = vpop.f32.mrb[0].mxu0
        %v1177 = vpop.f32.mrb[0].mxu0
        %v1178 = vadd.f32 %v1124, %v1177
        %v1179 = vpop.f32.mrb[0].mxu0
        %1180 = vdwg.mxu0
        %v1181 = vpack.c.bf16 %v1056, %v1053
        %v1182 = vpack.c.bf16 %v1064, %v1061
        %v1183 = vpack.c.bf16 %v1072, %v1069
        %v1184 = vpack.c.bf16 %v1080, %v1077
        %v1185 = vpack.c.bf16 %v1088, %v1085
        %v1186 = vpack.c.bf16 %v1096, %v1093
        %v1187 = vpack.c.bf16 %v1104, %v1101
        %v1188 = vpack.c.bf16 %v1112, %v1109
        %v1189 = vpack.c.bf16 %v1178, %v1175
        %v1190 = vld [vmem:[%s11] sm:$0xf]
        %v1191 = vld [vmem:[%s11 + $0x4] sm:$0xf]
        %v1192 = vld [vmem:[%s11 + $0x8] sm:$0xf]
        %v1193 = vld [vmem:[%s11 + $0xc] sm:$0xf]
        %v1198 = vunpack.c.l.b16 %v1190
        %v1199 = vunpack.c.l.b16 %v1191
        %v1200 = vunpack.c.l.b16 %v1192
        %v1201 = vunpack.c.l.b16 %v1193
        %v1202 = vpack.c.b16 %v1199, %v1198
        %v1203 = vpack.c.b16 %v1201, %v1200
        %vm1206 = vcmask 261120
        %v1208 = vsel %vm1206, %v1189, 0
        %1210 = vmatprep.subr.bf16.mxu0 0
        %1211 = vmatpush1.bf16.msra.mxu0 %v1202
        %1212 = vmatprep.subr.bf16.mxu0 0
        %1213 = vmatpush1.bf16.msra.mxu0 %v1203
        %1214 = vmatprep.subr.bf16.mxu0 0
        %1215 = vmatpush1.bf16.msra.mxu0 0
        %1216 = vmatprep.subr.bf16.mxu0 0
        %1217 = vmatpush1.bf16.msra.mxu0 0
        %1218 = vmatprep.subr.bf16.mxu0 0
        %1219 = vmatpush1.bf16.msra.mxu0 0
        %1220 = vmatprep.subr.bf16.mxu0 0
        %1221 = vmatpush1.bf16.msra.mxu0 0
        %1222 = vmatprep.subr.bf16.mxu0 0
        %1223 = vmatpush1.bf16.msra.mxu0 0
        %1224 = vmatprep.subr.bf16.mxu0 0
        %1225 = vmatpush1.bf16.msra.mxu0 0
        %1226 = vmatprep.subr.bf16.mxu0 0
        %1227 = vmatpush1.bf16.msra.mxu0 0
        %1228 = vmatprep.subr.bf16.mxu0 0
        %1229 = vmatpush1.bf16.msra.mxu0 0
        %1230 = vmatprep.subr.bf16.mxu0 0
        %1231 = vmatpush1.bf16.msra.mxu0 0
        %1232 = vmatprep.subr.bf16.mxu0 0
        %1233 = vmatpush1.bf16.msra.mxu0 0
        %1234 = vmatprep.subr.bf16.mxu0 0
        %1235 = vmatpush1.bf16.msra.mxu0 0
        %1236 = vmatprep.subr.bf16.mxu0 0
        %1237 = vmatpush1.bf16.msra.mxu0 0
        %1238 = vmatprep.subr.bf16.mxu0 0
        %1239 = vmatpush1.bf16.msra.mxu0 0
        %1240 = vmatprep.subr.bf16.mxu0 0
        %1241 = vmatpush1.bf16.msra.mxu0 0
        %1242 = vmatprep.mubr.bf16.mxu0 0
        %1243 = vmatmul.mubr.bf16.gmra.mrb[0].mxu0 %v1208
        %v1244 = vpop.f32.mrb[0].mxu0
        %v1245 = vadd.f32 0.0, %v1244
        %v1246 = vpop.f32.mrb[0].mxu0
        %v1247 = vpop.f32.mrb[0].mxu0
        %v1248 = vadd.f32 0.0, %v1247
        %v1249 = vpop.f32.mrb[0].mxu0
        %1250 = vdwg.mxu0
        %v1251 = vld [vmem:[#allocation19] sm:$0xf]
        %v1252 = vld [vmem:[#allocation19 + $0x4] sm:$0xf]
        %v1253 = vld [vmem:[#allocation19 + $0x8] sm:$0xf]
        %v1254 = vld [vmem:[#allocation19 + $0xc] sm:$0xf]
        %v1259 = vunpack.c.l.b16 %v1251
        %v1260 = vunpack.c.l.b16 %v1252
        %v1261 = vunpack.c.l.b16 %v1253
        %v1262 = vunpack.c.l.b16 %v1254
        %v1263 = vpack.c.b16 %v1260, %v1259
        %v1264 = vpack.c.b16 %v1262, %v1261
        %v1268 = vsel %vm1206, %v1181, 0
        %v1271 = vsel %vm1206, %v1182, 0
        %v1274 = vsel %vm1206, %v1183, 0
        %v1277 = vsel %vm1206, %v1184, 0
        %v1280 = vsel %vm1206, %v1185, 0
        %v1283 = vsel %vm1206, %v1186, 0
        %v1286 = vsel %vm1206, %v1187, 0
        %v1289 = vsel %vm1206, %v1188, 0
        %1291 = vmatprep.subr.bf16.mxu0 0
        %1292 = vmatpush1.bf16.msra.mxu0 %v1263
        %1293 = vmatprep.subr.bf16.mxu0 0
        %1294 = vmatpush1.bf16.msra.mxu0 %v1264
        %1295 = vmatprep.subr.bf16.mxu0 0
        %1296 = vmatpush1.bf16.msra.mxu0 0
        %1297 = vmatprep.subr.bf16.mxu0 0
        %1298 = vmatpush1.bf16.msra.mxu0 0
        %1299 = vmatprep.subr.bf16.mxu0 0
        %1300 = vmatpush1.bf16.msra.mxu0 0
        %1301 = vmatprep.subr.bf16.mxu0 0
        %1302 = vmatpush1.bf16.msra.mxu0 0
        %1303 = vmatprep.subr.bf16.mxu0 0
        %1304 = vmatpush1.bf16.msra.mxu0 0
        %1305 = vmatprep.subr.bf16.mxu0 0
        %1306 = vmatpush1.bf16.msra.mxu0 0
        %1307 = vmatprep.subr.bf16.mxu0 0
        %1308 = vmatpush1.bf16.msra.mxu0 0
        %1309 = vmatprep.subr.bf16.mxu0 0
        %1310 = vmatpush1.bf16.msra.mxu0 0
        %1311 = vmatprep.subr.bf16.mxu0 0
        %1312 = vmatpush1.bf16.msra.mxu0 0
        %1313 = vmatprep.subr.bf16.mxu0 0
        %1314 = vmatpush1.bf16.msra.mxu0 0
        %1315 = vmatprep.subr.bf16.mxu0 0
        %1316 = vmatpush1.bf16.msra.mxu0 0
        %1317 = vmatprep.subr.bf16.mxu0 0
        %1318 = vmatpush1.bf16.msra.mxu0 0
        %1319 = vmatprep.subr.bf16.mxu0 0
        %1320 = vmatpush1.bf16.msra.mxu0 0
        %1321 = vmatprep.subr.bf16.mxu0 0
        %1322 = vmatpush1.bf16.msra.mxu0 0
        %1323 = vmatprep.mubr.bf16.mxu0 0
        %1324 = vmatmul.mubr.bf16.gmra.mrb[0].mxu0 %v1268
        %v1325 = vpop.f32.mrb[0].mxu0
        %v1326 = vadd.f32 0.0, %v1325
        %v1327 = vpop.f32.mrb[0].mxu0
        %v1328 = vpop.f32.mrb[0].mxu0
        %v1329 = vadd.f32 0.0, %v1328
        %v1330 = vpop.f32.mrb[0].mxu0
        %1331 = vmatprep.mubr.bf16.mxu0 0
        %1332 = vmatmul.mubr.bf16.gmra.mrb[0].mxu0 %v1271
        %v1333 = vpop.f32.mrb[0].mxu0
        %v1334 = vadd.f32 0.0, %v1333
        %v1335 = vpop.f32.mrb[0].mxu0
        %v1336 = vpop.f32.mrb[0].mxu0
        %v1337 = vadd.f32 0.0, %v1336
        %v1338 = vpop.f32.mrb[0].mxu0
        %1339 = vmatprep.mubr.bf16.mxu0 0
        %1340 = vmatmul.mubr.bf16.gmra.mrb[0].mxu0 %v1274
        %v1341 = vpop.f32.mrb[0].mxu0
        %v1342 = vadd.f32 0.0, %v1341
        %v1343 = vpop.f32.mrb[0].mxu0
        %v1344 = vpop.f32.mrb[0].mxu0
        %v1345 = vadd.f32 0.0, %v1344
        %v1346 = vpop.f32.mrb[0].mxu0
        %1347 = vmatprep.mubr.bf16.mxu0 0
        %1348 = vmatmul.mubr.bf16.gmra.mrb[0].mxu0 %v1277
        %v1349 = vpop.f32.mrb[0].mxu0
        %v1350 = vadd.f32 0.0, %v1349
        %v1351 = vpop.f32.mrb[0].mxu0
        %v1352 = vpop.f32.mrb[0].mxu0
        %v1353 = vadd.f32 0.0, %v1352
        %v1354 = vpop.f32.mrb[0].mxu0
        %1355 = vmatprep.mubr.bf16.mxu0 0
        %1356 = vmatmul.mubr.bf16.gmra.mrb[0].mxu0 %v1280
        %v1357 = vpop.f32.mrb[0].mxu0
        %v1358 = vadd.f32 0.0, %v1357
        %v1359 = vpop.f32.mrb[0].mxu0
        %v1360 = vpop.f32.mrb[0].mxu0
        %v1361 = vadd.f32 0.0, %v1360
        %v1362 = vpop.f32.mrb[0].mxu0
        %1363 = vmatprep.mubr.bf16.mxu0 0
        %1364 = vmatmul.mubr.bf16.gmra.mrb[0].mxu0 %v1283
        %v1365 = vpop.f32.mrb[0].mxu0
        %v1366 = vadd.f32 0.0, %v1365
        %v1367 = vpop.f32.mrb[0].mxu0
        %v1368 = vpop.f32.mrb[0].mxu0
        %v1369 = vadd.f32 0.0, %v1368
        %v1370 = vpop.f32.mrb[0].mxu0
        %1371 = vmatprep.mubr.bf16.mxu0 0
        %1372 = vmatmul.mubr.bf16.gmra.mrb[0].mxu0 %v1286
        %v1373 = vpop.f32.mrb[0].mxu0
        %v1374 = vadd.f32 0.0, %v1373
        %v1375 = vpop.f32.mrb[0].mxu0
        %v1376 = vpop.f32.mrb[0].mxu0
        %v1377 = vadd.f32 0.0, %v1376
        %v1378 = vpop.f32.mrb[0].mxu0
        %1379 = vmatprep.mubr.bf16.mxu0 0
        %1380 = vmatmul.mubr.bf16.gmra.mrb[0].mxu0 %v1289
        %v1381 = vpop.f32.mrb[0].mxu0
        %v1382 = vadd.f32 0.0, %v1381
        %v1383 = vpop.f32.mrb[0].mxu0
        %v1384 = vpop.f32.mrb[0].mxu0
        %v1385 = vadd.f32 0.0, %v1384
        %v1386 = vpop.f32.mrb[0].mxu0
        %1387 = vdwg.mxu0
        %v1388 = vadd.f32 %v1326, %v1245
        %v1389 = vadd.f32 %v1329, %v1245
        %v1390 = vadd.f32 %v1334, %v1245
        %v1391 = vadd.f32 %v1337, %v1245
        %v1392 = vadd.f32 %v1342, %v1245
        %v1393 = vadd.f32 %v1345, %v1245
        %v1394 = vadd.f32 %v1350, %v1245
        %v1395 = vadd.f32 %v1353, %v1245
        %v1396 = vadd.f32 %v1358, %v1248
        %v1397 = vadd.f32 %v1361, %v1248
        %v1398 = vadd.f32 %v1366, %v1248
        %v1399 = vadd.f32 %v1369, %v1248
        %v1400 = vadd.f32 %v1374, %v1248
        %v1401 = vadd.f32 %v1377, %v1248
        %v1402 = vadd.f32 %v1382, %v1248
        %v1403 = vadd.f32 %v1385, %v1248
        %v1404 = vld [vmem:[#allocation20] sm:$0x1]
        %v1406 = vlaneseq
        %v1407 = vshrl.u32 %v1406, 7
        %v1408 = vsub.s32 0, %v1407
        %v1409 = vrot.slane %v1404, %v1408
        %v1411 = vadd.f32 %v1388, %v1409
        %v1412 = vadd.f32 %v1389, %v1409
        %v1413 = vadd.f32 %v1390, %v1409
        %v1414 = vadd.f32 %v1391, %v1409
        %v1415 = vadd.f32 %v1392, %v1409
        %v1416 = vadd.f32 %v1393, %v1409
        %v1417 = vadd.f32 %v1394, %v1409
        %v1418 = vadd.f32 %v1395, %v1409
        %v1419 = vadd.f32 %v1396, %v1409
        %v1420 = vadd.f32 %v1397, %v1409
        %v1421 = vadd.f32 %v1398, %v1409
        %v1422 = vadd.f32 %v1399, %v1409
        %v1423 = vadd.f32 %v1400, %v1409
        %v1424 = vadd.f32 %v1401, %v1409
        %v1425 = vadd.f32 %v1402, %v1409
        %v1426 = vadd.f32 %v1403, %v1409
        %v1427 = vmax.f32 %v1411, 0.0
        %v1428 = vmax.f32 %v1412, 0.0
        %v1429 = vmax.f32 %v1413, 0.0
        %v1430 = vmax.f32 %v1414, 0.0
        %v1431 = vmax.f32 %v1415, 0.0
        %v1432 = vmax.f32 %v1416, 0.0
        %v1433 = vmax.f32 %v1417, 0.0
        %v1434 = vmax.f32 %v1418, 0.0
        %v1435 = vmax.f32 %v1419, 0.0
        %v1436 = vmax.f32 %v1420, 0.0
        %v1437 = vmax.f32 %v1421, 0.0
        %v1438 = vmax.f32 %v1422, 0.0
        %v1439 = vmax.f32 %v1423, 0.0
        %v1440 = vmax.f32 %v1424, 0.0
        %v1441 = vmax.f32 %v1425, 0.0
        %v1442 = vmax.f32 %v1426, 0.0
        %v1443 = vpack.c.bf16 %v1427, %v1427
        %v1444 = vpack.c.bf16 %v1428, %v1428
        %v1445 = vpack.c.bf16 %v1429, %v1429
        %v1446 = vpack.c.bf16 %v1430, %v1430
        %v1447 = vpack.c.bf16 %v1431, %v1431
        %v1448 = vpack.c.bf16 %v1432, %v1432
        %v1449 = vpack.c.bf16 %v1433, %v1433
        %v1450 = vpack.c.bf16 %v1434, %v1434
        %v1451 = vpack.c.bf16 %v1435, %v1435
        %v1452 = vpack.c.bf16 %v1436, %v1436
        %v1453 = vpack.c.bf16 %v1437, %v1437
        %v1454 = vpack.c.bf16 %v1438, %v1438
        %v1455 = vpack.c.bf16 %v1439, %v1439
        %v1456 = vpack.c.bf16 %v1440, %v1440
        %v1457 = vpack.c.bf16 %v1441, %v1441
        %v1458 = vpack.c.bf16 %v1442, %v1442
        %v1459 = vld [vmem:[#allocation16] sm:$0x1]
        %v1460 = vld [vmem:[#allocation17] sm:$0x1]
        %v1461 = vld [vmem:[#allocation4] sm:$0x1]
        %v1462 = vld [vmem:[%s7] sm:$0xf]
        %v1463 = vld [vmem:[%s7 + $0x4] sm:$0xf]
        %v1464 = vld [vmem:[%s7 + $0x8] sm:$0xf]
        %v1465 = vld [vmem:[%s7 + $0xc] sm:$0xf]
        %v1482 = vunpack.c.l.b16 %v1443
        %v1483 = vunpack.c.l.b16 %v1444
        %v1484 = vunpack.c.l.b16 %v1445
        %v1485 = vunpack.c.l.b16 %v1446
        %v1486 = vunpack.c.l.b16 %v1447
        %v1487 = vunpack.c.l.b16 %v1448
        %v1488 = vunpack.c.l.b16 %v1449
        %v1489 = vunpack.c.l.b16 %v1450
        %v1490 = vunpack.c.l.b16 %v1451
        %v1491 = vunpack.c.l.b16 %v1452
        %v1492 = vunpack.c.l.b16 %v1453
        %v1493 = vunpack.c.l.b16 %v1454
        %v1494 = vunpack.c.l.b16 %v1455
        %v1495 = vunpack.c.l.b16 %v1456
        %v1496 = vunpack.c.l.b16 %v1457
        %v1497 = vunpack.c.l.b16 %v1458
        %v1498 = vpack.c.b16 %v1483, %v1482
        %v1499 = vpack.c.b16 %v1485, %v1484
        %v1500 = vpack.c.b16 %v1487, %v1486
        %v1501 = vpack.c.b16 %v1489, %v1488
        %v1502 = vpack.c.b16 %v1491, %v1490
        %v1503 = vpack.c.b16 %v1493, %v1492
        %v1504 = vpack.c.b16 %v1495, %v1494
        %v1505 = vpack.c.b16 %v1497, %v1496
        %v1510 = vunpack.c.l.b16 %v1462
        %v1511 = vunpack.c.l.b16 %v1463
        %v1512 = vunpack.c.l.b16 %v1464
        %v1513 = vunpack.c.l.b16 %v1465
        %v1514 = vpack.c.b16 %v1511, %v1510
        %v1515 = vpack.c.b16 %v1513, %v1512
        %v1519 = vsel %vm1206, %v1498, 0
        %v1522 = vsel %vm1206, %v1499, 0
        %v1525 = vsel %vm1206, %v1500, 0
        %v1528 = vsel %vm1206, %v1501, 0
        %v1531 = vsel %vm1206, %v1502, 0
        %v1534 = vsel %vm1206, %v1503, 0
        %v1537 = vsel %vm1206, %v1504, 0
        %v1540 = vsel %vm1206, %v1505, 0
        %1542 = vmatprep.subr.bf16.mxu0 0
        %1543 = vmatpush1.bf16.msra.mxu0 %v1514
        %1544 = vmatprep.subr.bf16.mxu0 0
        %1545 = vmatpush1.bf16.msra.mxu0 %v1515
        %1546 = vmatprep.subr.bf16.mxu0 0
        %1547 = vmatpush1.bf16.msra.mxu0 0
        %1548 = vmatprep.subr.bf16.mxu0 0
        %1549 = vmatpush1.bf16.msra.mxu0 0
        %1550 = vmatprep.subr.bf16.mxu0 0
        %1551 = vmatpush1.bf16.msra.mxu0 0
        %1552 = vmatprep.subr.bf16.mxu0 0
        %1553 = vmatpush1.bf16.msra.mxu0 0
        %1554 = vmatprep.subr.bf16.mxu0 0
        %1555 = vmatpush1.bf16.msra.mxu0 0
        %1556 = vmatprep.subr.bf16.mxu0 0
        %1557 = vmatpush1.bf16.msra.mxu0 0
        %1558 = vmatprep.subr.bf16.mxu0 0
        %1559 = vmatpush1.bf16.msra.mxu0 0
        %1560 = vmatprep.subr.bf16.mxu0 0
        %1561 = vmatpush1.bf16.msra.mxu0 0
        %1562 = vmatprep.subr.bf16.mxu0 0
        %1563 = vmatpush1.bf16.msra.mxu0 0
        %1564 = vmatprep.subr.bf16.mxu0 0
        %1565 = vmatpush1.bf16.msra.mxu0 0
        %1566 = vmatprep.subr.bf16.mxu0 0
        %1567 = vmatpush1.bf16.msra.mxu0 0
        %1568 = vmatprep.subr.bf16.mxu0 0
        %1569 = vmatpush1.bf16.msra.mxu0 0
        %1570 = vmatprep.subr.bf16.mxu0 0
        %1571 = vmatpush1.bf16.msra.mxu0 0
        %1572 = vmatprep.subr.bf16.mxu0 0
        %1573 = vmatpush1.bf16.msra.mxu0 0
        %1574 = vmatprep.mubr.bf16.mxu0 0
        %1575 = vmatmul.mubr.bf16.gmra.mrb[0].mxu0 %v1519
        %v1576 = vpop.f32.mrb[0].mxu0
        %v1577 = vadd.f32 0.0, %v1576
        %v1578 = vpop.f32.mrb[0].mxu0
        %v1579 = vpop.f32.mrb[0].mxu0
        %v1580 = vadd.f32 0.0, %v1579
        %v1581 = vpop.f32.mrb[0].mxu0
        %1582 = vmatprep.mubr.bf16.mxu0 0
        %1583 = vmatmul.mubr.bf16.gmra.mrb[0].mxu0 %v1522
        %v1584 = vpop.f32.mrb[0].mxu0
        %v1585 = vadd.f32 0.0, %v1584
        %v1586 = vpop.f32.mrb[0].mxu0
        %v1587 = vpop.f32.mrb[0].mxu0
        %v1588 = vadd.f32 0.0, %v1587
        %v1589 = vpop.f32.mrb[0].mxu0
        %1590 = vmatprep.mubr.bf16.mxu0 0
        %1591 = vmatmul.mubr.bf16.gmra.mrb[0].mxu0 %v1525
        %v1592 = vpop.f32.mrb[0].mxu0
        %v1593 = vadd.f32 0.0, %v1592
        %v1594 = vpop.f32.mrb[0].mxu0
        %v1595 = vpop.f32.mrb[0].mxu0
        %v1596 = vadd.f32 0.0, %v1595
        %v1597 = vpop.f32.mrb[0].mxu0
        %1598 = vmatprep.mubr.bf16.mxu0 0
        %1599 = vmatmul.mubr.bf16.gmra.mrb[0].mxu0 %v1528
        %v1600 = vpop.f32.mrb[0].mxu0
        %v1601 = vadd.f32 0.0, %v1600
        %v1602 = vpop.f32.mrb[0].mxu0
        %v1603 = vpop.f32.mrb[0].mxu0
        %v1604 = vadd.f32 0.0, %v1603
        %v1605 = vpop.f32.mrb[0].mxu0
        %1606 = vmatprep.mubr.bf16.mxu0 0
        %1607 = vmatmul.mubr.bf16.gmra.mrb[0].mxu0 %v1531
        %v1608 = vpop.f32.mrb[0].mxu0
        %v1609 = vadd.f32 0.0, %v1608
        %v1610 = vpop.f32.mrb[0].mxu0
        %v1611 = vpop.f32.mrb[0].mxu0
        %v1612 = vadd.f32 0.0, %v1611
        %v1613 = vpop.f32.mrb[0].mxu0
        %1614 = vmatprep.mubr.bf16.mxu0 0
        %1615 = vmatmul.mubr.bf16.gmra.mrb[0].mxu0 %v1534
        %v1616 = vpop.f32.mrb[0].mxu0
        %v1617 = vadd.f32 0.0, %v1616
        %v1618 = vpop.f32.mrb[0].mxu0
        %v1619 = vpop.f32.mrb[0].mxu0
        %v1620 = vadd.f32 0.0, %v1619
        %v1621 = vpop.f32.mrb[0].mxu0
        %1622 = vmatprep.mubr.bf16.mxu0 0
        %1623 = vmatmul.mubr.bf16.gmra.mrb[0].mxu0 %v1537
        %v1624 = vpop.f32.mrb[0].mxu0
        %v1625 = vadd.f32 0.0, %v1624
        %v1626 = vpop.f32.mrb[0].mxu0
        %v1627 = vpop.f32.mrb[0].mxu0
        %v1628 = vadd.f32 0.0, %v1627
        %v1629 = vpop.f32.mrb[0].mxu0
        %1630 = vmatprep.mubr.bf16.mxu0 0
        %1631 = vmatmul.mubr.bf16.gmra.mrb[0].mxu0 %v1540
        %v1632 = vpop.f32.mrb[0].mxu0
        %v1633 = vadd.f32 0.0, %v1632
        %v1634 = vpop.f32.mrb[0].mxu0
        %v1635 = vpop.f32.mrb[0].mxu0
        %v1636 = vadd.f32 0.0, %v1635
        %v1637 = vpop.f32.mrb[0].mxu0
        %1638 = vdwg.mxu0
        %v1639 = vpack.c.bf16 %v1577, %v1577
        %v1640 = vpack.c.bf16 %v1580, %v1580
        %v1641 = vpack.c.bf16 %v1585, %v1585
        %v1642 = vpack.c.bf16 %v1588, %v1588
        %v1643 = vpack.c.bf16 %v1593, %v1593
        %v1644 = vpack.c.bf16 %v1596, %v1596
        %v1645 = vpack.c.bf16 %v1601, %v1601
        %v1646 = vpack.c.bf16 %v1604, %v1604
        %v1647 = vpack.c.bf16 %v1609, %v1609
        %v1648 = vpack.c.bf16 %v1612, %v1612
        %v1649 = vpack.c.bf16 %v1617, %v1617
        %v1650 = vpack.c.bf16 %v1620, %v1620
        %v1651 = vpack.c.bf16 %v1625, %v1625
        %v1652 = vpack.c.bf16 %v1628, %v1628
        %v1653 = vpack.c.bf16 %v1633, %v1633
        %v1654 = vpack.c.bf16 %v1636, %v1636
        %v1656 = vlaneseq
        %v1657 = vshrl.u32 %v1656, 7
        %v1658 = vsub.s32 0, %v1657
        %v1659 = vrot.slane %v1459, %v1658
        %1661 = vmatprep.subr.bf16.mxu0 0
        %1662 = vmatpush1.bf16.msra.mxu0 %v1514
        %1663 = vmatprep.subr.bf16.mxu0 0
        %1664 = vmatpush1.bf16.msra.mxu0 %v1515
        %1665 = vmatprep.subr.bf16.mxu0 0
        %1666 = vmatpush1.bf16.msra.mxu0 0
        %1667 = vmatprep.subr.bf16.mxu0 0
        %1668 = vmatpush1.bf16.msra.mxu0 0
        %1669 = vmatprep.subr.bf16.mxu0 0
        %1670 = vmatpush1.bf16.msra.mxu0 0
        %1671 = vmatprep.subr.bf16.mxu0 0
        %1672 = vmatpush1.bf16.msra.mxu0 0
        %1673 = vmatprep.subr.bf16.mxu0 0
        %1674 = vmatpush1.bf16.msra.mxu0 0
        %1675 = vmatprep.subr.bf16.mxu0 0
        %1676 = vmatpush1.bf16.msra.mxu0 0
        %1677 = vmatprep.subr.bf16.mxu0 0
        %1678 = vmatpush1.bf16.msra.mxu0 0
        %1679 = vmatprep.subr.bf16.mxu0 0
        %1680 = vmatpush1.bf16.msra.mxu0 0
        %1681 = vmatprep.subr.bf16.mxu0 0
        %1682 = vmatpush1.bf16.msra.mxu0 0
        %1683 = vmatprep.subr.bf16.mxu0 0
        %1684 = vmatpush1.bf16.msra.mxu0 0
        %1685 = vmatprep.subr.bf16.mxu0 0
        %1686 = vmatpush1.bf16.msra.mxu0 0
        %1687 = vmatprep.subr.bf16.mxu0 0
        %1688 = vmatpush1.bf16.msra.mxu0 0
        %1689 = vmatprep.subr.bf16.mxu0 0
        %1690 = vmatpush1.bf16.msra.mxu0 0
        %1691 = vmatprep.subr.bf16.mxu0 0
        %1692 = vmatpush1.bf16.msra.mxu0 0
        %1693 = vmatprep.mubr.bf16.mxu0 0
        %1694 = vmatmul.mubr.bf16.gmra.mrb[0].mxu0 %v1268
        %v1695 = vpop.f32.mrb[0].mxu0
        %v1696 = vadd.f32 %v1659, %v1695
        %v1697 = vpop.f32.mrb[0].mxu0
        %v1698 = vpop.f32.mrb[0].mxu0
        %v1699 = vadd.f32 %v1659, %v1698
        %v1700 = vpop.f32.mrb[0].mxu0
        %1701 = vmatprep.mubr.bf16.mxu0 0
        %1702 = vmatmul.mubr.bf16.gmra.mrb[0].mxu0 %v1271
        %v1703 = vpop.f32.mrb[0].mxu0
        %v1704 = vadd.f32 %v1659, %v1703
        %v1705 = vpop.f32.mrb[0].mxu0
        %v1706 = vpop.f32.mrb[0].mxu0
        %v1707 = vadd.f32 %v1659, %v1706
        %v1708 = vpop.f32.mrb[0].mxu0
        %1709 = vmatprep.mubr.bf16.mxu0 0
        %1710 = vmatmul.mubr.bf16.gmra.mrb[0].mxu0 %v1274
        %v1711 = vpop.f32.mrb[0].mxu0
        %v1712 = vadd.f32 %v1659, %v1711
        %v1713 = vpop.f32.mrb[0].mxu0
        %v1714 = vpop.f32.mrb[0].mxu0
        %v1715 = vadd.f32 %v1659, %v1714
        %v1716 = vpop.f32.mrb[0].mxu0
        %1717 = vmatprep.mubr.bf16.mxu0 0
        %1718 = vmatmul.mubr.bf16.gmra.mrb[0].mxu0 %v1277
        %v1719 = vpop.f32.mrb[0].mxu0
        %v1720 = vadd.f32 %v1659, %v1719
        %v1721 = vpop.f32.mrb[0].mxu0
        %v1722 = vpop.f32.mrb[0].mxu0
        %v1723 = vadd.f32 %v1659, %v1722
        %v1724 = vpop.f32.mrb[0].mxu0
        %1725 = vmatprep.mubr.bf16.mxu0 0
        %1726 = vmatmul.mubr.bf16.gmra.mrb[0].mxu0 %v1280
        %v1727 = vpop.f32.mrb[0].mxu0
        %v1728 = vadd.f32 %v1659, %v1727
        %v1729 = vpop.f32.mrb[0].mxu0
        %v1730 = vpop.f32.mrb[0].mxu0
        %v1731 = vadd.f32 %v1659, %v1730
        %v1732 = vpop.f32.mrb[0].mxu0
        %1733 = vmatprep.mubr.bf16.mxu0 0
        %1734 = vmatmul.mubr.bf16.gmra.mrb[0].mxu0 %v1283
        %v1735 = vpop.f32.mrb[0].mxu0
        %v1736 = vadd.f32 %v1659, %v1735
        %v1737 = vpop.f32.mrb[0].mxu0
        %v1738 = vpop.f32.mrb[0].mxu0
        %v1739 = vadd.f32 %v1659, %v1738
        %v1740 = vpop.f32.mrb[0].mxu0
        %1741 = vmatprep.mubr.bf16.mxu0 0
        %1742 = vmatmul.mubr.bf16.gmra.mrb[0].mxu0 %v1286
        %v1743 = vpop.f32.mrb[0].mxu0
        %v1744 = vadd.f32 %v1659, %v1743
        %v1745 = vpop.f32.mrb[0].mxu0
        %v1746 = vpop.f32.mrb[0].mxu0
        %v1747 = vadd.f32 %v1659, %v1746
        %v1748 = vpop.f32.mrb[0].mxu0
        %1749 = vmatprep.mubr.bf16.mxu0 0
        %1750 = vmatmul.mubr.bf16.gmra.mrb[0].mxu0 %v1289
        %v1751 = vpop.f32.mrb[0].mxu0
        %v1752 = vadd.f32 %v1659, %v1751
        %v1753 = vpop.f32.mrb[0].mxu0
        %v1754 = vpop.f32.mrb[0].mxu0
        %v1755 = vadd.f32 %v1659, %v1754
        %v1756 = vpop.f32.mrb[0].mxu0
        %1757 = vdwg.mxu0
        %v1758 = vmax.f32 %v1696, 0.0
        %v1759 = vmax.f32 %v1699, 0.0
        %v1760 = vmax.f32 %v1704, 0.0
        %v1761 = vmax.f32 %v1707, 0.0
        %v1762 = vmax.f32 %v1712, 0.0
        %v1763 = vmax.f32 %v1715, 0.0
        %v1764 = vmax.f32 %v1720, 0.0
        %v1765 = vmax.f32 %v1723, 0.0
        %v1766 = vmax.f32 %v1728, 0.0
        %v1767 = vmax.f32 %v1731, 0.0
        %v1768 = vmax.f32 %v1736, 0.0
        %v1769 = vmax.f32 %v1739, 0.0
        %v1770 = vmax.f32 %v1744, 0.0
        %v1771 = vmax.f32 %v1747, 0.0
        %v1772 = vmax.f32 %v1752, 0.0
        %v1773 = vmax.f32 %v1755, 0.0
        %v1775 = vlaneseq
        %v1776 = vshrl.u32 %v1775, 7
        %v1777 = vsub.s32 0, %v1776
        %v1778 = vrot.slane %v1460, %v1777
        %v1780 = vmul.f32 %v1758, %v1778
        %v1781 = vmul.f32 %v1759, %v1778
        %v1782 = vmul.f32 %v1760, %v1778
        %v1783 = vmul.f32 %v1761, %v1778
        %v1784 = vmul.f32 %v1762, %v1778
        %v1785 = vmul.f32 %v1763, %v1778
        %v1786 = vmul.f32 %v1764, %v1778
        %v1787 = vmul.f32 %v1765, %v1778
        %v1788 = vmul.f32 %v1766, %v1778
        %v1789 = vmul.f32 %v1767, %v1778
        %v1790 = vmul.f32 %v1768, %v1778
        %v1791 = vmul.f32 %v1769, %v1778
        %v1792 = vmul.f32 %v1770, %v1778
        %v1793 = vmul.f32 %v1771, %v1778
        %v1794 = vmul.f32 %v1772, %v1778
        %v1795 = vmul.f32 %v1773, %v1778
        %v1796 = vsel %vm1206, %v1780, 0.0
        %1797 = vadd.xlane.f32.xlu0 %v1796
        %v1798 = vpop.xlane.xlu0 %1797
        %v1799 = vsel %vm1206, %v1781, 0.0
        %1800 = vadd.xlane.f32.xlu0 %v1799
        %v1801 = vpop.xlane.xlu0 %1800
        %v1802 = vsel %vm1206, %v1782, 0.0
        %1803 = vadd.xlane.f32.xlu0 %v1802
        %v1804 = vpop.xlane.xlu0 %1803
        %v1805 = vsel %vm1206, %v1783, 0.0
        %1806 = vadd.xlane.f32.xlu0 %v1805
        %v1807 = vpop.xlane.xlu0 %1806
        %v1808 = vsel %vm1206, %v1784, 0.0
        %1809 = vadd.xlane.f32.xlu0 %v1808
        %v1810 = vpop.xlane.xlu0 %1809
        %v1811 = vsel %vm1206, %v1785, 0.0
        %1812 = vadd.xlane.f32.xlu0 %v1811
        %v1813 = vpop.xlane.xlu0 %1812
        %v1814 = vsel %vm1206, %v1786, 0.0
        %1815 = vadd.xlane.f32.xlu0 %v1814
        %v1816 = vpop.xlane.xlu0 %1815
        %v1817 = vsel %vm1206, %v1787, 0.0
        %1818 = vadd.xlane.f32.xlu0 %v1817
        %v1819 = vpop.xlane.xlu0 %1818
        %v1820 = vsel %vm1206, %v1788, 0.0
        %1821 = vadd.xlane.f32.xlu0 %v1820
        %v1822 = vpop.xlane.xlu0 %1821
        %v1823 = vsel %vm1206, %v1789, 0.0
        %1824 = vadd.xlane.f32.xlu0 %v1823
        %v1825 = vpop.xlane.xlu0 %1824
        %v1826 = vsel %vm1206, %v1790, 0.0
        %1827 = vadd.xlane.f32.xlu0 %v1826
        %v1828 = vpop.xlane.xlu0 %1827
        %v1829 = vsel %vm1206, %v1791, 0.0
        %1830 = vadd.xlane.f32.xlu0 %v1829
        %v1831 = vpop.xlane.xlu0 %1830
        %v1832 = vsel %vm1206, %v1792, 0.0
        %1833 = vadd.xlane.f32.xlu0 %v1832
        %v1834 = vpop.xlane.xlu0 %1833
        %v1835 = vsel %vm1206, %v1793, 0.0
        %1836 = vadd.xlane.f32.xlu0 %v1835
        %v1837 = vpop.xlane.xlu0 %1836
        %v1838 = vsel %vm1206, %v1794, 0.0
        %1839 = vadd.xlane.f32.xlu0 %v1838
        %v1840 = vpop.xlane.xlu0 %1839
        %v1841 = vsel %vm1206, %v1795, 0.0
        %1842 = vadd.xlane.f32.xlu0 %v1841
        %v1843 = vpop.xlane.xlu0 %1842
        %v1845 = vlaneseq
        %v1846 = vshrl.u32 %v1845, 7
        %v1847 = vsub.s32 0, %v1846
        %v1848 = vrot.slane %v1461, %v1847
        %1849 = vset.pattern.permute.xlu0 0
        %1850 = vperm.xlu0 %1849, %v1848
        %v1851 = vpop.permute.xlu0 %1850
        %v1853 = vadd.f32 %v1798, %v1851
        %v1854 = vadd.f32 %v1801, %v1851
        %v1855 = vadd.f32 %v1804, %v1851
        %v1856 = vadd.f32 %v1807, %v1851
        %v1857 = vadd.f32 %v1810, %v1851
        %v1858 = vadd.f32 %v1813, %v1851
        %v1859 = vadd.f32 %v1816, %v1851
        %v1860 = vadd.f32 %v1819, %v1851
        %v1861 = vadd.f32 %v1822, %v1851
        %v1862 = vadd.f32 %v1825, %v1851
        %v1863 = vadd.f32 %v1828, %v1851
        %v1864 = vadd.f32 %v1831, %v1851
        %v1865 = vadd.f32 %v1834, %v1851
        %v1866 = vadd.f32 %v1837, %v1851
        %v1867 = vadd.f32 %v1840, %v1851
        %v1868 = vadd.f32 %v1843, %v1851
        %v1869 = vxor.u32 %v1853, 2147483648
        %v1870 = vxor.u32 %v1854, 2147483648
        %v1871 = vxor.u32 %v1855, 2147483648
        %v1872 = vxor.u32 %v1856, 2147483648
        %v1873 = vxor.u32 %v1857, 2147483648
        %v1874 = vxor.u32 %v1858, 2147483648
        %v1875 = vxor.u32 %v1859, 2147483648
        %v1876 = vxor.u32 %v1860, 2147483648
        %v1877 = vxor.u32 %v1861, 2147483648
        %v1878 = vxor.u32 %v1862, 2147483648
        %v1879 = vxor.u32 %v1863, 2147483648
        %v1880 = vxor.u32 %v1864, 2147483648
        %v1881 = vxor.u32 %v1865, 2147483648
        %v1882 = vxor.u32 %v1866, 2147483648
        %v1883 = vxor.u32 %v1867, 2147483648
        %v1884 = vxor.u32 %v1868, 2147483648
        %v1885 = vmul.f32 %v1869, 1.442695
        %v1886 = vpow.pop %v1885
        %v1887 = vmul.f32 %v1870, 1.442695
        %v1888 = vpow.pop %v1887
        %v1889 = vmul.f32 %v1871, 1.442695
        %v1890 = vpow.pop %v1889
        %v1891 = vmul.f32 %v1872, 1.442695
        %v1892 = vpow.pop %v1891
        %v1893 = vmul.f32 %v1873, 1.442695
        %v1894 = vpow.pop %v1893
        %v1895 = vmul.f32 %v1874, 1.442695
        %v1896 = vpow.pop %v1895
        %v1897 = vmul.f32 %v1875, 1.442695
        %v1898 = vpow.pop %v1897
        %v1899 = vmul.f32 %v1876, 1.442695
        %v1900 = vpow.pop %v1899
        %v1901 = vmul.f32 %v1877, 1.442695
        %v1902 = vpow.pop %v1901
        %v1903 = vmul.f32 %v1878, 1.442695
        %v1904 = vpow.pop %v1903
        %v1905 = vmul.f32 %v1879, 1.442695
        %v1906 = vpow.pop %v1905
        %v1907 = vmul.f32 %v1880, 1.442695
        %v1908 = vpow.pop %v1907
        %v1909 = vmul.f32 %v1881, 1.442695
        %v1910 = vpow.pop %v1909
        %v1911 = vmul.f32 %v1882, 1.442695
        %v1912 = vpow.pop %v1911
        %v1913 = vmul.f32 %v1883, 1.442695
        %v1914 = vpow.pop %v1913
        %v1915 = vmul.f32 %v1884, 1.442695
        %v1916 = vpow.pop %v1915
        %v1917 = vadd.f32 %v1886, 1.0
        %v1918 = vadd.f32 %v1888, 1.0
        %v1919 = vadd.f32 %v1890, 1.0
        %v1920 = vadd.f32 %v1892, 1.0
        %v1921 = vadd.f32 %v1894, 1.0
        %v1922 = vadd.f32 %v1896, 1.0
        %v1923 = vadd.f32 %v1898, 1.0
        %v1924 = vadd.f32 %v1900, 1.0
        %v1925 = vadd.f32 %v1902, 1.0
        %v1926 = vadd.f32 %v1904, 1.0
        %v1927 = vadd.f32 %v1906, 1.0
        %v1928 = vadd.f32 %v1908, 1.0
        %v1929 = vadd.f32 %v1910, 1.0
        %v1930 = vadd.f32 %v1912, 1.0
        %v1931 = vadd.f32 %v1914, 1.0
        %v1932 = vadd.f32 %v1916, 1.0
        %v1933 = vrcp.pop %v1917
        %v1934 = vmul.f32 1.0, %v1933
        %v1935 = vrcp.pop %v1918
        %v1936 = vmul.f32 1.0, %v1935
        %v1937 = vrcp.pop %v1919
        %v1938 = vmul.f32 1.0, %v1937
        %v1939 = vrcp.pop %v1920
        %v1940 = vmul.f32 1.0, %v1939
        %v1941 = vrcp.pop %v1921
        %v1942 = vmul.f32 1.0, %v1941
        %v1943 = vrcp.pop %v1922
        %v1944 = vmul.f32 1.0, %v1943
        %v1945 = vrcp.pop %v1923
        %v1946 = vmul.f32 1.0, %v1945
        %v1947 = vrcp.pop %v1924
        %v1948 = vmul.f32 1.0, %v1947
        %v1949 = vrcp.pop %v1925
        %v1950 = vmul.f32 1.0, %v1949
        %v1951 = vrcp.pop %v1926
        %v1952 = vmul.f32 1.0, %v1951
        %v1953 = vrcp.pop %v1927
        %v1954 = vmul.f32 1.0, %v1953
        %v1955 = vrcp.pop %v1928
        %v1956 = vmul.f32 1.0, %v1955
        %v1957 = vrcp.pop %v1929
        %v1958 = vmul.f32 1.0, %v1957
        %v1959 = vrcp.pop %v1930
        %v1960 = vmul.f32 1.0, %v1959
        %v1961 = vrcp.pop %v1931
        %v1962 = vmul.f32 1.0, %v1961
        %v1963 = vrcp.pop %v1932
        %v1964 = vmul.f32 1.0, %v1963
        %v1967 = vlaneseq
        %v1968 = vshrl.u32 %v1967, 7
        %v1969 = vsub.s32 0, %v1968
        %v1970 = vrot.slane %v920, %v1969
        %1972 = vbcast.lane.b32.xlu0 %v1970, 256
        %v1973 = vpop.permute.xlu0 %1972
        %v1974 = vlaneseq
        %v1975 = vshrl.u32 %v1974, 7
        %v1976 = vsub.s32 1, %v1975
        %v1977 = vrot.slane %v920, %v1976
        %1979 = vbcast.lane.b32.xlu0 %v1977, 256
        %v1980 = vpop.permute.xlu0 %1979
        %v1981 = vlaneseq
        %v1982 = vshrl.u32 %v1981, 7
        %v1983 = vsub.s32 2, %v1982
        %v1984 = vrot.slane %v920, %v1983
        %1986 = vbcast.lane.b32.xlu0 %v1984, 256
        %v1987 = vpop.permute.xlu0 %1986
        %v1988 = vlaneseq
        %v1989 = vshrl.u32 %v1988, 7
        %v1990 = vsub.s32 3, %v1989
        %v1991 = vrot.slane %v920, %v1990
        %1993 = vbcast.lane.b32.xlu0 %v1991, 256
        %v1994 = vpop.permute.xlu0 %1993
        %v1995 = vlaneseq
        %v1996 = vshrl.u32 %v1995, 7
        %v1997 = vsub.s32 4, %v1996
        %v1998 = vrot.slane %v920, %v1997
        %2000 = vbcast.lane.b32.xlu0 %v1998, 256
        %v2001 = vpop.permute.xlu0 %2000
        %v2002 = vlaneseq
        %v2003 = vshrl.u32 %v2002, 7
        %v2004 = vsub.s32 5, %v2003
        %v2005 = vrot.slane %v920, %v2004
        %2007 = vbcast.lane.b32.xlu0 %v2005, 256
        %v2008 = vpop.permute.xlu0 %2007
        %v2009 = vlaneseq
        %v2010 = vshrl.u32 %v2009, 7
        %v2011 = vsub.s32 6, %v2010
        %v2012 = vrot.slane %v920, %v2011
        %2014 = vbcast.lane.b32.xlu0 %v2012, 256
        %v2015 = vpop.permute.xlu0 %2014
        %v2016 = vlaneseq
        %v2017 = vshrl.u32 %v2016, 7
        %v2018 = vsub.s32 7, %v2017
        %v2019 = vrot.slane %v920, %v2018
        %2021 = vbcast.lane.b32.xlu0 %v2019, 256
        %v2022 = vpop.permute.xlu0 %2021
        %v2023 = vlaneseq
        %v2024 = vshrl.u32 %v2023, 7
        %v2025 = vsub.s32 0, %v2024
        %v2026 = vrot.slane %v921, %v2025
        %2028 = vbcast.lane.b32.xlu0 %v2026, 256
        %v2029 = vpop.permute.xlu0 %2028
        %v2030 = vlaneseq
        %v2031 = vshrl.u32 %v2030, 7
        %v2032 = vsub.s32 1, %v2031
        %v2033 = vrot.slane %v921, %v2032
        %2035 = vbcast.lane.b32.xlu0 %v2033, 256
        %v2036 = vpop.permute.xlu0 %2035
        %v2037 = vlaneseq
        %v2038 = vshrl.u32 %v2037, 7
        %v2039 = vsub.s32 2, %v2038
        %v2040 = vrot.slane %v921, %v2039
        %2042 = vbcast.lane.b32.xlu0 %v2040, 256
        %v2043 = vpop.permute.xlu0 %2042
        %v2044 = vlaneseq
        %v2045 = vshrl.u32 %v2044, 7
        %v2046 = vsub.s32 3, %v2045
        %v2047 = vrot.slane %v921, %v2046
        %2049 = vbcast.lane.b32.xlu0 %v2047, 256
        %v2050 = vpop.permute.xlu0 %2049
        %v2051 = vlaneseq
        %v2052 = vshrl.u32 %v2051, 7
        %v2053 = vsub.s32 4, %v2052
        %v2054 = vrot.slane %v921, %v2053
        %2056 = vbcast.lane.b32.xlu0 %v2054, 256
        %v2057 = vpop.permute.xlu0 %2056
        %v2058 = vlaneseq
        %v2059 = vshrl.u32 %v2058, 7
        %v2060 = vsub.s32 5, %v2059
        %v2061 = vrot.slane %v921, %v2060
        %2063 = vbcast.lane.b32.xlu0 %v2061, 256
        %v2064 = vpop.permute.xlu0 %2063
        %v2065 = vlaneseq
        %v2066 = vshrl.u32 %v2065, 7
        %v2067 = vsub.s32 6, %v2066
        %v2068 = vrot.slane %v921, %v2067
        %2070 = vbcast.lane.b32.xlu0 %v2068, 256
        %v2071 = vpop.permute.xlu0 %2070
        %v2072 = vlaneseq
        %v2073 = vshrl.u32 %v2072, 7
        %v2074 = vsub.s32 7, %v2073
        %v2075 = vrot.slane %v921, %v2074
        %2077 = vbcast.lane.b32.xlu0 %v2075, 256
        %v2078 = vpop.permute.xlu0 %2077
        %v2095 = vmul.f32 %v1934, %v1973
        %v2096 = vmul.f32 %v1936, %v1980
        %v2097 = vmul.f32 %v1938, %v1987
        %v2098 = vmul.f32 %v1940, %v1994
        %v2099 = vmul.f32 %v1942, %v2001
        %v2100 = vmul.f32 %v1944, %v2008
        %v2101 = vmul.f32 %v1946, %v2015
        %v2102 = vmul.f32 %v1948, %v2022
        %v2103 = vmul.f32 %v1950, %v2029
        %v2104 = vmul.f32 %v1952, %v2036
        %v2105 = vmul.f32 %v1954, %v2043
        %v2106 = vmul.f32 %v1956, %v2050
        %v2107 = vmul.f32 %v1958, %v2057
        %v2108 = vmul.f32 %v1960, %v2064
        %v2109 = vmul.f32 %v1962, %v2071
        %v2110 = vmul.f32 %v1964, %v2078
        %v2111 = vunpack.c.l.bf16 %v1639
        %v2112 = vunpack.c.l.bf16 %v1640
        %v2113 = vunpack.c.l.bf16 %v1641
        %v2114 = vunpack.c.l.bf16 %v1642
        %v2115 = vunpack.c.l.bf16 %v1643
        %v2116 = vunpack.c.l.bf16 %v1644
        %v2117 = vunpack.c.l.bf16 %v1645
        %v2118 = vunpack.c.l.bf16 %v1646
        %v2119 = vunpack.c.l.bf16 %v1647
        %v2120 = vunpack.c.l.bf16 %v1648
        %v2121 = vunpack.c.l.bf16 %v1649
        %v2122 = vunpack.c.l.bf16 %v1650
        %v2123 = vunpack.c.l.bf16 %v1651
        %v2124 = vunpack.c.l.bf16 %v1652
        %v2125 = vunpack.c.l.bf16 %v1653
        %v2126 = vunpack.c.l.bf16 %v1654
        %2128 = vset.pattern.permute.xlu0 0
        %2129 = vperm.xlu0 %2128, %v2095
        %v2130 = vpop.permute.xlu0 %2129
        %2133 = vset.pattern.permute.xlu0 0
        %2134 = vperm.xlu0 %2133, %v2096
        %v2135 = vpop.permute.xlu0 %2134
        %2138 = vset.pattern.permute.xlu0 0
        %2139 = vperm.xlu0 %2138, %v2097
        %v2140 = vpop.permute.xlu0 %2139
        %2143 = vset.pattern.permute.xlu0 0
        %2144 = vperm.xlu0 %2143, %v2098
        %v2145 = vpop.permute.xlu0 %2144
        %2148 = vset.pattern.permute.xlu0 0
        %2149 = vperm.xlu0 %2148, %v2099
        %v2150 = vpop.permute.xlu0 %2149
        %2153 = vset.pattern.permute.xlu0 0
        %2154 = vperm.xlu0 %2153, %v2100
        %v2155 = vpop.permute.xlu0 %2154
        %2158 = vset.pattern.permute.xlu0 0
        %2159 = vperm.xlu0 %2158, %v2101
        %v2160 = vpop.permute.xlu0 %2159
        %2163 = vset.pattern.permute.xlu0 0
        %2164 = vperm.xlu0 %2163, %v2102
        %v2165 = vpop.permute.xlu0 %2164
        %2168 = vset.pattern.permute.xlu0 0
        %2169 = vperm.xlu0 %2168, %v2103
        %v2170 = vpop.permute.xlu0 %2169
        %2173 = vset.pattern.permute.xlu0 0
        %2174 = vperm.xlu0 %2173, %v2104
        %v2175 = vpop.permute.xlu0 %2174
        %2178 = vset.pattern.permute.xlu0 0
        %2179 = vperm.xlu0 %2178, %v2105
        %v2180 = vpop.permute.xlu0 %2179
        %2183 = vset.pattern.permute.xlu0 0
        %2184 = vperm.xlu0 %2183, %v2106
        %v2185 = vpop.permute.xlu0 %2184
        %2188 = vset.pattern.permute.xlu0 0
        %2189 = vperm.xlu0 %2188, %v2107
        %v2190 = vpop.permute.xlu0 %2189
        %2193 = vset.pattern.permute.xlu0 0
        %2194 = vperm.xlu0 %2193, %v2108
        %v2195 = vpop.permute.xlu0 %2194
        %2198 = vset.pattern.permute.xlu0 0
        %2199 = vperm.xlu0 %2198, %v2109
        %v2200 = vpop.permute.xlu0 %2199
        %2203 = vset.pattern.permute.xlu0 0
        %2204 = vperm.xlu0 %2203, %v2110
        %v2205 = vpop.permute.xlu0 %2204
        %v2207 = vmul.f32 %v2130, %v2111
        %v2208 = vmul.f32 %v2135, %v2112
        %v2209 = vmul.f32 %v2140, %v2113
        %v2210 = vmul.f32 %v2145, %v2114
        %v2211 = vmul.f32 %v2150, %v2115
        %v2212 = vmul.f32 %v2155, %v2116
        %v2213 = vmul.f32 %v2160, %v2117
        %v2214 = vmul.f32 %v2165, %v2118
        %v2215 = vmul.f32 %v2170, %v2119
        %v2216 = vmul.f32 %v2175, %v2120
        %v2217 = vmul.f32 %v2180, %v2121
        %v2218 = vmul.f32 %v2185, %v2122
        %v2219 = vmul.f32 %v2190, %v2123
        %v2220 = vmul.f32 %v2195, %v2124
        %v2221 = vmul.f32 %v2200, %v2125
        %v2222 = vmul.f32 %v2205, %v2126
        %v2223 = vadd.f32 %v2207, %v1659
        %v2224 = vadd.f32 %v2208, %v1659
        %v2225 = vadd.f32 %v2209, %v1659
        %v2226 = vadd.f32 %v2210, %v1659
        %v2227 = vadd.f32 %v2211, %v1659
        %v2228 = vadd.f32 %v2212, %v1659
        %v2229 = vadd.f32 %v2213, %v1659
        %v2230 = vadd.f32 %v2214, %v1659
        %v2231 = vadd.f32 %v2215, %v1659
        %v2232 = vadd.f32 %v2216, %v1659
        %v2233 = vadd.f32 %v2217, %v1659
        %v2234 = vadd.f32 %v2218, %v1659
        %v2235 = vadd.f32 %v2219, %v1659
        %v2236 = vadd.f32 %v2220, %v1659
        %v2237 = vadd.f32 %v2221, %v1659
        %v2238 = vadd.f32 %v2222, %v1659
        %v2239 = vmax.f32 %v2223, 0.0
        %v2240 = vmax.f32 %v2224, 0.0
        %v2241 = vmax.f32 %v2225, 0.0
        %v2242 = vmax.f32 %v2226, 0.0
        %v2243 = vmax.f32 %v2227, 0.0
        %v2244 = vmax.f32 %v2228, 0.0
        %v2245 = vmax.f32 %v2229, 0.0
        %v2246 = vmax.f32 %v2230, 0.0
        %v2247 = vmax.f32 %v2231, 0.0
        %v2248 = vmax.f32 %v2232, 0.0
        %v2249 = vmax.f32 %v2233, 0.0
        %v2250 = vmax.f32 %v2234, 0.0
        %v2251 = vmax.f32 %v2235, 0.0
        %v2252 = vmax.f32 %v2236, 0.0
        %v2253 = vmax.f32 %v2237, 0.0
        %v2254 = vmax.f32 %v2238, 0.0
        %v2255 = vmul.f32 %v2239, %v1778
        %v2256 = vmul.f32 %v2240, %v1778
        %v2257 = vmul.f32 %v2241, %v1778
        %v2258 = vmul.f32 %v2242, %v1778
        %v2259 = vmul.f32 %v2243, %v1778
        %v2260 = vmul.f32 %v2244, %v1778
        %v2261 = vmul.f32 %v2245, %v1778
        %v2262 = vmul.f32 %v2246, %v1778
        %v2263 = vmul.f32 %v2247, %v1778
        %v2264 = vmul.f32 %v2248, %v1778
        %v2265 = vmul.f32 %v2249, %v1778
        %v2266 = vmul.f32 %v2250, %v1778
        %v2267 = vmul.f32 %v2251, %v1778
        %v2268 = vmul.f32 %v2252, %v1778
        %v2269 = vmul.f32 %v2253, %v1778
        %v2270 = vmul.f32 %v2254, %v1778
        %v2271 = vsel %vm1206, %v2255, 0.0
        %2272 = vadd.xlane.f32.xlu0 %v2271
        %v2273 = vpop.xlane.xlu0 %2272
        %v2274 = vsel %vm1206, %v2256, 0.0
        %2275 = vadd.xlane.f32.xlu0 %v2274
        %v2276 = vpop.xlane.xlu0 %2275
        %v2277 = vsel %vm1206, %v2257, 0.0
        %2278 = vadd.xlane.f32.xlu0 %v2277
        %v2279 = vpop.xlane.xlu0 %2278
        %v2280 = vsel %vm1206, %v2258, 0.0
        %2281 = vadd.xlane.f32.xlu0 %v2280
        %v2282 = vpop.xlane.xlu0 %2281
        %v2283 = vsel %vm1206, %v2259, 0.0
        %2284 = vadd.xlane.f32.xlu0 %v2283
        %v2285 = vpop.xlane.xlu0 %2284
        %v2286 = vsel %vm1206, %v2260, 0.0
        %2287 = vadd.xlane.f32.xlu0 %v2286
        %v2288 = vpop.xlane.xlu0 %2287
        %v2289 = vsel %vm1206, %v2261, 0.0
        %2290 = vadd.xlane.f32.xlu0 %v2289
        %v2291 = vpop.xlane.xlu0 %2290
        %v2292 = vsel %vm1206, %v2262, 0.0
        %2293 = vadd.xlane.f32.xlu0 %v2292
        %v2294 = vpop.xlane.xlu0 %2293
        %v2295 = vsel %vm1206, %v2263, 0.0
        %2296 = vadd.xlane.f32.xlu0 %v2295
        %v2297 = vpop.xlane.xlu0 %2296
        %v2298 = vsel %vm1206, %v2264, 0.0
        %2299 = vadd.xlane.f32.xlu0 %v2298
        %v2300 = vpop.xlane.xlu0 %2299
        %v2301 = vsel %vm1206, %v2265, 0.0
        %2302 = vadd.xlane.f32.xlu0 %v2301
        %v2303 = vpop.xlane.xlu0 %2302
        %v2304 = vsel %vm1206, %v2266, 0.0
        %2305 = vadd.xlane.f32.xlu0 %v2304
        %v2306 = vpop.xlane.xlu0 %2305
        %v2307 = vsel %vm1206, %v2267, 0.0
        %2308 = vadd.xlane.f32.xlu0 %v2307
        %v2309 = vpop.xlane.xlu0 %2308
        %v2310 = vsel %vm1206, %v2268, 0.0
        %2311 = vadd.xlane.f32.xlu0 %v2310
        %v2312 = vpop.xlane.xlu0 %2311
        %v2313 = vsel %vm1206, %v2269, 0.0
        %2314 = vadd.xlane.f32.xlu0 %v2313
        %v2315 = vpop.xlane.xlu0 %2314
        %v2316 = vsel %vm1206, %v2270, 0.0
        %2317 = vadd.xlane.f32.xlu0 %v2316
        %v2318 = vpop.xlane.xlu0 %2317
        %v2319 = vadd.f32 %v2273, %v1851
        %v2320 = vadd.f32 %v2276, %v1851
        %v2321 = vadd.f32 %v2279, %v1851
        %v2322 = vadd.f32 %v2282, %v1851
        %v2323 = vadd.f32 %v2285, %v1851
        %v2324 = vadd.f32 %v2288, %v1851
        %v2325 = vadd.f32 %v2291, %v1851
        %v2326 = vadd.f32 %v2294, %v1851
        %v2327 = vadd.f32 %v2297, %v1851
        %v2328 = vadd.f32 %v2300, %v1851
        %v2329 = vadd.f32 %v2303, %v1851
        %v2330 = vadd.f32 %v2306, %v1851
        %v2331 = vadd.f32 %v2309, %v1851
        %v2332 = vadd.f32 %v2312, %v1851
        %v2333 = vadd.f32 %v2315, %v1851
        %v2334 = vadd.f32 %v2318, %v1851
        %v2351 = vlaneseq
        %v2352 = vshrl.u32 %v2351, 7
        %v2353 = vsub.s32 %v858, %v2352
        %v2354 = vrot.slane %v2319, %v2353
        %v2355 = vlaneseq
        %v2356 = vshrl.u32 %v2355, 7
        %v2357 = vsub.s32 %v858, %v2356
        %v2358 = vrot.slane %v2320, %v2357
        %v2359 = vlaneseq
        %v2360 = vshrl.u32 %v2359, 7
        %v2361 = vsub.s32 %v858, %v2360
        %v2362 = vrot.slane %v2321, %v2361
        %v2363 = vlaneseq
        %v2364 = vshrl.u32 %v2363, 7
        %v2365 = vsub.s32 %v858, %v2364
        %v2366 = vrot.slane %v2322, %v2365
        %v2367 = vlaneseq
        %v2368 = vshrl.u32 %v2367, 7
        %v2369 = vsub.s32 %v858, %v2368
        %v2370 = vrot.slane %v2323, %v2369
        %v2371 = vlaneseq
        %v2372 = vshrl.u32 %v2371, 7
        %v2373 = vsub.s32 %v858, %v2372
        %v2374 = vrot.slane %v2324, %v2373
        %v2375 = vlaneseq
        %v2376 = vshrl.u32 %v2375, 7
        %v2377 = vsub.s32 %v858, %v2376
        %v2378 = vrot.slane %v2325, %v2377
        %v2379 = vlaneseq
        %v2380 = vshrl.u32 %v2379, 7
        %v2381 = vsub.s32 %v858, %v2380
        %v2382 = vrot.slane %v2326, %v2381
        %v2383 = vlaneseq
        %v2384 = vshrl.u32 %v2383, 7
        %v2385 = vsub.s32 %v858, %v2384
        %v2386 = vrot.slane %v2327, %v2385
        %v2387 = vlaneseq
        %v2388 = vshrl.u32 %v2387, 7
        %v2389 = vsub.s32 %v858, %v2388
        %v2390 = vrot.slane %v2328, %v2389
        %v2391 = vlaneseq
        %v2392 = vshrl.u32 %v2391, 7
        %v2393 = vsub.s32 %v858, %v2392
        %v2394 = vrot.slane %v2329, %v2393
        %v2395 = vlaneseq
        %v2396 = vshrl.u32 %v2395, 7
        %v2397 = vsub.s32 %v858, %v2396
        %v2398 = vrot.slane %v2330, %v2397
        %v2399 = vlaneseq
        %v2400 = vshrl.u32 %v2399, 7
        %v2401 = vsub.s32 %v858, %v2400
        %v2402 = vrot.slane %v2331, %v2401
        %v2403 = vlaneseq
        %v2404 = vshrl.u32 %v2403, 7
        %v2405 = vsub.s32 %v858, %v2404
        %v2406 = vrot.slane %v2332, %v2405
        %v2407 = vlaneseq
        %v2408 = vshrl.u32 %v2407, 7
        %v2409 = vsub.s32 %v858, %v2408
        %v2410 = vrot.slane %v2333, %v2409
        %v2411 = vlaneseq
        %v2412 = vshrl.u32 %v2411, 7
        %v2413 = vsub.s32 %v858, %v2412
        %v2414 = vrot.slane %v2334, %v2413
        %vm2415 = vcmask 1041409
        %v2416 = vsel %vm2415, %v2358, %v2354
        %vm2417 = vcmask 1042434
        %v2418 = vsel %vm2417, %v2362, %v2416
        %vm2419 = vcmask 1043459
        %v2420 = vsel %vm2419, %v2366, %v2418
        %vm2421 = vcmask 1044484
        %v2422 = vsel %vm2421, %v2370, %v2420
        %vm2423 = vcmask 1045509
        %v2424 = vsel %vm2423, %v2374, %v2422
        %vm2425 = vcmask 1046534
        %v2426 = vsel %vm2425, %v2378, %v2424
        %vm2427 = vcmask 1047559
        %v2428 = vsel %vm2427, %v2382, %v2426
        %v2429 = vsel %vm2415, %v2390, %v2386
        %v2430 = vsel %vm2417, %v2394, %v2429
        %v2431 = vsel %vm2419, %v2398, %v2430
        %v2432 = vsel %vm2421, %v2402, %v2431
        %v2433 = vsel %vm2423, %v2406, %v2432
        %v2434 = vsel %vm2425, %v2410, %v2433
        %v2435 = vsel %vm2427, %v2414, %v2434
        %2438 = vxpose.xlu0.b32.start [1/16] %v2428, 128
        %2439 = vxpose.xlu0.b32.cont [2/16] 0.0, 128
        %2440 = vxpose.xlu0.b32.cont [3/16] 0.0, 128
        %2441 = vxpose.xlu0.b32.cont [4/16] 0.0, 128
        %2442 = vxpose.xlu0.b32.cont [5/16] 0.0, 128
        %2443 = vxpose.xlu0.b32.cont [6/16] 0.0, 128
        %2444 = vxpose.xlu0.b32.cont [7/16] 0.0, 128
        %2445 = vxpose.xlu0.b32.cont [8/16] 0.0, 128
        %2446 = vxpose.xlu0.b32.cont [9/16] 0.0, 128
        %2447 = vxpose.xlu0.b32.cont [10/16] 0.0, 128
        %2448 = vxpose.xlu0.b32.cont [11/16] 0.0, 128
        %2449 = vxpose.xlu0.b32.cont [12/16] 0.0, 128
        %2450 = vxpose.xlu0.b32.cont [13/16] 0.0, 128
        %2451 = vxpose.xlu0.b32.cont [14/16] 0.0, 128
        %2452 = vxpose.xlu0.b32.cont [15/16] 0.0, 128
        %2453 = vxpose.xlu0.b32.end [16/16] 0.0, 128
        %v2454 = vpop.trf.xlu0
        %v2455 = vpop.trf.xlu0
        %v2456 = vpop.trf.xlu0
        %v2457 = vpop.trf.xlu0
        %v2458 = vpop.trf.xlu0
        %v2459 = vpop.trf.xlu0
        %v2460 = vpop.trf.xlu0
        %v2461 = vpop.trf.xlu0
        %v2462 = vpop.trf.xlu0
        %v2463 = vpop.trf.xlu0
        %v2464 = vpop.trf.xlu0
        %v2465 = vpop.trf.xlu0
        %v2466 = vpop.trf.xlu0
        %v2467 = vpop.trf.xlu0
        %v2468 = vpop.trf.xlu0
        %v2469 = vpop.trf.xlu0
        %2470 = vxpose.xlu0.b32.start [1/16] %v2435, 128
        %2471 = vxpose.xlu0.b32.cont [2/16] 0.0, 128
        %2472 = vxpose.xlu0.b32.cont [3/16] 0.0, 128
        %2473 = vxpose.xlu0.b32.cont [4/16] 0.0, 128
        %2474 = vxpose.xlu0.b32.cont [5/16] 0.0, 128
        %2475 = vxpose.xlu0.b32.cont [6/16] 0.0, 128
        %2476 = vxpose.xlu0.b32.cont [7/16] 0.0, 128
        %2477 = vxpose.xlu0.b32.cont [8/16] 0.0, 128
        %2478 = vxpose.xlu0.b32.cont [9/16] 0.0, 128
        %2479 = vxpose.xlu0.b32.cont [10/16] 0.0, 128
        %2480 = vxpose.xlu0.b32.cont [11/16] 0.0, 128
        %2481 = vxpose.xlu0.b32.cont [12/16] 0.0, 128
        %2482 = vxpose.xlu0.b32.cont [13/16] 0.0, 128
        %2483 = vxpose.xlu0.b32.cont [14/16] 0.0, 128
        %2484 = vxpose.xlu0.b32.cont [15/16] 0.0, 128
        %2485 = vxpose.xlu0.b32.end [16/16] 0.0, 128
        %v2486 = vpop.trf.xlu0
        %v2487 = vpop.trf.xlu0
        %v2488 = vpop.trf.xlu0
        %v2489 = vpop.trf.xlu0
        %v2490 = vpop.trf.xlu0
        %v2491 = vpop.trf.xlu0
        %v2492 = vpop.trf.xlu0
        %v2493 = vpop.trf.xlu0
        %v2494 = vpop.trf.xlu0
        %v2495 = vpop.trf.xlu0
        %v2496 = vpop.trf.xlu0
        %v2497 = vpop.trf.xlu0
        %v2498 = vpop.trf.xlu0
        %v2499 = vpop.trf.xlu0
        %v2500 = vpop.trf.xlu0
        %v2501 = vpop.trf.xlu0
        %v2502 = vxor.u32 %v2454, 2147483648
        %v2503 = vxor.u32 %v2486, 2147483648
        %v2504 = vmul.f32 %v2502, 1.442695
        %v2505 = vpow.pop %v2504
        %v2506 = vmul.f32 %v2503, 1.442695
        %v2507 = vpow.pop %v2506
        %v2508 = vadd.f32 %v2505, 1.0
        %v2509 = vadd.f32 %v2507, 1.0
        %v2510 = vrcp.pop %v2508
        %v2511 = vmul.f32 1.0, %v2510
        %v2512 = vrcp.pop %v2509
        %v2513 = vmul.f32 1.0, %v2512
        %v2514 = vmul.f32 %v2511, %v920
        %v2515 = vmul.f32 %v2513, %v921
        %v2516 = vlaneseq
        %v2517 = vshrl.u32 %v2516, 7
        %v2518 = vsub.s32 0, %v2517
        %v2519 = vrot.slane %v2514, %v2518
        %2521 = vbcast.lane.b32.xlu0 %v2519, 256
        %v2522 = vpop.permute.xlu0 %2521
        %v2523 = vlaneseq
        %v2524 = vshrl.u32 %v2523, 7
        %v2525 = vsub.s32 1, %v2524
        %v2526 = vrot.slane %v2514, %v2525
        %2528 = vbcast.lane.b32.xlu0 %v2526, 256
        %v2529 = vpop.permute.xlu0 %2528
        %v2530 = vlaneseq
        %v2531 = vshrl.u32 %v2530, 7
        %v2532 = vsub.s32 2, %v2531
        %v2533 = vrot.slane %v2514, %v2532
        %2535 = vbcast.lane.b32.xlu0 %v2533, 256
        %v2536 = vpop.permute.xlu0 %2535
        %v2537 = vlaneseq
        %v2538 = vshrl.u32 %v2537, 7
        %v2539 = vsub.s32 3, %v2538
        %v2540 = vrot.slane %v2514, %v2539
        %2542 = vbcast.lane.b32.xlu0 %v2540, 256
        %v2543 = vpop.permute.xlu0 %2542
        %v2544 = vlaneseq
        %v2545 = vshrl.u32 %v2544, 7
        %v2546 = vsub.s32 4, %v2545
        %v2547 = vrot.slane %v2514, %v2546
        %2549 = vbcast.lane.b32.xlu0 %v2547, 256
        %v2550 = vpop.permute.xlu0 %2549
        %v2551 = vlaneseq
        %v2552 = vshrl.u32 %v2551, 7
        %v2553 = vsub.s32 5, %v2552
        %v2554 = vrot.slane %v2514, %v2553
        %2556 = vbcast.lane.b32.xlu0 %v2554, 256
        %v2557 = vpop.permute.xlu0 %2556
        %v2558 = vlaneseq
        %v2559 = vshrl.u32 %v2558, 7
        %v2560 = vsub.s32 6, %v2559
        %v2561 = vrot.slane %v2514, %v2560
        %2563 = vbcast.lane.b32.xlu0 %v2561, 256
        %v2564 = vpop.permute.xlu0 %2563
        %v2565 = vlaneseq
        %v2566 = vshrl.u32 %v2565, 7
        %v2567 = vsub.s32 7, %v2566
        %v2568 = vrot.slane %v2514, %v2567
        %2570 = vbcast.lane.b32.xlu0 %v2568, 256
        %v2571 = vpop.permute.xlu0 %2570
        %v2572 = vlaneseq
        %v2573 = vshrl.u32 %v2572, 7
        %v2574 = vsub.s32 0, %v2573
        %v2575 = vrot.slane %v2515, %v2574
        %2577 = vbcast.lane.b32.xlu0 %v2575, 256
        %v2578 = vpop.permute.xlu0 %2577
        %v2579 = vlaneseq
        %v2580 = vshrl.u32 %v2579, 7
        %v2581 = vsub.s32 1, %v2580
        %v2582 = vrot.slane %v2515, %v2581
        %2584 = vbcast.lane.b32.xlu0 %v2582, 256
        %v2585 = vpop.permute.xlu0 %2584
        %v2586 = vlaneseq
        %v2587 = vshrl.u32 %v2586, 7
        %v2588 = vsub.s32 2, %v2587
        %v2589 = vrot.slane %v2515, %v2588
        %2591 = vbcast.lane.b32.xlu0 %v2589, 256
        %v2592 = vpop.permute.xlu0 %2591
        %v2593 = vlaneseq
        %v2594 = vshrl.u32 %v2593, 7
        %v2595 = vsub.s32 3, %v2594
        %v2596 = vrot.slane %v2515, %v2595
        %2598 = vbcast.lane.b32.xlu0 %v2596, 256
        %v2599 = vpop.permute.xlu0 %2598
        %v2600 = vlaneseq
        %v2601 = vshrl.u32 %v2600, 7
        %v2602 = vsub.s32 4, %v2601
        %v2603 = vrot.slane %v2515, %v2602
        %2605 = vbcast.lane.b32.xlu0 %v2603, 256
        %v2606 = vpop.permute.xlu0 %2605
        %v2607 = vlaneseq
        %v2608 = vshrl.u32 %v2607, 7
        %v2609 = vsub.s32 5, %v2608
        %v2610 = vrot.slane %v2515, %v2609
        %2612 = vbcast.lane.b32.xlu0 %v2610, 256
        %v2613 = vpop.permute.xlu0 %2612
        %v2614 = vlaneseq
        %v2615 = vshrl.u32 %v2614, 7
        %v2616 = vsub.s32 6, %v2615
        %v2617 = vrot.slane %v2515, %v2616
        %2619 = vbcast.lane.b32.xlu0 %v2617, 256
        %v2620 = vpop.permute.xlu0 %2619
        %v2621 = vlaneseq
        %v2622 = vshrl.u32 %v2621, 7
        %v2623 = vsub.s32 7, %v2622
        %v2624 = vrot.slane %v2515, %v2623
        %2626 = vbcast.lane.b32.xlu0 %v2624, 256
        %v2627 = vpop.permute.xlu0 %2626
        %v2628 = vunpack.c.l.bf16 %v1443
        %v2629 = vunpack.c.l.bf16 %v1444
        %v2630 = vunpack.c.l.bf16 %v1445
        %v2631 = vunpack.c.l.bf16 %v1446
        %v2632 = vunpack.c.l.bf16 %v1447
        %v2633 = vunpack.c.l.bf16 %v1448
        %v2634 = vunpack.c.l.bf16 %v1449
        %v2635 = vunpack.c.l.bf16 %v1450
        %v2636 = vunpack.c.l.bf16 %v1451
        %v2637 = vunpack.c.l.bf16 %v1452
        %v2638 = vunpack.c.l.bf16 %v1453
        %v2639 = vunpack.c.l.bf16 %v1454
        %v2640 = vunpack.c.l.bf16 %v1455
        %v2641 = vunpack.c.l.bf16 %v1456
        %v2642 = vunpack.c.l.bf16 %v1457
        %v2643 = vunpack.c.l.bf16 %v1458
        %v2644 = vmul.f32 %v2522, %v2628
        %v2645 = vmul.f32 %v2529, %v2629
        %v2646 = vmul.f32 %v2536, %v2630
        %v2647 = vmul.f32 %v2543, %v2631
        %v2648 = vmul.f32 %v2550, %v2632
        %v2649 = vmul.f32 %v2557, %v2633
        %v2650 = vmul.f32 %v2564, %v2634
        %v2651 = vmul.f32 %v2571, %v2635
        %v2652 = vmul.f32 %v2578, %v2636
        %v2653 = vmul.f32 %v2585, %v2637
        %v2654 = vmul.f32 %v2592, %v2638
        %v2655 = vmul.f32 %v2599, %v2639
        %v2656 = vmul.f32 %v2606, %v2640
        %v2657 = vmul.f32 %v2613, %v2641
        %v2658 = vmul.f32 %v2620, %v2642
        %v2659 = vmul.f32 %v2627, %v2643
        %v2660 = vsel %vm1206, %v2644, 0.0
        %v2661 = vrot.slane %v2660, 4
        %v2662 = vadd.f32 %v2660, %v2661
        %v2663 = vrot.slane %v2662, 2
        %v2664 = vadd.f32 %v2662, %v2663
        %v2665 = vrot.slane %v2664, 1
        %v2666 = vadd.f32 %v2664, %v2665
        %v2667 = vsel %vm1206, %v2645, 0.0
        %v2668 = vrot.slane %v2667, 4
        %v2669 = vadd.f32 %v2667, %v2668
        %v2670 = vrot.slane %v2669, 2
        %v2671 = vadd.f32 %v2669, %v2670
        %v2672 = vrot.slane %v2671, 1
        %v2673 = vadd.f32 %v2671, %v2672
        %v2674 = vsel %vm1206, %v2646, 0.0
        %v2675 = vrot.slane %v2674, 4
        %v2676 = vadd.f32 %v2674, %v2675
        %v2677 = vrot.slane %v2676, 2
        %v2678 = vadd.f32 %v2676, %v2677
        %v2679 = vrot.slane %v2678, 1
        %v2680 = vadd.f32 %v2678, %v2679
        %v2681 = vsel %vm1206, %v2647, 0.0
        %v2682 = vrot.slane %v2681, 4
        %v2683 = vadd.f32 %v2681, %v2682
        %v2684 = vrot.slane %v2683, 2
        %v2685 = vadd.f32 %v2683, %v2684
        %v2686 = vrot.slane %v2685, 1
        %v2687 = vadd.f32 %v2685, %v2686
        %v2688 = vsel %vm1206, %v2648, 0.0
        %v2689 = vrot.slane %v2688, 4
        %v2690 = vadd.f32 %v2688, %v2689
        %v2691 = vrot.slane %v2690, 2
        %v2692 = vadd.f32 %v2690, %v2691
        %v2693 = vrot.slane %v2692, 1
        %v2694 = vadd.f32 %v2692, %v2693
        %v2695 = vsel %vm1206, %v2649, 0.0
        %v2696 = vrot.slane %v2695, 4
        %v2697 = vadd.f32 %v2695, %v2696
        %v2698 = vrot.slane %v2697, 2
        %v2699 = vadd.f32 %v2697, %v2698
        %v2700 = vrot.slane %v2699, 1
        %v2701 = vadd.f32 %v2699, %v2700
        %v2702 = vsel %vm1206, %v2650, 0.0
        %v2703 = vrot.slane %v2702, 4
        %v2704 = vadd.f32 %v2702, %v2703
        %v2705 = vrot.slane %v2704, 2
        %v2706 = vadd.f32 %v2704, %v2705
        %v2707 = vrot.slane %v2706, 1
        %v2708 = vadd.f32 %v2706, %v2707
        %v2709 = vsel %vm1206, %v2651, 0.0
        %v2710 = vrot.slane %v2709, 4
        %v2711 = vadd.f32 %v2709, %v2710
        %v2712 = vrot.slane %v2711, 2
        %v2713 = vadd.f32 %v2711, %v2712
        %v2714 = vrot.slane %v2713, 1
        %v2715 = vadd.f32 %v2713, %v2714
        %v2716 = vsel %vm1206, %v2652, 0.0
        %v2717 = vrot.slane %v2716, 4
        %v2718 = vadd.f32 %v2716, %v2717
        %v2719 = vrot.slane %v2718, 2
        %v2720 = vadd.f32 %v2718, %v2719
        %v2721 = vrot.slane %v2720, 1
        %v2722 = vadd.f32 %v2720, %v2721
        %v2723 = vsel %vm1206, %v2653, 0.0
        %v2724 = vrot.slane %v2723, 4
        %v2725 = vadd.f32 %v2723, %v2724
        %v2726 = vrot.slane %v2725, 2
        %v2727 = vadd.f32 %v2725, %v2726
        %v2728 = vrot.slane %v2727, 1
        %v2729 = vadd.f32 %v2727, %v2728
        %v2730 = vsel %vm1206, %v2654, 0.0
        %v2731 = vrot.slane %v2730, 4
        %v2732 = vadd.f32 %v2730, %v2731
        %v2733 = vrot.slane %v2732, 2
        %v2734 = vadd.f32 %v2732, %v2733
        %v2735 = vrot.slane %v2734, 1
        %v2736 = vadd.f32 %v2734, %v2735
        %v2737 = vsel %vm1206, %v2655, 0.0
        %v2738 = vrot.slane %v2737, 4
        %v2739 = vadd.f32 %v2737, %v2738
        %v2740 = vrot.slane %v2739, 2
        %v2741 = vadd.f32 %v2739, %v2740
        %v2742 = vrot.slane %v2741, 1
        %v2743 = vadd.f32 %v2741, %v2742
        %v2744 = vsel %vm1206, %v2656, 0.0
        %v2745 = vrot.slane %v2744, 4
        %v2746 = vadd.f32 %v2744, %v2745
        %v2747 = vrot.slane %v2746, 2
        %v2748 = vadd.f32 %v2746, %v2747
        %v2749 = vrot.slane %v2748, 1
        %v2750 = vadd.f32 %v2748, %v2749
        %v2751 = vsel %vm1206, %v2657, 0.0
        %v2752 = vrot.slane %v2751, 4
        %v2753 = vadd.f32 %v2751, %v2752
        %v2754 = vrot.slane %v2753, 2
        %v2755 = vadd.f32 %v2753, %v2754
        %v2756 = vrot.slane %v2755, 1
        %v2757 = vadd.f32 %v2755, %v2756
        %v2758 = vsel %vm1206, %v2658, 0.0
        %v2759 = vrot.slane %v2758, 4
        %v2760 = vadd.f32 %v2758, %v2759
        %v2761 = vrot.slane %v2760, 2
        %v2762 = vadd.f32 %v2760, %v2761
        %v2763 = vrot.slane %v2762, 1
        %v2764 = vadd.f32 %v2762, %v2763
        %v2765 = vsel %vm1206, %v2659, 0.0
        %v2766 = vrot.slane %v2765, 4
        %v2767 = vadd.f32 %v2765, %v2766
        %v2768 = vrot.slane %v2767, 2
        %v2769 = vadd.f32 %v2767, %v2768
        %v2770 = vrot.slane %v2769, 1
        %v2771 = vadd.f32 %v2769, %v2770
        %v2772 = vpack.c.bf16 %v2666, %v2666
        %v2773 = vpack.c.bf16 %v2673, %v2673
        %v2774 = vpack.c.bf16 %v2680, %v2680
        %v2775 = vpack.c.bf16 %v2687, %v2687
        %v2776 = vpack.c.bf16 %v2694, %v2694
        %v2777 = vpack.c.bf16 %v2701, %v2701
        %v2778 = vpack.c.bf16 %v2708, %v2708
        %v2779 = vpack.c.bf16 %v2715, %v2715
        %v2780 = vpack.c.bf16 %v2722, %v2722
        %v2781 = vpack.c.bf16 %v2729, %v2729
        %v2782 = vpack.c.bf16 %v2736, %v2736
        %v2783 = vpack.c.bf16 %v2743, %v2743
        %v2784 = vpack.c.bf16 %v2750, %v2750
        %v2785 = vpack.c.bf16 %v2757, %v2757
        %v2786 = vpack.c.bf16 %v2764, %v2764
        %v2787 = vpack.c.bf16 %v2771, %v2771
        %v2788 = vld [vmem:[%s14] sm:$0xf]
        %v2789 = vld [vmem:[%s14 + $0x4] sm:$0xf]
        %v2790 = vld [vmem:[%s14 + $0x8] sm:$0xf]
        %v2791 = vld [vmem:[%s14 + $0xc] sm:$0xf]
        %v2792 = vld [vmem:[#allocation23] sm:$0x1]
        %v2794 = vlaneseq
        %v2795 = vshrl.u32 %v2794, 7
        %v2796 = vsub.s32 0, %v2795
        %v2797 = vrot.slane %v2792, %v2796
        %v2815 = vunpack.c.l.b16 %v2772
        %v2816 = vunpack.c.l.b16 %v2773
        %v2817 = vunpack.c.l.b16 %v2774
        %v2818 = vunpack.c.l.b16 %v2775
        %v2819 = vunpack.c.l.b16 %v2776
        %v2820 = vunpack.c.l.b16 %v2777
        %v2821 = vunpack.c.l.b16 %v2778
        %v2822 = vunpack.c.l.b16 %v2779
        %v2823 = vunpack.c.l.b16 %v2780
        %v2824 = vunpack.c.l.b16 %v2781
        %v2825 = vunpack.c.l.b16 %v2782
        %v2826 = vunpack.c.l.b16 %v2783
        %v2827 = vunpack.c.l.b16 %v2784
        %v2828 = vunpack.c.l.b16 %v2785
        %v2829 = vunpack.c.l.b16 %v2786
        %v2830 = vunpack.c.l.b16 %v2787
        %v2831 = vsel %vm2415, %v2816, %v2815
        %v2832 = vsel %vm2417, %v2817, %v2831
        %v2833 = vsel %vm2419, %v2818, %v2832
        %v2834 = vsel %vm2421, %v2819, %v2833
        %v2835 = vsel %vm2423, %v2820, %v2834
        %v2836 = vsel %vm2425, %v2821, %v2835
        %v2837 = vsel %vm2427, %v2822, %v2836
        %v2838 = vsel %vm2415, %v2824, %v2823
        %v2839 = vsel %vm2417, %v2825, %v2838
        %v2840 = vsel %vm2419, %v2826, %v2839
        %v2841 = vsel %vm2421, %v2827, %v2840
        %v2842 = vsel %vm2423, %v2828, %v2841
        %v2843 = vsel %vm2425, %v2829, %v2842
        %v2844 = vsel %vm2427, %v2830, %v2843
        %v2845 = vpack.c.b16 %v2844, %v2837
        %v2850 = vunpack.c.l.b16 %v2788
        %v2851 = vunpack.c.l.b16 %v2789
        %v2852 = vunpack.c.l.b16 %v2790
        %v2853 = vunpack.c.l.b16 %v2791
        %v2854 = vpack.c.b16 %v2851, %v2850
        %v2855 = vpack.c.b16 %v2853, %v2852
        %v2859 = vsel %vm1206, %v2845, 0
        %2861 = vmatprep.subr.bf16.mxu0 0
        %2862 = vmatpush1.bf16.msra.mxu0 %v2854
        %2863 = vmatprep.subr.bf16.mxu0 0
        %2864 = vmatpush1.bf16.msra.mxu0 %v2855
        %2865 = vmatprep.subr.bf16.mxu0 0
        %2866 = vmatpush1.bf16.msra.mxu0 0
        %2867 = vmatprep.subr.bf16.mxu0 0
        %2868 = vmatpush1.bf16.msra.mxu0 0
        %2869 = vmatprep.subr.bf16.mxu0 0
        %2870 = vmatpush1.bf16.msra.mxu0 0
        %2871 = vmatprep.subr.bf16.mxu0 0
        %2872 = vmatpush1.bf16.msra.mxu0 0
        %2873 = vmatprep.subr.bf16.mxu0 0
        %2874 = vmatpush1.bf16.msra.mxu0 0
        %2875 = vmatprep.subr.bf16.mxu0 0
        %2876 = vmatpush1.bf16.msra.mxu0 0
        %2877 = vmatprep.subr.bf16.mxu0 0
        %2878 = vmatpush1.bf16.msra.mxu0 0
        %2879 = vmatprep.subr.bf16.mxu0 0
        %2880 = vmatpush1.bf16.msra.mxu0 0
        %2881 = vmatprep.subr.bf16.mxu0 0
        %2882 = vmatpush1.bf16.msra.mxu0 0
        %2883 = vmatprep.subr.bf16.mxu0 0
        %2884 = vmatpush1.bf16.msra.mxu0 0
        %2885 = vmatprep.subr.bf16.mxu0 0
        %2886 = vmatpush1.bf16.msra.mxu0 0
        %2887 = vmatprep.subr.bf16.mxu0 0
        %2888 = vmatpush1.bf16.msra.mxu0 0
        %2889 = vmatprep.subr.bf16.mxu0 0
        %2890 = vmatpush1.bf16.msra.mxu0 0
        %2891 = vmatprep.subr.bf16.mxu0 0
        %2892 = vmatpush1.bf16.msra.mxu0 0
        %2893 = vmatprep.mubr.bf16.mxu0 0
        %2894 = vmatmul.mubr.bf16.gmra.mrb[0].mxu0 %v2859
        %v2895 = vpop.f32.mrb[0].mxu0
        %v2896 = vadd.f32 %v2797, %v2895
        %v2897 = vpop.f32.mrb[0].mxu0
        %v2898 = vpop.f32.mrb[0].mxu0
        %v2899 = vadd.f32 %v2797, %v2898
        %v2900 = vpop.f32.mrb[0].mxu0
        %2901 = vdwg.mxu0
        %v2902 = vld [vmem:[#allocation22] sm:$0xf]
        %v2903 = vld [vmem:[#allocation22 + $0x4] sm:$0xf]
        %v2904 = vld [vmem:[#allocation22 + $0x8] sm:$0xf]
        %v2905 = vld [vmem:[#allocation22 + $0xc] sm:$0xf]
        %v2906 = vld [vmem:[#allocation25] sm:$0x1]
        %v2908 = vlaneseq
        %v2909 = vshrl.u32 %v2908, 7
        %v2910 = vsub.s32 0, %v2909
        %v2911 = vrot.slane %v2906, %v2910
        %v2917 = vunpack.c.l.b16 %v2902
        %v2918 = vunpack.c.l.b16 %v2903
        %v2919 = vunpack.c.l.b16 %v2904
        %v2920 = vunpack.c.l.b16 %v2905
        %v2921 = vpack.c.b16 %v2918, %v2917
        %v2922 = vpack.c.b16 %v2920, %v2919
        %2925 = vmatprep.subr.bf16.mxu0 0
        %2926 = vmatpush1.bf16.msra.mxu0 %v2921
        %2927 = vmatprep.subr.bf16.mxu0 0
        %2928 = vmatpush1.bf16.msra.mxu0 %v2922
        %2929 = vmatprep.subr.bf16.mxu0 0
        %2930 = vmatpush1.bf16.msra.mxu0 0
        %2931 = vmatprep.subr.bf16.mxu0 0
        %2932 = vmatpush1.bf16.msra.mxu0 0
        %2933 = vmatprep.subr.bf16.mxu0 0
        %2934 = vmatpush1.bf16.msra.mxu0 0
        %2935 = vmatprep.subr.bf16.mxu0 0
        %2936 = vmatpush1.bf16.msra.mxu0 0
        %2937 = vmatprep.subr.bf16.mxu0 0
        %2938 = vmatpush1.bf16.msra.mxu0 0
        %2939 = vmatprep.subr.bf16.mxu0 0
        %2940 = vmatpush1.bf16.msra.mxu0 0
        %2941 = vmatprep.subr.bf16.mxu0 0
        %2942 = vmatpush1.bf16.msra.mxu0 0
        %2943 = vmatprep.subr.bf16.mxu0 0
        %2944 = vmatpush1.bf16.msra.mxu0 0
        %2945 = vmatprep.subr.bf16.mxu0 0
        %2946 = vmatpush1.bf16.msra.mxu0 0
        %2947 = vmatprep.subr.bf16.mxu0 0
        %2948 = vmatpush1.bf16.msra.mxu0 0
        %2949 = vmatprep.subr.bf16.mxu0 0
        %2950 = vmatpush1.bf16.msra.mxu0 0
        %2951 = vmatprep.subr.bf16.mxu0 0
        %2952 = vmatpush1.bf16.msra.mxu0 0
        %2953 = vmatprep.subr.bf16.mxu0 0
        %2954 = vmatpush1.bf16.msra.mxu0 0
        %2955 = vmatprep.subr.bf16.mxu0 0
        %2956 = vmatpush1.bf16.msra.mxu0 0
        %2957 = vmatprep.mubr.bf16.mxu0 0
        %2958 = vmatmul.mubr.bf16.gmra.mrb[0].mxu0 %v1208
        %v2959 = vpop.f32.mrb[0].mxu0
        %v2960 = vadd.f32 %v2911, %v2959
        %v2961 = vpop.f32.mrb[0].mxu0
        %v2962 = vpop.f32.mrb[0].mxu0
        %v2963 = vadd.f32 %v2911, %v2962
        %v2964 = vpop.f32.mrb[0].mxu0
        %2965 = vdwg.mxu0
        %v2966 = vadd.f32 %v2896, %v2960
        %v2967 = vadd.f32 %v2899, %v2963
        %v2968 = vxor.u32 %v2966, 2147483648
        %v2969 = vxor.u32 %v2967, 2147483648
        %v2970 = vmul.f32 %v2968, 1.442695
        %v2971 = vpow.pop %v2970
        %v2972 = vmul.f32 %v2969, 1.442695
        %v2973 = vpow.pop %v2972
        %v2974 = vadd.f32 %v2971, 1.0
        %v2975 = vadd.f32 %v2973, 1.0
        %v2976 = vrcp.pop %v2974
        %v2977 = vmul.f32 1.0, %v2976
        %v2978 = vrcp.pop %v2975
        %v2979 = vmul.f32 1.0, %v2978
        %2982 = vrot.lane.b32.xlu0 %v2960, 64
        %v2983 = vpop.permute.xlu0 %2982
        %2984 = vrot.lane.b32.xlu0 %v2963, 64
        %v2985 = vpop.permute.xlu0 %2984
        %v2988 = vmul.f32 %v2977, %v2983
        %v2989 = vmul.f32 %v2979, %v2985
        %2992 = vrot.lane.b32.xlu0 %v2988, 64
        %v2993 = vpop.permute.xlu0 %2992
        %2994 = vrot.lane.b32.xlu0 %v2989, 64
        %v2995 = vpop.permute.xlu0 %2994
        %v2998 = vadd.f32 %v2896, %v2993
        %v2999 = vadd.f32 %v2899, %v2995
        %v3000 = vtanh.pop %v2998
        %v3001 = vtanh.pop %v2999
        %v3002 = vsub.f32 1.0, %v2977
        %v3003 = vsub.f32 1.0, %v2979
        %3006 = vrot.lane.b32.xlu0 %v3000, 96
        %v3007 = vpop.permute.xlu0 %3006
        %3008 = vrot.lane.b32.xlu0 %v3001, 96
        %v3009 = vpop.permute.xlu0 %3008
        %v3012 = vmul.f32 %v3002, %v3007
        %v3013 = vmul.f32 %v3003, %v3009
        %3016 = vrot.lane.b32.xlu0 %v1175, 32
        %v3017 = vpop.permute.xlu0 %3016
        %3018 = vrot.lane.b32.xlu0 %v1178, 32
        %v3019 = vpop.permute.xlu0 %3018
        %v3022 = vmul.f32 %v2977, %v3017
        %v3023 = vmul.f32 %v2979, %v3019
        %v3024 = vadd.f32 %v3012, %v3022
        %v3025 = vadd.f32 %v3013, %v3023
        %v3026 = vpack.c.bf16 %v3025, %v3024
        %v3027 = vld [vmem:[%s18] sm:$0xf]
        %v3028 = vld [vmem:[%s18 + $0x4] sm:$0xf]
        %v3029 = vld [vmem:[%s18 + $0x8] sm:$0xf]
        %v3030 = vld [vmem:[%s18 + $0xc] sm:$0xf]
        %v3031 = vld [vmem:[%s19] sm:$0x1]
        %v3033 = vlaneseq
        %v3034 = vshrl.u32 %v3033, 7
        %v3035 = vsub.s32 0, %v3034
        %v3036 = vrot.slane %v3031, %v3035
        %3039 = vrot.lane.b32.xlu0 %v3026, 96
        %v3040 = vpop.permute.xlu0 %3039
        %v3045 = vunpack.c.l.b16 %v3027
        %v3046 = vunpack.c.l.b16 %v3028
        %v3047 = vunpack.c.l.b16 %v3029
        %v3048 = vunpack.c.l.b16 %v3030
        %v3049 = vpack.c.b16 %v3046, %v3045
        %v3050 = vpack.c.b16 %v3048, %v3047
        %v3054 = vsel %vm1206, %v3040, 0
        %3056 = vmatprep.subr.bf16.mxu0 0
        %3057 = vmatpush1.bf16.msra.mxu0 %v3049
        %3058 = vmatprep.subr.bf16.mxu0 0
        %3059 = vmatpush1.bf16.msra.mxu0 %v3050
        %3060 = vmatprep.subr.bf16.mxu0 0
        %3061 = vmatpush1.bf16.msra.mxu0 0
        %3062 = vmatprep.subr.bf16.mxu0 0
        %3063 = vmatpush1.bf16.msra.mxu0 0
        %3064 = vmatprep.subr.bf16.mxu0 0
        %3065 = vmatpush1.bf16.msra.mxu0 0
        %3066 = vmatprep.subr.bf16.mxu0 0
        %3067 = vmatpush1.bf16.msra.mxu0 0
        %3068 = vmatprep.subr.bf16.mxu0 0
        %3069 = vmatpush1.bf16.msra.mxu0 0
        %3070 = vmatprep.subr.bf16.mxu0 0
        %3071 = vmatpush1.bf16.msra.mxu0 0
        %3072 = vmatprep.subr.bf16.mxu0 0
        %3073 = vmatpush1.bf16.msra.mxu0 0
        %3074 = vmatprep.subr.bf16.mxu0 0
        %3075 = vmatpush1.bf16.msra.mxu0 0
        %3076 = vmatprep.subr.bf16.mxu0 0
        %3077 = vmatpush1.bf16.msra.mxu0 0
        %3078 = vmatprep.subr.bf16.mxu0 0
        %3079 = vmatpush1.bf16.msra.mxu0 0
        %3080 = vmatprep.subr.bf16.mxu0 0
        %3081 = vmatpush1.bf16.msra.mxu0 0
        %3082 = vmatprep.subr.bf16.mxu0 0
        %3083 = vmatpush1.bf16.msra.mxu0 0
        %3084 = vmatprep.subr.bf16.mxu0 0
        %3085 = vmatpush1.bf16.msra.mxu0 0
        %3086 = vmatprep.subr.bf16.mxu0 0
        %3087 = vmatpush1.bf16.msra.mxu0 0
        %3088 = vmatprep.mubr.bf16.mxu0 0
        %3089 = vmatmul.mubr.bf16.gmra.mrb[0].mxu0 %v3054
        %v3090 = vpop.f32.mrb[0].mxu0
        %v3091 = vadd.f32 %v3036, %v3090
        %v3092 = vpop.f32.mrb[0].mxu0
        %v3093 = vpop.f32.mrb[0].mxu0
        %v3094 = vadd.f32 %v3036, %v3093
        %v3095 = vpop.f32.mrb[0].mxu0
        %3096 = vdwg.mxu0
        %v3097 = vmul.f32 %v3091, %v879
        %v3098 = vmul.f32 %v3094, %v886
        %3099 = vst [vmem:[%s851] sm:$0xff] %v3097
        %3100 = vst [vmem:[%s851 + $0x8] sm:$0xff] %v3098
        %v3101 = vmul.f32 %v2454, %v920
        %v3102 = vmul.f32 %v2486, %v921
        %vm3103 = vcmask 64512
        %v3104 = vsel %vm3103, %v3101, 0.0
        %v3105 = vsel %vm3103, %v3102, 0.0
        %3106 = vst [vmem:[%s844] sm:$0xff] %v3104
        %3107 = vst [vmem:[%s844 + $0x8] sm:$0xff] %v3105
        %s3108 = sand.u32 %s473, 1
        %s3109 = scalar_lea.sflag [#allocation7], %s3108
        %s3110 = sand.u32 %s473, 1
        %s3111 = smul.addr %s3110, 16
        %s3112 = scalar_lea.vmem [#allocation26], %s3111
        %s3113 = sand.u32 %s499, 1
        %s3114 = scalar_lea.sflag [#allocation28], %s3113
        %s3115 = sand.u32 %s499, 1
        %s3116 = smul.addr %s3115, 16
        %s3117 = scalar_lea.vmem [#allocation27], %s3116
        // Predicated region
        $region149: #{tpu_custom_call.1} parent=95 // pred_check
          %p3118 = pneg %p483
        $region150: #{tpu_custom_call.1} parent=95 // pred_check_branch
          %3120 = sbr.rel (%p3118) target = $region152
        $region151: #{tpu_custom_call.1} parent=95 // pred_region
          %s3121 = smul.u32 2, %s56
          %s3123 = ssub.s32 256, 256
          %3124 = vsyncadd %s3109, %s3123
          %s3125 = smul.addr %s3121, 128
          %s3126 = scalar_lea.hbm %s20, %s3125
          %s3127 = sshll.u32 %s3112, 4
          %s3128 = int_to_ptr.vmem [resolvable:$true] %s3127
          %3133 = dma.vmem_to_hbm [thread:$0]  %s3128, 256, %s3126, %s3109, 128, 128, 8
        $region152: #{tpu_custom_call.1} parent=95 // pred_fallthru
          _
        // Predicated region
        $region153: #{tpu_custom_call.1} parent=95 // pred_check
          %p3134 = pneg %p509
        $region154: #{tpu_custom_call.1} parent=95 // pred_check_branch
          %3136 = sbr.rel (%p3134) target = $region156
        $region155: #{tpu_custom_call.1} parent=95 // pred_region
          %s3137 = smul.u32 2, %s56
          %s3139 = ssub.s32 256, 256
          %3140 = vsyncadd %s3114, %s3139
          %s3141 = smul.addr %s3137, 128
          %s3142 = scalar_lea.hbm %s21, %s3141
          %s3143 = sshll.u32 %s3117, 4
          %s3144 = int_to_ptr.vmem [resolvable:$true] %s3143
          %3149 = dma.vmem_to_hbm [thread:$0]  %s3144, 256, %s3142, %s3114, 128, 128, 8
        $region156: #{tpu_custom_call.1} parent=95 // pred_fallthru
          _
      $region96: #{tpu_custom_call.1} parent=5 // pred_fallthru
        _
      %p3150 = scmp.le.s32.totalorder 2, %s51
      // Predicated region
      $region157: #{tpu_custom_call.1} parent=5 // pred_check
        %p3151 = pneg %p3150
      $region158: #{tpu_custom_call.1} parent=5 // pred_check_branch
        %3153 = sbr.rel (%p3151) target = $region160
      $region159: #{tpu_custom_call.1} parent=5 // pred_region
        %s3154 = ssub.s32 %s51, 2
        // Predicated region
        $region161: #{tpu_custom_call.1} parent=159 // pred_check
          %p3155 = pneg %p489
        $region162: #{tpu_custom_call.1} parent=159 // pred_check_branch
          %3157 = sbr.rel (%p3155) target = $region164
        $region163: #{tpu_custom_call.1} parent=159 // pred_region
          %s3158 = sand.u32 %s474, 1
          %s3159 = scalar_lea.sflag [#allocation7], %s3158
          %s3160 = sand.u32 %s474, 1
          %s3161 = smul.addr %s3160, 16
          %s3162 = scalar_lea.vmem [#allocation26], %s3161
          %3163 = dma.done %s3159, 256
        $region164: #{tpu_custom_call.1} parent=159 // pred_fallthru
          _
        // Predicated region
        $region165: #{tpu_custom_call.1} parent=159 // pred_check
          %p3164 = pneg %p515
        $region166: #{tpu_custom_call.1} parent=159 // pred_check_branch
          %3166 = sbr.rel (%p3164) target = $region168
        $region167: #{tpu_custom_call.1} parent=159 // pred_region
          %s3167 = sand.u32 %s500, 1
          %s3168 = scalar_lea.sflag [#allocation28], %s3167
          %s3169 = sand.u32 %s500, 1
          %s3170 = smul.addr %s3169, 16
          %s3171 = scalar_lea.vmem [#allocation27], %s3170
          %3172 = dma.done %s3168, 256
        $region168: #{tpu_custom_call.1} parent=159 // pred_fallthru
          _
      $region160: #{tpu_custom_call.1} parent=5 // pred_fallthru
        _
    $region6: #{tpu_custom_call.1} parent=1 // loop_footer
      %s55 = sadd.s32 1, %s51
    $region7: #{tpu_custom_call.1} parent=1 // loop_footer_branch
      %50 = sbr.rel target = $region3
    $region8: #{tpu_custom_call.1} parent=1 // loop_exit
      _
    %3173 = vsyncpa [#allocation6], 1
    %s3174 = scalar_lea.sflag [#allocation6], 1
    %3175 = vsyncpa %s3174, 1
    %3176 = vsyncpa [#allocation9], 1
    %s3177 = scalar_lea.sflag [#allocation9], 1
    %3178 = vsyncpa %s3177, 1
    %3179 = vsyncpa [#allocation12], 1
    %3180 = vsyncpa [#allocation15], 1
    %3181 = vsyncpa [#allocation18], 1
    %3182 = vsyncpa [#allocation21], 1
    %3183 = vsyncpa [#allocation24], 1
    %3184 = vsyncpa [#allocation7], 1
    %s3185 = scalar_lea.sflag [#allocation7], 1
    %3186 = vsyncpa %s3185, 1
    %3187 = vsyncpa [#allocation28], 1
    %s3188 = scalar_lea.sflag [#allocation28], 1
    %3189 = vsyncpa %s3188, 1

// kernel: tpu_custom_call.1
$region0: #{tpu_custom_call.1}
  #allocation0 [shape = 'u32[]', space=smem, size = 0x4, offset = 0x4, fixed_abs, tag = 'smem constant byte address 0x4 - core index']
  #allocation1 [shape = 'u32[144,128]{1,0:T(1,128)}', space=vmem, size = 0x12000, scoped, tag = 'internal scratch']
  #allocation2 [shape = 's32[1]{0}', space=sflag, size = 0x4, scoped, tag = 'scoped memory for tpu_custom_call.1']
  #allocation3 [shape = 'u8[512]{0}', space=smem, size = 0x200, scoped, tag = 'prefetched SMEM operand 0']
  #allocation4 [shape = 'f32[1,1]{1,0:T(1,128)S(1)}', space=vmem, size = 0x200, scoped, tag = 'scoped memory for tpu_custom_call.1']
  %s0 = inlined_call_operand.hbm [shape: s32[4], index: 0, kind: input, shape index: {}]
  %s1 = inlined_call_operand.hbm [shape: bf16[4,8,8,16], index: 1, kind: input, shape index: {}]
  %s2 = inlined_call_operand.hbm [shape: bf16[4,8,16], index: 2, kind: input, shape index: {}]
  %s3 = inlined_call_operand.hbm [shape: bf16[16,32], index: 3, kind: input, shape index: {}]
  %s4 = inlined_call_operand.hbm [shape: f32[1,32], index: 4, kind: input, shape index: {}]
  %s5 = inlined_call_operand.hbm [shape: bf16[16,32], index: 5, kind: input, shape index: {}]
  %s6 = inlined_call_operand.hbm [shape: f32[1,32], index: 6, kind: input, shape index: {}]
  %s7 = inlined_call_operand.vmem [shape: bf16[32,32], index: 7, kind: input, shape index: {}]
  %s8 = inlined_call_operand.hbm [shape: f32[1,32], index: 8, kind: input, shape index: {}]
  %s9 = inlined_call_operand.hbm [shape: f32[1,32], index: 9, kind: input, shape index: {}]
  %s10 = inlined_call_operand.<no memory space> [shape: f32[1,1], index: 10, kind: input, shape index: {}]
  %s11 = inlined_call_operand.vmem [shape: bf16[32,32], index: 11, kind: input, shape index: {}]
  %s12 = inlined_call_operand.hbm [shape: bf16[32,32], index: 12, kind: input, shape index: {}]
  %s13 = inlined_call_operand.hbm [shape: f32[1,32], index: 13, kind: input, shape index: {}]
  %s14 = inlined_call_operand.vmem [shape: bf16[32,96], index: 14, kind: input, shape index: {}]
  %s15 = inlined_call_operand.hbm [shape: bf16[32,96], index: 15, kind: input, shape index: {}]
  %s16 = inlined_call_operand.hbm [shape: f32[1,96], index: 16, kind: input, shape index: {}]
  %s17 = inlined_call_operand.hbm [shape: f32[1,96], index: 17, kind: input, shape index: {}]
  %s18 = inlined_call_operand.vmem [shape: bf16[32,128], index: 18, kind: input, shape index: {}]
  %s19 = inlined_call_operand.vmem [shape: f32[1,128], index: 19, kind: input, shape index: {}]
  %s20 = inlined_call_operand.hbm [shape: f32[4,8,128], index: 20, kind: output, shape index: {0}]
  %s21 = inlined_call_operand.hbm [shape: f32[4,8,128], index: 21, kind: output, shape index: {1}]
  %22 = xla_tuple %s20, %s21
  %s23 = sld [smem:[#allocation0]]
  $region169: #{tpu_custom_call.1} parent=0
    _
  %s25 = ssub.s32 1, %s23
  %s26 = scalar_select 0, %s25, %s23
  %28 = dma.hbm_to_smem %s0, 16, [#allocation3], [#allocation2]
  %v29 = vstv %s10
  %30 = vst [vmem:[#allocation4] sm:$0x1] %v29
  %31 = dma.done [#allocation2], 16
  %32 = sfence
  $region1: #{tpu_custom_call.1} parent=0
    #allocation5 [shape = 'u8[65536]{0}', space=vmem, size = 0x10000, scoped, tag = 'input window, operand 1']
    #allocation6 [shape = 's32[2]{0}', space=sflag, size = 0x8, scoped, tag = 'scoped memory for tpu_custom_call.1']
    #allocation7 [shape = 's32[2]{0}', space=sflag, size = 0x8, scoped, tag = 'scoped memory for tpu_custom_call.1']
    #allocation8 [shape = 'u8[8192]{0}', space=vmem, size = 0x2000, scoped, tag = 'input window, operand 2']
    #allocation9 [shape = 's32[2]{0}', space=sflag, size = 0x8, scoped, tag = 'scoped memory for tpu_custom_call.1']
    #allocation10 [shape = 'u8[4096]{0}', space=vmem, size = 0x1000, scoped, tag = 'input window, operand 3, single buffered']
    #allocation11 [shape = 'u8[512]{0}', space=vmem, size = 0x400, scoped, tag = 'input window, operand 4, single buffered']
    #allocation12 [shape = 's32[1]{0}', space=sflag, size = 0x4, scoped, tag = 'scoped memory for tpu_custom_call.1']
    #allocation13 [shape = 'u8[4096]{0}', space=vmem, size = 0x1000, scoped, tag = 'input window, operand 5, single buffered']
    #allocation14 [shape = 'u8[512]{0}', space=vmem, size = 0x400, scoped, tag = 'input window, operand 6, single buffered']
    #allocation15 [shape = 's32[1]{0}', space=sflag, size = 0x4, scoped, tag = 'scoped memory for tpu_custom_call.1']
    #allocation16 [shape = 'u8[512]{0}', space=vmem, size = 0x400, scoped, tag = 'input window, operand 8, single buffered']
    #allocation17 [shape = 'u8[512]{0}', space=vmem, size = 0x400, scoped, tag = 'input window, operand 9, single buffered']
    #allocation18 [shape = 's32[1]{0}', space=sflag, size = 0x4, scoped, tag = 'scoped memory for tpu_custom_call.1']
    #allocation19 [shape = 'u8[8192]{0}', space=vmem, size = 0x2000, scoped, tag = 'input window, operand 12, single buffered']
    #allocation20 [shape = 'u8[512]{0}', space=vmem, size = 0x400, scoped, tag = 'input window, operand 13, single buffered']
    #allocation21 [shape = 's32[1]{0}', space=sflag, size = 0x4, scoped, tag = 'scoped memory for tpu_custom_call.1']
    #allocation22 [shape = 'u8[8192]{0}', space=vmem, size = 0x2000, scoped, tag = 'input window, operand 15, single buffered']
    #allocation23 [shape = 'u8[512]{0}', space=vmem, size = 0x400, scoped, tag = 'input window, operand 16, single buffered']
    #allocation24 [shape = 's32[1]{0}', space=sflag, size = 0x4, scoped, tag = 'scoped memory for tpu_custom_call.1']
    #allocation25 [shape = 'u8[512]{0}', space=vmem, size = 0x400, scoped, tag = 'input window, operand 17, single buffered']
    #allocation26 [shape = 'u8[16384]{0}', space=vmem, size = 0x4000, scoped, tag = 'output window, operand 0']
    #allocation27 [shape = 'u8[16384]{0}', space=vmem, size = 0x4000, scoped, tag = 'output window, operand 1']
    #allocation28 [shape = 's32[2]{0}', space=sflag, size = 0x8, scoped, tag = 'scoped memory for tpu_custom_call.1']
    %33 = vsyncpa [#allocation6], 0
    %s34 = scalar_lea.sflag [#allocation6], 1
    %35 = vsyncpa %s34, 0
    %36 = vsyncpa [#allocation9], 0
    %s37 = scalar_lea.sflag [#allocation9], 1
    %38 = vsyncpa %s37, 0
    %39 = vsyncpa [#allocation12], 0
    %40 = vsyncpa [#allocation15], 0
    %41 = vsyncpa [#allocation18], 0
    %42 = vsyncpa [#allocation21], 0
    %43 = vsyncpa [#allocation24], 0
    %44 = vsyncpa [#allocation7], 0
    %s45 = scalar_lea.sflag [#allocation7], 1
    %46 = vsyncpa %s45, 0
    %47 = vsyncpa [#allocation28], 0
    %s48 = scalar_lea.sflag [#allocation28], 1
    %49 = vsyncpa %s48, 0
    loop: start=0, step=1, limit=4
    $region2: #{tpu_custom_call.1} parent=1 // loop_pre_header
      _
    $region3: #{tpu_custom_call.1} parent=1 // loop_header
      %s51 = sphi 0, %s55
      %p52 = scmp.ge.s32.totalorder %s51, 4
      %s61 = sphi 0, %s63
      %s64 = sphi 0, %s61
      %s65 = sphi 0, %s64
      %s81 = sphi 0, %s65
      %s87 = sphi 0, %s89
      %s90 = sphi 0, %s87
      %s91 = sphi 0, %s90
      %s107 = sphi 0, %s91
      %s111 = sphi 0, %s111
      %s113 = sphi 0, %s111
      %s114 = sphi 0, %s113
      %s128 = sphi 0, %s114
      %s132 = sphi 0, %s132
      %s134 = sphi 0, %s132
      %s135 = sphi 0, %s134
      %s149 = sphi 0, %s135
      %s153 = sphi 0, %s153
      %s155 = sphi 0, %s153
      %s156 = sphi 0, %s155
      %s170 = sphi 0, %s156
      %s174 = sphi 0, %s174
      %s176 = sphi 0, %s174
      %s177 = sphi 0, %s176
      %s191 = sphi 0, %s177
      %s195 = sphi 0, %s195
      %s197 = sphi 0, %s195
      %s198 = sphi 0, %s197
      %s212 = sphi 0, %s198
      %s216 = sphi 0, %s216
      %s218 = sphi 0, %s216
      %s219 = sphi 0, %s218
      %s233 = sphi 0, %s219
      %s237 = sphi 0, %s237
      %s239 = sphi 0, %s237
      %s240 = sphi 0, %s239
      %s254 = sphi 0, %s240
      %s258 = sphi 0, %s258
      %s260 = sphi 0, %s258
      %s261 = sphi 0, %s260
      %s275 = sphi 0, %s261
      %s279 = sphi 0, %s279
      %s281 = sphi 0, %s279
      %s282 = sphi 0, %s281
      %s296 = sphi 0, %s282
      %s300 = sphi 0, %s300
      %s302 = sphi 0, %s300
      %s303 = sphi 0, %s302
      %s317 = sphi 0, %s303
      %s321 = sphi 0, %s321
      %s323 = sphi 0, %s321
      %s324 = sphi 0, %s323
      %s338 = sphi 0, %s324
      %s342 = sphi 0, %s342
      %s344 = sphi 0, %s342
      %s345 = sphi 0, %s344
      %s359 = sphi 0, %s345
      %s363 = sphi 0, %s363
      %s365 = sphi 0, %s363
      %s366 = sphi 0, %s365
      %s380 = sphi 0, %s366
      %s384 = sphi 0, %s384
      %s386 = sphi 0, %s384
      %s387 = sphi 0, %s386
      %s401 = sphi 0, %s387
      %s405 = sphi 0, %s405
      %s407 = sphi 0, %s405
      %s408 = sphi 0, %s407
      %s422 = sphi 0, %s408
      %s426 = sphi 0, %s426
      %s428 = sphi 0, %s426
      %s429 = sphi 0, %s428
      %s443 = sphi 0, %s429
      %s447 = sphi 0, %s447
      %s449 = sphi 0, %s447
      %s450 = sphi 0, %s449
      %s464 = sphi 0, %s450
      %s470 = sphi 0, %s472
      %s473 = sphi 0, %s470
      %s474 = sphi 0, %s473
      %s490 = sphi 0, %s474
      %s496 = sphi 0, %s498
      %s499 = sphi 0, %s496
      %s500 = sphi 0, %s499
      %s516 = sphi 0, %s500
    $region4: #{tpu_custom_call.1} parent=1 // loop_header_branch
      %54 = sbr.rel (%p52) target = $region8
    $region5: #{tpu_custom_call.1} parent=1 // loop_body
      %s56 = ssub.s32 %s51, 1
      %s57 = ssub.s32 %s51, 2
      %s58 = sadd.s32 %s51, 1
      %s59 = ssub.s32 %s51, %s58
      %p60 = scmp.eq.s32.totalorder %s59, 0
      %s62 = sadd.s32 %s61, 1
      %s63 = scalar_select %p60, %s61, %s62
      %p66 = pneg %p60
      %p67 = scmp.eq.s32.totalorder %s51, 1
      %p68 = por %p66, %p67
      %p69 = scmp.ne.s32.totalorder %s61, %s64
      %p70 = scmp.eq.s32.totalorder %s51, 0
      %p71 = por %p69, %p70
      %p72 = scmp.ne.s32.totalorder %s61, %s64
      %p73 = scmp.eq.s32.totalorder %s56, 1
      %p74 = por %p72, %p73
      %p75 = scmp.ne.s32.totalorder %s64, %s65
      %p76 = scmp.eq.s32.totalorder %s56, 0
      %p77 = por %p75, %p76
      %p78 = scmp.ne.s32.totalorder %s64, %s65
      %p79 = scmp.eq.s32.totalorder %s57, 1
      %p80 = por %p78, %p79
      %p82 = scmp.ne.s32.totalorder %s65, %s81
      %p83 = scmp.eq.s32.totalorder %s57, 0
      %p84 = por %p82, %p83
      %s85 = ssub.s32 %s51, %s58
      %p86 = scmp.eq.s32.totalorder %s85, 0
      %s88 = sadd.s32 %s87, 1
      %s89 = scalar_select %p86, %s87, %s88
      %p92 = pneg %p86
      %p93 = scmp.eq.s32.totalorder %s51, 1
      %p94 = por %p92, %p93
      %p95 = scmp.ne.s32.totalorder %s87, %s90
      %p96 = scmp.eq.s32.totalorder %s51, 0
      %p97 = por %p95, %p96
      %p98 = scmp.ne.s32.totalorder %s87, %s90
      %p99 = scmp.eq.s32.totalorder %s56, 1
      %p100 = por %p98, %p99
      %p101 = scmp.ne.s32.totalorder %s90, %s91
      %p102 = scmp.eq.s32.totalorder %s56, 0
      %p103 = por %p101, %p102
      %p104 = scmp.ne.s32.totalorder %s90, %s91
      %p105 = scmp.eq.s32.totalorder %s57, 1
      %p106 = por %p104, %p105
      %p108 = scmp.ne.s32.totalorder %s91, %s107
      %p109 = scmp.eq.s32.totalorder %s57, 0
      %p110 = por %p108, %p109
      %s112 = sadd.s32 %s111, 1
      %p115 = scmp.eq.s32.totalorder %s51, 1
      %p116 = scmp.ne.s32.totalorder %s111, %s113
      %p117 = scmp.eq.s32.totalorder %s51, 0
      %p118 = por %p116, %p117
      %p119 = scmp.ne.s32.totalorder %s111, %s113
      %p120 = scmp.eq.s32.totalorder %s56, 1
      %p121 = por %p119, %p120
      %p122 = scmp.ne.s32.totalorder %s113, %s114
      %p123 = scmp.eq.s32.totalorder %s56, 0
      %p124 = por %p122, %p123
      %p125 = scmp.ne.s32.totalorder %s113, %s114
      %p126 = scmp.eq.s32.totalorder %s57, 1
      %p127 = por %p125, %p126
      %p129 = scmp.ne.s32.totalorder %s114, %s128
      %p130 = scmp.eq.s32.totalorder %s57, 0
      %p131 = por %p129, %p130
      %s133 = sadd.s32 %s132, 1
      %p136 = scmp.eq.s32.totalorder %s51, 1
      %p137 = scmp.ne.s32.totalorder %s132, %s134
      %p138 = scmp.eq.s32.totalorder %s51, 0
      %p139 = por %p137, %p138
      %p140 = scmp.ne.s32.totalorder %s132, %s134
      %p141 = scmp.eq.s32.totalorder %s56, 1
      %p142 = por %p140, %p141
      %p143 = scmp.ne.s32.totalorder %s134, %s135
      %p144 = scmp.eq.s32.totalorder %s56, 0
      %p145 = por %p143, %p144
      %p146 = scmp.ne.s32.totalorder %s134, %s135
      %p147 = scmp.eq.s32.totalorder %s57, 1
      %p148 = por %p146, %p147
      %p150 = scmp.ne.s32.totalorder %s135, %s149
      %p151 = scmp.eq.s32.totalorder %s57, 0
      %p152 = por %p150, %p151
      %s154 = sadd.s32 %s153, 1
      %p157 = scmp.eq.s32.totalorder %s51, 1
      %p158 = scmp.ne.s32.totalorder %s153, %s155
      %p159 = scmp.eq.s32.totalorder %s51, 0
      %p160 = por %p158, %p159
      %p161 = scmp.ne.s32.totalorder %s153, %s155
      %p162 = scmp.eq.s32.totalorder %s56, 1
      %p163 = por %p161, %p162
      %p164 = scmp.ne.s32.totalorder %s155, %s156
      %p165 = scmp.eq.s32.totalorder %s56, 0
      %p166 = por %p164, %p165
      %p167 = scmp.ne.s32.totalorder %s155, %s156
      %p168 = scmp.eq.s32.totalorder %s57, 1
      %p169 = por %p167, %p168
      %p171 = scmp.ne.s32.totalorder %s156, %s170
      %p172 = scmp.eq.s32.totalorder %s57, 0
      %p173 = por %p171, %p172
      %s175 = sadd.s32 %s174, 1
      %p178 = scmp.eq.s32.totalorder %s51, 1
      %p179 = scmp.ne.s32.totalorder %s174, %s176
      %p180 = scmp.eq.s32.totalorder %s51, 0
      %p181 = por %p179, %p180
      %p182 = scmp.ne.s32.totalorder %s174, %s176
      %p183 = scmp.eq.s32.totalorder %s56, 1
      %p184 = por %p182, %p183
      %p185 = scmp.ne.s32.totalorder %s176, %s177
      %p186 = scmp.eq.s32.totalorder %s56, 0
      %p187 = por %p185, %p186
      %p188 = scmp.ne.s32.totalorder %s176, %s177
      %p189 = scmp.eq.s32.totalorder %s57, 1
      %p190 = por %p188, %p189
      %p192 = scmp.ne.s32.totalorder %s177, %s191
      %p193 = scmp.eq.s32.totalorder %s57, 0
      %p194 = por %p192, %p193
      %s196 = sadd.s32 %s195, 1
      %p199 = scmp.eq.s32.totalorder %s51, 1
      %p200 = scmp.ne.s32.totalorder %s195, %s197
      %p201 = scmp.eq.s32.totalorder %s51, 0
      %p202 = por %p200, %p201
      %p203 = scmp.ne.s32.totalorder %s195, %s197
      %p204 = scmp.eq.s32.totalorder %s56, 1
      %p205 = por %p203, %p204
      %p206 = scmp.ne.s32.totalorder %s197, %s198
      %p207 = scmp.eq.s32.totalorder %s56, 0
      %p208 = por %p206, %p207
      %p209 = scmp.ne.s32.totalorder %s197, %s198
      %p210 = scmp.eq.s32.totalorder %s57, 1
      %p211 = por %p209, %p210
      %p213 = scmp.ne.s32.totalorder %s198, %s212
      %p214 = scmp.eq.s32.totalorder %s57, 0
      %p215 = por %p213, %p214
      %s217 = sadd.s32 %s216, 1
      %p220 = scmp.eq.s32.totalorder %s51, 1
      %p221 = scmp.ne.s32.totalorder %s216, %s218
      %p222 = scmp.eq.s32.totalorder %s51, 0
      %p223 = por %p221, %p222
      %p224 = scmp.ne.s32.totalorder %s216, %s218
      %p225 = scmp.eq.s32.totalorder %s56, 1
      %p226 = por %p224, %p225
      %p227 = scmp.ne.s32.totalorder %s218, %s219
      %p228 = scmp.eq.s32.totalorder %s56, 0
      %p229 = por %p227, %p228
      %p230 = scmp.ne.s32.totalorder %s218, %s219
      %p231 = scmp.eq.s32.totalorder %s57, 1
      %p232 = por %p230, %p231
      %p234 = scmp.ne.s32.totalorder %s219, %s233
      %p235 = scmp.eq.s32.totalorder %s57, 0
      %p236 = por %p234, %p235
      %s238 = sadd.s32 %s237, 1
      %p241 = scmp.eq.s32.totalorder %s51, 1
      %p242 = scmp.ne.s32.totalorder %s237, %s239
      %p243 = scmp.eq.s32.totalorder %s51, 0
      %p244 = por %p242, %p243
      %p245 = scmp.ne.s32.totalorder %s237, %s239
      %p246 = scmp.eq.s32.totalorder %s56, 1
      %p247 = por %p245, %p246
      %p248 = scmp.ne.s32.totalorder %s239, %s240
      %p249 = scmp.eq.s32.totalorder %s56, 0
      %p250 = por %p248, %p249
      %p251 = scmp.ne.s32.totalorder %s239, %s240
      %p252 = scmp.eq.s32.totalorder %s57, 1
      %p253 = por %p251, %p252
      %p255 = scmp.ne.s32.totalorder %s240, %s254
      %p256 = scmp.eq.s32.totalorder %s57, 0
      %p257 = por %p255, %p256
      %s259 = sadd.s32 %s258, 1
      %p262 = scmp.eq.s32.totalorder %s51, 1
      %p263 = scmp.ne.s32.totalorder %s258, %s260
      %p264 = scmp.eq.s32.totalorder %s51, 0
      %p265 = por %p263, %p264
      %p266 = scmp.ne.s32.totalorder %s258, %s260
      %p267 = scmp.eq.s32.totalorder %s56, 1
      %p268 = por %p266, %p267
      %p269 = scmp.ne.s32.totalorder %s260, %s261
      %p270 = scmp.eq.s32.totalorder %s56, 0
      %p271 = por %p269, %p270
      %p272 = scmp.ne.s32.totalorder %s260, %s261
      %p273 = scmp.eq.s32.totalorder %s57, 1
      %p274 = por %p272, %p273
      %p276 = scmp.ne.s32.totalorder %s261, %s275
      %p277 = scmp.eq.s32.totalorder %s57, 0
      %p278 = por %p276, %p277
      %s280 = sadd.s32 %s279, 1
      %p283 = scmp.eq.s32.totalorder %s51, 1
      %p284 = scmp.ne.s32.totalorder %s279, %s281
      %p285 = scmp.eq.s32.totalorder %s51, 0
      %p286 = por %p284, %p285
      %p287 = scmp.ne.s32.totalorder %s279, %s281
      %p288 = scmp.eq.s32.totalorder %s56, 1
      %p289 = por %p287, %p288
      %p290 = scmp.ne.s32.totalorder %s281, %s282
      %p291 = scmp.eq.s32.totalorder %s56, 0
      %p292 = por %p290, %p291
      %p293 = scmp.ne.s32.totalorder %s281, %s282
      %p294 = scmp.eq.s32.totalorder %s57, 1
      %p295 = por %p293, %p294
      %p297 = scmp.ne.s32.totalorder %s282, %s296
      %p298 = scmp.eq.s32.totalorder %s57, 0
      %p299 = por %p297, %p298
      %s301 = sadd.s32 %s300, 1
      %p304 = scmp.eq.s32.totalorder %s51, 1
      %p305 = scmp.ne.s32.totalorder %s300, %s302
      %p306 = scmp.eq.s32.totalorder %s51, 0
      %p307 = por %p305, %p306
      %p308 = scmp.ne.s32.totalorder %s300, %s302
      %p309 = scmp.eq.s32.totalorder %s56, 1
      %p310 = por %p308, %p309
      %p311 = scmp.ne.s32.totalorder %s302, %s303
      %p312 = scmp.eq.s32.totalorder %s56, 0
      %p313 = por %p311, %p312
      %p314 = scmp.ne.s32.totalorder %s302, %s303
      %p315 = scmp.eq.s32.totalorder %s57, 1
      %p316 = por %p314, %p315
      %p318 = scmp.ne.s32.totalorder %s303, %s317
      %p319 = scmp.eq.s32.totalorder %s57, 0
      %p320 = por %p318, %p319
      %s322 = sadd.s32 %s321, 1
      %p325 = scmp.eq.s32.totalorder %s51, 1
      %p326 = scmp.ne.s32.totalorder %s321, %s323
      %p327 = scmp.eq.s32.totalorder %s51, 0
      %p328 = por %p326, %p327
      %p329 = scmp.ne.s32.totalorder %s321, %s323
      %p330 = scmp.eq.s32.totalorder %s56, 1
      %p331 = por %p329, %p330
      %p332 = scmp.ne.s32.totalorder %s323, %s324
      %p333 = scmp.eq.s32.totalorder %s56, 0
      %p334 = por %p332, %p333
      %p335 = scmp.ne.s32.totalorder %s323, %s324
      %p336 = scmp.eq.s32.totalorder %s57, 1
      %p337 = por %p335, %p336
      %p339 = scmp.ne.s32.totalorder %s324, %s338
      %p340 = scmp.eq.s32.totalorder %s57, 0
      %p341 = por %p339, %p340
      %s343 = sadd.s32 %s342, 1
      %p346 = scmp.eq.s32.totalorder %s51, 1
      %p347 = scmp.ne.s32.totalorder %s342, %s344
      %p348 = scmp.eq.s32.totalorder %s51, 0
      %p349 = por %p347, %p348
      %p350 = scmp.ne.s32.totalorder %s342, %s344
      %p351 = scmp.eq.s32.totalorder %s56, 1
      %p352 = por %p350, %p351
      %p353 = scmp.ne.s32.totalorder %s344, %s345
      %p354 = scmp.eq.s32.totalorder %s56, 0
      %p355 = por %p353, %p354
      %p356 = scmp.ne.s32.totalorder %s344, %s345
      %p357 = scmp.eq.s32.totalorder %s57, 1
      %p358 = por %p356, %p357
      %p360 = scmp.ne.s32.totalorder %s345, %s359
      %p361 = scmp.eq.s32.totalorder %s57, 0
      %p362 = por %p360, %p361
      %s364 = sadd.s32 %s363, 1
      %p367 = scmp.eq.s32.totalorder %s51, 1
      %p368 = scmp.ne.s32.totalorder %s363, %s365
      %p369 = scmp.eq.s32.totalorder %s51, 0
      %p370 = por %p368, %p369
      %p371 = scmp.ne.s32.totalorder %s363, %s365
      %p372 = scmp.eq.s32.totalorder %s56, 1
      %p373 = por %p371, %p372
      %p374 = scmp.ne.s32.totalorder %s365, %s366
      %p375 = scmp.eq.s32.totalorder %s56, 0
      %p376 = por %p374, %p375
      %p377 = scmp.ne.s32.totalorder %s365, %s366
      %p378 = scmp.eq.s32.totalorder %s57, 1
      %p379 = por %p377, %p378
      %p381 = scmp.ne.s32.totalorder %s366, %s380
      %p382 = scmp.eq.s32.totalorder %s57, 0
      %p383 = por %p381, %p382
      %s385 = sadd.s32 %s384, 1
      %p388 = scmp.eq.s32.totalorder %s51, 1
      %p389 = scmp.ne.s32.totalorder %s384, %s386
      %p390 = scmp.eq.s32.totalorder %s51, 0
      %p391 = por %p389, %p390
      %p392 = scmp.ne.s32.totalorder %s384, %s386
      %p393 = scmp.eq.s32.totalorder %s56, 1
      %p394 = por %p392, %p393
      %p395 = scmp.ne.s32.totalorder %s386, %s387
      %p396 = scmp.eq.s32.totalorder %s56, 0
      %p397 = por %p395, %p396
      %p398 = scmp.ne.s32.totalorder %s386, %s387
      %p399 = scmp.eq.s32.totalorder %s57, 1
      %p400 = por %p398, %p399
      %p402 = scmp.ne.s32.totalorder %s387, %s401
      %p403 = scmp.eq.s32.totalorder %s57, 0
      %p404 = por %p402, %p403
      %s406 = sadd.s32 %s405, 1
      %p409 = scmp.eq.s32.totalorder %s51, 1
      %p410 = scmp.ne.s32.totalorder %s405, %s407
      %p411 = scmp.eq.s32.totalorder %s51, 0
      %p412 = por %p410, %p411
      %p413 = scmp.ne.s32.totalorder %s405, %s407
      %p414 = scmp.eq.s32.totalorder %s56, 1
      %p415 = por %p413, %p414
      %p416 = scmp.ne.s32.totalorder %s407, %s408
      %p417 = scmp.eq.s32.totalorder %s56, 0
      %p418 = por %p416, %p417
      %p419 = scmp.ne.s32.totalorder %s407, %s408
      %p420 = scmp.eq.s32.totalorder %s57, 1
      %p421 = por %p419, %p420
      %p423 = scmp.ne.s32.totalorder %s408, %s422
      %p424 = scmp.eq.s32.totalorder %s57, 0
      %p425 = por %p423, %p424
      %s427 = sadd.s32 %s426, 1
      %p430 = scmp.eq.s32.totalorder %s51, 1
      %p431 = scmp.ne.s32.totalorder %s426, %s428
      %p432 = scmp.eq.s32.totalorder %s51, 0
      %p433 = por %p431, %p432
      %p434 = scmp.ne.s32.totalorder %s426, %s428
      %p435 = scmp.eq.s32.totalorder %s56, 1
      %p436 = por %p434, %p435
      %p437 = scmp.ne.s32.totalorder %s428, %s429
      %p438 = scmp.eq.s32.totalorder %s56, 0
      %p439 = por %p437, %p438
      %p440 = scmp.ne.s32.totalorder %s428, %s429
      %p441 = scmp.eq.s32.totalorder %s57, 1
      %p442 = por %p440, %p441
      %p444 = scmp.ne.s32.totalorder %s429, %s443
      %p445 = scmp.eq.s32.totalorder %s57, 0
      %p446 = por %p444, %p445
      %s448 = sadd.s32 %s447, 1
      %p451 = scmp.eq.s32.totalorder %s51, 1
      %p452 = scmp.ne.s32.totalorder %s447, %s449
      %p453 = scmp.eq.s32.totalorder %s51, 0
      %p454 = por %p452, %p453
      %p455 = scmp.ne.s32.totalorder %s447, %s449
      %p456 = scmp.eq.s32.totalorder %s56, 1
      %p457 = por %p455, %p456
      %p458 = scmp.ne.s32.totalorder %s449, %s450
      %p459 = scmp.eq.s32.totalorder %s56, 0
      %p460 = por %p458, %p459
      %p461 = scmp.ne.s32.totalorder %s449, %s450
      %p462 = scmp.eq.s32.totalorder %s57, 1
      %p463 = por %p461, %p462
      %p465 = scmp.ne.s32.totalorder %s450, %s464
      %p466 = scmp.eq.s32.totalorder %s57, 0
      %p467 = por %p465, %p466
      %s468 = ssub.s32 %s51, %s58
      %p469 = scmp.eq.s32.totalorder %s468, 0
      %s471 = sadd.s32 %s470, 1
      %s472 = scalar_select %p469, %s470, %s471
      %p475 = pneg %p469
      %p476 = scmp.eq.s32.totalorder %s51, 1
      %p477 = por %p475, %p476
      %p478 = scmp.ne.s32.totalorder %s470, %s473
      %p479 = scmp.eq.s32.totalorder %s51, 0
      %p480 = por %p478, %p479
      %p481 = scmp.ne.s32.totalorder %s470, %s473
      %p482 = scmp.eq.s32.totalorder %s56, 1
      %p483 = por %p481, %p482
      %p484 = scmp.ne.s32.totalorder %s473, %s474
      %p485 = scmp.eq.s32.totalorder %s56, 0
      %p486 = por %p484, %p485
      %p487 = scmp.ne.s32.totalorder %s473, %s474
      %p488 = scmp.eq.s32.totalorder %s57, 1
      %p489 = por %p487, %p488
      %p491 = scmp.ne.s32.totalorder %s474, %s490
      %p492 = scmp.eq.s32.totalorder %s57, 0
      %p493 = por %p491, %p492
      %s494 = ssub.s32 %s51, %s58
      %p495 = scmp.eq.s32.totalorder %s494, 0
      %s497 = sadd.s32 %s496, 1
      %s498 = scalar_select %p495, %s496, %s497
      %p501 = pneg %p495
      %p502 = scmp.eq.s32.totalorder %s51, 1
      %p503 = por %p501, %p502
      %p504 = scmp.ne.s32.totalorder %s496, %s499
      %p505 = scmp.eq.s32.totalorder %s51, 0
      %p506 = por %p504, %p505
      %p507 = scmp.ne.s32.totalorder %s496, %s499
      %p508 = scmp.eq.s32.totalorder %s56, 1
      %p509 = por %p507, %p508
      %p510 = scmp.ne.s32.totalorder %s499, %s500
      %p511 = scmp.eq.s32.totalorder %s56, 0
      %p512 = por %p510, %p511
      %p513 = scmp.ne.s32.totalorder %s499, %s500
      %p514 = scmp.eq.s32.totalorder %s57, 1
      %p515 = por %p513, %p514
      %p517 = scmp.ne.s32.totalorder %s500, %s516
      %p518 = scmp.eq.s32.totalorder %s57, 0
      %p519 = por %p517, %p518
      %p520 = scmp.le.s32.totalorder 1, %s51
      %p521 = scmp.lt.s32.totalorder %s51, 3
      %p522 = pnand %p520, %p521
      %p523 = pneg %p522
      // Predicated region
      $region9: #{tpu_custom_call.1} parent=5 // pred_check
        _
      $region10: #{tpu_custom_call.1} parent=5 // pred_check_branch
        %525 = sbr.rel (%p522) target = $region12
      $region11: #{tpu_custom_call.1} parent=5 // pred_region
        %s526 = ssub.s32 %s51, 1
        // Predicated region
        $region13: #{tpu_custom_call.1} parent=11 // pred_check
          %p527 = pneg %p124
        $region14: #{tpu_custom_call.1} parent=11 // pred_check_branch
          %529 = sbr.rel (%p527) target = $region16
        $region15: #{tpu_custom_call.1} parent=11 // pred_region
          %s531 = ssub.s32 128, 128
          %532 = vsyncadd [#allocation9], %s531
          %s533 = sshll.u32 [#allocation10], 4
          %s534 = int_to_ptr.vmem [resolvable:$true] %s533
          %539 = dma.hbm_to_vmem [thread:$0]  %s3, 128, %s534, [#allocation9], 64, 64, 4
        $region16: #{tpu_custom_call.1} parent=11 // pred_fallthru
          _
        // Predicated region
        $region17: #{tpu_custom_call.1} parent=11 // pred_check
          %p540 = pneg %p145
        $region18: #{tpu_custom_call.1} parent=11 // pred_check_branch
          %542 = sbr.rel (%p540) target = $region20
        $region19: #{tpu_custom_call.1} parent=11 // pred_region
          %s544 = ssub.s32 16, 16
          %545 = vsyncadd [#allocation12], %s544
          %s547 = sshll.u32 [#allocation11], 4
          %s548 = int_to_ptr.vmem [resolvable:$true] %s547
          %550 = dma.hbm_to_vmem [thread:$0]  %s4, 16, %s548, [#allocation12]
        $region20: #{tpu_custom_call.1} parent=11 // pred_fallthru
          _
        // Predicated region
        $region21: #{tpu_custom_call.1} parent=11 // pred_check
          %p551 = pneg %p166
        $region22: #{tpu_custom_call.1} parent=11 // pred_check_branch
          %553 = sbr.rel (%p551) target = $region24
        $region23: #{tpu_custom_call.1} parent=11 // pred_region
          %s555 = ssub.s32 128, 128
          %556 = vsyncadd [#allocation12], %s555
          %s557 = sshll.u32 [#allocation13], 4
          %s558 = int_to_ptr.vmem [resolvable:$true] %s557
          %563 = dma.hbm_to_vmem [thread:$0]  %s5, 128, %s558, [#allocation12], 64, 64, 4
        $region24: #{tpu_custom_call.1} parent=11 // pred_fallthru
          _
        // Predicated region
        $region25: #{tpu_custom_call.1} parent=11 // pred_check
          %p564 = pneg %p187
        $region26: #{tpu_custom_call.1} parent=11 // pred_check_branch
          %566 = sbr.rel (%p564) target = $region28
        $region27: #{tpu_custom_call.1} parent=11 // pred_region
          %s568 = ssub.s32 16, 16
          %569 = vsyncadd [#allocation15], %s568
          %s571 = sshll.u32 [#allocation14], 4
          %s572 = int_to_ptr.vmem [resolvable:$true] %s571
          %574 = dma.hbm_to_vmem [thread:$0]  %s6, 16, %s572, [#allocation15]
        $region28: #{tpu_custom_call.1} parent=11 // pred_fallthru
          _
        // Predicated region
        $region29: #{tpu_custom_call.1} parent=11 // pred_check
          %p575 = pneg %p208
        $region30: #{tpu_custom_call.1} parent=11 // pred_check_branch
          %577 = sbr.rel (%p575) target = $region32
        $region31: #{tpu_custom_call.1} parent=11 // pred_region
          _
        $region32: #{tpu_custom_call.1} parent=11 // pred_fallthru
          _
        // Predicated region
        $region33: #{tpu_custom_call.1} parent=11 // pred_check
          %p578 = pneg %p229
        $region34: #{tpu_custom_call.1} parent=11 // pred_check_branch
          %580 = sbr.rel (%p578) target = $region36
        $region35: #{tpu_custom_call.1} parent=11 // pred_region
          %s582 = ssub.s32 16, 16
          %583 = vsyncadd [#allocation15], %s582
          %s585 = sshll.u32 [#allocation16], 4
          %s586 = int_to_ptr.vmem [resolvable:$true] %s585
          %588 = dma.hbm_to_vmem [thread:$0]  %s8, 16, %s586, [#allocation15]
        $region36: #{tpu_custom_call.1} parent=11 // pred_fallthru
          _
        // Predicated region
        $region37: #{tpu_custom_call.1} parent=11 // pred_check
          %p589 = pneg %p250
        $region38: #{tpu_custom_call.1} parent=11 // pred_check_branch
          %591 = sbr.rel (%p589) target = $region40
        $region39: #{tpu_custom_call.1} parent=11 // pred_region
          %s593 = ssub.s32 16, 16
          %594 = vsyncadd [#allocation18], %s593
          %s596 = sshll.u32 [#allocation17], 4
          %s597 = int_to_ptr.vmem [resolvable:$true] %s596
          %599 = dma.hbm_to_vmem [thread:$0]  %s9, 16, %s597, [#allocation18]
        $region40: #{tpu_custom_call.1} parent=11 // pred_fallthru
          _
        // Predicated region
        $region41: #{tpu_custom_call.1} parent=11 // pred_check
          %p600 = pneg %p271
        $region42: #{tpu_custom_call.1} parent=11 // pred_check_branch
          %602 = sbr.rel (%p600) target = $region44
        $region43: #{tpu_custom_call.1} parent=11 // pred_region
          _
        $region44: #{tpu_custom_call.1} parent=11 // pred_fallthru
          _
        // Predicated region
        $region45: #{tpu_custom_call.1} parent=11 // pred_check
          %p603 = pneg %p292
        $region46: #{tpu_custom_call.1} parent=11 // pred_check_branch
          %605 = sbr.rel (%p603) target = $region48
        $region47: #{tpu_custom_call.1} parent=11 // pred_region
          _
        $region48: #{tpu_custom_call.1} parent=11 // pred_fallthru
          _
        // Predicated region
        $region49: #{tpu_custom_call.1} parent=11 // pred_check
          %p606 = pneg %p313
        $region50: #{tpu_custom_call.1} parent=11 // pred_check_branch
          %608 = sbr.rel (%p606) target = $region52
        $region51: #{tpu_custom_call.1} parent=11 // pred_region
          %s610 = ssub.s32 256, 256
          %611 = vsyncadd [#allocation18], %s610
          %s612 = sshll.u32 [#allocation19], 4
          %s613 = int_to_ptr.vmem [resolvable:$true] %s612
          %618 = dma.hbm_to_vmem [thread:$0]  %s12, 256, %s613, [#allocation18], 64, 64, 4
        $region52: #{tpu_custom_call.1} parent=11 // pred_fallthru
          _
        // Predicated region
        $region53: #{tpu_custom_call.1} parent=11 // pred_check
          %p619 = pneg %p334
        $region54: #{tpu_custom_call.1} parent=11 // pred_check_branch
          %621 = sbr.rel (%p619) target = $region56
        $region55: #{tpu_custom_call.1} parent=11 // pred_region
          %s623 = ssub.s32 16, 16
          %624 = vsyncadd [#allocation21], %s623
          %s626 = sshll.u32 [#allocation20], 4
          %s627 = int_to_ptr.vmem [resolvable:$true] %s626
          %629 = dma.hbm_to_vmem [thread:$0]  %s13, 16, %s627, [#allocation21]
        $region56: #{tpu_custom_call.1} parent=11 // pred_fallthru
          _
        // Predicated region
        $region57: #{tpu_custom_call.1} parent=11 // pred_check
          %p630 = pneg %p355
        $region58: #{tpu_custom_call.1} parent=11 // pred_check_branch
          %632 = sbr.rel (%p630) target = $region60
        $region59: #{tpu_custom_call.1} parent=11 // pred_region
          _
        $region60: #{tpu_custom_call.1} parent=11 // pred_fallthru
          _
        // Predicated region
        $region61: #{tpu_custom_call.1} parent=11 // pred_check
          %p633 = pneg %p376
        $region62: #{tpu_custom_call.1} parent=11 // pred_check_branch
          %635 = sbr.rel (%p633) target = $region64
        $region63: #{tpu_custom_call.1} parent=11 // pred_region
          %s637 = ssub.s32 256, 256
          %638 = vsyncadd [#allocation21], %s637
          %s639 = sshll.u32 [#allocation22], 4
          %s640 = int_to_ptr.vmem [resolvable:$true] %s639
          %645 = dma.hbm_to_vmem [thread:$0]  %s15, 256, %s640, [#allocation21], 64, 64, 4
        $region64: #{tpu_custom_call.1} parent=11 // pred_fallthru
          _
        // Predicated region
        $region65: #{tpu_custom_call.1} parent=11 // pred_check
          %p646 = pneg %p397
        $region66: #{tpu_custom_call.1} parent=11 // pred_check_branch
          %648 = sbr.rel (%p646) target = $region68
        $region67: #{tpu_custom_call.1} parent=11 // pred_region
          %s650 = ssub.s32 16, 16
          %651 = vsyncadd [#allocation24], %s650
          %s653 = sshll.u32 [#allocation23], 4
          %s654 = int_to_ptr.vmem [resolvable:$true] %s653
          %656 = dma.hbm_to_vmem [thread:$0]  %s16, 16, %s654, [#allocation24]
        $region68: #{tpu_custom_call.1} parent=11 // pred_fallthru
          _
        // Predicated region
        $region69: #{tpu_custom_call.1} parent=11 // pred_check
          %p657 = pneg %p418
        $region70: #{tpu_custom_call.1} parent=11 // pred_check_branch
          %659 = sbr.rel (%p657) target = $region72
        $region71: #{tpu_custom_call.1} parent=11 // pred_region
          %s661 = ssub.s32 16, 16
          %662 = vsyncadd [#allocation24], %s661
          %s664 = sshll.u32 [#allocation25], 4
          %s665 = int_to_ptr.vmem [resolvable:$true] %s664
          %667 = dma.hbm_to_vmem [thread:$0]  %s17, 16, %s665, [#allocation24]
        $region72: #{tpu_custom_call.1} parent=11 // pred_fallthru
          _
        // Predicated region
        $region73: #{tpu_custom_call.1} parent=11 // pred_check
          %p668 = pneg %p439
        $region74: #{tpu_custom_call.1} parent=11 // pred_check_branch
          %670 = sbr.rel (%p668) target = $region76
        $region75: #{tpu_custom_call.1} parent=11 // pred_region
          _
        $region76: #{tpu_custom_call.1} parent=11 // pred_fallthru
          _
        // Predicated region
        $region77: #{tpu_custom_call.1} parent=11 // pred_check
          %p671 = pneg %p460
        $region78: #{tpu_custom_call.1} parent=11 // pred_check_branch
          %673 = sbr.rel (%p671) target = $region80
        $region79: #{tpu_custom_call.1} parent=11 // pred_region
          _
        $region80: #{tpu_custom_call.1} parent=11 // pred_fallthru
          _
      $region12: #{tpu_custom_call.1} parent=5 // pred_fallthru
        _
      %p674 = scmp.lt.s32.totalorder %s51, 2
      // Predicated region
      $region81: #{tpu_custom_call.1} parent=5 // pred_check
        %p675 = pneg %p674
      $region82: #{tpu_custom_call.1} parent=5 // pred_check_branch
        %677 = sbr.rel (%p675) target = $region84
      $region83: #{tpu_custom_call.1} parent=5 // pred_region
        // Predicated region
        $region85: #{tpu_custom_call.1} parent=83 // pred_check
          %p678 = pneg %p71
        $region86: #{tpu_custom_call.1} parent=83 // pred_check_branch
          %680 = sbr.rel (%p678) target = $region88
        $region87: #{tpu_custom_call.1} parent=83 // pred_region
          %s681 = sand.u32 %s61, 1
          %s682 = scalar_lea.sflag [#allocation6], %s681
          %s683 = sand.u32 %s61, 1
          %s684 = smul.addr %s683, 64
          %s685 = scalar_lea.vmem [#allocation5], %s684
          %s686 = smul.u32 2, %s51
          %s688 = ssub.s32 1024, 1024
          %689 = vsyncadd %s682, %s688
          %s690 = smul.addr %s686, 8
          %s691 = smul.addr %s690, 64
          %s692 = scalar_lea.hbm %s1, %s691
          %s693 = sshll.u32 %s685, 4
          %s694 = int_to_ptr.vmem [resolvable:$true] %s693
          %699 = dma.hbm_to_vmem [thread:$0]  %s692, 1024, %s694, %s682, 64, 64, 4
        $region88: #{tpu_custom_call.1} parent=83 // pred_fallthru
          _
        // Predicated region
        $region89: #{tpu_custom_call.1} parent=83 // pred_check
          %p700 = pneg %p97
        $region90: #{tpu_custom_call.1} parent=83 // pred_check_branch
          %702 = sbr.rel (%p700) target = $region92
        $region91: #{tpu_custom_call.1} parent=83 // pred_region
          %s703 = sand.u32 %s51, 1
          %s704 = scalar_lea.sflag [#allocation9], %s703
          %s705 = sand.u32 %s87, 1
          %s706 = smul.addr %s705, 8
          %s707 = scalar_lea.vmem [#allocation8], %s706
          %s708 = smul.u32 2, %s51
          %s710 = ssub.s32 128, 128
          %711 = vsyncadd %s704, %s710
          %s712 = smul.addr %s708, 64
          %s713 = scalar_lea.hbm %s2, %s712
          %s714 = sshll.u32 %s707, 4
          %s715 = int_to_ptr.vmem [resolvable:$true] %s714
          %720 = dma.hbm_to_vmem [thread:$0]  %s713, 128, %s715, %s704, 64, 64, 4
        $region92: #{tpu_custom_call.1} parent=83 // pred_fallthru
          _
      $region84: #{tpu_custom_call.1} parent=5 // pred_fallthru
        _
      %p721 = scmp.le.s32.totalorder 1, %s51
      %p722 = scmp.lt.s32.totalorder %s51, 3
      %p723 = pnand %p721, %p722
      %p724 = pneg %p723
      // Predicated region
      $region93: #{tpu_custom_call.1} parent=5 // pred_check
        _
      $region94: #{tpu_custom_call.1} parent=5 // pred_check_branch
        %726 = sbr.rel (%p723) target = $region96
      $region95: #{tpu_custom_call.1} parent=5 // pred_region
        %s727 = ssub.s32 %s51, 1
        %s728 = sand.u32 %s64, 1
        %s729 = scalar_lea.sflag [#allocation6], %s728
        %s730 = sand.u32 %s64, 1
        %s731 = smul.addr %s730, 64
        %s732 = scalar_lea.vmem [#allocation5], %s731
        // Predicated region
        $region97: #{tpu_custom_call.1} parent=95 // pred_check
          %p733 = pneg %p77
        $region98: #{tpu_custom_call.1} parent=95 // pred_check_branch
          %735 = sbr.rel (%p733) target = $region100
        $region99: #{tpu_custom_call.1} parent=95 // pred_region
          %736 = dma.done %s729, 1024
        $region100: #{tpu_custom_call.1} parent=95 // pred_fallthru
          _
        %s737 = sand.u32 %s56, 1
        %s738 = scalar_lea.sflag [#allocation9], %s737
        %s739 = sand.u32 %s90, 1
        %s740 = smul.addr %s739, 8
        %s741 = scalar_lea.vmem [#allocation8], %s740
        // Predicated region
        $region101: #{tpu_custom_call.1} parent=95 // pred_check
          %p742 = pneg %p103
        $region102: #{tpu_custom_call.1} parent=95 // pred_check_branch
          %744 = sbr.rel (%p742) target = $region104
        $region103: #{tpu_custom_call.1} parent=95 // pred_region
          %745 = dma.done %s738, 128
        $region104: #{tpu_custom_call.1} parent=95 // pred_fallthru
          _
        // Predicated region
        $region105: #{tpu_custom_call.1} parent=95 // pred_check
          %p746 = pneg %p124
        $region106: #{tpu_custom_call.1} parent=95 // pred_check_branch
          %748 = sbr.rel (%p746) target = $region108
        $region107: #{tpu_custom_call.1} parent=95 // pred_region
          %749 = dma.done [#allocation9], 128
        $region108: #{tpu_custom_call.1} parent=95 // pred_fallthru
          _
        // Predicated region
        $region109: #{tpu_custom_call.1} parent=95 // pred_check
          %p750 = pneg %p145
        $region110: #{tpu_custom_call.1} parent=95 // pred_check_branch
          %752 = sbr.rel (%p750) target = $region112
        $region111: #{tpu_custom_call.1} parent=95 // pred_region
          %753 = dma.done [#allocation12], 16
        $region112: #{tpu_custom_call.1} parent=95 // pred_fallthru
          _
        // Predicated region
        $region113: #{tpu_custom_call.1} parent=95 // pred_check
          %p754 = pneg %p166
        $region114: #{tpu_custom_call.1} parent=95 // pred_check_branch
          %756 = sbr.rel (%p754) target = $region116
        $region115: #{tpu_custom_call.1} parent=95 // pred_region
          %757 = dma.done [#allocation12], 128
        $region116: #{tpu_custom_call.1} parent=95 // pred_fallthru
          _
        // Predicated region
        $region117: #{tpu_custom_call.1} parent=95 // pred_check
          %p758 = pneg %p187
        $region118: #{tpu_custom_call.1} parent=95 // pred_check_branch
          %760 = sbr.rel (%p758) target = $region120
        $region119: #{tpu_custom_call.1} parent=95 // pred_region
          %761 = dma.done [#allocation15], 16
        $region120: #{tpu_custom_call.1} parent=95 // pred_fallthru
          _
        // Predicated region
        $region121: #{tpu_custom_call.1} parent=95 // pred_check
          %p762 = pneg %p229
        $region122: #{tpu_custom_call.1} parent=95 // pred_check_branch
          %764 = sbr.rel (%p762) target = $region124
        $region123: #{tpu_custom_call.1} parent=95 // pred_region
          %765 = dma.done [#allocation15], 16
        $region124: #{tpu_custom_call.1} parent=95 // pred_fallthru
          _
        // Predicated region
        $region125: #{tpu_custom_call.1} parent=95 // pred_check
          %p766 = pneg %p250
        $region126: #{tpu_custom_call.1} parent=95 // pred_check_branch
          %768 = sbr.rel (%p766) target = $region128
        $region127: #{tpu_custom_call.1} parent=95 // pred_region
          %769 = dma.done [#allocation18], 16
        $region128: #{tpu_custom_call.1} parent=95 // pred_fallthru
          _
        // Predicated region
        $region129: #{tpu_custom_call.1} parent=95 // pred_check
          %p770 = pneg %p313
        $region130: #{tpu_custom_call.1} parent=95 // pred_check_branch
          %772 = sbr.rel (%p770) target = $region132
        $region131: #{tpu_custom_call.1} parent=95 // pred_region
          %773 = dma.done [#allocation18], 256
        $region132: #{tpu_custom_call.1} parent=95 // pred_fallthru
          _
        // Predicated region
        $region133: #{tpu_custom_call.1} parent=95 // pred_check
          %p774 = pneg %p334
        $region134: #{tpu_custom_call.1} parent=95 // pred_check_branch
          %776 = sbr.rel (%p774) target = $region136
        $region135: #{tpu_custom_call.1} parent=95 // pred_region
          %777 = dma.done [#allocation21], 16
        $region136: #{tpu_custom_call.1} parent=95 // pred_fallthru
          _
        // Predicated region
        $region137: #{tpu_custom_call.1} parent=95 // pred_check
          %p778 = pneg %p376
        $region138: #{tpu_custom_call.1} parent=95 // pred_check_branch
          %780 = sbr.rel (%p778) target = $region140
        $region139: #{tpu_custom_call.1} parent=95 // pred_region
          %781 = dma.done [#allocation21], 256
        $region140: #{tpu_custom_call.1} parent=95 // pred_fallthru
          _
        // Predicated region
        $region141: #{tpu_custom_call.1} parent=95 // pred_check
          %p782 = pneg %p397
        $region142: #{tpu_custom_call.1} parent=95 // pred_check_branch
          %784 = sbr.rel (%p782) target = $region144
        $region143: #{tpu_custom_call.1} parent=95 // pred_region
          %785 = dma.done [#allocation24], 16
        $region144: #{tpu_custom_call.1} parent=95 // pred_fallthru
          _
        // Predicated region
        $region145: #{tpu_custom_call.1} parent=95 // pred_check
          %p786 = pneg %p418
        $region146: #{tpu_custom_call.1} parent=95 // pred_check_branch
          %788 = sbr.rel (%p786) target = $region148
        $region147: #{tpu_custom_call.1} parent=95 // pred_region
          %789 = dma.done [#allocation24], 16
        $region148: #{tpu_custom_call.1} parent=95 // pred_fallthru
          _
        %s790 = sand.u32 %s64, 1
        %s791 = scalar_lea.sflag [#allocation6], %s790
        %s792 = sand.u32 %s64, 1
        %s793 = smul.addr %s792, 64
        %s794 = scalar_lea.vmem [#allocation5], %s793
        %p795 = pneg %p77
        %p796 = pneg %p74
        %s797 = sand.u32 %s56, 1
        %s798 = scalar_lea.sflag [#allocation9], %s797
        %s799 = sand.u32 %s90, 1
        %s800 = smul.addr %s799, 8
        %s801 = scalar_lea.vmem [#allocation8], %s800
        %p802 = pneg %p103
        %p803 = pneg %p100
        %p804 = pneg %p124
        %p805 = pneg %p121
        %p806 = pneg %p145
        %p807 = pneg %p142
        %p808 = pneg %p166
        %p809 = pneg %p163
        %p810 = pneg %p187
        %p811 = pneg %p184
        %p812 = pneg %p208
        %p813 = pneg %p205
        %p814 = pneg %p229
        %p815 = pneg %p226
        %p816 = pneg %p250
        %p817 = pneg %p247
        %p818 = pneg %p271
        %p819 = pneg %p268
        %p820 = pneg %p292
        %p821 = pneg %p289
        %p822 = pneg %p313
        %p823 = pneg %p310
        %p824 = pneg %p334
        %p825 = pneg %p331
        %p826 = pneg %p355
        %p827 = pneg %p352
        %p828 = pneg %p376
        %p829 = pneg %p373
        %p830 = pneg %p397
        %p831 = pneg %p394
        %p832 = pneg %p418
        %p833 = pneg %p415
        %p834 = pneg %p439
        %p835 = pneg %p436
        %p836 = pneg %p460
        %p837 = pneg %p457
        %p838 = pneg %p486
        %p839 = pneg %p483
        %s840 = sand.u32 %s473, 1
        %s841 = scalar_lea.sflag [#allocation7], %s840
        %s842 = sand.u32 %s473, 1
        %s843 = smul.addr %s842, 16
        %s844 = scalar_lea.vmem [#allocation26], %s843
        %p845 = pneg %p512
        %p846 = pneg %p509
        %s847 = sand.u32 %s499, 1
        %s848 = scalar_lea.sflag [#allocation28], %s847
        %s849 = sand.u32 %s499, 1
        %s850 = smul.addr %s849, 16
        %s851 = scalar_lea.vmem [#allocation27], %s850
        %s852 = smul.u32 2, %s56
        %s853 = smul.u32 2, %s56
        %s854 = smul.u32 2, %s56
        %s855 = smul.u32 2, %s56
        %v857 = vlaneseq
        %v858 = vand.u32 %v857, 127
        %s859 = smul.u32 %s56, 2
        %s860 = sld [smem:[#allocation3 + %s859]]
        %v861 = vstv %s860
        %vm862 = vcmp.lt.s32.totalorder %v858, %v861
        %v863 = vsel %vm862, 1, 0
        %v864 = vcvt.s32.f32 %v863
        %s865 = sadd.s32 %s859, 1
        %s866 = sld [smem:[#allocation3 + %s865]]
        %v867 = vstv %s866
        %vm868 = vcmp.lt.s32.totalorder %v858, %v867
        %v869 = vsel %vm868, 1, 0
        %v870 = vcvt.s32.f32 %v869
        %vm871 = vcmask 1040384
        %v872 = vsel %vm871, %v864, %v870
        %v873 = vlaneseq
        %v874 = vshrl.u32 %v873, 7
        %v875 = vsub.s32 0, %v874
        %v876 = vrot.slane %v872, %v875
        %878 = vbcast.lane.b32.xlu0 %v876, 256
        %v879 = vpop.permute.xlu0 %878
        %v880 = vlaneseq
        %v881 = vshrl.u32 %v880, 7
        %v882 = vsub.s32 1, %v881
        %v883 = vrot.slane %v872, %v882
        %885 = vbcast.lane.b32.xlu0 %v883, 256
        %v886 = vpop.permute.xlu0 %885
        %v889 = vunpack.c.l.s4 1966171168
        %v890 = vunpack.c.0.s8 %v889
        %v891 = vlaneseq
        %v892 = vshrl.u32 %v891, 7
        %v893 = vsub.s32 %v890, %v892
        %v894 = vrot.slane %v872, %v893
        %v895 = vcombine.high %v894, %v894
        %v897 = vunpack.c.l.s4 1966171168
        %v898 = vunpack.c.0.s8 %v897
        %v899 = vlaneseq
        %v900 = vshrl.u32 %v899, 7
        %v901 = vsub.s32 %v898, %v900
        %v902 = vrot.slane %v894, %v901
        %v904 = vunpack.c.l.s4 1966171168
        %v905 = vunpack.c.0.s8 %v904
        %v906 = vlaneseq
        %v907 = vshrl.u32 %v906, 7
        %v908 = vsub.s32 %v905, %v907
        %v909 = vrot.slane %v895, %v908
        %v910 = vlaneseq
        %v911 = vshrl.u32 %v910, 7
        %v912 = vsub.s32 0, %v911
        %v913 = vrot.slane %v902, %v912
        %v914 = vlaneseq
        %v915 = vshrl.u32 %v914, 7
        %v916 = vsub.s32 0, %v915
        %v917 = vrot.slane %v909, %v916
        %v920 = vmul.f32 %v879, %v913
        %v921 = vmul.f32 %v886, %v917
        %v922 = vld [vmem:[%s732] sm:$0xf]
        %v923 = vld [vmem:[%s732 + $0x4] sm:$0xf]
        %v924 = vld [vmem:[%s732 + $0x8] sm:$0xf]
        %v925 = vld [vmem:[%s732 + $0xc] sm:$0xf]
        %v926 = vld [vmem:[%s732 + $0x10] sm:$0xf]
        %v927 = vld [vmem:[%s732 + $0x14] sm:$0xf]
        %v928 = vld [vmem:[%s732 + $0x18] sm:$0xf]
        %v929 = vld [vmem:[%s732 + $0x1c] sm:$0xf]
        %v930 = vld [vmem:[%s732 + $0x20] sm:$0xf]
        %v931 = vld [vmem:[%s732 + $0x24] sm:$0xf]
        %v932 = vld [vmem:[%s732 + $0x28] sm:$0xf]
        %v933 = vld [vmem:[%s732 + $0x2c] sm:$0xf]
        %v934 = vld [vmem:[%s732 + $0x30] sm:$0xf]
        %v935 = vld [vmem:[%s732 + $0x34] sm:$0xf]
        %v936 = vld [vmem:[%s732 + $0x38] sm:$0xf]
        %v937 = vld [vmem:[%s732 + $0x3c] sm:$0xf]
        %v938 = vld [vmem:[#allocation10] sm:$0xf]
        %v939 = vld [vmem:[#allocation10 + $0x4] sm:$0xf]
        %v940 = vld [vmem:[#allocation11] sm:$0x1]
        %v942 = vlaneseq
        %v943 = vshrl.u32 %v942, 7
        %v944 = vsub.s32 0, %v943
        %v945 = vrot.slane %v940, %v944
        %v963 = vunpack.c.l.b16 %v922
        %v964 = vunpack.c.l.b16 %v923
        %v965 = vunpack.c.l.b16 %v924
        %v966 = vunpack.c.l.b16 %v925
        %v967 = vunpack.c.l.b16 %v926
        %v968 = vunpack.c.l.b16 %v927
        %v969 = vunpack.c.l.b16 %v928
        %v970 = vunpack.c.l.b16 %v929
        %v971 = vunpack.c.l.b16 %v930
        %v972 = vunpack.c.l.b16 %v931
        %v973 = vunpack.c.l.b16 %v932
        %v974 = vunpack.c.l.b16 %v933
        %v975 = vunpack.c.l.b16 %v934
        %v976 = vunpack.c.l.b16 %v935
        %v977 = vunpack.c.l.b16 %v936
        %v978 = vunpack.c.l.b16 %v937
        %v979 = vpack.c.b16 %v964, %v963
        %v980 = vpack.c.b16 %v966, %v965
        %v981 = vpack.c.b16 %v968, %v967
        %v982 = vpack.c.b16 %v970, %v969
        %v983 = vpack.c.b16 %v972, %v971
        %v984 = vpack.c.b16 %v974, %v973
        %v985 = vpack.c.b16 %v976, %v975
        %v986 = vpack.c.b16 %v978, %v977
        %v989 = vunpack.c.l.b16 %v938
        %v990 = vunpack.c.l.b16 %v939
        %v991 = vpack.c.b16 %v990, %v989
        %vm993 = vcmask 130048
        %v995 = vsel %vm993, %v979, 0
        %v998 = vsel %vm993, %v980, 0
        %v1001 = vsel %vm993, %v981, 0
        %v1004 = vsel %vm993, %v982, 0
        %v1007 = vsel %vm993, %v983, 0
        %v1010 = vsel %vm993, %v984, 0
        %v1013 = vsel %vm993, %v985, 0
        %v1016 = vsel %vm993, %v986, 0
        %1018 = vmatprep.subr.bf16.mxu0 0
        %1019 = vmatpush1.bf16.msra.mxu0 %v991
        %1020 = vmatprep.subr.bf16.mxu0 0
        %1021 = vmatpush1.bf16.msra.mxu0 0
        %1022 = vmatprep.subr.bf16.mxu0 0
        %1023 = vmatpush1.bf16.msra.mxu0 0
        %1024 = vmatprep.subr.bf16.mxu0 0
        %1025 = vmatpush1.bf16.msra.mxu0 0
        %1026 = vmatprep.subr.bf16.mxu0 0
        %1027 = vmatpush1.bf16.msra.mxu0 0
        %1028 = vmatprep.subr.bf16.mxu0 0
        %1029 = vmatpush1.bf16.msra.mxu0 0
        %1030 = vmatprep.subr.bf16.mxu0 0
        %1031 = vmatpush1.bf16.msra.mxu0 0
        %1032 = vmatprep.subr.bf16.mxu0 0
        %1033 = vmatpush1.bf16.msra.mxu0 0
        %1034 = vmatprep.subr.bf16.mxu0 0
        %1035 = vmatpush1.bf16.msra.mxu0 0
        %1036 = vmatprep.subr.bf16.mxu0 0
        %1037 = vmatpush1.bf16.msra.mxu0 0
        %1038 = vmatprep.subr.bf16.mxu0 0
        %1039 = vmatpush1.bf16.msra.mxu0 0
        %1040 = vmatprep.subr.bf16.mxu0 0
        %1041 = vmatpush1.bf16.msra.mxu0 0
        %1042 = vmatprep.subr.bf16.mxu0 0
        %1043 = vmatpush1.bf16.msra.mxu0 0
        %1044 = vmatprep.subr.bf16.mxu0 0
        %1045 = vmatpush1.bf16.msra.mxu0 0
        %1046 = vmatprep.subr.bf16.mxu0 0
        %1047 = vmatpush1.bf16.msra.mxu0 0
        %1048 = vmatprep.subr.bf16.mxu0 0
        %1049 = vmatpush1.bf16.msra.mxu0 0
        %1050 = vmatprep.mubr.bf16.mxu0 0
        %1051 = vmatmul.mubr.bf16.gmra.mrb[0].mxu0 %v995
        %v1052 = vpop.f32.mrb[0].mxu0
        %v1053 = vadd.f32 %v945, %v1052
        %v1054 = vpop.f32.mrb[0].mxu0
        %v1055 = vpop.f32.mrb[0].mxu0
        %v1056 = vadd.f32 %v945, %v1055
        %v1057 = vpop.f32.mrb[0].mxu0
        %1058 = vmatprep.mubr.bf16.mxu0 0
        %1059 = vmatmul.mubr.bf16.gmra.mrb[0].mxu0 %v998
        %v1060 = vpop.f32.mrb[0].mxu0
        %v1061 = vadd.f32 %v945, %v1060
        %v1062 = vpop.f32.mrb[0].mxu0
        %v1063 = vpop.f32.mrb[0].mxu0
        %v1064 = vadd.f32 %v945, %v1063
        %v1065 = vpop.f32.mrb[0].mxu0
        %1066 = vmatprep.mubr.bf16.mxu0 0
        %1067 = vmatmul.mubr.bf16.gmra.mrb[0].mxu0 %v1001
        %v1068 = vpop.f32.mrb[0].mxu0
        %v1069 = vadd.f32 %v945, %v1068
        %v1070 = vpop.f32.mrb[0].mxu0
        %v1071 = vpop.f32.mrb[0].mxu0
        %v1072 = vadd.f32 %v945, %v1071
        %v1073 = vpop.f32.mrb[0].mxu0
        %1074 = vmatprep.mubr.bf16.mxu0 0
        %1075 = vmatmul.mubr.bf16.gmra.mrb[0].mxu0 %v1004
        %v1076 = vpop.f32.mrb[0].mxu0
        %v1077 = vadd.f32 %v945, %v1076
        %v1078 = vpop.f32.mrb[0].mxu0
        %v1079 = vpop.f32.mrb[0].mxu0
        %v1080 = vadd.f32 %v945, %v1079
        %v1081 = vpop.f32.mrb[0].mxu0
        %1082 = vmatprep.mubr.bf16.mxu0 0
        %1083 = vmatmul.mubr.bf16.gmra.mrb[0].mxu0 %v1007
        %v1084 = vpop.f32.mrb[0].mxu0
        %v1085 = vadd.f32 %v945, %v1084
        %v1086 = vpop.f32.mrb[0].mxu0
        %v1087 = vpop.f32.mrb[0].mxu0
        %v1088 = vadd.f32 %v945, %v1087
        %v1089 = vpop.f32.mrb[0].mxu0
        %1090 = vmatprep.mubr.bf16.mxu0 0
        %1091 = vmatmul.mubr.bf16.gmra.mrb[0].mxu0 %v1010
        %v1092 = vpop.f32.mrb[0].mxu0
        %v1093 = vadd.f32 %v945, %v1092
        %v1094 = vpop.f32.mrb[0].mxu0
        %v1095 = vpop.f32.mrb[0].mxu0
        %v1096 = vadd.f32 %v945, %v1095
        %v1097 = vpop.f32.mrb[0].mxu0
        %1098 = vmatprep.mubr.bf16.mxu0 0
        %1099 = vmatmul.mubr.bf16.gmra.mrb[0].mxu0 %v1013
        %v1100 = vpop.f32.mrb[0].mxu0
        %v1101 = vadd.f32 %v945, %v1100
        %v1102 = vpop.f32.mrb[0].mxu0
        %v1103 = vpop.f32.mrb[0].mxu0
        %v1104 = vadd.f32 %v945, %v1103
        %v1105 = vpop.f32.mrb[0].mxu0
        %1106 = vmatprep.mubr.bf16.mxu0 0
        %1107 = vmatmul.mubr.bf16.gmra.mrb[0].mxu0 %v1016
        %v1108 = vpop.f32.mrb[0].mxu0
        %v1109 = vadd.f32 %v945, %v1108
        %v1110 = vpop.f32.mrb[0].mxu0
        %v1111 = vpop.f32.mrb[0].mxu0
        %v1112 = vadd.f32 %v945, %v1111
        %v1113 = vpop.f32.mrb[0].mxu0
        %1114 = vdwg.mxu0
        %v1115 = vld [vmem:[%s741] sm:$0xf]
        %v1116 = vld [vmem:[%s741 + $0x4] sm:$0xf]
        %v1117 = vld [vmem:[#allocation13] sm:$0xf]
        %v1118 = vld [vmem:[#allocation13 + $0x4] sm:$0xf]
        %v1119 = vld [vmem:[#allocation14] sm:$0x1]
        %v1121 = vlaneseq
        %v1122 = vshrl.u32 %v1121, 7
        %v1123 = vsub.s32 0, %v1122
        %v1124 = vrot.slane %v1119, %v1123
        %v1128 = vunpack.c.l.b16 %v1115
        %v1129 = vunpack.c.l.b16 %v1116
        %v1130 = vpack.c.b16 %v1129, %v1128
        %v1133 = vunpack.c.l.b16 %v1117
        %v1134 = vunpack.c.l.b16 %v1118
        %v1135 = vpack.c.b16 %v1134, %v1133
        %v1138 = vsel %vm993, %v1130, 0
        %1140 = vmatprep.subr.bf16.mxu0 0
        %1141 = vmatpush1.bf16.msra.mxu0 %v1135
        %1142 = vmatprep.subr.bf16.mxu0 0
        %1143 = vmatpush1.bf16.msra.mxu0 0
        %1144 = vmatprep.subr.bf16.mxu0 0
        %1145 = vmatpush1.bf16.msra.mxu0 0
        %1146 = vmatprep.subr.bf16.mxu0 0
        %1147 = vmatpush1.bf16.msra.mxu0 0
        %1148 = vmatprep.subr.bf16.mxu0 0
        %1149 = vmatpush1.bf16.msra.mxu0 0
        %1150 = vmatprep.subr.bf16.mxu0 0
        %1151 = vmatpush1.bf16.msra.mxu0 0
        %1152 = vmatprep.subr.bf16.mxu0 0
        %1153 = vmatpush1.bf16.msra.mxu0 0
        %1154 = vmatprep.subr.bf16.mxu0 0
        %1155 = vmatpush1.bf16.msra.mxu0 0
        %1156 = vmatprep.subr.bf16.mxu0 0
        %1157 = vmatpush1.bf16.msra.mxu0 0
        %1158 = vmatprep.subr.bf16.mxu0 0
        %1159 = vmatpush1.bf16.msra.mxu0 0
        %1160 = vmatprep.subr.bf16.mxu0 0
        %1161 = vmatpush1.bf16.msra.mxu0 0
        %1162 = vmatprep.subr.bf16.mxu0 0
        %1163 = vmatpush1.bf16.msra.mxu0 0
        %1164 = vmatprep.subr.bf16.mxu0 0
        %1165 = vmatpush1.bf16.msra.mxu0 0
        %1166 = vmatprep.subr.bf16.mxu0 0
        %1167 = vmatpush1.bf16.msra.mxu0 0
        %1168 = vmatprep.subr.bf16.mxu0 0
        %1169 = vmatpush1.bf16.msra.mxu0 0
        %1170 = vmatprep.subr.bf16.mxu0 0
        %1171 = vmatpush1.bf16.msra.mxu0 0
        %1172 = vmatprep.mubr.bf16.mxu0 0
        %1173 = vmatmul.mubr.bf16.gmra.mrb[0].mxu0 %v1138
        %v1174 = vpop.f32.mrb[0].mxu0
        %v1175 = vadd.f32 %v1124, %v1174
        %v1176 = vpop.f32.mrb[0].mxu0
        %v1177 = vpop.f32.mrb[0].mxu0
        %v1178 = vadd.f32 %v1124, %v1177
        %v1179 = vpop.f32.mrb[0].mxu0
        %1180 = vdwg.mxu0
        %v1181 = vpack.c.bf16 %v1056, %v1053
        %v1182 = vpack.c.bf16 %v1064, %v1061
        %v1183 = vpack.c.bf16 %v1072, %v1069
        %v1184 = vpack.c.bf16 %v1080, %v1077
        %v1185 = vpack.c.bf16 %v1088, %v1085
        %v1186 = vpack.c.bf16 %v1096, %v1093
        %v1187 = vpack.c.bf16 %v1104, %v1101
        %v1188 = vpack.c.bf16 %v1112, %v1109
        %v1189 = vpack.c.bf16 %v1178, %v1175
        %v1190 = vld [vmem:[%s11] sm:$0xf]
        %v1191 = vld [vmem:[%s11 + $0x4] sm:$0xf]
        %v1192 = vld [vmem:[%s11 + $0x8] sm:$0xf]
        %v1193 = vld [vmem:[%s11 + $0xc] sm:$0xf]
        %v1198 = vunpack.c.l.b16 %v1190
        %v1199 = vunpack.c.l.b16 %v1191
        %v1200 = vunpack.c.l.b16 %v1192
        %v1201 = vunpack.c.l.b16 %v1193
        %v1202 = vpack.c.b16 %v1199, %v1198
        %v1203 = vpack.c.b16 %v1201, %v1200
        %vm1206 = vcmask 261120
        %v1208 = vsel %vm1206, %v1189, 0
        %1210 = vmatprep.subr.bf16.mxu0 0
        %1211 = vmatpush1.bf16.msra.mxu0 %v1202
        %1212 = vmatprep.subr.bf16.mxu0 0
        %1213 = vmatpush1.bf16.msra.mxu0 %v1203
        %1214 = vmatprep.subr.bf16.mxu0 0
        %1215 = vmatpush1.bf16.msra.mxu0 0
        %1216 = vmatprep.subr.bf16.mxu0 0
        %1217 = vmatpush1.bf16.msra.mxu0 0
        %1218 = vmatprep.subr.bf16.mxu0 0
        %1219 = vmatpush1.bf16.msra.mxu0 0
        %1220 = vmatprep.subr.bf16.mxu0 0
        %1221 = vmatpush1.bf16.msra.mxu0 0
        %1222 = vmatprep.subr.bf16.mxu0 0
        %1223 = vmatpush1.bf16.msra.mxu0 0
        %1224 = vmatprep.subr.bf16.mxu0 0
        %1225 = vmatpush1.bf16.msra.mxu0 0
        %1226 = vmatprep.subr.bf16.mxu0 0
        %1227 = vmatpush1.bf16.msra.mxu0 0
        %1228 = vmatprep.subr.bf16.mxu0 0
        %1229 = vmatpush1.bf16.msra.mxu0 0
        %1230 = vmatprep.subr.bf16.mxu0 0
        %1231 = vmatpush1.bf16.msra.mxu0 0
        %1232 = vmatprep.subr.bf16.mxu0 0
        %1233 = vmatpush1.bf16.msra.mxu0 0
        %1234 = vmatprep.subr.bf16.mxu0 0
        %1235 = vmatpush1.bf16.msra.mxu0 0
        %1236 = vmatprep.subr.bf16.mxu0 0
        %1237 = vmatpush1.bf16.msra.mxu0 0
        %1238 = vmatprep.subr.bf16.mxu0 0
        %1239 = vmatpush1.bf16.msra.mxu0 0
        %1240 = vmatprep.subr.bf16.mxu0 0
        %1241 = vmatpush1.bf16.msra.mxu0 0
        %1242 = vmatprep.mubr.bf16.mxu0 0
        %1243 = vmatmul.mubr.bf16.gmra.mrb[0].mxu0 %v1208
        %v1244 = vpop.f32.mrb[0].mxu0
        %v1245 = vadd.f32 0.0, %v1244
        %v1246 = vpop.f32.mrb[0].mxu0
        %v1247 = vpop.f32.mrb[0].mxu0
        %v1248 = vadd.f32 0.0, %v1247
        %v1249 = vpop.f32.mrb[0].mxu0
        %1250 = vdwg.mxu0
        %v1251 = vld [vmem:[#allocation19] sm:$0xf]
        %v1252 = vld [vmem:[#allocation19 + $0x4] sm:$0xf]
        %v1253 = vld [vmem:[#allocation19 + $0x8] sm:$0xf]
        %v1254 = vld [vmem:[#allocation19 + $0xc] sm:$0xf]
        %v1259 = vunpack.c.l.b16 %v1251
        %v1260 = vunpack.c.l.b16 %v1252
        %v1261 = vunpack.c.l.b16 %v1253
        %v1262 = vunpack.c.l.b16 %v1254
        %v1263 = vpack.c.b16 %v1260, %v1259
        %v1264 = vpack.c.b16 %v1262, %v1261
        %v1268 = vsel %vm1206, %v1181, 0
        %v1271 = vsel %vm1206, %v1182, 0
        %v1274 = vsel %vm1206, %v1183, 0
        %v1277 = vsel %vm1206, %v1184, 0
        %v1280 = vsel %vm1206, %v1185, 0
        %v1283 = vsel %vm1206, %v1186, 0
        %v1286 = vsel %vm1206, %v1187, 0
        %v1289 = vsel %vm1206, %v1188, 0
        %1291 = vmatprep.subr.bf16.mxu0 0
        %1292 = vmatpush1.bf16.msra.mxu0 %v1263
        %1293 = vmatprep.subr.bf16.mxu0 0
        %1294 = vmatpush1.bf16.msra.mxu0 %v1264
        %1295 = vmatprep.subr.bf16.mxu0 0
        %1296 = vmatpush1.bf16.msra.mxu0 0
        %1297 = vmatprep.subr.bf16.mxu0 0
        %1298 = vmatpush1.bf16.msra.mxu0 0
        %1299 = vmatprep.subr.bf16.mxu0 0
        %1300 = vmatpush1.bf16.msra.mxu0 0
        %1301 = vmatprep.subr.bf16.mxu0 0
        %1302 = vmatpush1.bf16.msra.mxu0 0
        %1303 = vmatprep.subr.bf16.mxu0 0
        %1304 = vmatpush1.bf16.msra.mxu0 0
        %1305 = vmatprep.subr.bf16.mxu0 0
        %1306 = vmatpush1.bf16.msra.mxu0 0
        %1307 = vmatprep.subr.bf16.mxu0 0
        %1308 = vmatpush1.bf16.msra.mxu0 0
        %1309 = vmatprep.subr.bf16.mxu0 0
        %1310 = vmatpush1.bf16.msra.mxu0 0
        %1311 = vmatprep.subr.bf16.mxu0 0
        %1312 = vmatpush1.bf16.msra.mxu0 0
        %1313 = vmatprep.subr.bf16.mxu0 0
        %1314 = vmatpush1.bf16.msra.mxu0 0
        %1315 = vmatprep.subr.bf16.mxu0 0
        %1316 = vmatpush1.bf16.msra.mxu0 0
        %1317 = vmatprep.subr.bf16.mxu0 0
        %1318 = vmatpush1.bf16.msra.mxu0 0
        %1319 = vmatprep.subr.bf16.mxu0 0
        %1320 = vmatpush1.bf16.msra.mxu0 0
        %1321 = vmatprep.subr.bf16.mxu0 0
        %1322 = vmatpush1.bf16.msra.mxu0 0
        %1323 = vmatprep.mubr.bf16.mxu0 0
        %1324 = vmatmul.mubr.bf16.gmra.mrb[0].mxu0 %v1268
        %v1325 = vpop.f32.mrb[0].mxu0
        %v1326 = vadd.f32 0.0, %v1325
        %v1327 = vpop.f32.mrb[0].mxu0
        %v1328 = vpop.f32.mrb[0].mxu0
        %v1329 = vadd.f32 0.0, %v1328
        %v1330 = vpop.f32.mrb[0].mxu0
        %1331 = vmatprep.mubr.bf16.mxu0 0
        %1332 = vmatmul.mubr.bf16.gmra.mrb[0].mxu0 %v1271
        %v1333 = vpop.f32.mrb[0].mxu0
        %v1334 = vadd.f32 0.0, %v1333
        %v1335 = vpop.f32.mrb[0].mxu0
        %v1336 = vpop.f32.mrb[0].mxu0
        %v1337 = vadd.f32 0.0, %v1336
        %v1338 = vpop.f32.mrb[0].mxu0
        %1339 = vmatprep.mubr.bf16.mxu0 0
        %1340 = vmatmul.mubr.bf16.gmra.mrb[0].mxu0 %v1274
        %v1341 = vpop.f32.mrb[0].mxu0
        %v1342 = vadd.f32 0.0, %v1341
        %v1343 = vpop.f32.mrb[0].mxu0
        %v1344 = vpop.f32.mrb[0].mxu0
        %v1345 = vadd.f32 0.0, %v1344
        %v1346 = vpop.f32.mrb[0].mxu0
        %1347 = vmatprep.mubr.bf16.mxu0 0
        %1348 = vmatmul.mubr.bf16.gmra.mrb[0].mxu0 %v1277
        %v1349 = vpop.f32.mrb[0].mxu0
        %v1350 = vadd.f32 0.0, %v1349
        %v1351 = vpop.f32.mrb[0].mxu0
        %v1352 = vpop.f32.mrb[0].mxu0
        %v1353 = vadd.f32 0.0, %v1352
        %v1354 = vpop.f32.mrb[0].mxu0
        %1355 = vmatprep.mubr.bf16.mxu0 0
        %1356 = vmatmul.mubr.bf16.gmra.mrb[0].mxu0 %v1280
        %v1357 = vpop.f32.mrb[0].mxu0
        %v1358 = vadd.f32 0.0, %v1357
        %v1359 = vpop.f32.mrb[0].mxu0
        %v1360 = vpop.f32.mrb[0].mxu0
        %v1361 = vadd.f32 0.0, %v1360
        %v1362 = vpop.f32.mrb[0].mxu0
        %1363 = vmatprep.mubr.bf16.mxu0 0
        %1364 = vmatmul.mubr.bf16.gmra.mrb[0].mxu0 %v1283
        %v1365 = vpop.f32.mrb[0].mxu0
        %v1366 = vadd.f32 0.0, %v1365
        %v1367 = vpop.f32.mrb[0].mxu0
        %v1368 = vpop.f32.mrb[0].mxu0
        %v1369 = vadd.f32 0.0, %v1368
        %v1370 = vpop.f32.mrb[0].mxu0
        %1371 = vmatprep.mubr.bf16.mxu0 0
        %1372 = vmatmul.mubr.bf16.gmra.mrb[0].mxu0 %v1286
        %v1373 = vpop.f32.mrb[0].mxu0
        %v1374 = vadd.f32 0.0, %v1373
        %v1375 = vpop.f32.mrb[0].mxu0
        %v1376 = vpop.f32.mrb[0].mxu0
        %v1377 = vadd.f32 0.0, %v1376
        %v1378 = vpop.f32.mrb[0].mxu0
        %1379 = vmatprep.mubr.bf16.mxu0 0
        %1380 = vmatmul.mubr.bf16.gmra.mrb[0].mxu0 %v1289
        %v1381 = vpop.f32.mrb[0].mxu0
        %v1382 = vadd.f32 0.0, %v1381
        %v1383 = vpop.f32.mrb[0].mxu0
        %v1384 = vpop.f32.mrb[0].mxu0
        %v1385 = vadd.f32 0.0, %v1384
        %v1386 = vpop.f32.mrb[0].mxu0
        %1387 = vdwg.mxu0
        %v1388 = vadd.f32 %v1326, %v1245
        %v1389 = vadd.f32 %v1329, %v1245
        %v1390 = vadd.f32 %v1334, %v1245
        %v1391 = vadd.f32 %v1337, %v1245
        %v1392 = vadd.f32 %v1342, %v1245
        %v1393 = vadd.f32 %v1345, %v1245
        %v1394 = vadd.f32 %v1350, %v1245
        %v1395 = vadd.f32 %v1353, %v1245
        %v1396 = vadd.f32 %v1358, %v1248
        %v1397 = vadd.f32 %v1361, %v1248
        %v1398 = vadd.f32 %v1366, %v1248
        %v1399 = vadd.f32 %v1369, %v1248
        %v1400 = vadd.f32 %v1374, %v1248
        %v1401 = vadd.f32 %v1377, %v1248
        %v1402 = vadd.f32 %v1382, %v1248
        %v1403 = vadd.f32 %v1385, %v1248
        %v1404 = vld [vmem:[#allocation20] sm:$0x1]
        %v1406 = vlaneseq
        %v1407 = vshrl.u32 %v1406, 7
        %v1408 = vsub.s32 0, %v1407
        %v1409 = vrot.slane %v1404, %v1408
        %v1411 = vadd.f32 %v1388, %v1409
        %v1412 = vadd.f32 %v1389, %v1409
        %v1413 = vadd.f32 %v1390, %v1409
        %v1414 = vadd.f32 %v1391, %v1409
        %v1415 = vadd.f32 %v1392, %v1409
        %v1416 = vadd.f32 %v1393, %v1409
        %v1417 = vadd.f32 %v1394, %v1409
        %v1418 = vadd.f32 %v1395, %v1409
        %v1419 = vadd.f32 %v1396, %v1409
        %v1420 = vadd.f32 %v1397, %v1409
        %v1421 = vadd.f32 %v1398, %v1409
        %v1422 = vadd.f32 %v1399, %v1409
        %v1423 = vadd.f32 %v1400, %v1409
        %v1424 = vadd.f32 %v1401, %v1409
        %v1425 = vadd.f32 %v1402, %v1409
        %v1426 = vadd.f32 %v1403, %v1409
        %v1427 = vmax.f32 %v1411, 0.0
        %v1428 = vmax.f32 %v1412, 0.0
        %v1429 = vmax.f32 %v1413, 0.0
        %v1430 = vmax.f32 %v1414, 0.0
        %v1431 = vmax.f32 %v1415, 0.0
        %v1432 = vmax.f32 %v1416, 0.0
        %v1433 = vmax.f32 %v1417, 0.0
        %v1434 = vmax.f32 %v1418, 0.0
        %v1435 = vmax.f32 %v1419, 0.0
        %v1436 = vmax.f32 %v1420, 0.0
        %v1437 = vmax.f32 %v1421, 0.0
        %v1438 = vmax.f32 %v1422, 0.0
        %v1439 = vmax.f32 %v1423, 0.0
        %v1440 = vmax.f32 %v1424, 0.0
        %v1441 = vmax.f32 %v1425, 0.0
        %v1442 = vmax.f32 %v1426, 0.0
        %v1443 = vpack.c.bf16 %v1427, %v1427
        %v1444 = vpack.c.bf16 %v1428, %v1428
        %v1445 = vpack.c.bf16 %v1429, %v1429
        %v1446 = vpack.c.bf16 %v1430, %v1430
        %v1447 = vpack.c.bf16 %v1431, %v1431
        %v1448 = vpack.c.bf16 %v1432, %v1432
        %v1449 = vpack.c.bf16 %v1433, %v1433
        %v1450 = vpack.c.bf16 %v1434, %v1434
        %v1451 = vpack.c.bf16 %v1435, %v1435
        %v1452 = vpack.c.bf16 %v1436, %v1436
        %v1453 = vpack.c.bf16 %v1437, %v1437
        %v1454 = vpack.c.bf16 %v1438, %v1438
        %v1455 = vpack.c.bf16 %v1439, %v1439
        %v1456 = vpack.c.bf16 %v1440, %v1440
        %v1457 = vpack.c.bf16 %v1441, %v1441
        %v1458 = vpack.c.bf16 %v1442, %v1442
        %v1459 = vld [vmem:[#allocation16] sm:$0x1]
        %v1460 = vld [vmem:[#allocation17] sm:$0x1]
        %v1461 = vld [vmem:[#allocation4] sm:$0x1]
        %v1462 = vld [vmem:[%s7] sm:$0xf]
        %v1463 = vld [vmem:[%s7 + $0x4] sm:$0xf]
        %v1464 = vld [vmem:[%s7 + $0x8] sm:$0xf]
        %v1465 = vld [vmem:[%s7 + $0xc] sm:$0xf]
        %v1482 = vunpack.c.l.b16 %v1443
        %v1483 = vunpack.c.l.b16 %v1444
        %v1484 = vunpack.c.l.b16 %v1445
        %v1485 = vunpack.c.l.b16 %v1446
        %v1486 = vunpack.c.l.b16 %v1447
        %v1487 = vunpack.c.l.b16 %v1448
        %v1488 = vunpack.c.l.b16 %v1449
        %v1489 = vunpack.c.l.b16 %v1450
        %v1490 = vunpack.c.l.b16 %v1451
        %v1491 = vunpack.c.l.b16 %v1452
        %v1492 = vunpack.c.l.b16 %v1453
        %v1493 = vunpack.c.l.b16 %v1454
        %v1494 = vunpack.c.l.b16 %v1455
        %v1495 = vunpack.c.l.b16 %v1456
        %v1496 = vunpack.c.l.b16 %v1457
        %v1497 = vunpack.c.l.b16 %v1458
        %v1498 = vpack.c.b16 %v1483, %v1482
        %v1499 = vpack.c.b16 %v1485, %v1484
        %v1500 = vpack.c.b16 %v1487, %v1486
        %v1501 = vpack.c.b16 %v1489, %v1488
        %v1502 = vpack.c.b16 %v1491, %v1490
        %v1503 = vpack.c.b16 %v1493, %v1492
        %v1504 = vpack.c.b16 %v1495, %v1494
        %v1505 = vpack.c.b16 %v1497, %v1496
        %v1510 = vunpack.c.l.b16 %v1462
        %v1511 = vunpack.c.l.b16 %v1463
        %v1512 = vunpack.c.l.b16 %v1464
        %v1513 = vunpack.c.l.b16 %v1465
        %v1514 = vpack.c.b16 %v1511, %v1510
        %v1515 = vpack.c.b16 %v1513, %v1512
        %v1519 = vsel %vm1206, %v1498, 0
        %v1522 = vsel %vm1206, %v1499, 0
        %v1525 = vsel %vm1206, %v1500, 0
        %v1528 = vsel %vm1206, %v1501, 0
        %v1531 = vsel %vm1206, %v1502, 0
        %v1534 = vsel %vm1206, %v1503, 0
        %v1537 = vsel %vm1206, %v1504, 0
        %v1540 = vsel %vm1206, %v1505, 0
        %1542 = vmatprep.subr.bf16.mxu0 0
        %1543 = vmatpush1.bf16.msra.mxu0 %v1514
        %1544 = vmatprep.subr.bf16.mxu0 0
        %1545 = vmatpush1.bf16.msra.mxu0 %v1515
        %1546 = vmatprep.subr.bf16.mxu0 0
        %1547 = vmatpush1.bf16.msra.mxu0 0
        %1548 = vmatprep.subr.bf16.mxu0 0
        %1549 = vmatpush1.bf16.msra.mxu0 0
        %1550 = vmatprep.subr.bf16.mxu0 0
        %1551 = vmatpush1.bf16.msra.mxu0 0
        %1552 = vmatprep.subr.bf16.mxu0 0
        %1553 = vmatpush1.bf16.msra.mxu0 0
        %1554 = vmatprep.subr.bf16.mxu0 0
        %1555 = vmatpush1.bf16.msra.mxu0 0
        %1556 = vmatprep.subr.bf16.mxu0 0
        %1557 = vmatpush1.bf16.msra.mxu0 0
        %1558 = vmatprep.subr.bf16.mxu0 0
        %1559 = vmatpush1.bf16.msra.mxu0 0
        %1560 = vmatprep.subr.bf16.mxu0 0
        %1561 = vmatpush1.bf16.msra.mxu0 0
        %1562 = vmatprep.subr.bf16.mxu0 0
        %1563 = vmatpush1.bf16.msra.mxu0 0
        %1564 = vmatprep.subr.bf16.mxu0 0
        %1565 = vmatpush1.bf16.msra.mxu0 0
        %1566 = vmatprep.subr.bf16.mxu0 0
        %1567 = vmatpush1.bf16.msra.mxu0 0
        %1568 = vmatprep.subr.bf16.mxu0 0
        %1569 = vmatpush1.bf16.msra.mxu0 0
        %1570 = vmatprep.subr.bf16.mxu0 0
        %1571 = vmatpush1.bf16.msra.mxu0 0
        %1572 = vmatprep.subr.bf16.mxu0 0
        %1573 = vmatpush1.bf16.msra.mxu0 0
        %1574 = vmatprep.mubr.bf16.mxu0 0
        %1575 = vmatmul.mubr.bf16.gmra.mrb[0].mxu0 %v1519
        %v1576 = vpop.f32.mrb[0].mxu0
        %v1577 = vadd.f32 0.0, %v1576
        %v1578 = vpop.f32.mrb[0].mxu0
        %v1579 = vpop.f32.mrb[0].mxu0
        %v1580 = vadd.f32 0.0, %v1579
        %v1581 = vpop.f32.mrb[0].mxu0
        %1582 = vmatprep.mubr.bf16.mxu0 0
        %1583 = vmatmul.mubr.bf16.gmra.mrb[0].mxu0 %v1522
        %v1584 = vpop.f32.mrb[0].mxu0
        %v1585 = vadd.f32 0.0, %v1584
        %v1586 = vpop.f32.mrb[0].mxu0
        %v1587 = vpop.f32.mrb[0].mxu0
        %v1588 = vadd.f32 0.0, %v1587
        %v1589 = vpop.f32.mrb[0].mxu0
        %1590 = vmatprep.mubr.bf16.mxu0 0
        %1591 = vmatmul.mubr.bf16.gmra.mrb[0].mxu0 %v1525
        %v1592 = vpop.f32.mrb[0].mxu0
        %v1593 = vadd.f32 0.0, %v1592
        %v1594 = vpop.f32.mrb[0].mxu0
        %v1595 = vpop.f32.mrb[0].mxu0
        %v1596 = vadd.f32 0.0, %v1595
        %v1597 = vpop.f32.mrb[0].mxu0
        %1598 = vmatprep.mubr.bf16.mxu0 0
        %1599 = vmatmul.mubr.bf16.gmra.mrb[0].mxu0 %v1528
        %v1600 = vpop.f32.mrb[0].mxu0
        %v1601 = vadd.f32 0.0, %v1600
        %v1602 = vpop.f32.mrb[0].mxu0
        %v1603 = vpop.f32.mrb[0].mxu0
        %v1604 = vadd.f32 0.0, %v1603
        %v1605 = vpop.f32.mrb[0].mxu0
        %1606 = vmatprep.mubr.bf16.mxu0 0
        %1607 = vmatmul.mubr.bf16.gmra.mrb[0].mxu0 %v1531
        %v1608 = vpop.f32.mrb[0].mxu0
        %v1609 = vadd.f32 0.0, %v1608
        %v1610 = vpop.f32.mrb[0].mxu0
        %v1611 = vpop.f32.mrb[0].mxu0
        %v1612 = vadd.f32 0.0, %v1611
        %v1613 = vpop.f32.mrb[0].mxu0
        %1614 = vmatprep.mubr.bf16.mxu0 0
        %1615 = vmatmul.mubr.bf16.gmra.mrb[0].mxu0 %v1534
        %v1616 = vpop.f32.mrb[0].mxu0
        %v1617 = vadd.f32 0.0, %v1616
        %v1618 = vpop.f32.mrb[0].mxu0
        %v1619 = vpop.f32.mrb[0].mxu0
        %v1620 = vadd.f32 0.0, %v1619
        %v1621 = vpop.f32.mrb[0].mxu0
        %1622 = vmatprep.mubr.bf16.mxu0 0
        %1623 = vmatmul.mubr.bf16.gmra.mrb[0].mxu0 %v1537
        %v1624 = vpop.f32.mrb[0].mxu0
        %v1625 = vadd.f32 0.0, %v1624
        %v1626 = vpop.f32.mrb[0].mxu0
        %v1627 = vpop.f32.mrb[0].mxu0
        %v1628 = vadd.f32 0.0, %v1627
        %v1629 = vpop.f32.mrb[0].mxu0
        %1630 = vmatprep.mubr.bf16.mxu0 0
        %1631 = vmatmul.mubr.bf16.gmra.mrb[0].mxu0 %v1540
        %v1632 = vpop.f32.mrb[0].mxu0
        %v1633 = vadd.f32 0.0, %v1632
        %v1634 = vpop.f32.mrb[0].mxu0
        %v1635 = vpop.f32.mrb[0].mxu0
        %v1636 = vadd.f32 0.0, %v1635
        %v1637 = vpop.f32.mrb[0].mxu0
        %1638 = vdwg.mxu0
        %v1639 = vpack.c.bf16 %v1577, %v1577
        %v1640 = vpack.c.bf16 %v1580, %v1580
        %v1641 = vpack.c.bf16 %v1585, %v1585
        %v1642 = vpack.c.bf16 %v1588, %v1588
        %v1643 = vpack.c.bf16 %v1593, %v1593
        %v1644 = vpack.c.bf16 %v1596, %v1596
        %v1645 = vpack.c.bf16 %v1601, %v1601
        %v1646 = vpack.c.bf16 %v1604, %v1604
        %v1647 = vpack.c.bf16 %v1609, %v1609
        %v1648 = vpack.c.bf16 %v1612, %v1612
        %v1649 = vpack.c.bf16 %v1617, %v1617
        %v1650 = vpack.c.bf16 %v1620, %v1620
        %v1651 = vpack.c.bf16 %v1625, %v1625
        %v1652 = vpack.c.bf16 %v1628, %v1628
        %v1653 = vpack.c.bf16 %v1633, %v1633
        %v1654 = vpack.c.bf16 %v1636, %v1636
        %v1656 = vlaneseq
        %v1657 = vshrl.u32 %v1656, 7
        %v1658 = vsub.s32 0, %v1657
        %v1659 = vrot.slane %v1459, %v1658
        %1661 = vmatprep.subr.bf16.mxu0 0
        %1662 = vmatpush1.bf16.msra.mxu0 %v1514
        %1663 = vmatprep.subr.bf16.mxu0 0
        %1664 = vmatpush1.bf16.msra.mxu0 %v1515
        %1665 = vmatprep.subr.bf16.mxu0 0
        %1666 = vmatpush1.bf16.msra.mxu0 0
        %1667 = vmatprep.subr.bf16.mxu0 0
        %1668 = vmatpush1.bf16.msra.mxu0 0
        %1669 = vmatprep.subr.bf16.mxu0 0
        %1670 = vmatpush1.bf16.msra.mxu0 0
        %1671 = vmatprep.subr.bf16.mxu0 0
        %1672 = vmatpush1.bf16.msra.mxu0 0
        %1673 = vmatprep.subr.bf16.mxu0 0
        %1674 = vmatpush1.bf16.msra.mxu0 0
        %1675 = vmatprep.subr.bf16.mxu0 0
        %1676 = vmatpush1.bf16.msra.mxu0 0
        %1677 = vmatprep.subr.bf16.mxu0 0
        %1678 = vmatpush1.bf16.msra.mxu0 0
        %1679 = vmatprep.subr.bf16.mxu0 0
        %1680 = vmatpush1.bf16.msra.mxu0 0
        %1681 = vmatprep.subr.bf16.mxu0 0
        %1682 = vmatpush1.bf16.msra.mxu0 0
        %1683 = vmatprep.subr.bf16.mxu0 0
        %1684 = vmatpush1.bf16.msra.mxu0 0
        %1685 = vmatprep.subr.bf16.mxu0 0
        %1686 = vmatpush1.bf16.msra.mxu0 0
        %1687 = vmatprep.subr.bf16.mxu0 0
        %1688 = vmatpush1.bf16.msra.mxu0 0
        %1689 = vmatprep.subr.bf16.mxu0 0
        %1690 = vmatpush1.bf16.msra.mxu0 0
        %1691 = vmatprep.subr.bf16.mxu0 0
        %1692 = vmatpush1.bf16.msra.mxu0 0
        %1693 = vmatprep.mubr.bf16.mxu0 0
        %1694 = vmatmul.mubr.bf16.gmra.mrb[0].mxu0 %v1268
        %v1695 = vpop.f32.mrb[0].mxu0
        %v1696 = vadd.f32 %v1659, %v1695
        %v1697 = vpop.f32.mrb[0].mxu0
        %v1698 = vpop.f32.mrb[0].mxu0
        %v1699 = vadd.f32 %v1659, %v1698
        %v1700 = vpop.f32.mrb[0].mxu0
        %1701 = vmatprep.mubr.bf16.mxu0 0
        %1702 = vmatmul.mubr.bf16.gmra.mrb[0].mxu0 %v1271
        %v1703 = vpop.f32.mrb[0].mxu0
        %v1704 = vadd.f32 %v1659, %v1703
        %v1705 = vpop.f32.mrb[0].mxu0
        %v1706 = vpop.f32.mrb[0].mxu0
        %v1707 = vadd.f32 %v1659, %v1706
        %v1708 = vpop.f32.mrb[0].mxu0
        %1709 = vmatprep.mubr.bf16.mxu0 0
        %1710 = vmatmul.mubr.bf16.gmra.mrb[0].mxu0 %v1274
        %v1711 = vpop.f32.mrb[0].mxu0
        %v1712 = vadd.f32 %v1659, %v1711
        %v1713 = vpop.f32.mrb[0].mxu0
        %v1714 = vpop.f32.mrb[0].mxu0
        %v1715 = vadd.f32 %v1659, %v1714
        %v1716 = vpop.f32.mrb[0].mxu0
        %1717 = vmatprep.mubr.bf16.mxu0 0
        %1718 = vmatmul.mubr.bf16.gmra.mrb[0].mxu0 %v1277
        %v1719 = vpop.f32.mrb[0].mxu0
        %v1720 = vadd.f32 %v1659, %v1719
        %v1721 = vpop.f32.mrb[0].mxu0
        %v1722 = vpop.f32.mrb[0].mxu0
        %v1723 = vadd.f32 %v1659, %v1722
        %v1724 = vpop.f32.mrb[0].mxu0
        %1725 = vmatprep.mubr.bf16.mxu0 0
        %1726 = vmatmul.mubr.bf16.gmra.mrb[0].mxu0 %v1280
        %v1727 = vpop.f32.mrb[0].mxu0
        %v1728 = vadd.f32 %v1659, %v1727
        %v1729 = vpop.f32.mrb[0].mxu0
        %v1730 = vpop.f32.mrb[0].mxu0
        %v1731 = vadd.f32 %v1659, %v1730
        %v1732 = vpop.f32.mrb[0].mxu0
        %1733 = vmatprep.mubr.bf16.mxu0 0
        %1734 = vmatmul.mubr.bf16.gmra.mrb[0].mxu0 %v1283
        %v1735 = vpop.f32.mrb[0].mxu0
        %v1736 = vadd.f32 %v1659, %v1735
        %v1737 = vpop.f32.mrb[0].mxu0
        %v1738 = vpop.f32.mrb[0].mxu0
        %v1739 = vadd.f32 %v1659, %v1738
        %v1740 = vpop.f32.mrb[0].mxu0
        %1741 = vmatprep.mubr.bf16.mxu0 0
        %1742 = vmatmul.mubr.bf16.gmra.mrb[0].mxu0 %v1286
        %v1743 = vpop.f32.mrb[0].mxu0
        %v1744 = vadd.f32 %v1659, %v1743
        %v1745 = vpop.f32.mrb[0].mxu0
        %v1746 = vpop.f32.mrb[0].mxu0
        %v1747 = vadd.f32 %v1659, %v1746
        %v1748 = vpop.f32.mrb[0].mxu0
        %1749 = vmatprep.mubr.bf16.mxu0 0
        %1750 = vmatmul.mubr.bf16.gmra.mrb[0].mxu0 %v1289
        %v1751 = vpop.f32.mrb[0].mxu0
        %v1752 = vadd.f32 %v1659, %v1751
        %v1753 = vpop.f32.mrb[0].mxu0
        %v1754 = vpop.f32.mrb[0].mxu0
        %v1755 = vadd.f32 %v1659, %v1754
        %v1756 = vpop.f32.mrb[0].mxu0
        %1757 = vdwg.mxu0
        %v1758 = vmax.f32 %v1696, 0.0
        %v1759 = vmax.f32 %v1699, 0.0
        %v1760 = vmax.f32 %v1704, 0.0
        %v1761 = vmax.f32 %v1707, 0.0
        %v1762 = vmax.f32 %v1712, 0.0
        %v1763 = vmax.f32 %v1715, 0.0
        %v1764 = vmax.f32 %v1720, 0.0
        %v1765 = vmax.f32 %v1723, 0.0
        %v1766 = vmax.f32 %v1728, 0.0
        %v1767 = vmax.f32 %v1731, 0.0
        %v1768 = vmax.f32 %v1736, 0.0
        %v1769 = vmax.f32 %v1739, 0.0
        %v1770 = vmax.f32 %v1744, 0.0
        %v1771 = vmax.f32 %v1747, 0.0
        %v1772 = vmax.f32 %v1752, 0.0
        %v1773 = vmax.f32 %v1755, 0.0
        %v1775 = vlaneseq
        %v1776 = vshrl.u32 %v1775, 7
        %v1777 = vsub.s32 0, %v1776
        %v1778 = vrot.slane %v1460, %v1777
        %v1780 = vmul.f32 %v1758, %v1778
        %v1781 = vmul.f32 %v1759, %v1778
        %v1782 = vmul.f32 %v1760, %v1778
        %v1783 = vmul.f32 %v1761, %v1778
        %v1784 = vmul.f32 %v1762, %v1778
        %v1785 = vmul.f32 %v1763, %v1778
        %v1786 = vmul.f32 %v1764, %v1778
        %v1787 = vmul.f32 %v1765, %v1778
        %v1788 = vmul.f32 %v1766, %v1778
        %v1789 = vmul.f32 %v1767, %v1778
        %v1790 = vmul.f32 %v1768, %v1778
        %v1791 = vmul.f32 %v1769, %v1778
        %v1792 = vmul.f32 %v1770, %v1778
        %v1793 = vmul.f32 %v1771, %v1778
        %v1794 = vmul.f32 %v1772, %v1778
        %v1795 = vmul.f32 %v1773, %v1778
        %v1796 = vsel %vm1206, %v1780, 0.0
        %1797 = vadd.xlane.f32.xlu0 %v1796
        %v1798 = vpop.xlane.xlu0 %1797
        %v1799 = vsel %vm1206, %v1781, 0.0
        %1800 = vadd.xlane.f32.xlu0 %v1799
        %v1801 = vpop.xlane.xlu0 %1800
        %v1802 = vsel %vm1206, %v1782, 0.0
        %1803 = vadd.xlane.f32.xlu0 %v1802
        %v1804 = vpop.xlane.xlu0 %1803
        %v1805 = vsel %vm1206, %v1783, 0.0
        %1806 = vadd.xlane.f32.xlu0 %v1805
        %v1807 = vpop.xlane.xlu0 %1806
        %v1808 = vsel %vm1206, %v1784, 0.0
        %1809 = vadd.xlane.f32.xlu0 %v1808
        %v1810 = vpop.xlane.xlu0 %1809
        %v1811 = vsel %vm1206, %v1785, 0.0
        %1812 = vadd.xlane.f32.xlu0 %v1811
        %v1813 = vpop.xlane.xlu0 %1812
        %v1814 = vsel %vm1206, %v1786, 0.0
        %1815 = vadd.xlane.f32.xlu0 %v1814
        %v1816 = vpop.xlane.xlu0 %1815
        %v1817 = vsel %vm1206, %v1787, 0.0
        %1818 = vadd.xlane.f32.xlu0 %v1817
        %v1819 = vpop.xlane.xlu0 %1818
        %v1820 = vsel %vm1206, %v1788, 0.0
        %1821 = vadd.xlane.f32.xlu0 %v1820
        %v1822 = vpop.xlane.xlu0 %1821
        %v1823 = vsel %vm1206, %v1789, 0.0
        %1824 = vadd.xlane.f32.xlu0 %v1823
        %v1825 = vpop.xlane.xlu0 %1824
        %v1826 = vsel %vm1206, %v1790, 0.0
        %1827 = vadd.xlane.f32.xlu0 %v1826
        %v1828 = vpop.xlane.xlu0 %1827
        %v1829 = vsel %vm1206, %v1791, 0.0
        %1830 = vadd.xlane.f32.xlu0 %v1829
        %v1831 = vpop.xlane.xlu0 %1830
        %v1832 = vsel %vm1206, %v1792, 0.0
        %1833 = vadd.xlane.f32.xlu0 %v1832
        %v1834 = vpop.xlane.xlu0 %1833
        %v1835 = vsel %vm1206, %v1793, 0.0
        %1836 = vadd.xlane.f32.xlu0 %v1835
        %v1837 = vpop.xlane.xlu0 %1836
        %v1838 = vsel %vm1206, %v1794, 0.0
        %1839 = vadd.xlane.f32.xlu0 %v1838
        %v1840 = vpop.xlane.xlu0 %1839
        %v1841 = vsel %vm1206, %v1795, 0.0
        %1842 = vadd.xlane.f32.xlu0 %v1841
        %v1843 = vpop.xlane.xlu0 %1842
        %v1845 = vlaneseq
        %v1846 = vshrl.u32 %v1845, 7
        %v1847 = vsub.s32 0, %v1846
        %v1848 = vrot.slane %v1461, %v1847
        %1849 = vset.pattern.permute.xlu0 0
        %1850 = vperm.xlu0 %1849, %v1848
        %v1851 = vpop.permute.xlu0 %1850
        %v1853 = vadd.f32 %v1798, %v1851
        %v1854 = vadd.f32 %v1801, %v1851
        %v1855 = vadd.f32 %v1804, %v1851
        %v1856 = vadd.f32 %v1807, %v1851
        %v1857 = vadd.f32 %v1810, %v1851
        %v1858 = vadd.f32 %v1813, %v1851
        %v1859 = vadd.f32 %v1816, %v1851
        %v1860 = vadd.f32 %v1819, %v1851
        %v1861 = vadd.f32 %v1822, %v1851
        %v1862 = vadd.f32 %v1825, %v1851
        %v1863 = vadd.f32 %v1828, %v1851
        %v1864 = vadd.f32 %v1831, %v1851
        %v1865 = vadd.f32 %v1834, %v1851
        %v1866 = vadd.f32 %v1837, %v1851
        %v1867 = vadd.f32 %v1840, %v1851
        %v1868 = vadd.f32 %v1843, %v1851
        %v1869 = vxor.u32 %v1853, 2147483648
        %v1870 = vxor.u32 %v1854, 2147483648
        %v1871 = vxor.u32 %v1855, 2147483648
        %v1872 = vxor.u32 %v1856, 2147483648
        %v1873 = vxor.u32 %v1857, 2147483648
        %v1874 = vxor.u32 %v1858, 2147483648
        %v1875 = vxor.u32 %v1859, 2147483648
        %v1876 = vxor.u32 %v1860, 2147483648
        %v1877 = vxor.u32 %v1861, 2147483648
        %v1878 = vxor.u32 %v1862, 2147483648
        %v1879 = vxor.u32 %v1863, 2147483648
        %v1880 = vxor.u32 %v1864, 2147483648
        %v1881 = vxor.u32 %v1865, 2147483648
        %v1882 = vxor.u32 %v1866, 2147483648
        %v1883 = vxor.u32 %v1867, 2147483648
        %v1884 = vxor.u32 %v1868, 2147483648
        %v1885 = vmul.f32 %v1869, 1.442695
        %v1886 = vpow.pop %v1885
        %v1887 = vmul.f32 %v1870, 1.442695
        %v1888 = vpow.pop %v1887
        %v1889 = vmul.f32 %v1871, 1.442695
        %v1890 = vpow.pop %v1889
        %v1891 = vmul.f32 %v1872, 1.442695
        %v1892 = vpow.pop %v1891
        %v1893 = vmul.f32 %v1873, 1.442695
        %v1894 = vpow.pop %v1893
        %v1895 = vmul.f32 %v1874, 1.442695
        %v1896 = vpow.pop %v1895
        %v1897 = vmul.f32 %v1875, 1.442695
        %v1898 = vpow.pop %v1897
        %v1899 = vmul.f32 %v1876, 1.442695
        %v1900 = vpow.pop %v1899
        %v1901 = vmul.f32 %v1877, 1.442695
        %v1902 = vpow.pop %v1901
        %v1903 = vmul.f32 %v1878, 1.442695
        %v1904 = vpow.pop %v1903
        %v1905 = vmul.f32 %v1879, 1.442695
        %v1906 = vpow.pop %v1905
        %v1907 = vmul.f32 %v1880, 1.442695
        %v1908 = vpow.pop %v1907
        %v1909 = vmul.f32 %v1881, 1.442695
        %v1910 = vpow.pop %v1909
        %v1911 = vmul.f32 %v1882, 1.442695
        %v1912 = vpow.pop %v1911
        %v1913 = vmul.f32 %v1883, 1.442695
        %v1914 = vpow.pop %v1913
        %v1915 = vmul.f32 %v1884, 1.442695
        %v1916 = vpow.pop %v1915
        %v1917 = vadd.f32 %v1886, 1.0
        %v1918 = vadd.f32 %v1888, 1.0
        %v1919 = vadd.f32 %v1890, 1.0
        %v1920 = vadd.f32 %v1892, 1.0
        %v1921 = vadd.f32 %v1894, 1.0
        %v1922 = vadd.f32 %v1896, 1.0
        %v1923 = vadd.f32 %v1898, 1.0
        %v1924 = vadd.f32 %v1900, 1.0
        %v1925 = vadd.f32 %v1902, 1.0
        %v1926 = vadd.f32 %v1904, 1.0
        %v1927 = vadd.f32 %v1906, 1.0
        %v1928 = vadd.f32 %v1908, 1.0
        %v1929 = vadd.f32 %v1910, 1.0
        %v1930 = vadd.f32 %v1912, 1.0
        %v1931 = vadd.f32 %v1914, 1.0
        %v1932 = vadd.f32 %v1916, 1.0
        %v1933 = vrcp.pop %v1917
        %v1934 = vmul.f32 1.0, %v1933
        %v1935 = vrcp.pop %v1918
        %v1936 = vmul.f32 1.0, %v1935
        %v1937 = vrcp.pop %v1919
        %v1938 = vmul.f32 1.0, %v1937
        %v1939 = vrcp.pop %v1920
        %v1940 = vmul.f32 1.0, %v1939
        %v1941 = vrcp.pop %v1921
        %v1942 = vmul.f32 1.0, %v1941
        %v1943 = vrcp.pop %v1922
        %v1944 = vmul.f32 1.0, %v1943
        %v1945 = vrcp.pop %v1923
        %v1946 = vmul.f32 1.0, %v1945
        %v1947 = vrcp.pop %v1924
        %v1948 = vmul.f32 1.0, %v1947
        %v1949 = vrcp.pop %v1925
        %v1950 = vmul.f32 1.0, %v1949
        %v1951 = vrcp.pop %v1926
        %v1952 = vmul.f32 1.0, %v1951
        %v1953 = vrcp.pop %v1927
        %v1954 = vmul.f32 1.0, %v1953
        %v1955 = vrcp.pop %v1928
        %v1956 = vmul.f32 1.0, %v1955
        %v1957 = vrcp.pop %v1929
        %v1958 = vmul.f32 1.0, %v1957
        %v1959 = vrcp.pop %v1930
        %v1960 = vmul.f32 1.0, %v1959
        %v1961 = vrcp.pop %v1931
        %v1962 = vmul.f32 1.0, %v1961
        %v1963 = vrcp.pop %v1932
        %v1964 = vmul.f32 1.0, %v1963
        %v1967 = vlaneseq
        %v1968 = vshrl.u32 %v1967, 7
        %v1969 = vsub.s32 0, %v1968
        %v1970 = vrot.slane %v920, %v1969
        %1972 = vbcast.lane.b32.xlu0 %v1970, 256
        %v1973 = vpop.permute.xlu0 %1972
        %v1974 = vlaneseq
        %v1975 = vshrl.u32 %v1974, 7
        %v1976 = vsub.s32 1, %v1975
        %v1977 = vrot.slane %v920, %v1976
        %1979 = vbcast.lane.b32.xlu0 %v1977, 256
        %v1980 = vpop.permute.xlu0 %1979
        %v1981 = vlaneseq
        %v1982 = vshrl.u32 %v1981, 7
        %v1983 = vsub.s32 2, %v1982
        %v1984 = vrot.slane %v920, %v1983
        %1986 = vbcast.lane.b32.xlu0 %v1984, 256
        %v1987 = vpop.permute.xlu0 %1986
        %v1988 = vlaneseq
        %v1989 = vshrl.u32 %v1988, 7
        %v1990 = vsub.s32 3, %v1989
        %v1991 = vrot.slane %v920, %v1990
        %1993 = vbcast.lane.b32.xlu0 %v1991, 256
        %v1994 = vpop.permute.xlu0 %1993
        %v1995 = vlaneseq
        %v1996 = vshrl.u32 %v1995, 7
        %v1997 = vsub.s32 4, %v1996
        %v1998 = vrot.slane %v920, %v1997
        %2000 = vbcast.lane.b32.xlu0 %v1998, 256
        %v2001 = vpop.permute.xlu0 %2000
        %v2002 = vlaneseq
        %v2003 = vshrl.u32 %v2002, 7
        %v2004 = vsub.s32 5, %v2003
        %v2005 = vrot.slane %v920, %v2004
        %2007 = vbcast.lane.b32.xlu0 %v2005, 256
        %v2008 = vpop.permute.xlu0 %2007
        %v2009 = vlaneseq
        %v2010 = vshrl.u32 %v2009, 7
        %v2011 = vsub.s32 6, %v2010
        %v2012 = vrot.slane %v920, %v2011
        %2014 = vbcast.lane.b32.xlu0 %v2012, 256
        %v2015 = vpop.permute.xlu0 %2014
        %v2016 = vlaneseq
        %v2017 = vshrl.u32 %v2016, 7
        %v2018 = vsub.s32 7, %v2017
        %v2019 = vrot.slane %v920, %v2018
        %2021 = vbcast.lane.b32.xlu0 %v2019, 256
        %v2022 = vpop.permute.xlu0 %2021
        %v2023 = vlaneseq
        %v2024 = vshrl.u32 %v2023, 7
        %v2025 = vsub.s32 0, %v2024
        %v2026 = vrot.slane %v921, %v2025
        %2028 = vbcast.lane.b32.xlu0 %v2026, 256
        %v2029 = vpop.permute.xlu0 %2028
        %v2030 = vlaneseq
        %v2031 = vshrl.u32 %v2030, 7
        %v2032 = vsub.s32 1, %v2031
        %v2033 = vrot.slane %v921, %v2032
        %2035 = vbcast.lane.b32.xlu0 %v2033, 256
        %v2036 = vpop.permute.xlu0 %2035
        %v2037 = vlaneseq
        %v2038 = vshrl.u32 %v2037, 7
        %v2039 = vsub.s32 2, %v2038
        %v2040 = vrot.slane %v921, %v2039
        %2042 = vbcast.lane.b32.xlu0 %v2040, 256
        %v2043 = vpop.permute.xlu0 %2042
        %v2044 = vlaneseq
        %v2045 = vshrl.u32 %v2044, 7
        %v2046 = vsub.s32 3, %v2045
        %v2047 = vrot.slane %v921, %v2046
        %2049 = vbcast.lane.b32.xlu0 %v2047, 256
        %v2050 = vpop.permute.xlu0 %2049
        %v2051 = vlaneseq
        %v2052 = vshrl.u32 %v2051, 7
        %v2053 = vsub.s32 4, %v2052
        %v2054 = vrot.slane %v921, %v2053
        %2056 = vbcast.lane.b32.xlu0 %v2054, 256
        %v2057 = vpop.permute.xlu0 %2056
        %v2058 = vlaneseq
        %v2059 = vshrl.u32 %v2058, 7
        %v2060 = vsub.s32 5, %v2059
        %v2061 = vrot.slane %v921, %v2060
        %2063 = vbcast.lane.b32.xlu0 %v2061, 256
        %v2064 = vpop.permute.xlu0 %2063
        %v2065 = vlaneseq
        %v2066 = vshrl.u32 %v2065, 7
        %v2067 = vsub.s32 6, %v2066
        %v2068 = vrot.slane %v921, %v2067
        %2070 = vbcast.lane.b32.xlu0 %v2068, 256
        %v2071 = vpop.permute.xlu0 %2070
        %v2072 = vlaneseq
        %v2073 = vshrl.u32 %v2072, 7
        %v2074 = vsub.s32 7, %v2073
        %v2075 = vrot.slane %v921, %v2074
        %2077 = vbcast.lane.b32.xlu0 %v2075, 256
        %v2078 = vpop.permute.xlu0 %2077
        %v2095 = vmul.f32 %v1934, %v1973
        %v2096 = vmul.f32 %v1936, %v1980
        %v2097 = vmul.f32 %v1938, %v1987
        %v2098 = vmul.f32 %v1940, %v1994
        %v2099 = vmul.f32 %v1942, %v2001
        %v2100 = vmul.f32 %v1944, %v2008
        %v2101 = vmul.f32 %v1946, %v2015
        %v2102 = vmul.f32 %v1948, %v2022
        %v2103 = vmul.f32 %v1950, %v2029
        %v2104 = vmul.f32 %v1952, %v2036
        %v2105 = vmul.f32 %v1954, %v2043
        %v2106 = vmul.f32 %v1956, %v2050
        %v2107 = vmul.f32 %v1958, %v2057
        %v2108 = vmul.f32 %v1960, %v2064
        %v2109 = vmul.f32 %v1962, %v2071
        %v2110 = vmul.f32 %v1964, %v2078
        %v2111 = vunpack.c.l.bf16 %v1639
        %v2112 = vunpack.c.l.bf16 %v1640
        %v2113 = vunpack.c.l.bf16 %v1641
        %v2114 = vunpack.c.l.bf16 %v1642
        %v2115 = vunpack.c.l.bf16 %v1643
        %v2116 = vunpack.c.l.bf16 %v1644
        %v2117 = vunpack.c.l.bf16 %v1645
        %v2118 = vunpack.c.l.bf16 %v1646
        %v2119 = vunpack.c.l.bf16 %v1647
        %v2120 = vunpack.c.l.bf16 %v1648
        %v2121 = vunpack.c.l.bf16 %v1649
        %v2122 = vunpack.c.l.bf16 %v1650
        %v2123 = vunpack.c.l.bf16 %v1651
        %v2124 = vunpack.c.l.bf16 %v1652
        %v2125 = vunpack.c.l.bf16 %v1653
        %v2126 = vunpack.c.l.bf16 %v1654
        %2128 = vset.pattern.permute.xlu0 0
        %2129 = vperm.xlu0 %2128, %v2095
        %v2130 = vpop.permute.xlu0 %2129
        %2133 = vset.pattern.permute.xlu0 0
        %2134 = vperm.xlu0 %2133, %v2096
        %v2135 = vpop.permute.xlu0 %2134
        %2138 = vset.pattern.permute.xlu0 0
        %2139 = vperm.xlu0 %2138, %v2097
        %v2140 = vpop.permute.xlu0 %2139
        %2143 = vset.pattern.permute.xlu0 0
        %2144 = vperm.xlu0 %2143, %v2098
        %v2145 = vpop.permute.xlu0 %2144
        %2148 = vset.pattern.permute.xlu0 0
        %2149 = vperm.xlu0 %2148, %v2099
        %v2150 = vpop.permute.xlu0 %2149
        %2153 = vset.pattern.permute.xlu0 0
        %2154 = vperm.xlu0 %2153, %v2100
        %v2155 = vpop.permute.xlu0 %2154
        %2158 = vset.pattern.permute.xlu0 0
        %2159 = vperm.xlu0 %2158, %v2101
        %v2160 = vpop.permute.xlu0 %2159
        %2163 = vset.pattern.permute.xlu0 0
        %2164 = vperm.xlu0 %2163, %v2102
        %v2165 = vpop.permute.xlu0 %2164
        %2168 = vset.pattern.permute.xlu0 0
        %2169 = vperm.xlu0 %2168, %v2103
        %v2170 = vpop.permute.xlu0 %2169
        %2173 = vset.pattern.permute.xlu0 0
        %2174 = vperm.xlu0 %2173, %v2104
        %v2175 = vpop.permute.xlu0 %2174
        %2178 = vset.pattern.permute.xlu0 0
        %2179 = vperm.xlu0 %2178, %v2105
        %v2180 = vpop.permute.xlu0 %2179
        %2183 = vset.pattern.permute.xlu0 0
        %2184 = vperm.xlu0 %2183, %v2106
        %v2185 = vpop.permute.xlu0 %2184
        %2188 = vset.pattern.permute.xlu0 0
        %2189 = vperm.xlu0 %2188, %v2107
        %v2190 = vpop.permute.xlu0 %2189
        %2193 = vset.pattern.permute.xlu0 0
        %2194 = vperm.xlu0 %2193, %v2108
        %v2195 = vpop.permute.xlu0 %2194
        %2198 = vset.pattern.permute.xlu0 0
        %2199 = vperm.xlu0 %2198, %v2109
        %v2200 = vpop.permute.xlu0 %2199
        %2203 = vset.pattern.permute.xlu0 0
        %2204 = vperm.xlu0 %2203, %v2110
        %v2205 = vpop.permute.xlu0 %2204
        %v2207 = vmul.f32 %v2130, %v2111
        %v2208 = vmul.f32 %v2135, %v2112
        %v2209 = vmul.f32 %v2140, %v2113
        %v2210 = vmul.f32 %v2145, %v2114
        %v2211 = vmul.f32 %v2150, %v2115
        %v2212 = vmul.f32 %v2155, %v2116
        %v2213 = vmul.f32 %v2160, %v2117
        %v2214 = vmul.f32 %v2165, %v2118
        %v2215 = vmul.f32 %v2170, %v2119
        %v2216 = vmul.f32 %v2175, %v2120
        %v2217 = vmul.f32 %v2180, %v2121
        %v2218 = vmul.f32 %v2185, %v2122
        %v2219 = vmul.f32 %v2190, %v2123
        %v2220 = vmul.f32 %v2195, %v2124
        %v2221 = vmul.f32 %v2200, %v2125
        %v2222 = vmul.f32 %v2205, %v2126
        %v2223 = vadd.f32 %v2207, %v1659
        %v2224 = vadd.f32 %v2208, %v1659
        %v2225 = vadd.f32 %v2209, %v1659
        %v2226 = vadd.f32 %v2210, %v1659
        %v2227 = vadd.f32 %v2211, %v1659
        %v2228 = vadd.f32 %v2212, %v1659
        %v2229 = vadd.f32 %v2213, %v1659
        %v2230 = vadd.f32 %v2214, %v1659
        %v2231 = vadd.f32 %v2215, %v1659
        %v2232 = vadd.f32 %v2216, %v1659
        %v2233 = vadd.f32 %v2217, %v1659
        %v2234 = vadd.f32 %v2218, %v1659
        %v2235 = vadd.f32 %v2219, %v1659
        %v2236 = vadd.f32 %v2220, %v1659
        %v2237 = vadd.f32 %v2221, %v1659
        %v2238 = vadd.f32 %v2222, %v1659
        %v2239 = vmax.f32 %v2223, 0.0
        %v2240 = vmax.f32 %v2224, 0.0
        %v2241 = vmax.f32 %v2225, 0.0
        %v2242 = vmax.f32 %v2226, 0.0
        %v2243 = vmax.f32 %v2227, 0.0
        %v2244 = vmax.f32 %v2228, 0.0
        %v2245 = vmax.f32 %v2229, 0.0
        %v2246 = vmax.f32 %v2230, 0.0
        %v2247 = vmax.f32 %v2231, 0.0
        %v2248 = vmax.f32 %v2232, 0.0
        %v2249 = vmax.f32 %v2233, 0.0
        %v2250 = vmax.f32 %v2234, 0.0
        %v2251 = vmax.f32 %v2235, 0.0
        %v2252 = vmax.f32 %v2236, 0.0
        %v2253 = vmax.f32 %v2237, 0.0
        %v2254 = vmax.f32 %v2238, 0.0
        %v2255 = vmul.f32 %v2239, %v1778
        %v2256 = vmul.f32 %v2240, %v1778
        %v2257 = vmul.f32 %v2241, %v1778
        %v2258 = vmul.f32 %v2242, %v1778
        %v2259 = vmul.f32 %v2243, %v1778
        %v2260 = vmul.f32 %v2244, %v1778
        %v2261 = vmul.f32 %v2245, %v1778
        %v2262 = vmul.f32 %v2246, %v1778
        %v2263 = vmul.f32 %v2247, %v1778
        %v2264 = vmul.f32 %v2248, %v1778
        %v2265 = vmul.f32 %v2249, %v1778
        %v2266 = vmul.f32 %v2250, %v1778
        %v2267 = vmul.f32 %v2251, %v1778
        %v2268 = vmul.f32 %v2252, %v1778
        %v2269 = vmul.f32 %v2253, %v1778
        %v2270 = vmul.f32 %v2254, %v1778
        %v2271 = vsel %vm1206, %v2255, 0.0
        %2272 = vadd.xlane.f32.xlu0 %v2271
        %v2273 = vpop.xlane.xlu0 %2272
        %v2274 = vsel %vm1206, %v2256, 0.0
        %2275 = vadd.xlane.f32.xlu0 %v2274
        %v2276 = vpop.xlane.xlu0 %2275
        %v2277 = vsel %vm1206, %v2257, 0.0
        %2278 = vadd.xlane.f32.xlu0 %v2277
        %v2279 = vpop.xlane.xlu0 %2278
        %v2280 = vsel %vm1206, %v2258, 0.0
        %2281 = vadd.xlane.f32.xlu0 %v2280
        %v2282 = vpop.xlane.xlu0 %2281
        %v2283 = vsel %vm1206, %v2259, 0.0
        %2284 = vadd.xlane.f32.xlu0 %v2283
        %v2285 = vpop.xlane.xlu0 %2284
        %v2286 = vsel %vm1206, %v2260, 0.0
        %2287 = vadd.xlane.f32.xlu0 %v2286
        %v2288 = vpop.xlane.xlu0 %2287
        %v2289 = vsel %vm1206, %v2261, 0.0
        %2290 = vadd.xlane.f32.xlu0 %v2289
        %v2291 = vpop.xlane.xlu0 %2290
        %v2292 = vsel %vm1206, %v2262, 0.0
        %2293 = vadd.xlane.f32.xlu0 %v2292
        %v2294 = vpop.xlane.xlu0 %2293
        %v2295 = vsel %vm1206, %v2263, 0.0
        %2296 = vadd.xlane.f32.xlu0 %v2295
        %v2297 = vpop.xlane.xlu0 %2296
        %v2298 = vsel %vm1206, %v2264, 0.0
        %2299 = vadd.xlane.f32.xlu0 %v2298
        %v2300 = vpop.xlane.xlu0 %2299
        %v2301 = vsel %vm1206, %v2265, 0.0
        %2302 = vadd.xlane.f32.xlu0 %v2301
        %v2303 = vpop.xlane.xlu0 %2302
        %v2304 = vsel %vm1206, %v2266, 0.0
        %2305 = vadd.xlane.f32.xlu0 %v2304
        %v2306 = vpop.xlane.xlu0 %2305
        %v2307 = vsel %vm1206, %v2267, 0.0
        %2308 = vadd.xlane.f32.xlu0 %v2307
        %v2309 = vpop.xlane.xlu0 %2308
        %v2310 = vsel %vm1206, %v2268, 0.0
        %2311 = vadd.xlane.f32.xlu0 %v2310
        %v2312 = vpop.xlane.xlu0 %2311
        %v2313 = vsel %vm1206, %v2269, 0.0
        %2314 = vadd.xlane.f32.xlu0 %v2313
        %v2315 = vpop.xlane.xlu0 %2314
        %v2316 = vsel %vm1206, %v2270, 0.0
        %2317 = vadd.xlane.f32.xlu0 %v2316
        %v2318 = vpop.xlane.xlu0 %2317
        %v2319 = vadd.f32 %v2273, %v1851
        %v2320 = vadd.f32 %v2276, %v1851
        %v2321 = vadd.f32 %v2279, %v1851
        %v2322 = vadd.f32 %v2282, %v1851
        %v2323 = vadd.f32 %v2285, %v1851
        %v2324 = vadd.f32 %v2288, %v1851
        %v2325 = vadd.f32 %v2291, %v1851
        %v2326 = vadd.f32 %v2294, %v1851
        %v2327 = vadd.f32 %v2297, %v1851
        %v2328 = vadd.f32 %v2300, %v1851
        %v2329 = vadd.f32 %v2303, %v1851
        %v2330 = vadd.f32 %v2306, %v1851
        %v2331 = vadd.f32 %v2309, %v1851
        %v2332 = vadd.f32 %v2312, %v1851
        %v2333 = vadd.f32 %v2315, %v1851
        %v2334 = vadd.f32 %v2318, %v1851
        %v2351 = vlaneseq
        %v2352 = vshrl.u32 %v2351, 7
        %v2353 = vsub.s32 %v858, %v2352
        %v2354 = vrot.slane %v2319, %v2353
        %v2355 = vlaneseq
        %v2356 = vshrl.u32 %v2355, 7
        %v2357 = vsub.s32 %v858, %v2356
        %v2358 = vrot.slane %v2320, %v2357
        %v2359 = vlaneseq
        %v2360 = vshrl.u32 %v2359, 7
        %v2361 = vsub.s32 %v858, %v2360
        %v2362 = vrot.slane %v2321, %v2361
        %v2363 = vlaneseq
        %v2364 = vshrl.u32 %v2363, 7
        %v2365 = vsub.s32 %v858, %v2364
        %v2366 = vrot.slane %v2322, %v2365
        %v2367 = vlaneseq
        %v2368 = vshrl.u32 %v2367, 7
        %v2369 = vsub.s32 %v858, %v2368
        %v2370 = vrot.slane %v2323, %v2369
        %v2371 = vlaneseq
        %v2372 = vshrl.u32 %v2371, 7
        %v2373 = vsub.s32 %v858, %v2372
        %v2374 = vrot.slane %v2324, %v2373
        %v2375 = vlaneseq
        %v2376 = vshrl.u32 %v2375, 7
        %v2377 = vsub.s32 %v858, %v2376
        %v2378 = vrot.slane %v2325, %v2377
        %v2379 = vlaneseq
        %v2380 = vshrl.u32 %v2379, 7
        %v2381 = vsub.s32 %v858, %v2380
        %v2382 = vrot.slane %v2326, %v2381
        %v2383 = vlaneseq
        %v2384 = vshrl.u32 %v2383, 7
        %v2385 = vsub.s32 %v858, %v2384
        %v2386 = vrot.slane %v2327, %v2385
        %v2387 = vlaneseq
        %v2388 = vshrl.u32 %v2387, 7
        %v2389 = vsub.s32 %v858, %v2388
        %v2390 = vrot.slane %v2328, %v2389
        %v2391 = vlaneseq
        %v2392 = vshrl.u32 %v2391, 7
        %v2393 = vsub.s32 %v858, %v2392
        %v2394 = vrot.slane %v2329, %v2393
        %v2395 = vlaneseq
        %v2396 = vshrl.u32 %v2395, 7
        %v2397 = vsub.s32 %v858, %v2396
        %v2398 = vrot.slane %v2330, %v2397
        %v2399 = vlaneseq
        %v2400 = vshrl.u32 %v2399, 7
        %v2401 = vsub.s32 %v858, %v2400
        %v2402 = vrot.slane %v2331, %v2401
        %v2403 = vlaneseq
        %v2404 = vshrl.u32 %v2403, 7
        %v2405 = vsub.s32 %v858, %v2404
        %v2406 = vrot.slane %v2332, %v2405
        %v2407 = vlaneseq
        %v2408 = vshrl.u32 %v2407, 7
        %v2409 = vsub.s32 %v858, %v2408
        %v2410 = vrot.slane %v2333, %v2409
        %v2411 = vlaneseq
        %v2412 = vshrl.u32 %v2411, 7
        %v2413 = vsub.s32 %v858, %v2412
        %v2414 = vrot.slane %v2334, %v2413
        %vm2415 = vcmask 1041409
        %v2416 = vsel %vm2415, %v2358, %v2354
        %vm2417 = vcmask 1042434
        %v2418 = vsel %vm2417, %v2362, %v2416
        %vm2419 = vcmask 1043459
        %v2420 = vsel %vm2419, %v2366, %v2418
        %vm2421 = vcmask 1044484
        %v2422 = vsel %vm2421, %v2370, %v2420
        %vm2423 = vcmask 1045509
        %v2424 = vsel %vm2423, %v2374, %v2422
        %vm2425 = vcmask 1046534
        %v2426 = vsel %vm2425, %v2378, %v2424
        %vm2427 = vcmask 1047559
        %v2428 = vsel %vm2427, %v2382, %v2426
        %v2429 = vsel %vm2415, %v2390, %v2386
        %v2430 = vsel %vm2417, %v2394, %v2429
        %v2431 = vsel %vm2419, %v2398, %v2430
        %v2432 = vsel %vm2421, %v2402, %v2431
        %v2433 = vsel %vm2423, %v2406, %v2432
        %v2434 = vsel %vm2425, %v2410, %v2433
        %v2435 = vsel %vm2427, %v2414, %v2434
        %2438 = vxpose.xlu0.b32.start [1/16] %v2428, 128
        %2439 = vxpose.xlu0.b32.cont [2/16] 0.0, 128
        %2440 = vxpose.xlu0.b32.cont [3/16] 0.0, 128
        %2441 = vxpose.xlu0.b32.cont [4/16] 0.0, 128
        %2442 = vxpose.xlu0.b32.cont [5/16] 0.0, 128
        %2443 = vxpose.xlu0.b32.cont [6/16] 0.0, 128
        %2444 = vxpose.xlu0.b32.cont [7/16] 0.0, 128
        %2445 = vxpose.xlu0.b32.cont [8/16] 0.0, 128
        %2446 = vxpose.xlu0.b32.cont [9/16] 0.0, 128
        %2447 = vxpose.xlu0.b32.cont [10/16] 0.0, 128
        %2448 = vxpose.xlu0.b32.cont [11/16] 0.0, 128
        %2449 = vxpose.xlu0.b32.cont [12/16] 0.0, 128
        %2450 = vxpose.xlu0.b32.cont [13/16] 0.0, 128
        %2451 = vxpose.xlu0.b32.cont [14/16] 0.0, 128
        %2452 = vxpose.xlu0.b32.cont [15/16] 0.0, 128
        %2453 = vxpose.xlu0.b32.end [16/16] 0.0, 128
        %v2454 = vpop.trf.xlu0
        %v2455 = vpop.trf.xlu0
        %v2456 = vpop.trf.xlu0
        %v2457 = vpop.trf.xlu0
        %v2458 = vpop.trf.xlu0
        %v2459 = vpop.trf.xlu0
        %v2460 = vpop.trf.xlu0
        %v2461 = vpop.trf.xlu0
        %v2462 = vpop.trf.xlu0
        %v2463 = vpop.trf.xlu0
        %v2464 = vpop.trf.xlu0
        %v2465 = vpop.trf.xlu0
        %v2466 = vpop.trf.xlu0
        %v2467 = vpop.trf.xlu0
        %v2468 = vpop.trf.xlu0
        %v2469 = vpop.trf.xlu0
        %2470 = vxpose.xlu0.b32.start [1/16] %v2435, 128
        %2471 = vxpose.xlu0.b32.cont [2/16] 0.0, 128
        %2472 = vxpose.xlu0.b32.cont [3/16] 0.0, 128
        %2473 = vxpose.xlu0.b32.cont [4/16] 0.0, 128
        %2474 = vxpose.xlu0.b32.cont [5/16] 0.0, 128
        %2475 = vxpose.xlu0.b32.cont [6/16] 0.0, 128
        %2476 = vxpose.xlu0.b32.cont [7/16] 0.0, 128
        %2477 = vxpose.xlu0.b32.cont [8/16] 0.0, 128
        %2478 = vxpose.xlu0.b32.cont [9/16] 0.0, 128
        %2479 = vxpose.xlu0.b32.cont [10/16] 0.0, 128
        %2480 = vxpose.xlu0.b32.cont [11/16] 0.0, 128
        %2481 = vxpose.xlu0.b32.cont [12/16] 0.0, 128
        %2482 = vxpose.xlu0.b32.cont [13/16] 0.0, 128
        %2483 = vxpose.xlu0.b32.cont [14/16] 0.0, 128
        %2484 = vxpose.xlu0.b32.cont [15/16] 0.0, 128
        %2485 = vxpose.xlu0.b32.end [16/16] 0.0, 128
        %v2486 = vpop.trf.xlu0
        %v2487 = vpop.trf.xlu0
        %v2488 = vpop.trf.xlu0
        %v2489 = vpop.trf.xlu0
        %v2490 = vpop.trf.xlu0
        %v2491 = vpop.trf.xlu0
        %v2492 = vpop.trf.xlu0
        %v2493 = vpop.trf.xlu0
        %v2494 = vpop.trf.xlu0
        %v2495 = vpop.trf.xlu0
        %v2496 = vpop.trf.xlu0
        %v2497 = vpop.trf.xlu0
        %v2498 = vpop.trf.xlu0
        %v2499 = vpop.trf.xlu0
        %v2500 = vpop.trf.xlu0
        %v2501 = vpop.trf.xlu0
        %v2502 = vxor.u32 %v2454, 2147483648
        %v2503 = vxor.u32 %v2486, 2147483648
        %v2504 = vmul.f32 %v2502, 1.442695
        %v2505 = vpow.pop %v2504
        %v2506 = vmul.f32 %v2503, 1.442695
        %v2507 = vpow.pop %v2506
        %v2508 = vadd.f32 %v2505, 1.0
        %v2509 = vadd.f32 %v2507, 1.0
        %v2510 = vrcp.pop %v2508
        %v2511 = vmul.f32 1.0, %v2510
        %v2512 = vrcp.pop %v2509
        %v2513 = vmul.f32 1.0, %v2512
        %v2514 = vmul.f32 %v2511, %v920
        %v2515 = vmul.f32 %v2513, %v921
        %v2516 = vlaneseq
        %v2517 = vshrl.u32 %v2516, 7
        %v2518 = vsub.s32 0, %v2517
        %v2519 = vrot.slane %v2514, %v2518
        %2521 = vbcast.lane.b32.xlu0 %v2519, 256
        %v2522 = vpop.permute.xlu0 %2521
        %v2523 = vlaneseq
        %v2524 = vshrl.u32 %v2523, 7
        %v2525 = vsub.s32 1, %v2524
        %v2526 = vrot.slane %v2514, %v2525
        %2528 = vbcast.lane.b32.xlu0 %v2526, 256
        %v2529 = vpop.permute.xlu0 %2528
        %v2530 = vlaneseq
        %v2531 = vshrl.u32 %v2530, 7
        %v2532 = vsub.s32 2, %v2531
        %v2533 = vrot.slane %v2514, %v2532
        %2535 = vbcast.lane.b32.xlu0 %v2533, 256
        %v2536 = vpop.permute.xlu0 %2535
        %v2537 = vlaneseq
        %v2538 = vshrl.u32 %v2537, 7
        %v2539 = vsub.s32 3, %v2538
        %v2540 = vrot.slane %v2514, %v2539
        %2542 = vbcast.lane.b32.xlu0 %v2540, 256
        %v2543 = vpop.permute.xlu0 %2542
        %v2544 = vlaneseq
        %v2545 = vshrl.u32 %v2544, 7
        %v2546 = vsub.s32 4, %v2545
        %v2547 = vrot.slane %v2514, %v2546
        %2549 = vbcast.lane.b32.xlu0 %v2547, 256
        %v2550 = vpop.permute.xlu0 %2549
        %v2551 = vlaneseq
        %v2552 = vshrl.u32 %v2551, 7
        %v2553 = vsub.s32 5, %v2552
        %v2554 = vrot.slane %v2514, %v2553
        %2556 = vbcast.lane.b32.xlu0 %v2554, 256
        %v2557 = vpop.permute.xlu0 %2556
        %v2558 = vlaneseq
        %v2559 = vshrl.u32 %v2558, 7
        %v2560 = vsub.s32 6, %v2559
        %v2561 = vrot.slane %v2514, %v2560
        %2563 = vbcast.lane.b32.xlu0 %v2561, 256
        %v2564 = vpop.permute.xlu0 %2563
        %v2565 = vlaneseq
        %v2566 = vshrl.u32 %v2565, 7
        %v2567 = vsub.s32 7, %v2566
        %v2568 = vrot.slane %v2514, %v2567
        %2570 = vbcast.lane.b32.xlu0 %v2568, 256
        %v2571 = vpop.permute.xlu0 %2570
        %v2572 = vlaneseq
        %v2573 = vshrl.u32 %v2572, 7
        %v2574 = vsub.s32 0, %v2573
        %v2575 = vrot.slane %v2515, %v2574
        %2577 = vbcast.lane.b32.xlu0 %v2575, 256
        %v2578 = vpop.permute.xlu0 %2577
        %v2579 = vlaneseq
        %v2580 = vshrl.u32 %v2579, 7
        %v2581 = vsub.s32 1, %v2580
        %v2582 = vrot.slane %v2515, %v2581
        %2584 = vbcast.lane.b32.xlu0 %v2582, 256
        %v2585 = vpop.permute.xlu0 %2584
        %v2586 = vlaneseq
        %v2587 = vshrl.u32 %v2586, 7
        %v2588 = vsub.s32 2, %v2587
        %v2589 = vrot.slane %v2515, %v2588
        %2591 = vbcast.lane.b32.xlu0 %v2589, 256
        %v2592 = vpop.permute.xlu0 %2591
        %v2593 = vlaneseq
        %v2594 = vshrl.u32 %v2593, 7
        %v2595 = vsub.s32 3, %v2594
        %v2596 = vrot.slane %v2515, %v2595
        %2598 = vbcast.lane.b32.xlu0 %v2596, 256
        %v2599 = vpop.permute.xlu0 %2598
        %v2600 = vlaneseq
        %v2601 = vshrl.u32 %v2600, 7
        %v2602 = vsub.s32 4, %v2601
        %v2603 = vrot.slane %v2515, %v2602
        %2605 = vbcast.lane.b32.xlu0 %v2603, 256
        %v2606 = vpop.permute.xlu0 %2605
        %v2607 = vlaneseq
        %v2608 = vshrl.u32 %v2607, 7
        %v2609 = vsub.s32 5, %v2608
        %v2610 = vrot.slane %v2515, %v2609
        %2612 = vbcast.lane.b32.xlu0 %v2610, 256
        %v2613 = vpop.permute.xlu0 %2612
        %v2614 = vlaneseq
        %v2615 = vshrl.u32 %v2614, 7
        %v2616 = vsub.s32 6, %v2615
        %v2617 = vrot.slane %v2515, %v2616
        %2619 = vbcast.lane.b32.xlu0 %v2617, 256
        %v2620 = vpop.permute.xlu0 %2619
        %v2621 = vlaneseq
        %v2622 = vshrl.u32 %v2621, 7
        %v2623 = vsub.s32 7, %v2622
        %v2624 = vrot.slane %v2515, %v2623
        %2626 = vbcast.lane.b32.xlu0 %v2624, 256
        %v2627 = vpop.permute.xlu0 %2626
        %v2628 = vunpack.c.l.bf16 %v1443
        %v2629 = vunpack.c.l.bf16 %v1444
        %v2630 = vunpack.c.l.bf16 %v1445
        %v2631 = vunpack.c.l.bf16 %v1446
        %v2632 = vunpack.c.l.bf16 %v1447
        %v2633 = vunpack.c.l.bf16 %v1448
        %v2634 = vunpack.c.l.bf16 %v1449
        %v2635 = vunpack.c.l.bf16 %v1450
        %v2636 = vunpack.c.l.bf16 %v1451
        %v2637 = vunpack.c.l.bf16 %v1452
        %v2638 = vunpack.c.l.bf16 %v1453
        %v2639 = vunpack.c.l.bf16 %v1454
        %v2640 = vunpack.c.l.bf16 %v1455
        %v2641 = vunpack.c.l.bf16 %v1456
        %v2642 = vunpack.c.l.bf16 %v1457
        %v2643 = vunpack.c.l.bf16 %v1458
        %v2644 = vmul.f32 %v2522, %v2628
        %v2645 = vmul.f32 %v2529, %v2629
        %v2646 = vmul.f32 %v2536, %v2630
        %v2647 = vmul.f32 %v2543, %v2631
        %v2648 = vmul.f32 %v2550, %v2632
        %v2649 = vmul.f32 %v2557, %v2633
        %v2650 = vmul.f32 %v2564, %v2634
        %v2651 = vmul.f32 %v2571, %v2635
        %v2652 = vmul.f32 %v2578, %v2636
        %v2653 = vmul.f32 %v2585, %v2637
        %v2654 = vmul.f32 %v2592, %v2638
        %v2655 = vmul.f32 %v2599, %v2639
        %v2656 = vmul.f32 %v2606, %v2640
        %v2657 = vmul.f32 %v2613, %v2641
        %v2658 = vmul.f32 %v2620, %v2642
        %v2659 = vmul.f32 %v2627, %v2643
        %v2660 = vsel %vm1206, %v2644, 0.0
        %v2661 = vrot.slane %v2660, 4
        %v2662 = vadd.f32 %v2660, %v2661
        %v2663 = vrot.slane %v2662, 2
        %v2664 = vadd.f32 %v2662, %v2663
        %v2665 = vrot.slane %v2664, 1
        %v2666 = vadd.f32 %v2664, %v2665
        %v2667 = vsel %vm1206, %v2645, 0.0
        %v2668 = vrot.slane %v2667, 4
        %v2669 = vadd.f32 %v2667, %v2668
        %v2670 = vrot.slane %v2669, 2
        %v2671 = vadd.f32 %v2669, %v2670
        %v2672 = vrot.slane %v2671, 1
        %v2673 = vadd.f32 %v2671, %v2672
        %v2674 = vsel %vm1206, %v2646, 0.0
        %v2675 = vrot.slane %v2674, 4
        %v2676 = vadd.f32 %v2674, %v2675
        %v2677 = vrot.slane %v2676, 2
        %v2678 = vadd.f32 %v2676, %v2677
        %v2679 = vrot.slane %v2678, 1
        %v2680 = vadd.f32 %v2678, %v2679
        %v2681 = vsel %vm1206, %v2647, 0.0
        %v2682 = vrot.slane %v2681, 4
        %v2683 = vadd.f32 %v2681, %v2682
        %v2684 = vrot.slane %v2683, 2
        %v2685 = vadd.f32 %v2683, %v2684
        %v2686 = vrot.slane %v2685, 1
        %v2687 = vadd.f32 %v2685, %v2686
        %v2688 = vsel %vm1206, %v2648, 0.0
        %v2689 = vrot.slane %v2688, 4
        %v2690 = vadd.f32 %v2688, %v2689
        %v2691 = vrot.slane %v2690, 2
        %v2692 = vadd.f32 %v2690, %v2691
        %v2693 = vrot.slane %v2692, 1
        %v2694 = vadd.f32 %v2692, %v2693
        %v2695 = vsel %vm1206, %v2649, 0.0
        %v2696 = vrot.slane %v2695, 4
        %v2697 = vadd.f32 %v2695, %v2696
        %v2698 = vrot.slane %v2697, 2
        %v2699 = vadd.f32 %v2697, %v2698
        %v2700 = vrot.slane %v2699, 1
        %v2701 = vadd.f32 %v2699, %v2700
        %v2702 = vsel %vm1206, %v2650, 0.0
        %v2703 = vrot.slane %v2702, 4
        %v2704 = vadd.f32 %v2702, %v2703
        %v2705 = vrot.slane %v2704, 2
        %v2706 = vadd.f32 %v2704, %v2705
        %v2707 = vrot.slane %v2706, 1
        %v2708 = vadd.f32 %v2706, %v2707
        %v2709 = vsel %vm1206, %v2651, 0.0
        %v2710 = vrot.slane %v2709, 4
        %v2711 = vadd.f32 %v2709, %v2710
        %v2712 = vrot.slane %v2711, 2
        %v2713 = vadd.f32 %v2711, %v2712
        %v2714 = vrot.slane %v2713, 1
        %v2715 = vadd.f32 %v2713, %v2714
        %v2716 = vsel %vm1206, %v2652, 0.0
        %v2717 = vrot.slane %v2716, 4
        %v2718 = vadd.f32 %v2716, %v2717
        %v2719 = vrot.slane %v2718, 2
        %v2720 = vadd.f32 %v2718, %v2719
        %v2721 = vrot.slane %v2720, 1
        %v2722 = vadd.f32 %v2720, %v2721
        %v2723 = vsel %vm1206, %v2653, 0.0
        %v2724 = vrot.slane %v2723, 4
        %v2725 = vadd.f32 %v2723, %v2724
        %v2726 = vrot.slane %v2725, 2
        %v2727 = vadd.f32 %v2725, %v2726
        %v2728 = vrot.slane %v2727, 1
        %v2729 = vadd.f32 %v2727, %v2728
        %v2730 = vsel %vm1206, %v2654, 0.0
        %v2731 = vrot.slane %v2730, 4
        %v2732 = vadd.f32 %v2730, %v2731
        %v2733 = vrot.slane %v2732, 2
        %v2734 = vadd.f32 %v2732, %v2733
        %v2735 = vrot.slane %v2734, 1
        %v2736 = vadd.f32 %v2734, %v2735
        %v2737 = vsel %vm1206, %v2655, 0.0
        %v2738 = vrot.slane %v2737, 4
        %v2739 = vadd.f32 %v2737, %v2738
        %v2740 = vrot.slane %v2739, 2
        %v2741 = vadd.f32 %v2739, %v2740
        %v2742 = vrot.slane %v2741, 1
        %v2743 = vadd.f32 %v2741, %v2742
        %v2744 = vsel %vm1206, %v2656, 0.0
        %v2745 = vrot.slane %v2744, 4
        %v2746 = vadd.f32 %v2744, %v2745
        %v2747 = vrot.slane %v2746, 2
        %v2748 = vadd.f32 %v2746, %v2747
        %v2749 = vrot.slane %v2748, 1
        %v2750 = vadd.f32 %v2748, %v2749
        %v2751 = vsel %vm1206, %v2657, 0.0
        %v2752 = vrot.slane %v2751, 4
        %v2753 = vadd.f32 %v2751, %v2752
        %v2754 = vrot.slane %v2753, 2
        %v2755 = vadd.f32 %v2753, %v2754
        %v2756 = vrot.slane %v2755, 1
        %v2757 = vadd.f32 %v2755, %v2756
        %v2758 = vsel %vm1206, %v2658, 0.0
        %v2759 = vrot.slane %v2758, 4
        %v2760 = vadd.f32 %v2758, %v2759
        %v2761 = vrot.slane %v2760, 2
        %v2762 = vadd.f32 %v2760, %v2761
        %v2763 = vrot.slane %v2762, 1
        %v2764 = vadd.f32 %v2762, %v2763
        %v2765 = vsel %vm1206, %v2659, 0.0
        %v2766 = vrot.slane %v2765, 4
        %v2767 = vadd.f32 %v2765, %v2766
        %v2768 = vrot.slane %v2767, 2
        %v2769 = vadd.f32 %v2767, %v2768
        %v2770 = vrot.slane %v2769, 1
        %v2771 = vadd.f32 %v2769, %v2770
        %v2772 = vpack.c.bf16 %v2666, %v2666
        %v2773 = vpack.c.bf16 %v2673, %v2673
        %v2774 = vpack.c.bf16 %v2680, %v2680
        %v2775 = vpack.c.bf16 %v2687, %v2687
        %v2776 = vpack.c.bf16 %v2694, %v2694
        %v2777 = vpack.c.bf16 %v2701, %v2701
        %v2778 = vpack.c.bf16 %v2708, %v2708
        %v2779 = vpack.c.bf16 %v2715, %v2715
        %v2780 = vpack.c.bf16 %v2722, %v2722
        %v2781 = vpack.c.bf16 %v2729, %v2729
        %v2782 = vpack.c.bf16 %v2736, %v2736
        %v2783 = vpack.c.bf16 %v2743, %v2743
        %v2784 = vpack.c.bf16 %v2750, %v2750
        %v2785 = vpack.c.bf16 %v2757, %v2757
        %v2786 = vpack.c.bf16 %v2764, %v2764
        %v2787 = vpack.c.bf16 %v2771, %v2771
        %v2788 = vld [vmem:[%s14] sm:$0xf]
        %v2789 = vld [vmem:[%s14 + $0x4] sm:$0xf]
        %v2790 = vld [vmem:[%s14 + $0x8] sm:$0xf]
        %v2791 = vld [vmem:[%s14 + $0xc] sm:$0xf]
        %v2792 = vld [vmem:[#allocation23] sm:$0x1]
        %v2794 = vlaneseq
        %v2795 = vshrl.u32 %v2794, 7
        %v2796 = vsub.s32 0, %v2795
        %v2797 = vrot.slane %v2792, %v2796
        %v2815 = vunpack.c.l.b16 %v2772
        %v2816 = vunpack.c.l.b16 %v2773
        %v2817 = vunpack.c.l.b16 %v2774
        %v2818 = vunpack.c.l.b16 %v2775
        %v2819 = vunpack.c.l.b16 %v2776
        %v2820 = vunpack.c.l.b16 %v2777
        %v2821 = vunpack.c.l.b16 %v2778
        %v2822 = vunpack.c.l.b16 %v2779
        %v2823 = vunpack.c.l.b16 %v2780
        %v2824 = vunpack.c.l.b16 %v2781
        %v2825 = vunpack.c.l.b16 %v2782
        %v2826 = vunpack.c.l.b16 %v2783
        %v2827 = vunpack.c.l.b16 %v2784
        %v2828 = vunpack.c.l.b16 %v2785
        %v2829 = vunpack.c.l.b16 %v2786
        %v2830 = vunpack.c.l.b16 %v2787
        %v2831 = vsel %vm2415, %v2816, %v2815
        %v2832 = vsel %vm2417, %v2817, %v2831
        %v2833 = vsel %vm2419, %v2818, %v2832
        %v2834 = vsel %vm2421, %v2819, %v2833
        %v2835 = vsel %vm2423, %v2820, %v2834
        %v2836 = vsel %vm2425, %v2821, %v2835
        %v2837 = vsel %vm2427, %v2822, %v2836
        %v2838 = vsel %vm2415, %v2824, %v2823
        %v2839 = vsel %vm2417, %v2825, %v2838
        %v2840 = vsel %vm2419, %v2826, %v2839
        %v2841 = vsel %vm2421, %v2827, %v2840
        %v2842 = vsel %vm2423, %v2828, %v2841
        %v2843 = vsel %vm2425, %v2829, %v2842
        %v2844 = vsel %vm2427, %v2830, %v2843
        %v2845 = vpack.c.b16 %v2844, %v2837
        %v2850 = vunpack.c.l.b16 %v2788
        %v2851 = vunpack.c.l.b16 %v2789
        %v2852 = vunpack.c.l.b16 %v2790
        %v2853 = vunpack.c.l.b16 %v2791
        %v2854 = vpack.c.b16 %v2851, %v2850
        %v2855 = vpack.c.b16 %v2853, %v2852
        %v2859 = vsel %vm1206, %v2845, 0
        %2861 = vmatprep.subr.bf16.mxu0 0
        %2862 = vmatpush1.bf16.msra.mxu0 %v2854
        %2863 = vmatprep.subr.bf16.mxu0 0
        %2864 = vmatpush1.bf16.msra.mxu0 %v2855
        %2865 = vmatprep.subr.bf16.mxu0 0
        %2866 = vmatpush1.bf16.msra.mxu0 0
        %2867 = vmatprep.subr.bf16.mxu0 0
        %2868 = vmatpush1.bf16.msra.mxu0 0
        %2869 = vmatprep.subr.bf16.mxu0 0
        %2870 = vmatpush1.bf16.msra.mxu0 0
        %2871 = vmatprep.subr.bf16.mxu0 0
        %2872 = vmatpush1.bf16.msra.mxu0 0
        %2873 = vmatprep.subr.bf16.mxu0 0
        %2874 = vmatpush1.bf16.msra.mxu0 0
        %2875 = vmatprep.subr.bf16.mxu0 0
        %2876 = vmatpush1.bf16.msra.mxu0 0
        %2877 = vmatprep.subr.bf16.mxu0 0
        %2878 = vmatpush1.bf16.msra.mxu0 0
        %2879 = vmatprep.subr.bf16.mxu0 0
        %2880 = vmatpush1.bf16.msra.mxu0 0
        %2881 = vmatprep.subr.bf16.mxu0 0
        %2882 = vmatpush1.bf16.msra.mxu0 0
        %2883 = vmatprep.subr.bf16.mxu0 0
        %2884 = vmatpush1.bf16.msra.mxu0 0
        %2885 = vmatprep.subr.bf16.mxu0 0
        %2886 = vmatpush1.bf16.msra.mxu0 0
        %2887 = vmatprep.subr.bf16.mxu0 0
        %2888 = vmatpush1.bf16.msra.mxu0 0
        %2889 = vmatprep.subr.bf16.mxu0 0
        %2890 = vmatpush1.bf16.msra.mxu0 0
        %2891 = vmatprep.subr.bf16.mxu0 0
        %2892 = vmatpush1.bf16.msra.mxu0 0
        %2893 = vmatprep.mubr.bf16.mxu0 0
        %2894 = vmatmul.mubr.bf16.gmra.mrb[0].mxu0 %v2859
        %v2895 = vpop.f32.mrb[0].mxu0
        %v2896 = vadd.f32 %v2797, %v2895
        %v2897 = vpop.f32.mrb[0].mxu0
        %v2898 = vpop.f32.mrb[0].mxu0
        %v2899 = vadd.f32 %v2797, %v2898
        %v2900 = vpop.f32.mrb[0].mxu0
        %2901 = vdwg.mxu0
        %v2902 = vld [vmem:[#allocation22] sm:$0xf]
        %v2903 = vld [vmem:[#allocation22 + $0x4] sm:$0xf]
        %v2904 = vld [vmem:[#allocation22 + $0x8] sm:$0xf]
        %v2905 = vld [vmem:[#allocation22 + $0xc] sm:$0xf]
        %v2906 = vld [vmem:[#allocation25] sm:$0x1]
        %v2908 = vlaneseq
        %v2909 = vshrl.u32 %v2908, 7
        %v2910 = vsub.s32 0, %v2909
        %v2911 = vrot.slane %v2906, %v2910
        %v2917 = vunpack.c.l.b16 %v2902
        %v2918 = vunpack.c.l.b16 %v2903
        %v2919 = vunpack.c.l.b16 %v2904
        %v2920 = vunpack.c.l.b16 %v2905
        %v2921 = vpack.c.b16 %v2918, %v2917
        %v2922 = vpack.c.b16 %v2920, %v2919
        %2925 = vmatprep.subr.bf16.mxu0 0
        %2926 = vmatpush1.bf16.msra.mxu0 %v2921
        %2927 = vmatprep.subr.bf16.mxu0 0
        %2928 = vmatpush1.bf16.msra.mxu0 %v2922
        %2929 = vmatprep.subr.bf16.mxu0 0
        %2930 = vmatpush1.bf16.msra.mxu0 0
        %2931 = vmatprep.subr.bf16.mxu0 0
        %2932 = vmatpush1.bf16.msra.mxu0 0
        %2933 = vmatprep.subr.bf16.mxu0 0
        %2934 = vmatpush1.bf16.msra.mxu0 0
        %2935 = vmatprep.subr.bf16.mxu0 0
        %2936 = vmatpush1.bf16.msra.mxu0 0
        %2937 = vmatprep.subr.bf16.mxu0 0
        %2938 = vmatpush1.bf16.msra.mxu0 0
        %2939 = vmatprep.subr.bf16.mxu0 0
        %2940 = vmatpush1.bf16.msra.mxu0 0
        %2941 = vmatprep.subr.bf16.mxu0 0
        %2942 = vmatpush1.bf16.msra.mxu0 0
        %2943 = vmatprep.subr.bf16.mxu0 0
        %2944 = vmatpush1.bf16.msra.mxu0 0
        %2945 = vmatprep.subr.bf16.mxu0 0
        %2946 = vmatpush1.bf16.msra.mxu0 0
        %2947 = vmatprep.subr.bf16.mxu0 0
        %2948 = vmatpush1.bf16.msra.mxu0 0
        %2949 = vmatprep.subr.bf16.mxu0 0
        %2950 = vmatpush1.bf16.msra.mxu0 0
        %2951 = vmatprep.subr.bf16.mxu0 0
        %2952 = vmatpush1.bf16.msra.mxu0 0
        %2953 = vmatprep.subr.bf16.mxu0 0
        %2954 = vmatpush1.bf16.msra.mxu0 0
        %2955 = vmatprep.subr.bf16.mxu0 0
        %2956 = vmatpush1.bf16.msra.mxu0 0
        %2957 = vmatprep.mubr.bf16.mxu0 0
        %2958 = vmatmul.mubr.bf16.gmra.mrb[0].mxu0 %v1208
        %v2959 = vpop.f32.mrb[0].mxu0
        %v2960 = vadd.f32 %v2911, %v2959
        %v2961 = vpop.f32.mrb[0].mxu0
        %v2962 = vpop.f32.mrb[0].mxu0
        %v2963 = vadd.f32 %v2911, %v2962
        %v2964 = vpop.f32.mrb[0].mxu0
        %2965 = vdwg.mxu0
        %v2966 = vadd.f32 %v2896, %v2960
        %v2967 = vadd.f32 %v2899, %v2963
        %v2968 = vxor.u32 %v2966, 2147483648
        %v2969 = vxor.u32 %v2967, 2147483648
        %v2970 = vmul.f32 %v2968, 1.442695
        %v2971 = vpow.pop %v2970
        %v2972 = vmul.f32 %v2969, 1.442695
        %v2973 = vpow.pop %v2972
        %v2974 = vadd.f32 %v2971, 1.0
        %v2975 = vadd.f32 %v2973, 1.0
        %v2976 = vrcp.pop %v2974
        %v2977 = vmul.f32 1.0, %v2976
        %v2978 = vrcp.pop %v2975
        %v2979 = vmul.f32 1.0, %v2978
        %2982 = vrot.lane.b32.xlu0 %v2960, 64
        %v2983 = vpop.permute.xlu0 %2982
        %2984 = vrot.lane.b32.xlu0 %v2963, 64
        %v2985 = vpop.permute.xlu0 %2984
        %v2988 = vmul.f32 %v2977, %v2983
        %v2989 = vmul.f32 %v2979, %v2985
        %2992 = vrot.lane.b32.xlu0 %v2988, 64
        %v2993 = vpop.permute.xlu0 %2992
        %2994 = vrot.lane.b32.xlu0 %v2989, 64
        %v2995 = vpop.permute.xlu0 %2994
        %v2998 = vadd.f32 %v2896, %v2993
        %v2999 = vadd.f32 %v2899, %v2995
        %v3000 = vtanh.pop %v2998
        %v3001 = vtanh.pop %v2999
        %v3002 = vsub.f32 1.0, %v2977
        %v3003 = vsub.f32 1.0, %v2979
        %3006 = vrot.lane.b32.xlu0 %v3000, 96
        %v3007 = vpop.permute.xlu0 %3006
        %3008 = vrot.lane.b32.xlu0 %v3001, 96
        %v3009 = vpop.permute.xlu0 %3008
        %v3012 = vmul.f32 %v3002, %v3007
        %v3013 = vmul.f32 %v3003, %v3009
        %3016 = vrot.lane.b32.xlu0 %v1175, 32
        %v3017 = vpop.permute.xlu0 %3016
        %3018 = vrot.lane.b32.xlu0 %v1178, 32
        %v3019 = vpop.permute.xlu0 %3018
        %v3022 = vmul.f32 %v2977, %v3017
        %v3023 = vmul.f32 %v2979, %v3019
        %v3024 = vadd.f32 %v3012, %v3022
        %v3025 = vadd.f32 %v3013, %v3023
        %v3026 = vpack.c.bf16 %v3025, %v3024
        %v3027 = vld [vmem:[%s18] sm:$0xf]
        %v3028 = vld [vmem:[%s18 + $0x4] sm:$0xf]
        %v3029 = vld [vmem:[%s18 + $0x8] sm:$0xf]
        %v3030 = vld [vmem:[%s18 + $0xc] sm:$0xf]
        %v3031 = vld [vmem:[%s19] sm:$0x1]
        %v3033 = vlaneseq
        %v3034 = vshrl.u32 %v3033, 7
        %v3035 = vsub.s32 0, %v3034
        %v3036 = vrot.slane %v3031, %v3035
        %3039 = vrot.lane.b32.xlu0 %v3026, 96
        %v3040 = vpop.permute.xlu0 %3039
        %v3045 = vunpack.c.l.b16 %v3027
        %v3046 = vunpack.c.l.b16 %v3028
        %v3047 = vunpack.c.l.b16 %v3029
        %v3048 = vunpack.c.l.b16 %v3030
        %v3049 = vpack.c.b16 %v3046, %v3045
        %v3050 = vpack.c.b16 %v3048, %v3047
        %v3054 = vsel %vm1206, %v3040, 0
        %3056 = vmatprep.subr.bf16.mxu0 0
        %3057 = vmatpush1.bf16.msra.mxu0 %v3049
        %3058 = vmatprep.subr.bf16.mxu0 0
        %3059 = vmatpush1.bf16.msra.mxu0 %v3050
        %3060 = vmatprep.subr.bf16.mxu0 0
        %3061 = vmatpush1.bf16.msra.mxu0 0
        %3062 = vmatprep.subr.bf16.mxu0 0
        %3063 = vmatpush1.bf16.msra.mxu0 0
        %3064 = vmatprep.subr.bf16.mxu0 0
        %3065 = vmatpush1.bf16.msra.mxu0 0
        %3066 = vmatprep.subr.bf16.mxu0 0
        %3067 = vmatpush1.bf16.msra.mxu0 0
        %3068 = vmatprep.subr.bf16.mxu0 0
        %3069 = vmatpush1.bf16.msra.mxu0 0
        %3070 = vmatprep.subr.bf16.mxu0 0
        %3071 = vmatpush1.bf16.msra.mxu0 0
        %3072 = vmatprep.subr.bf16.mxu0 0
        %3073 = vmatpush1.bf16.msra.mxu0 0
        %3074 = vmatprep.subr.bf16.mxu0 0
        %3075 = vmatpush1.bf16.msra.mxu0 0
        %3076 = vmatprep.subr.bf16.mxu0 0
        %3077 = vmatpush1.bf16.msra.mxu0 0
        %3078 = vmatprep.subr.bf16.mxu0 0
        %3079 = vmatpush1.bf16.msra.mxu0 0
        %3080 = vmatprep.subr.bf16.mxu0 0
        %3081 = vmatpush1.bf16.msra.mxu0 0
        %3082 = vmatprep.subr.bf16.mxu0 0
        %3083 = vmatpush1.bf16.msra.mxu0 0
        %3084 = vmatprep.subr.bf16.mxu0 0
        %3085 = vmatpush1.bf16.msra.mxu0 0
        %3086 = vmatprep.subr.bf16.mxu0 0
        %3087 = vmatpush1.bf16.msra.mxu0 0
        %3088 = vmatprep.mubr.bf16.mxu0 0
        %3089 = vmatmul.mubr.bf16.gmra.mrb[0].mxu0 %v3054
        %v3090 = vpop.f32.mrb[0].mxu0
        %v3091 = vadd.f32 %v3036, %v3090
        %v3092 = vpop.f32.mrb[0].mxu0
        %v3093 = vpop.f32.mrb[0].mxu0
        %v3094 = vadd.f32 %v3036, %v3093
        %v3095 = vpop.f32.mrb[0].mxu0
        %3096 = vdwg.mxu0
        %v3097 = vmul.f32 %v3091, %v879
        %v3098 = vmul.f32 %v3094, %v886
        %3099 = vst [vmem:[%s851] sm:$0xff] %v3097
        %3100 = vst [vmem:[%s851 + $0x8] sm:$0xff] %v3098
        %v3101 = vmul.f32 %v2454, %v920
        %v3102 = vmul.f32 %v2486, %v921
        %vm3103 = vcmask 64512
        %v3104 = vsel %vm3103, %v3101, 0.0
        %v3105 = vsel %vm3103, %v3102, 0.0
        %3106 = vst [vmem:[%s844] sm:$0xff] %v3104
        %3107 = vst [vmem:[%s844 + $0x8] sm:$0xff] %v3105
        %s3108 = sand.u32 %s473, 1
        %s3109 = scalar_lea.sflag [#allocation7], %s3108
        %s3110 = sand.u32 %s473, 1
        %s3111 = smul.addr %s3110, 16
        %s3112 = scalar_lea.vmem [#allocation26], %s3111
        %s3113 = sand.u32 %s499, 1
        %s3114 = scalar_lea.sflag [#allocation28], %s3113
        %s3115 = sand.u32 %s499, 1
        %s3116 = smul.addr %s3115, 16
        %s3117 = scalar_lea.vmem [#allocation27], %s3116
        // Predicated region
        $region149: #{tpu_custom_call.1} parent=95 // pred_check
          %p3118 = pneg %p483
        $region150: #{tpu_custom_call.1} parent=95 // pred_check_branch
          %3120 = sbr.rel (%p3118) target = $region152
        $region151: #{tpu_custom_call.1} parent=95 // pred_region
          %s3121 = smul.u32 2, %s56
          %s3123 = ssub.s32 256, 256
          %3124 = vsyncadd %s3109, %s3123
          %s3125 = smul.addr %s3121, 128
          %s3126 = scalar_lea.hbm %s20, %s3125
          %s3127 = sshll.u32 %s3112, 4
          %s3128 = int_to_ptr.vmem [resolvable:$true] %s3127
          %3133 = dma.vmem_to_hbm [thread:$0]  %s3128, 256, %s3126, %s3109, 128, 128, 8
        $region152: #{tpu_custom_call.1} parent=95 // pred_fallthru
          _
        // Predicated region
        $region153: #{tpu_custom_call.1} parent=95 // pred_check
          %p3134 = pneg %p509
        $region154: #{tpu_custom_call.1} parent=95 // pred_check_branch
          %3136 = sbr.rel (%p3134) target = $region156
        $region155: #{tpu_custom_call.1} parent=95 // pred_region
          %s3137 = smul.u32 2, %s56
          %s3139 = ssub.s32 256, 256
          %3140 = vsyncadd %s3114, %s3139
          %s3141 = smul.addr %s3137, 128
          %s3142 = scalar_lea.hbm %s21, %s3141
          %s3143 = sshll.u32 %s3117, 4
          %s3144 = int_to_ptr.vmem [resolvable:$true] %s3143
          %3149 = dma.vmem_to_hbm [thread:$0]  %s3144, 256, %s3142, %s3114, 128, 128, 8
        $region156: #{tpu_custom_call.1} parent=95 // pred_fallthru
          _
      $region96: #{tpu_custom_call.1} parent=5 // pred_fallthru
        _
      %p3150 = scmp.le.s32.totalorder 2, %s51
      // Predicated region
      $region157: #{tpu_custom_call.1} parent=5 // pred_check
        %p3151 = pneg %p3150
      $region158: #{tpu_custom_call.1} parent=5 // pred_check_branch
        %3153 = sbr.rel (%p3151) target = $region160
      $region159: #{tpu_custom_call.1} parent=5 // pred_region
        %s3154 = ssub.s32 %s51, 2
        // Predicated region
        $region161: #{tpu_custom_call.1} parent=159 // pred_check
          %p3155 = pneg %p489
        $region162: #{tpu_custom_call.1} parent=159 // pred_check_branch
          %3157 = sbr.rel (%p3155) target = $region164
        $region163: #{tpu_custom_call.1} parent=159 // pred_region
          %s3158 = sand.u32 %s474, 1
          %s3159 = scalar_lea.sflag [#allocation7], %s3158
          %s3160 = sand.u32 %s474, 1
          %s3161 = smul.addr %s3160, 16
          %s3162 = scalar_lea.vmem [#allocation26], %s3161
          %3163 = dma.done %s3159, 256
        $region164: #{tpu_custom_call.1} parent=159 // pred_fallthru
          _
        // Predicated region
        $region165: #{tpu_custom_call.1} parent=159 // pred_check
          %p3164 = pneg %p515
        $region166: #{tpu_custom_call.1} parent=159 // pred_check_branch
          %3166 = sbr.rel (%p3164) target = $region168
        $region167: #{tpu_custom_call.1} parent=159 // pred_region
          %s3167 = sand.u32 %s500, 1
          %s3168 = scalar_lea.sflag [#allocation28], %s3167
          %s3169 = sand.u32 %s500, 1
          %s3170 = smul.addr %s3169, 16
          %s3171 = scalar_lea.vmem [#allocation27], %s3170
          %3172 = dma.done %s3168, 256
        $region168: #{tpu_custom_call.1} parent=159 // pred_fallthru
          _
      $region160: #{tpu_custom_call.1} parent=5 // pred_fallthru
        _
    $region6: #{tpu_custom_call.1} parent=1 // loop_footer
      %s55 = sadd.s32 1, %s51
    $region7: #{tpu_custom_call.1} parent=1 // loop_footer_branch
      %50 = sbr.rel target = $region3
    $region8: #{tpu_custom_call.1} parent=1 // loop_exit
      _
    %3173 = vsyncpa [#allocation6], 1
    %s3174 = scalar_lea.sflag [#allocation6], 1
    %3175 = vsyncpa %s3174, 1
    %3176 = vsyncpa [#allocation9], 1
    %s3177 = scalar_lea.sflag [#allocation9], 1
    %3178 = vsyncpa %s3177, 1
    %3179 = vsyncpa [#allocation12], 1
    %3180 = vsyncpa [#allocation15], 1
    %3181 = vsyncpa [#allocation18], 1
    %3182 = vsyncpa [#allocation21], 1
    %3183 = vsyncpa [#allocation24], 1
    %3184 = vsyncpa [#allocation7], 1
    %s3185 = scalar_lea.sflag [#allocation7], 1
    %3186 = vsyncpa %s3185, 1
    %3187 = vsyncpa [#allocation28], 1
    %s3188 = scalar_lea.sflag [#allocation28], 1
    %3189 = vsyncpa %s3188, 1

</llo_original>
